<compile_context>
chip_gen: v7x
topology: tpu7x:2x2x1
jax: 0.10.0
libtpu: 0.0.40
codegen_flags: <defaults>
</compile_context>

<pallas_src>
import math
from functools import partial

import jax
import jax.numpy as jnp
from jax.experimental import pallas as pl
from jax.experimental.pallas import tpu as pltpu


# Canonical per-block parameter ordering (kernel unpack order == wrapper order).
_BLOCK_PARAM_NAMES = (
    "cn1_g", "cn1_b", "cn2_g", "cn2_b",
    "n1_g", "n1_b", "n2_g", "n2_b",
    "caq_w", "cakv_w", "capj_w", "capj_b",
    "saqkv_w", "sapj_w", "sapj_b",
    "fc1_w", "fc1_b", "fc2_w", "fc2_b",
)


# ------------------------------ kernel helpers ------------------------------

def _ln(x, g, b, eps=1e-5):
    # x: (M, C) f32; g/b: (1, C) f32   (matches nn.LayerNorm, biased variance)
    mean = jnp.mean(x, axis=-1, keepdims=True)
    var = jnp.mean(jnp.square(x - mean), axis=-1, keepdims=True)
    return (x - mean) * jax.lax.rsqrt(var + eps) * g + b


def _gelu_exact(x):
    # exact (erf-based) GELU, matching nn.GELU() default
    return 0.5 * x * (1.0 + jax.lax.erf(x * 0.7071067811865476))


def _mha(q_src, kv_src, q_off, k_off, v_off, *, num_heads, head_dim, B, Tq, Tk):
    """Multi-head attention core.

    q_src: (B*Tq, >=C) f32, already scaled (scale folded into the q weights).
    kv_src: (B*Tk, ...) f32 holding k at lane offset k_off and v at v_off.
    Returns the per-head contexts lane-concatenated: (B*Tq, num_heads*head_dim)
    f32 — ready for ONE full-K output projection.
    """
    rows = []
    for b in range(B):                      # B is tiny & static
        qb = q_src[b * Tq:(b + 1) * Tq]
        kb = kv_src[b * Tk:(b + 1) * Tk]
        heads = []
        for h in range(num_heads):          # static lane slices per head
            qh = qb[:, q_off + h * head_dim: q_off + (h + 1) * head_dim]
            kh = kb[:, k_off + h * head_dim: k_off + (h + 1) * head_dim]
            vh = kb[:, v_off + h * head_dim: v_off + (h + 1) * head_dim]
            # scores (Tq, Tk): contract head_dim of q with head_dim of k
            s = jax.lax.dot_general(
                qh.astype(jnp.bfloat16), kh.astype(jnp.bfloat16),
                (((1,), (1,)), ((), ())), preferred_element_type=jnp.float32)
            s = s - jnp.max(s, axis=-1, keepdims=True)
            e = jnp.exp(s)
            p = e * pl.reciprocal(jnp.sum(e, axis=-1, keepdims=True), approx=True)
            heads.append(jnp.dot(p.astype(jnp.bfloat16), vh.astype(jnp.bfloat16),
                                 preferred_element_type=jnp.float32))
        rows.append(jnp.concatenate(heads, axis=-1))      # (Tq, C)
    return jnp.concatenate(rows, axis=0)                  # (B*Tq, C)


def _csblock(x, ctx, p, *, num_heads, B, Tq, Tc):
    """One CSBlock on flattened activations.  x: (B*Tq, C) f32, ctx: (B*Tc, Cc)."""
    C = x.shape[-1]
    hd = C // num_heads

    # ---- cross attention: x = x + proj(MHA(LN(x), LN(ctx))) ----
    xn = _ln(x, p["cn1_g"], p["cn1_b"])
    cn = _ln(ctx, p["cn2_g"], p["cn2_b"])
    q = jnp.dot(xn.astype(jnp.bfloat16), p["caq_w"],          # scale pre-folded
                preferred_element_type=jnp.float32)            # (B*Tq, C)
    kv = jnp.dot(cn.astype(jnp.bfloat16), p["cakv_w"],
                 preferred_element_type=jnp.float32)           # (B*Tc, 2C)
    att = _mha(q, kv, 0, 0, C, num_heads=num_heads, head_dim=hd, B=B, Tq=Tq, Tk=Tc)
    x = x + p["capj_b"] + jnp.dot(att.astype(jnp.bfloat16), p["capj_w"],
                                  preferred_element_type=jnp.float32)

    # ---- self attention: x = x + proj(MHA(LN(x))) ----
    xn = _ln(x, p["n1_g"], p["n1_b"])
    qkv = jnp.dot(xn.astype(jnp.bfloat16), p["saqkv_w"],       # q-third pre-scaled
                  preferred_element_type=jnp.float32)          # (B*Tq, 3C)
    att = _mha(qkv, qkv, 0, C, 2 * C, num_heads=num_heads, head_dim=hd,
               B=B, Tq=Tq, Tk=Tq)
    x = x + p["sapj_b"] + jnp.dot(att.astype(jnp.bfloat16), p["sapj_w"],
                                  preferred_element_type=jnp.float32)

    # ---- MLP: x = x + fc2(gelu(fc1(LN(x)))) ----
    xn = _ln(x, p["n2_g"], p["n2_b"])
    h = jnp.dot(xn.astype(jnp.bfloat16), p["fc1_w"],
                preferred_element_type=jnp.float32) + p["fc1_b"]
    h = _gelu_exact(h)
    x = x + p["fc2_b"] + jnp.dot(h.astype(jnp.bfloat16), p["fc2_w"],
                                 preferred_element_type=jnp.float32)
    return x


# ------------------------------ fused encoder kernel ------------------------

def encoder_kernel(x_in_ref, xa_in_ref, *rest, num_heads, B, T1, T2, depth):
    n = len(_BLOCK_PARAM_NAMES)
    v_refs = rest[:n]                      # video-block params (current depth)
    a_refs = rest[n:2 * n]                 # audio-block params (current depth)
    nx_g_ref, nx_b_ref, na_g_ref, na_b_ref = rest[2 * n:2 * n + 4]
    out_x_ref, out_a_ref = rest[2 * n + 4], rest[2 * n + 5]
    xs_ref, as_ref = rest[2 * n + 6], rest[2 * n + 7]          # f32 state scratch

    d = pl.program_id(0)

    @pl.when(d == 0)
    def _():
        xs_ref[...] = x_in_ref[...].astype(jnp.float32)
        as_ref[...] = xa_in_ref[...].astype(jnp.float32)

    pv = {k: r[...] for k, r in zip(_BLOCK_PARAM_NAMES, v_refs)}
    pa = {k: r[...] for k, r in zip(_BLOCK_PARAM_NAMES, a_refs)}

    x = xs_ref[...]                        # (B*T1, Cv) f32, previous-depth state
    xa = as_ref[...]                       # (B*T2, Ca) f32

    # torch: x, x_audio = blk(x, ctx=x_audio), blk_audio(x_audio, ctx=x)
    # -> both blocks read the OLD x / x_audio.
    x_new = _csblock(x, xa, pv, num_heads=num_heads, B=B, Tq=T1, Tc=T2)
    xa_new = _csblock(xa, x, pa, num_heads=num_heads, B=B, Tq=T2, Tc=T1)

    xs_ref[...] = x_new
    as_ref[...] = xa_new

    @pl.when(d == depth - 1)
    def _():
        out_x_ref[...] = _ln(x_new, nx_g_ref[...], nx_b_ref[...]).astype(out_x_ref.dtype)
        out_a_ref[...] = _ln(xa_new, na_g_ref[...], na_b_ref[...]).astype(out_a_ref.dtype)


# ------------------------------ operand prep --------------------------------

def _prep_block(bp, num_heads):
    """Convert one torch-layout block param dict into kernel operands.

    Weights (MXU operands) -> bf16; LN params / biases stay f32 as (1, C) rows.
    q scale (head_dim**-0.5) is folded into ca_q_w and the q-third of sa_qkv_w.
    """
    dim = bp["ca_q_w"].shape[0]
    scale = (dim // num_heads) ** (-0.5)
    row = lambda a: a.reshape(1, -1)
    bf = lambda a: a.astype(jnp.bfloat16)
    sa_qkv = jnp.concatenate(
        [bp["sa_qkv_w"][:, :dim] * scale, bp["sa_qkv_w"][:, dim:]], axis=1)
    return {
        "cn1_g": row(bp["cross_norm1"][0]), "cn1_b": row(bp["cross_norm1"][1]),
        "cn2_g": row(bp["cross_norm2"][0]), "cn2_b": row(bp["cross_norm2"][1]),
        "n1_g": row(bp["norm1"][0]), "n1_b": row(bp["norm1"][1]),
        "n2_g": row(bp["norm2"][0]), "n2_b": row(bp["norm2"][1]),
        "caq_w": bf(bp["ca_q_w"] * scale),
        "cakv_w": bf(bp["ca_kv_w"]),
        "capj_w": bf(bp["ca_proj_w"]),
        "capj_b": row(bp["ca_proj_b"]),
        "saqkv_w": bf(sa_qkv),
        "sapj_w": bf(bp["sa_proj_w"]),
        "sapj_b": row(bp["sa_proj_b"]),
        "fc1_w": bf(bp["fc1_w"]),
        "fc1_b": row(bp["fc1_b"]),
        "fc2_w": bf(bp["fc2_w"]),
        "fc2_b": row(bp["fc2_b"]),
    }


def _stack_block_params(blocks, num_heads):
    prepped = [_prep_block(bp, num_heads) for bp in blocks]
    return [jnp.stack([p[name] for p in prepped], axis=0)
            for name in _BLOCK_PARAM_NAMES]


# ------------------------------ encoder forward ------------------------------

def encoder_forward(x, x_audio, params, num_heads):
    B, T1, Cv = x.shape
    _, T2, Ca = x_audio.shape
    depth = len(params["blocks"])

    # Fold batch into the matmul M dimension (metadata-only reshape outside).
    x2 = x.reshape(B * T1, Cv)
    xa2 = x_audio.reshape(B * T2, Ca)

    v_stacked = _stack_block_params(params["blocks"], num_heads)        # 19 arrays (depth, ...)
    a_stacked = _stack_block_params(params["blocks_audio"], num_heads)  # 19 arrays (depth, ...)
    norm_args = (params["norm"][0].reshape(1, Cv), params["norm"][1].reshape(1, Cv),
                 params["norm_audio"][0].reshape(1, Ca), params["norm_audio"][1].reshape(1, Ca))

    args = (x2, xa2, *v_stacked, *a_stacked, *norm_args)

    def depth_spec(a):      # stream this depth's slice; next depth prefetched by pipeline
        return pl.BlockSpec((None,) + a.shape[1:], lambda d: (d, 0, 0))

    def const_spec(a):      # whole array, resident across all depth steps
        return pl.BlockSpec(a.shape, lambda d: (0,) * a.ndim)

    in_specs = ([const_spec(x2), const_spec(xa2)]
                + [depth_spec(a) for a in v_stacked]
                + [depth_spec(a) for a in a_stacked]
                + [const_spec(a) for a in norm_args])

    out_x, out_a = pl.pallas_call(
        partial(encoder_kernel, num_heads=num_heads, B=B, T1=T1, T2=T2, depth=depth),
        grid=(depth,),
        out_shape=(jax.ShapeDtypeStruct((B * T1, Cv), x.dtype),
                   jax.ShapeDtypeStruct((B * T2, Ca), x_audio.dtype)),
        in_specs=in_specs,
        out_specs=(const_spec(x2), const_spec(xa2)),
        scratch_shapes=[pltpu.VMEM((B * T1, Cv), jnp.float32),
                        pltpu.VMEM((B * T2, Ca), jnp.float32)],
        compiler_params=pltpu.CompilerParams(dimension_semantics=("arbitrary",)),
    )(*args)

    return out_x.reshape(B, T1, Cv), out_a.reshape(B, T2, Ca)


# ------------------------------ parameter init ------------------------------

def _xavier(key, in_dim, out_dim):
    a = math.sqrt(6.0 / (in_dim + out_dim))
    # stored as (in, out) == transpose of torch's (out, in)
    return jax.random.uniform(key, (in_dim, out_dim), jnp.float32, -a, a)


def init_csblock(key, dim, context_dim, num_heads, mlp_ratio=4.0):
    ks = jax.random.split(key, 7)
    hidden = int(dim * mlp_ratio)
    ln = lambda d: (jnp.ones((d,), jnp.float32), jnp.zeros((d,), jnp.float32))
    return {
        "cross_norm1": ln(dim),
        "cross_norm2": ln(context_dim),
        "norm1": ln(dim),
        "norm2": ln(dim),
        "ca_q_w": _xavier(ks[0], dim, dim),
        "ca_kv_w": _xavier(ks[1], context_dim, 2 * dim),
        "ca_proj_w": _xavier(ks[2], dim, dim),
        "ca_proj_b": jnp.zeros((dim,), jnp.float32),
        "sa_qkv_w": _xavier(ks[3], dim, 3 * dim),
        "sa_proj_w": _xavier(ks[4], dim, dim),
        "sa_proj_b": jnp.zeros((dim,), jnp.float32),
        "fc1_w": _xavier(ks[5], dim, hidden),
        "fc1_b": jnp.zeros((hidden,), jnp.float32),
        "fc2_w": _xavier(ks[6], hidden, dim),
        "fc2_b": jnp.zeros((dim,), jnp.float32),
    }


def init_encoder(key, embed_dim, embed_dim_audio, depth, num_heads, mlp_ratio=4.0):
    keys = jax.random.split(key, 2 * depth)
    ln = lambda d: (jnp.ones((d,), jnp.float32), jnp.zeros((d,), jnp.float32))
    return {
        "blocks": [init_csblock(keys[i], embed_dim, embed_dim_audio,
                                num_heads, mlp_ratio) for i in range(depth)],
        "blocks_audio": [init_csblock(keys[depth + i], embed_dim_audio, embed_dim,
                                      num_heads, mlp_ratio) for i in range(depth)],
        "norm": ln(embed_dim),
        "norm_audio": ln(embed_dim_audio),
    }


# ----------------------------------- main -----------------------------------

if __name__ == "__main__":
    embed_dim = 32        # video token dim
    embed_dim_audio = 64  # audio token dim
    depth = 2
    num_heads = 4
    B, Nv, Na = 2, 8, 6

    root = jax.random.PRNGKey(0)
    k_x, k_a, k_p = jax.random.split(root, 3)
    x = jax.random.normal(k_x, (B, Nv, embed_dim), jnp.float32)
    x_audio = jax.random.normal(k_a, (B, Na, embed_dim_audio), jnp.float32)
    params = init_encoder(k_p, embed_dim, embed_dim_audio, depth, num_heads)

    fwd = jax.jit(partial(encoder_forward, num_heads=num_heads))
    out_x, out_a = fwd(x, x_audio, params)
    jax.block_until_ready((out_x, out_a))

    assert out_x.shape == (B, Nv, embed_dim)
    assert out_a.shape == (B, Na, embed_dim_audio)
    assert bool(jnp.all(jnp.isfinite(out_x))) and bool(jnp.all(jnp.isfinite(out_a)))
    print("KERNEL_OK")
</pallas_src>

<mosaic_0001>
module attributes {stable_mosaic.version = 11 : i64} {
  func.func @encoder_kernel(%arg0: i32, %arg1: memref<16x32xf32, #tpu.memory_space<vmem>>, %arg2: memref<12x64xf32, #tpu.memory_space<vmem>>, %arg3: memref<1x1x32xf32, #tpu.memory_space<vmem>>, %arg4: memref<1x1x32xf32, #tpu.memory_space<vmem>>, %arg5: memref<1x1x64xf32, #tpu.memory_space<vmem>>, %arg6: memref<1x1x64xf32, #tpu.memory_space<vmem>>, %arg7: memref<1x1x32xf32, #tpu.memory_space<vmem>>, %arg8: memref<1x1x32xf32, #tpu.memory_space<vmem>>, %arg9: memref<1x1x32xf32, #tpu.memory_space<vmem>>, %arg10: memref<1x1x32xf32, #tpu.memory_space<vmem>>, %arg11: memref<1x32x32xbf16, #tpu.memory_space<vmem>>, %arg12: memref<1x64x64xbf16, #tpu.memory_space<vmem>>, %arg13: memref<1x32x32xbf16, #tpu.memory_space<vmem>>, %arg14: memref<1x1x32xf32, #tpu.memory_space<vmem>>, %arg15: memref<1x32x96xbf16, #tpu.memory_space<vmem>>, %arg16: memref<1x32x32xbf16, #tpu.memory_space<vmem>>, %arg17: memref<1x1x32xf32, #tpu.memory_space<vmem>>, %arg18: memref<1x32x128xbf16, #tpu.memory_space<vmem>>, %arg19: memref<1x1x128xf32, #tpu.memory_space<vmem>>, %arg20: memref<1x128x32xbf16, #tpu.memory_space<vmem>>, %arg21: memref<1x1x32xf32, #tpu.memory_space<vmem>>, %arg22: memref<1x1x64xf32, #tpu.memory_space<vmem>>, %arg23: memref<1x1x64xf32, #tpu.memory_space<vmem>>, %arg24: memref<1x1x32xf32, #tpu.memory_space<vmem>>, %arg25: memref<1x1x32xf32, #tpu.memory_space<vmem>>, %arg26: memref<1x1x64xf32, #tpu.memory_space<vmem>>, %arg27: memref<1x1x64xf32, #tpu.memory_space<vmem>>, %arg28: memref<1x1x64xf32, #tpu.memory_space<vmem>>, %arg29: memref<1x1x64xf32, #tpu.memory_space<vmem>>, %arg30: memref<1x64x64xbf16, #tpu.memory_space<vmem>>, %arg31: memref<1x32x128xbf16, #tpu.memory_space<vmem>>, %arg32: memref<1x64x64xbf16, #tpu.memory_space<vmem>>, %arg33: memref<1x1x64xf32, #tpu.memory_space<vmem>>, %arg34: memref<1x64x192xbf16, #tpu.memory_space<vmem>>, %arg35: memref<1x64x64xbf16, #tpu.memory_space<vmem>>, %arg36: memref<1x1x64xf32, #tpu.memory_space<vmem>>, %arg37: memref<1x64x256xbf16, #tpu.memory_space<vmem>>, %arg38: memref<1x1x256xf32, #tpu.memory_space<vmem>>, %arg39: memref<1x256x64xbf16, #tpu.memory_space<vmem>>, %arg40: memref<1x1x64xf32, #tpu.memory_space<vmem>>, %arg41: memref<1x32xf32, #tpu.memory_space<vmem>>, %arg42: memref<1x32xf32, #tpu.memory_space<vmem>>, %arg43: memref<1x64xf32, #tpu.memory_space<vmem>>, %arg44: memref<1x64xf32, #tpu.memory_space<vmem>>, %arg45: memref<16x32xf32, #tpu.memory_space<vmem>>, %arg46: memref<12x64xf32, #tpu.memory_space<vmem>>, %arg47: memref<16x32xf32, #tpu.memory_space<vmem>>, %arg48: memref<12x64xf32, #tpu.memory_space<vmem>>) attributes {dimension_semantics = [#tpu.dimension_semantics<arbitrary>], iteration_bounds = array<i64: 2>, scalar_prefetch = 0 : i64, scratch_operands = 2 : i64, tpu.core_type = #tpu.core_type<tc>, window_params = [{pipeline_mode = #tpu.pipeline_mode<synchronous>, transform_indices = @transform_0, window_bounds = array<i64: 16, 32>}, {pipeline_mode = #tpu.pipeline_mode<synchronous>, transform_indices = @transform_1, window_bounds = array<i64: 12, 64>}, {transform_indices = @transform_2, window_bounds = array<i64: 1, 1, 32>}, {transform_indices = @transform_3, window_bounds = array<i64: 1, 1, 32>}, {transform_indices = @transform_4, window_bounds = array<i64: 1, 1, 64>}, {transform_indices = @transform_5, window_bounds = array<i64: 1, 1, 64>}, {transform_indices = @transform_6, window_bounds = array<i64: 1, 1, 32>}, {transform_indices = @transform_7, window_bounds = array<i64: 1, 1, 32>}, {transform_indices = @transform_8, window_bounds = array<i64: 1, 1, 32>}, {transform_indices = @transform_9, window_bounds = array<i64: 1, 1, 32>}, {transform_indices = @transform_10, window_bounds = array<i64: 1, 32, 32>}, {transform_indices = @transform_11, window_bounds = array<i64: 1, 64, 64>}, {transform_indices = @transform_12, window_bounds = array<i64: 1, 32, 32>}, {transform_indices = @transform_13, window_bounds = array<i64: 1, 1, 32>}, {transform_indices = @transform_14, window_bounds = array<i64: 1, 32, 96>}, {transform_indices = @transform_15, window_bounds = array<i64: 1, 32, 32>}, {transform_indices = @transform_16, window_bounds = array<i64: 1, 1, 32>}, {transform_indices = @transform_17, window_bounds = array<i64: 1, 32, 128>}, {transform_indices = @transform_18, window_bounds = array<i64: 1, 1, 128>}, {transform_indices = @transform_19, window_bounds = array<i64: 1, 128, 32>}, {transform_indices = @transform_20, window_bounds = array<i64: 1, 1, 32>}, {transform_indices = @transform_21, window_bounds = array<i64: 1, 1, 64>}, {transform_indices = @transform_22, window_bounds = array<i64: 1, 1, 64>}, {transform_indices = @transform_23, window_bounds = array<i64: 1, 1, 32>}, {transform_indices = @transform_24, window_bounds = array<i64: 1, 1, 32>}, {transform_indices = @transform_25, window_bounds = array<i64: 1, 1, 64>}, {transform_indices = @transform_26, window_bounds = array<i64: 1, 1, 64>}, {transform_indices = @transform_27, window_bounds = array<i64: 1, 1, 64>}, {transform_indices = @transform_28, window_bounds = array<i64: 1, 1, 64>}, {transform_indices = @transform_29, window_bounds = array<i64: 1, 64, 64>}, {transform_indices = @transform_30, window_bounds = array<i64: 1, 32, 128>}, {transform_indices = @transform_31, window_bounds = array<i64: 1, 64, 64>}, {transform_indices = @transform_32, window_bounds = array<i64: 1, 1, 64>}, {transform_indices = @transform_33, window_bounds = array<i64: 1, 64, 192>}, {transform_indices = @transform_34, window_bounds = array<i64: 1, 64, 64>}, {transform_indices = @transform_35, window_bounds = array<i64: 1, 1, 64>}, {transform_indices = @transform_36, window_bounds = array<i64: 1, 64, 256>}, {transform_indices = @transform_37, window_bounds = array<i64: 1, 1, 256>}, {transform_indices = @transform_38, window_bounds = array<i64: 1, 256, 64>}, {transform_indices = @transform_39, window_bounds = array<i64: 1, 1, 64>}, {pipeline_mode = #tpu.pipeline_mode<synchronous>, transform_indices = @transform_40, window_bounds = array<i64: 1, 32>}, {pipeline_mode = #tpu.pipeline_mode<synchronous>, transform_indices = @transform_41, window_bounds = array<i64: 1, 32>}, {pipeline_mode = #tpu.pipeline_mode<synchronous>, transform_indices = @transform_42, window_bounds = array<i64: 1, 64>}, {pipeline_mode = #tpu.pipeline_mode<synchronous>, transform_indices = @transform_43, window_bounds = array<i64: 1, 64>}, {pipeline_mode = #tpu.pipeline_mode<synchronous>, transform_indices = @transform_44, window_bounds = array<i64: 16, 32>}, {pipeline_mode = #tpu.pipeline_mode<synchronous>, transform_indices = @transform_45, window_bounds = array<i64: 12, 64>}]} {
    %c0_i32 = arith.constant 0 : i32
    %0 = arith.cmpi eq, %arg0, %c0_i32 : i32
    %1 = arith.extui %0 : i1 to i32
    %c0_i32_0 = arith.constant 0 : i32
    %2 = arith.cmpi ne, %1, %c0_i32_0 : i32
    scf.if %2 {
      %c0_310 = arith.constant 0 : index
      %c0_311 = arith.constant 0 : index
      %964 = vector.load %arg1[%c0_310, %c0_311] : memref<16x32xf32, #tpu.memory_space<vmem>>, vector<16x32xf32>
      %c0_312 = arith.constant 0 : index
      %c0_313 = arith.constant 0 : index
      %965 = vector.load %arg47[%c0_312, %c0_313] : memref<16x32xf32, #tpu.memory_space<vmem>>, vector<16x32xf32>
      tpu.vector_store %arg47[%c0_312, %c0_313], %964 {strides = array<i32>} : memref<16x32xf32, #tpu.memory_space<vmem>>, vector<16x32xf32>,
      %c0_314 = arith.constant 0 : index
      %c0_315 = arith.constant 0 : index
      %966 = vector.load %arg2[%c0_314, %c0_315] : memref<12x64xf32, #tpu.memory_space<vmem>>, vector<12x64xf32>
      %c0_316 = arith.constant 0 : index
      %c0_317 = arith.constant 0 : index
      %967 = vector.load %arg48[%c0_316, %c0_317] : memref<12x64xf32, #tpu.memory_space<vmem>>, vector<12x64xf32>
      tpu.vector_store %arg48[%c0_316, %c0_317], %966 {strides = array<i32>} : memref<12x64xf32, #tpu.memory_space<vmem>>, vector<12x64xf32>,
    } else {
    }
    %c0 = arith.constant 0 : index
    %c0_1 = arith.constant 0 : index
    %c0_2 = arith.constant 0 : index
    %3 = vector.load %arg3[%c0, %c0_1, %c0_2] : memref<1x1x32xf32, #tpu.memory_space<vmem>>, vector<1x1x32xf32>
    %4 = vector.shape_cast %3 : vector<1x1x32xf32> to vector<1x32xf32>
    %c0_3 = arith.constant 0 : index
    %c0_4 = arith.constant 0 : index
    %c0_5 = arith.constant 0 : index
    %5 = vector.load %arg4[%c0_3, %c0_4, %c0_5] : memref<1x1x32xf32, #tpu.memory_space<vmem>>, vector<1x1x32xf32>
    %6 = vector.shape_cast %5 : vector<1x1x32xf32> to vector<1x32xf32>
    %c0_6 = arith.constant 0 : index
    %c0_7 = arith.constant 0 : index
    %c0_8 = arith.constant 0 : index
    %7 = vector.load %arg5[%c0_6, %c0_7, %c0_8] : memref<1x1x64xf32, #tpu.memory_space<vmem>>, vector<1x1x64xf32>
    %8 = vector.shape_cast %7 : vector<1x1x64xf32> to vector<1x64xf32>
    %c0_9 = arith.constant 0 : index
    %c0_10 = arith.constant 0 : index
    %c0_11 = arith.constant 0 : index
    %9 = vector.load %arg6[%c0_9, %c0_10, %c0_11] : memref<1x1x64xf32, #tpu.memory_space<vmem>>, vector<1x1x64xf32>
    %10 = vector.shape_cast %9 : vector<1x1x64xf32> to vector<1x64xf32>
    %c0_12 = arith.constant 0 : index
    %c0_13 = arith.constant 0 : index
    %c0_14 = arith.constant 0 : index
    %11 = vector.load %arg7[%c0_12, %c0_13, %c0_14] : memref<1x1x32xf32, #tpu.memory_space<vmem>>, vector<1x1x32xf32>
    %12 = vector.shape_cast %11 : vector<1x1x32xf32> to vector<1x32xf32>
    %c0_15 = arith.constant 0 : index
    %c0_16 = arith.constant 0 : index
    %c0_17 = arith.constant 0 : index
    %13 = vector.load %arg8[%c0_15, %c0_16, %c0_17] : memref<1x1x32xf32, #tpu.memory_space<vmem>>, vector<1x1x32xf32>
    %14 = vector.shape_cast %13 : vector<1x1x32xf32> to vector<1x32xf32>
    %c0_18 = arith.constant 0 : index
    %c0_19 = arith.constant 0 : index
    %c0_20 = arith.constant 0 : index
    %15 = vector.load %arg9[%c0_18, %c0_19, %c0_20] : memref<1x1x32xf32, #tpu.memory_space<vmem>>, vector<1x1x32xf32>
    %16 = vector.shape_cast %15 : vector<1x1x32xf32> to vector<1x32xf32>
    %c0_21 = arith.constant 0 : index
    %c0_22 = arith.constant 0 : index
    %c0_23 = arith.constant 0 : index
    %17 = vector.load %arg10[%c0_21, %c0_22, %c0_23] : memref<1x1x32xf32, #tpu.memory_space<vmem>>, vector<1x1x32xf32>
    %18 = vector.shape_cast %17 : vector<1x1x32xf32> to vector<1x32xf32>
    %c0_24 = arith.constant 0 : index
    %c0_25 = arith.constant 0 : index
    %c0_26 = arith.constant 0 : index
    %19 = vector.load %arg11[%c0_24, %c0_25, %c0_26] : memref<1x32x32xbf16, #tpu.memory_space<vmem>>, vector<1x32x32xbf16>
    %20 = vector.shape_cast %19 : vector<1x32x32xbf16> to vector<32x32xbf16>
    %c0_27 = arith.constant 0 : index
    %c0_28 = arith.constant 0 : index
    %c0_29 = arith.constant 0 : index
    %21 = vector.load %arg12[%c0_27, %c0_28, %c0_29] : memref<1x64x64xbf16, #tpu.memory_space<vmem>>, vector<1x64x64xbf16>
    %22 = vector.shape_cast %21 : vector<1x64x64xbf16> to vector<64x64xbf16>
    %c0_30 = arith.constant 0 : index
    %c0_31 = arith.constant 0 : index
    %c0_32 = arith.constant 0 : index
    %23 = vector.load %arg13[%c0_30, %c0_31, %c0_32] : memref<1x32x32xbf16, #tpu.memory_space<vmem>>, vector<1x32x32xbf16>
    %24 = vector.shape_cast %23 : vector<1x32x32xbf16> to vector<32x32xbf16>
    %c0_33 = arith.constant 0 : index
    %c0_34 = arith.constant 0 : index
    %c0_35 = arith.constant 0 : index
    %25 = vector.load %arg14[%c0_33, %c0_34, %c0_35] : memref<1x1x32xf32, #tpu.memory_space<vmem>>, vector<1x1x32xf32>
    %26 = vector.shape_cast %25 : vector<1x1x32xf32> to vector<1x32xf32>
    %c0_36 = arith.constant 0 : index
    %c0_37 = arith.constant 0 : index
    %c0_38 = arith.constant 0 : index
    %27 = vector.load %arg15[%c0_36, %c0_37, %c0_38] : memref<1x32x96xbf16, #tpu.memory_space<vmem>>, vector<1x32x96xbf16>
    %28 = vector.shape_cast %27 : vector<1x32x96xbf16> to vector<32x96xbf16>
    %c0_39 = arith.constant 0 : index
    %c0_40 = arith.constant 0 : index
    %c0_41 = arith.constant 0 : index
    %29 = vector.load %arg16[%c0_39, %c0_40, %c0_41] : memref<1x32x32xbf16, #tpu.memory_space<vmem>>, vector<1x32x32xbf16>
    %30 = vector.shape_cast %29 : vector<1x32x32xbf16> to vector<32x32xbf16>
    %c0_42 = arith.constant 0 : index
    %c0_43 = arith.constant 0 : index
    %c0_44 = arith.constant 0 : index
    %31 = vector.load %arg17[%c0_42, %c0_43, %c0_44] : memref<1x1x32xf32, #tpu.memory_space<vmem>>, vector<1x1x32xf32>
    %32 = vector.shape_cast %31 : vector<1x1x32xf32> to vector<1x32xf32>
    %c0_45 = arith.constant 0 : index
    %c0_46 = arith.constant 0 : index
    %c0_47 = arith.constant 0 : index
    %33 = vector.load %arg18[%c0_45, %c0_46, %c0_47] : memref<1x32x128xbf16, #tpu.memory_space<vmem>>, vector<1x32x128xbf16>
    %34 = vector.shape_cast %33 : vector<1x32x128xbf16> to vector<32x128xbf16>
    %c0_48 = arith.constant 0 : index
    %c0_49 = arith.constant 0 : index
    %c0_50 = arith.constant 0 : index
    %35 = vector.load %arg19[%c0_48, %c0_49, %c0_50] : memref<1x1x128xf32, #tpu.memory_space<vmem>>, vector<1x1x128xf32>
    %36 = vector.shape_cast %35 : vector<1x1x128xf32> to vector<1x128xf32>
    %c0_51 = arith.constant 0 : index
    %c0_52 = arith.constant 0 : index
    %c0_53 = arith.constant 0 : index
    %37 = vector.load %arg20[%c0_51, %c0_52, %c0_53] : memref<1x128x32xbf16, #tpu.memory_space<vmem>>, vector<1x128x32xbf16>
    %38 = vector.shape_cast %37 : vector<1x128x32xbf16> to vector<128x32xbf16>
    %c0_54 = arith.constant 0 : index
    %c0_55 = arith.constant 0 : index
    %c0_56 = arith.constant 0 : index
    %39 = vector.load %arg21[%c0_54, %c0_55, %c0_56] : memref<1x1x32xf32, #tpu.memory_space<vmem>>, vector<1x1x32xf32>
    %40 = vector.shape_cast %39 : vector<1x1x32xf32> to vector<1x32xf32>
    %c0_57 = arith.constant 0 : index
    %c0_58 = arith.constant 0 : index
    %c0_59 = arith.constant 0 : index
    %41 = vector.load %arg22[%c0_57, %c0_58, %c0_59] : memref<1x1x64xf32, #tpu.memory_space<vmem>>, vector<1x1x64xf32>
    %42 = vector.shape_cast %41 : vector<1x1x64xf32> to vector<1x64xf32>
    %c0_60 = arith.constant 0 : index
    %c0_61 = arith.constant 0 : index
    %c0_62 = arith.constant 0 : index
    %43 = vector.load %arg23[%c0_60, %c0_61, %c0_62] : memref<1x1x64xf32, #tpu.memory_space<vmem>>, vector<1x1x64xf32>
    %44 = vector.shape_cast %43 : vector<1x1x64xf32> to vector<1x64xf32>
    %c0_63 = arith.constant 0 : index
    %c0_64 = arith.constant 0 : index
    %c0_65 = arith.constant 0 : index
    %45 = vector.load %arg24[%c0_63, %c0_64, %c0_65] : memref<1x1x32xf32, #tpu.memory_space<vmem>>, vector<1x1x32xf32>
    %46 = vector.shape_cast %45 : vector<1x1x32xf32> to vector<1x32xf32>
    %c0_66 = arith.constant 0 : index
    %c0_67 = arith.constant 0 : index
    %c0_68 = arith.constant 0 : index
    %47 = vector.load %arg25[%c0_66, %c0_67, %c0_68] : memref<1x1x32xf32, #tpu.memory_space<vmem>>, vector<1x1x32xf32>
    %48 = vector.shape_cast %47 : vector<1x1x32xf32> to vector<1x32xf32>
    %c0_69 = arith.constant 0 : index
    %c0_70 = arith.constant 0 : index
    %c0_71 = arith.constant 0 : index
    %49 = vector.load %arg26[%c0_69, %c0_70, %c0_71] : memref<1x1x64xf32, #tpu.memory_space<vmem>>, vector<1x1x64xf32>
    %50 = vector.shape_cast %49 : vector<1x1x64xf32> to vector<1x64xf32>
    %c0_72 = arith.constant 0 : index
    %c0_73 = arith.constant 0 : index
    %c0_74 = arith.constant 0 : index
    %51 = vector.load %arg27[%c0_72, %c0_73, %c0_74] : memref<1x1x64xf32, #tpu.memory_space<vmem>>, vector<1x1x64xf32>
    %52 = vector.shape_cast %51 : vector<1x1x64xf32> to vector<1x64xf32>
    %c0_75 = arith.constant 0 : index
    %c0_76 = arith.constant 0 : index
    %c0_77 = arith.constant 0 : index
    %53 = vector.load %arg28[%c0_75, %c0_76, %c0_77] : memref<1x1x64xf32, #tpu.memory_space<vmem>>, vector<1x1x64xf32>
    %54 = vector.shape_cast %53 : vector<1x1x64xf32> to vector<1x64xf32>
    %c0_78 = arith.constant 0 : index
    %c0_79 = arith.constant 0 : index
    %c0_80 = arith.constant 0 : index
    %55 = vector.load %arg29[%c0_78, %c0_79, %c0_80] : memref<1x1x64xf32, #tpu.memory_space<vmem>>, vector<1x1x64xf32>
    %56 = vector.shape_cast %55 : vector<1x1x64xf32> to vector<1x64xf32>
    %c0_81 = arith.constant 0 : index
    %c0_82 = arith.constant 0 : index
    %c0_83 = arith.constant 0 : index
    %57 = vector.load %arg30[%c0_81, %c0_82, %c0_83] : memref<1x64x64xbf16, #tpu.memory_space<vmem>>, vector<1x64x64xbf16>
    %58 = vector.shape_cast %57 : vector<1x64x64xbf16> to vector<64x64xbf16>
    %c0_84 = arith.constant 0 : index
    %c0_85 = arith.constant 0 : index
    %c0_86 = arith.constant 0 : index
    %59 = vector.load %arg31[%c0_84, %c0_85, %c0_86] : memref<1x32x128xbf16, #tpu.memory_space<vmem>>, vector<1x32x128xbf16>
    %60 = vector.shape_cast %59 : vector<1x32x128xbf16> to vector<32x128xbf16>
    %c0_87 = arith.constant 0 : index
    %c0_88 = arith.constant 0 : index
    %c0_89 = arith.constant 0 : index
    %61 = vector.load %arg32[%c0_87, %c0_88, %c0_89] : memref<1x64x64xbf16, #tpu.memory_space<vmem>>, vector<1x64x64xbf16>
    %62 = vector.shape_cast %61 : vector<1x64x64xbf16> to vector<64x64xbf16>
    %c0_90 = arith.constant 0 : index
    %c0_91 = arith.constant 0 : index
    %c0_92 = arith.constant 0 : index
    %63 = vector.load %arg33[%c0_90, %c0_91, %c0_92] : memref<1x1x64xf32, #tpu.memory_space<vmem>>, vector<1x1x64xf32>
    %64 = vector.shape_cast %63 : vector<1x1x64xf32> to vector<1x64xf32>
    %c0_93 = arith.constant 0 : index
    %c0_94 = arith.constant 0 : index
    %c0_95 = arith.constant 0 : index
    %65 = vector.load %arg34[%c0_93, %c0_94, %c0_95] : memref<1x64x192xbf16, #tpu.memory_space<vmem>>, vector<1x64x192xbf16>
    %66 = vector.shape_cast %65 : vector<1x64x192xbf16> to vector<64x192xbf16>
    %c0_96 = arith.constant 0 : index
    %c0_97 = arith.constant 0 : index
    %c0_98 = arith.constant 0 : index
    %67 = vector.load %arg35[%c0_96, %c0_97, %c0_98] : memref<1x64x64xbf16, #tpu.memory_space<vmem>>, vector<1x64x64xbf16>
    %68 = vector.shape_cast %67 : vector<1x64x64xbf16> to vector<64x64xbf16>
    %c0_99 = arith.constant 0 : index
    %c0_100 = arith.constant 0 : index
    %c0_101 = arith.constant 0 : index
    %69 = vector.load %arg36[%c0_99, %c0_100, %c0_101] : memref<1x1x64xf32, #tpu.memory_space<vmem>>, vector<1x1x64xf32>
    %70 = vector.shape_cast %69 : vector<1x1x64xf32> to vector<1x64xf32>
    %c0_102 = arith.constant 0 : index
    %c0_103 = arith.constant 0 : index
    %c0_104 = arith.constant 0 : index
    %71 = vector.load %arg37[%c0_102, %c0_103, %c0_104] : memref<1x64x256xbf16, #tpu.memory_space<vmem>>, vector<1x64x256xbf16>
    %72 = vector.shape_cast %71 : vector<1x64x256xbf16> to vector<64x256xbf16>
    %c0_105 = arith.constant 0 : index
    %c0_106 = arith.constant 0 : index
    %c0_107 = arith.constant 0 : index
    %73 = vector.load %arg38[%c0_105, %c0_106, %c0_107] : memref<1x1x256xf32, #tpu.memory_space<vmem>>, vector<1x1x256xf32>
    %74 = vector.shape_cast %73 : vector<1x1x256xf32> to vector<1x256xf32>
    %c0_108 = arith.constant 0 : index
    %c0_109 = arith.constant 0 : index
    %c0_110 = arith.constant 0 : index
    %75 = vector.load %arg39[%c0_108, %c0_109, %c0_110] : memref<1x256x64xbf16, #tpu.memory_space<vmem>>, vector<1x256x64xbf16>
    %76 = vector.shape_cast %75 : vector<1x256x64xbf16> to vector<256x64xbf16>
    %c0_111 = arith.constant 0 : index
    %c0_112 = arith.constant 0 : index
    %c0_113 = arith.constant 0 : index
    %77 = vector.load %arg40[%c0_111, %c0_112, %c0_113] : memref<1x1x64xf32, #tpu.memory_space<vmem>>, vector<1x1x64xf32>
    %78 = vector.shape_cast %77 : vector<1x1x64xf32> to vector<1x64xf32>
    %c0_114 = arith.constant 0 : index
    %c0_115 = arith.constant 0 : index
    %79 = vector.load %arg47[%c0_114, %c0_115] : memref<16x32xf32, #tpu.memory_space<vmem>>, vector<16x32xf32>
    %c0_116 = arith.constant 0 : index
    %c0_117 = arith.constant 0 : index
    %80 = vector.load %arg48[%c0_116, %c0_117] : memref<12x64xf32, #tpu.memory_space<vmem>>, vector<12x64xf32>
    %cst = arith.constant dense<0.000000e+00> : vector<16xf32>
    %81 = vector.multi_reduction <add>, %79, %cst [1] : vector<16x32xf32> to vector<16xf32>
    %82 = vector.shape_cast %81 : vector<16xf32> to vector<16x1xf32>
    %cst_118 = arith.constant 3.200000e+01 : f32
    %83 = vector.broadcast %cst_118 : f32 to vector<16x1xf32>
    %84 = arith.divf %82, %83 : vector<16x1xf32>
    %85 = vector.broadcast %84 : vector<16x1xf32> to vector<16x32xf32>
    %86 = arith.subf %79, %85 : vector<16x32xf32>
    %87 = arith.mulf %86, %86 : vector<16x32xf32>
    %cst_119 = arith.constant dense<0.000000e+00> : vector<16xf32>
    %88 = vector.multi_reduction <add>, %87, %cst_119 [1] : vector<16x32xf32> to vector<16xf32>
    %89 = vector.shape_cast %88 : vector<16xf32> to vector<16x1xf32>
    %cst_120 = arith.constant 3.200000e+01 : f32
    %90 = vector.broadcast %cst_120 : f32 to vector<16x1xf32>
    %91 = arith.divf %89, %90 : vector<16x1xf32>
    %92 = vector.broadcast %84 : vector<16x1xf32> to vector<16x32xf32>
    %93 = arith.subf %79, %92 : vector<16x32xf32>
    %cst_121 = arith.constant 9.99999974E-6 : f32
    %94 = vector.broadcast %cst_121 : f32 to vector<16x1xf32>
    %95 = arith.addf %91, %94 : vector<16x1xf32>
    %96 = math.rsqrt %95 : vector<16x1xf32>
    %97 = vector.broadcast %96 : vector<16x1xf32> to vector<16x32xf32>
    %98 = arith.mulf %93, %97 : vector<16x32xf32>
    %99 = vector.broadcast %4 : vector<1x32xf32> to vector<16x32xf32>
    %100 = arith.mulf %98, %99 : vector<16x32xf32>
    %101 = vector.broadcast %6 : vector<1x32xf32> to vector<16x32xf32>
    %102 = arith.addf %100, %101 : vector<16x32xf32>
    %cst_122 = arith.constant dense<0.000000e+00> : vector<12xf32>
    %103 = vector.multi_reduction <add>, %80, %cst_122 [1] : vector<12x64xf32> to vector<12xf32>
    %104 = vector.shape_cast %103 : vector<12xf32> to vector<12x1xf32>
    %cst_123 = arith.constant 6.400000e+01 : f32
    %105 = vector.broadcast %cst_123 : f32 to vector<12x1xf32>
    %106 = arith.divf %104, %105 : vector<12x1xf32>
    %107 = vector.broadcast %106 : vector<12x1xf32> to vector<12x64xf32>
    %108 = arith.subf %80, %107 : vector<12x64xf32>
    %109 = arith.mulf %108, %108 : vector<12x64xf32>
    %cst_124 = arith.constant dense<0.000000e+00> : vector<12xf32>
    %110 = vector.multi_reduction <add>, %109, %cst_124 [1] : vector<12x64xf32> to vector<12xf32>
    %111 = vector.shape_cast %110 : vector<12xf32> to vector<12x1xf32>
    %cst_125 = arith.constant 6.400000e+01 : f32
    %112 = vector.broadcast %cst_125 : f32 to vector<12x1xf32>
    %113 = arith.divf %111, %112 : vector<12x1xf32>
    %114 = vector.broadcast %106 : vector<12x1xf32> to vector<12x64xf32>
    %115 = arith.subf %80, %114 : vector<12x64xf32>
    %cst_126 = arith.constant 9.99999974E-6 : f32
    %116 = vector.broadcast %cst_126 : f32 to vector<12x1xf32>
    %117 = arith.addf %113, %116 : vector<12x1xf32>
    %118 = math.rsqrt %117 : vector<12x1xf32>
    %119 = vector.broadcast %118 : vector<12x1xf32> to vector<12x64xf32>
    %120 = arith.mulf %115, %119 : vector<12x64xf32>
    %121 = vector.broadcast %8 : vector<1x64xf32> to vector<12x64xf32>
    %122 = arith.mulf %120, %121 : vector<12x64xf32>
    %123 = vector.broadcast %10 : vector<1x64xf32> to vector<12x64xf32>
    %124 = arith.addf %122, %123 : vector<12x64xf32>
    %125 = arith.truncf %102 : vector<16x32xf32> to vector<16x32xbf16>
    %cst_127 = arith.constant dense<0.000000e+00> : vector<16x32xf32>
    %126 = tpu.matmul %125, %20, %cst_127 {dimension_numbers = #tpu.dot_dimension_numbers<[1], [0], [0], [1], [0, 0, 1, 1], [], []>} : vector<16x32xbf16>, vector<32x32xbf16>, vector<16x32xf32> -> vector<16x32xf32>
    %127 = arith.truncf %124 : vector<12x64xf32> to vector<12x64xbf16>
    %cst_128 = arith.constant dense<0.000000e+00> : vector<12x64xf32>
    %128 = tpu.matmul %127, %22, %cst_128 {dimension_numbers = #tpu.dot_dimension_numbers<[1], [0], [0], [1], [0, 0, 1, 1], [], []>} : vector<12x64xbf16>, vector<64x64xbf16>, vector<12x64xf32> -> vector<12x64xf32>
    %129 = vector.extract_strided_slice %126 {offsets = [0, 0], sizes = [8, 32], strides = [1, 1]} : vector<16x32xf32> to vector<8x32xf32>
    %130 = vector.extract_strided_slice %128 {offsets = [0, 0], sizes = [6, 64], strides = [1, 1]} : vector<12x64xf32> to vector<6x64xf32>
    %131 = vector.extract_strided_slice %129 {offsets = [0, 0], sizes = [8, 8], strides = [1, 1]} : vector<8x32xf32> to vector<8x8xf32>
    %132 = vector.extract_strided_slice %130 {offsets = [0, 0], sizes = [6, 8], strides = [1, 1]} : vector<6x64xf32> to vector<6x8xf32>
    %133 = vector.extract_strided_slice %130 {offsets = [0, 32], sizes = [6, 8], strides = [1, 1]} : vector<6x64xf32> to vector<6x8xf32>
    %134 = arith.truncf %131 : vector<8x8xf32> to vector<8x8xbf16>
    %135 = arith.truncf %132 : vector<6x8xf32> to vector<6x8xbf16>
    %cst_129 = arith.constant dense<0.000000e+00> : vector<8x6xf32>
    %136 = tpu.matmul %134, %135, %cst_129 {dimension_numbers = #tpu.dot_dimension_numbers<[1], [1], [0], [0], [0, 0, 1, 0], [], []>} : vector<8x8xbf16>, vector<6x8xbf16>, vector<8x6xf32> -> vector<8x6xf32>
    %cst_130 = arith.constant dense<0xFF800000> : vector<8xf32>
    %137 = vector.multi_reduction <maximumf>, %136, %cst_130 [1] : vector<8x6xf32> to vector<8xf32>
    %138 = vector.shape_cast %137 : vector<8xf32> to vector<8x1xf32>
    %139 = vector.broadcast %138 : vector<8x1xf32> to vector<8x6xf32>
    %140 = arith.subf %136, %139 : vector<8x6xf32>
    %141 = math.exp %140 : vector<8x6xf32>
    %cst_131 = arith.constant dense<0.000000e+00> : vector<8xf32>
    %142 = vector.multi_reduction <add>, %141, %cst_131 [1] : vector<8x6xf32> to vector<8xf32>
    %143 = vector.shape_cast %142 : vector<8xf32> to vector<8x1xf32>
    %144 = tpu.reciprocal %143 {approx = true} : vector<8x1xf32> -> vector<8x1xf32>
    %145 = vector.broadcast %144 : vector<8x1xf32> to vector<8x6xf32>
    %146 = arith.mulf %141, %145 : vector<8x6xf32>
    %147 = arith.truncf %146 : vector<8x6xf32> to vector<8x6xbf16>
    %148 = arith.truncf %133 : vector<6x8xf32> to vector<6x8xbf16>
    %cst_132 = arith.constant dense<0.000000e+00> : vector<8x8xf32>
    %149 = tpu.matmul %147, %148, %cst_132 {dimension_numbers = #tpu.dot_dimension_numbers<[1], [0], [0], [1], [0, 0, 1, 1], [], []>} : vector<8x6xbf16>, vector<6x8xbf16>, vector<8x8xf32> -> vector<8x8xf32>
    %150 = vector.extract_strided_slice %129 {offsets = [0, 8], sizes = [8, 8], strides = [1, 1]} : vector<8x32xf32> to vector<8x8xf32>
    %151 = vector.extract_strided_slice %130 {offsets = [0, 8], sizes = [6, 8], strides = [1, 1]} : vector<6x64xf32> to vector<6x8xf32>
    %152 = vector.extract_strided_slice %130 {offsets = [0, 40], sizes = [6, 8], strides = [1, 1]} : vector<6x64xf32> to vector<6x8xf32>
    %153 = arith.truncf %150 : vector<8x8xf32> to vector<8x8xbf16>
    %154 = arith.truncf %151 : vector<6x8xf32> to vector<6x8xbf16>
    %cst_133 = arith.constant dense<0.000000e+00> : vector<8x6xf32>
    %155 = tpu.matmul %153, %154, %cst_133 {dimension_numbers = #tpu.dot_dimension_numbers<[1], [1], [0], [0], [0, 0, 1, 0], [], []>} : vector<8x8xbf16>, vector<6x8xbf16>, vector<8x6xf32> -> vector<8x6xf32>
    %cst_134 = arith.constant dense<0xFF800000> : vector<8xf32>
    %156 = vector.multi_reduction <maximumf>, %155, %cst_134 [1] : vector<8x6xf32> to vector<8xf32>
    %157 = vector.shape_cast %156 : vector<8xf32> to vector<8x1xf32>
    %158 = vector.broadcast %157 : vector<8x1xf32> to vector<8x6xf32>
    %159 = arith.subf %155, %158 : vector<8x6xf32>
    %160 = math.exp %159 : vector<8x6xf32>
    %cst_135 = arith.constant dense<0.000000e+00> : vector<8xf32>
    %161 = vector.multi_reduction <add>, %160, %cst_135 [1] : vector<8x6xf32> to vector<8xf32>
    %162 = vector.shape_cast %161 : vector<8xf32> to vector<8x1xf32>
    %163 = tpu.reciprocal %162 {approx = true} : vector<8x1xf32> -> vector<8x1xf32>
    %164 = vector.broadcast %163 : vector<8x1xf32> to vector<8x6xf32>
    %165 = arith.mulf %160, %164 : vector<8x6xf32>
    %166 = arith.truncf %165 : vector<8x6xf32> to vector<8x6xbf16>
    %167 = arith.truncf %152 : vector<6x8xf32> to vector<6x8xbf16>
    %cst_136 = arith.constant dense<0.000000e+00> : vector<8x8xf32>
    %168 = tpu.matmul %166, %167, %cst_136 {dimension_numbers = #tpu.dot_dimension_numbers<[1], [0], [0], [1], [0, 0, 1, 1], [], []>} : vector<8x6xbf16>, vector<6x8xbf16>, vector<8x8xf32> -> vector<8x8xf32>
    %169 = vector.extract_strided_slice %129 {offsets = [0, 16], sizes = [8, 8], strides = [1, 1]} : vector<8x32xf32> to vector<8x8xf32>
    %170 = vector.extract_strided_slice %130 {offsets = [0, 16], sizes = [6, 8], strides = [1, 1]} : vector<6x64xf32> to vector<6x8xf32>
    %171 = vector.extract_strided_slice %130 {offsets = [0, 48], sizes = [6, 8], strides = [1, 1]} : vector<6x64xf32> to vector<6x8xf32>
    %172 = arith.truncf %169 : vector<8x8xf32> to vector<8x8xbf16>
    %173 = arith.truncf %170 : vector<6x8xf32> to vector<6x8xbf16>
    %cst_137 = arith.constant dense<0.000000e+00> : vector<8x6xf32>
    %174 = tpu.matmul %172, %173, %cst_137 {dimension_numbers = #tpu.dot_dimension_numbers<[1], [1], [0], [0], [0, 0, 1, 0], [], []>} : vector<8x8xbf16>, vector<6x8xbf16>, vector<8x6xf32> -> vector<8x6xf32>
    %cst_138 = arith.constant dense<0xFF800000> : vector<8xf32>
    %175 = vector.multi_reduction <maximumf>, %174, %cst_138 [1] : vector<8x6xf32> to vector<8xf32>
    %176 = vector.shape_cast %175 : vector<8xf32> to vector<8x1xf32>
    %177 = vector.broadcast %176 : vector<8x1xf32> to vector<8x6xf32>
    %178 = arith.subf %174, %177 : vector<8x6xf32>
    %179 = math.exp %178 : vector<8x6xf32>
    %cst_139 = arith.constant dense<0.000000e+00> : vector<8xf32>
    %180 = vector.multi_reduction <add>, %179, %cst_139 [1] : vector<8x6xf32> to vector<8xf32>
    %181 = vector.shape_cast %180 : vector<8xf32> to vector<8x1xf32>
    %182 = tpu.reciprocal %181 {approx = true} : vector<8x1xf32> -> vector<8x1xf32>
    %183 = vector.broadcast %182 : vector<8x1xf32> to vector<8x6xf32>
    %184 = arith.mulf %179, %183 : vector<8x6xf32>
    %185 = arith.truncf %184 : vector<8x6xf32> to vector<8x6xbf16>
    %186 = arith.truncf %171 : vector<6x8xf32> to vector<6x8xbf16>
    %cst_140 = arith.constant dense<0.000000e+00> : vector<8x8xf32>
    %187 = tpu.matmul %185, %186, %cst_140 {dimension_numbers = #tpu.dot_dimension_numbers<[1], [0], [0], [1], [0, 0, 1, 1], [], []>} : vector<8x6xbf16>, vector<6x8xbf16>, vector<8x8xf32> -> vector<8x8xf32>
    %188 = vector.extract_strided_slice %129 {offsets = [0, 24], sizes = [8, 8], strides = [1, 1]} : vector<8x32xf32> to vector<8x8xf32>
    %189 = vector.extract_strided_slice %130 {offsets = [0, 24], sizes = [6, 8], strides = [1, 1]} : vector<6x64xf32> to vector<6x8xf32>
    %190 = vector.extract_strided_slice %130 {offsets = [0, 56], sizes = [6, 8], strides = [1, 1]} : vector<6x64xf32> to vector<6x8xf32>
    %191 = arith.truncf %188 : vector<8x8xf32> to vector<8x8xbf16>
    %192 = arith.truncf %189 : vector<6x8xf32> to vector<6x8xbf16>
    %cst_141 = arith.constant dense<0.000000e+00> : vector<8x6xf32>
    %193 = tpu.matmul %191, %192, %cst_141 {dimension_numbers = #tpu.dot_dimension_numbers<[1], [1], [0], [0], [0, 0, 1, 0], [], []>} : vector<8x8xbf16>, vector<6x8xbf16>, vector<8x6xf32> -> vector<8x6xf32>
    %cst_142 = arith.constant dense<0xFF800000> : vector<8xf32>
    %194 = vector.multi_reduction <maximumf>, %193, %cst_142 [1] : vector<8x6xf32> to vector<8xf32>
    %195 = vector.shape_cast %194 : vector<8xf32> to vector<8x1xf32>
    %196 = vector.broadcast %195 : vector<8x1xf32> to vector<8x6xf32>
    %197 = arith.subf %193, %196 : vector<8x6xf32>
    %198 = math.exp %197 : vector<8x6xf32>
    %cst_143 = arith.constant dense<0.000000e+00> : vector<8xf32>
    %199 = vector.multi_reduction <add>, %198, %cst_143 [1] : vector<8x6xf32> to vector<8xf32>
    %200 = vector.shape_cast %199 : vector<8xf32> to vector<8x1xf32>
    %201 = tpu.reciprocal %200 {approx = true} : vector<8x1xf32> -> vector<8x1xf32>
    %202 = vector.broadcast %201 : vector<8x1xf32> to vector<8x6xf32>
    %203 = arith.mulf %198, %202 : vector<8x6xf32>
    %204 = arith.truncf %203 : vector<8x6xf32> to vector<8x6xbf16>
    %205 = arith.truncf %190 : vector<6x8xf32> to vector<6x8xbf16>
    %cst_144 = arith.constant dense<0.000000e+00> : vector<8x8xf32>
    %206 = tpu.matmul %204, %205, %cst_144 {dimension_numbers = #tpu.dot_dimension_numbers<[1], [0], [0], [1], [0, 0, 1, 1], [], []>} : vector<8x6xbf16>, vector<6x8xbf16>, vector<8x8xf32> -> vector<8x8xf32>
    %207 = tpu.concatenate %149, %168, %187, %206 in 1 : vector<8x8xf32>, vector<8x8xf32>, vector<8x8xf32>, vector<8x8xf32> -> vector<8x32xf32>
    %208 = vector.extract_strided_slice %126 {offsets = [8, 0], sizes = [8, 32], strides = [1, 1]} : vector<16x32xf32> to vector<8x32xf32>
    %209 = vector.extract_strided_slice %128 {offsets = [6, 0], sizes = [6, 64], strides = [1, 1]} : vector<12x64xf32> to vector<6x64xf32>
    %210 = vector.extract_strided_slice %208 {offsets = [0, 0], sizes = [8, 8], strides = [1, 1]} : vector<8x32xf32> to vector<8x8xf32>
    %211 = vector.extract_strided_slice %209 {offsets = [0, 0], sizes = [6, 8], strides = [1, 1]} : vector<6x64xf32> to vector<6x8xf32>
    %212 = vector.extract_strided_slice %209 {offsets = [0, 32], sizes = [6, 8], strides = [1, 1]} : vector<6x64xf32> to vector<6x8xf32>
    %213 = arith.truncf %210 : vector<8x8xf32> to vector<8x8xbf16>
    %214 = arith.truncf %211 : vector<6x8xf32> to vector<6x8xbf16>
    %cst_145 = arith.constant dense<0.000000e+00> : vector<8x6xf32>
    %215 = tpu.matmul %213, %214, %cst_145 {dimension_numbers = #tpu.dot_dimension_numbers<[1], [1], [0], [0], [0, 0, 1, 0], [], []>} : vector<8x8xbf16>, vector<6x8xbf16>, vector<8x6xf32> -> vector<8x6xf32>
    %cst_146 = arith.constant dense<0xFF800000> : vector<8xf32>
    %216 = vector.multi_reduction <maximumf>, %215, %cst_146 [1] : vector<8x6xf32> to vector<8xf32>
    %217 = vector.shape_cast %216 : vector<8xf32> to vector<8x1xf32>
    %218 = vector.broadcast %217 : vector<8x1xf32> to vector<8x6xf32>
    %219 = arith.subf %215, %218 : vector<8x6xf32>
    %220 = math.exp %219 : vector<8x6xf32>
    %cst_147 = arith.constant dense<0.000000e+00> : vector<8xf32>
    %221 = vector.multi_reduction <add>, %220, %cst_147 [1] : vector<8x6xf32> to vector<8xf32>
    %222 = vector.shape_cast %221 : vector<8xf32> to vector<8x1xf32>
    %223 = tpu.reciprocal %222 {approx = true} : vector<8x1xf32> -> vector<8x1xf32>
    %224 = vector.broadcast %223 : vector<8x1xf32> to vector<8x6xf32>
    %225 = arith.mulf %220, %224 : vector<8x6xf32>
    %226 = arith.truncf %225 : vector<8x6xf32> to vector<8x6xbf16>
    %227 = arith.truncf %212 : vector<6x8xf32> to vector<6x8xbf16>
    %cst_148 = arith.constant dense<0.000000e+00> : vector<8x8xf32>
    %228 = tpu.matmul %226, %227, %cst_148 {dimension_numbers = #tpu.dot_dimension_numbers<[1], [0], [0], [1], [0, 0, 1, 1], [], []>} : vector<8x6xbf16>, vector<6x8xbf16>, vector<8x8xf32> -> vector<8x8xf32>
    %229 = vector.extract_strided_slice %208 {offsets = [0, 8], sizes = [8, 8], strides = [1, 1]} : vector<8x32xf32> to vector<8x8xf32>
    %230 = vector.extract_strided_slice %209 {offsets = [0, 8], sizes = [6, 8], strides = [1, 1]} : vector<6x64xf32> to vector<6x8xf32>
    %231 = vector.extract_strided_slice %209 {offsets = [0, 40], sizes = [6, 8], strides = [1, 1]} : vector<6x64xf32> to vector<6x8xf32>
    %232 = arith.truncf %229 : vector<8x8xf32> to vector<8x8xbf16>
    %233 = arith.truncf %230 : vector<6x8xf32> to vector<6x8xbf16>
    %cst_149 = arith.constant dense<0.000000e+00> : vector<8x6xf32>
    %234 = tpu.matmul %232, %233, %cst_149 {dimension_numbers = #tpu.dot_dimension_numbers<[1], [1], [0], [0], [0, 0, 1, 0], [], []>} : vector<8x8xbf16>, vector<6x8xbf16>, vector<8x6xf32> -> vector<8x6xf32>
    %cst_150 = arith.constant dense<0xFF800000> : vector<8xf32>
    %235 = vector.multi_reduction <maximumf>, %234, %cst_150 [1] : vector<8x6xf32> to vector<8xf32>
    %236 = vector.shape_cast %235 : vector<8xf32> to vector<8x1xf32>
    %237 = vector.broadcast %236 : vector<8x1xf32> to vector<8x6xf32>
    %238 = arith.subf %234, %237 : vector<8x6xf32>
    %239 = math.exp %238 : vector<8x6xf32>
    %cst_151 = arith.constant dense<0.000000e+00> : vector<8xf32>
    %240 = vector.multi_reduction <add>, %239, %cst_151 [1] : vector<8x6xf32> to vector<8xf32>
    %241 = vector.shape_cast %240 : vector<8xf32> to vector<8x1xf32>
    %242 = tpu.reciprocal %241 {approx = true} : vector<8x1xf32> -> vector<8x1xf32>
    %243 = vector.broadcast %242 : vector<8x1xf32> to vector<8x6xf32>
    %244 = arith.mulf %239, %243 : vector<8x6xf32>
    %245 = arith.truncf %244 : vector<8x6xf32> to vector<8x6xbf16>
    %246 = arith.truncf %231 : vector<6x8xf32> to vector<6x8xbf16>
    %cst_152 = arith.constant dense<0.000000e+00> : vector<8x8xf32>
    %247 = tpu.matmul %245, %246, %cst_152 {dimension_numbers = #tpu.dot_dimension_numbers<[1], [0], [0], [1], [0, 0, 1, 1], [], []>} : vector<8x6xbf16>, vector<6x8xbf16>, vector<8x8xf32> -> vector<8x8xf32>
    %248 = vector.extract_strided_slice %208 {offsets = [0, 16], sizes = [8, 8], strides = [1, 1]} : vector<8x32xf32> to vector<8x8xf32>
    %249 = vector.extract_strided_slice %209 {offsets = [0, 16], sizes = [6, 8], strides = [1, 1]} : vector<6x64xf32> to vector<6x8xf32>
    %250 = vector.extract_strided_slice %209 {offsets = [0, 48], sizes = [6, 8], strides = [1, 1]} : vector<6x64xf32> to vector<6x8xf32>
    %251 = arith.truncf %248 : vector<8x8xf32> to vector<8x8xbf16>
    %252 = arith.truncf %249 : vector<6x8xf32> to vector<6x8xbf16>
    %cst_153 = arith.constant dense<0.000000e+00> : vector<8x6xf32>
    %253 = tpu.matmul %251, %252, %cst_153 {dimension_numbers = #tpu.dot_dimension_numbers<[1], [1], [0], [0], [0, 0, 1, 0], [], []>} : vector<8x8xbf16>, vector<6x8xbf16>, vector<8x6xf32> -> vector<8x6xf32>
    %cst_154 = arith.constant dense<0xFF800000> : vector<8xf32>
    %254 = vector.multi_reduction <maximumf>, %253, %cst_154 [1] : vector<8x6xf32> to vector<8xf32>
    %255 = vector.shape_cast %254 : vector<8xf32> to vector<8x1xf32>
    %256 = vector.broadcast %255 : vector<8x1xf32> to vector<8x6xf32>
    %257 = arith.subf %253, %256 : vector<8x6xf32>
    %258 = math.exp %257 : vector<8x6xf32>
    %cst_155 = arith.constant dense<0.000000e+00> : vector<8xf32>
    %259 = vector.multi_reduction <add>, %258, %cst_155 [1] : vector<8x6xf32> to vector<8xf32>
    %260 = vector.shape_cast %259 : vector<8xf32> to vector<8x1xf32>
    %261 = tpu.reciprocal %260 {approx = true} : vector<8x1xf32> -> vector<8x1xf32>
    %262 = vector.broadcast %261 : vector<8x1xf32> to vector<8x6xf32>
    %263 = arith.mulf %258, %262 : vector<8x6xf32>
    %264 = arith.truncf %263 : vector<8x6xf32> to vector<8x6xbf16>
    %265 = arith.truncf %250 : vector<6x8xf32> to vector<6x8xbf16>
    %cst_156 = arith.constant dense<0.000000e+00> : vector<8x8xf32>
    %266 = tpu.matmul %264, %265, %cst_156 {dimension_numbers = #tpu.dot_dimension_numbers<[1], [0], [0], [1], [0, 0, 1, 1], [], []>} : vector<8x6xbf16>, vector<6x8xbf16>, vector<8x8xf32> -> vector<8x8xf32>
    %267 = vector.extract_strided_slice %208 {offsets = [0, 24], sizes = [8, 8], strides = [1, 1]} : vector<8x32xf32> to vector<8x8xf32>
    %268 = vector.extract_strided_slice %209 {offsets = [0, 24], sizes = [6, 8], strides = [1, 1]} : vector<6x64xf32> to vector<6x8xf32>
    %269 = vector.extract_strided_slice %209 {offsets = [0, 56], sizes = [6, 8], strides = [1, 1]} : vector<6x64xf32> to vector<6x8xf32>
    %270 = arith.truncf %267 : vector<8x8xf32> to vector<8x8xbf16>
    %271 = arith.truncf %268 : vector<6x8xf32> to vector<6x8xbf16>
    %cst_157 = arith.constant dense<0.000000e+00> : vector<8x6xf32>
    %272 = tpu.matmul %270, %271, %cst_157 {dimension_numbers = #tpu.dot_dimension_numbers<[1], [1], [0], [0], [0, 0, 1, 0], [], []>} : vector<8x8xbf16>, vector<6x8xbf16>, vector<8x6xf32> -> vector<8x6xf32>
    %cst_158 = arith.constant dense<0xFF800000> : vector<8xf32>
    %273 = vector.multi_reduction <maximumf>, %272, %cst_158 [1] : vector<8x6xf32> to vector<8xf32>
    %274 = vector.shape_cast %273 : vector<8xf32> to vector<8x1xf32>
    %275 = vector.broadcast %274 : vector<8x1xf32> to vector<8x6xf32>
    %276 = arith.subf %272, %275 : vector<8x6xf32>
    %277 = math.exp %276 : vector<8x6xf32>
    %cst_159 = arith.constant dense<0.000000e+00> : vector<8xf32>
    %278 = vector.multi_reduction <add>, %277, %cst_159 [1] : vector<8x6xf32> to vector<8xf32>
    %279 = vector.shape_cast %278 : vector<8xf32> to vector<8x1xf32>
    %280 = tpu.reciprocal %279 {approx = true} : vector<8x1xf32> -> vector<8x1xf32>
    %281 = vector.broadcast %280 : vector<8x1xf32> to vector<8x6xf32>
    %282 = arith.mulf %277, %281 : vector<8x6xf32>
    %283 = arith.truncf %282 : vector<8x6xf32> to vector<8x6xbf16>
    %284 = arith.truncf %269 : vector<6x8xf32> to vector<6x8xbf16>
    %cst_160 = arith.constant dense<0.000000e+00> : vector<8x8xf32>
    %285 = tpu.matmul %283, %284, %cst_160 {dimension_numbers = #tpu.dot_dimension_numbers<[1], [0], [0], [1], [0, 0, 1, 1], [], []>} : vector<8x6xbf16>, vector<6x8xbf16>, vector<8x8xf32> -> vector<8x8xf32>
    %286 = tpu.concatenate %228, %247, %266, %285 in 1 : vector<8x8xf32>, vector<8x8xf32>, vector<8x8xf32>, vector<8x8xf32> -> vector<8x32xf32>
    %287 = tpu.concatenate %207, %286 in 0 : vector<8x32xf32>, vector<8x32xf32> -> vector<16x32xf32>
    %288 = vector.broadcast %26 : vector<1x32xf32> to vector<16x32xf32>
    %289 = arith.addf %79, %288 : vector<16x32xf32>
    %290 = arith.truncf %287 : vector<16x32xf32> to vector<16x32xbf16>
    %cst_161 = arith.constant dense<0.000000e+00> : vector<16x32xf32>
    %291 = tpu.matmul %290, %24, %cst_161 {dimension_numbers = #tpu.dot_dimension_numbers<[1], [0], [0], [1], [0, 0, 1, 1], [], []>} : vector<16x32xbf16>, vector<32x32xbf16>, vector<16x32xf32> -> vector<16x32xf32>
    %292 = arith.addf %289, %291 : vector<16x32xf32>
    %cst_162 = arith.constant dense<0.000000e+00> : vector<16xf32>
    %293 = vector.multi_reduction <add>, %292, %cst_162 [1] : vector<16x32xf32> to vector<16xf32>
    %294 = vector.shape_cast %293 : vector<16xf32> to vector<16x1xf32>
    %cst_163 = arith.constant 3.200000e+01 : f32
    %295 = vector.broadcast %cst_163 : f32 to vector<16x1xf32>
    %296 = arith.divf %294, %295 : vector<16x1xf32>
    %297 = vector.broadcast %296 : vector<16x1xf32> to vector<16x32xf32>
    %298 = arith.subf %292, %297 : vector<16x32xf32>
    %299 = arith.mulf %298, %298 : vector<16x32xf32>
    %cst_164 = arith.constant dense<0.000000e+00> : vector<16xf32>
    %300 = vector.multi_reduction <add>, %299, %cst_164 [1] : vector<16x32xf32> to vector<16xf32>
    %301 = vector.shape_cast %300 : vector<16xf32> to vector<16x1xf32>
    %cst_165 = arith.constant 3.200000e+01 : f32
    %302 = vector.broadcast %cst_165 : f32 to vector<16x1xf32>
    %303 = arith.divf %301, %302 : vector<16x1xf32>
    %304 = vector.broadcast %296 : vector<16x1xf32> to vector<16x32xf32>
    %305 = arith.subf %292, %304 : vector<16x32xf32>
    %cst_166 = arith.constant 9.99999974E-6 : f32
    %306 = vector.broadcast %cst_166 : f32 to vector<16x1xf32>
    %307 = arith.addf %303, %306 : vector<16x1xf32>
    %308 = math.rsqrt %307 : vector<16x1xf32>
    %309 = vector.broadcast %308 : vector<16x1xf32> to vector<16x32xf32>
    %310 = arith.mulf %305, %309 : vector<16x32xf32>
    %311 = vector.broadcast %12 : vector<1x32xf32> to vector<16x32xf32>
    %312 = arith.mulf %310, %311 : vector<16x32xf32>
    %313 = vector.broadcast %14 : vector<1x32xf32> to vector<16x32xf32>
    %314 = arith.addf %312, %313 : vector<16x32xf32>
    %315 = arith.truncf %314 : vector<16x32xf32> to vector<16x32xbf16>
    %cst_167 = arith.constant dense<0.000000e+00> : vector<16x96xf32>
    %316 = tpu.matmul %315, %28, %cst_167 {dimension_numbers = #tpu.dot_dimension_numbers<[1], [0], [0], [1], [0, 0, 1, 1], [], []>} : vector<16x32xbf16>, vector<32x96xbf16>, vector<16x96xf32> -> vector<16x96xf32>
    %317 = vector.extract_strided_slice %316 {offsets = [0, 0], sizes = [8, 96], strides = [1, 1]} : vector<16x96xf32> to vector<8x96xf32>
    %318 = vector.extract_strided_slice %316 {offsets = [0, 0], sizes = [8, 96], strides = [1, 1]} : vector<16x96xf32> to vector<8x96xf32>
    %319 = vector.extract_strided_slice %317 {offsets = [0, 0], sizes = [8, 8], strides = [1, 1]} : vector<8x96xf32> to vector<8x8xf32>
    %320 = vector.extract_strided_slice %318 {offsets = [0, 32], sizes = [8, 8], strides = [1, 1]} : vector<8x96xf32> to vector<8x8xf32>
    %321 = vector.extract_strided_slice %318 {offsets = [0, 64], sizes = [8, 8], strides = [1, 1]} : vector<8x96xf32> to vector<8x8xf32>
    %322 = arith.truncf %319 : vector<8x8xf32> to vector<8x8xbf16>
    %323 = arith.truncf %320 : vector<8x8xf32> to vector<8x8xbf16>
    %cst_168 = arith.constant dense<0.000000e+00> : vector<8x8xf32>
    %324 = tpu.matmul %322, %323, %cst_168 {dimension_numbers = #tpu.dot_dimension_numbers<[1], [1], [0], [0], [0, 0, 1, 0], [], []>} : vector<8x8xbf16>, vector<8x8xbf16>, vector<8x8xf32> -> vector<8x8xf32>
    %cst_169 = arith.constant dense<0xFF800000> : vector<8xf32>
    %325 = vector.multi_reduction <maximumf>, %324, %cst_169 [1] : vector<8x8xf32> to vector<8xf32>
    %326 = vector.shape_cast %325 : vector<8xf32> to vector<8x1xf32>
    %327 = vector.broadcast %326 : vector<8x1xf32> to vector<8x8xf32>
    %328 = arith.subf %324, %327 : vector<8x8xf32>
    %329 = math.exp %328 : vector<8x8xf32>
    %cst_170 = arith.constant dense<0.000000e+00> : vector<8xf32>
    %330 = vector.multi_reduction <add>, %329, %cst_170 [1] : vector<8x8xf32> to vector<8xf32>
    %331 = vector.shape_cast %330 : vector<8xf32> to vector<8x1xf32>
    %332 = tpu.reciprocal %331 {approx = true} : vector<8x1xf32> -> vector<8x1xf32>
    %333 = vector.broadcast %332 : vector<8x1xf32> to vector<8x8xf32>
    %334 = arith.mulf %329, %333 : vector<8x8xf32>
    %335 = arith.truncf %334 : vector<8x8xf32> to vector<8x8xbf16>
    %336 = arith.truncf %321 : vector<8x8xf32> to vector<8x8xbf16>
    %cst_171 = arith.constant dense<0.000000e+00> : vector<8x8xf32>
    %337 = tpu.matmul %335, %336, %cst_171 {dimension_numbers = #tpu.dot_dimension_numbers<[1], [0], [0], [1], [0, 0, 1, 1], [], []>} : vector<8x8xbf16>, vector<8x8xbf16>, vector<8x8xf32> -> vector<8x8xf32>
    %338 = vector.extract_strided_slice %317 {offsets = [0, 8], sizes = [8, 8], strides = [1, 1]} : vector<8x96xf32> to vector<8x8xf32>
    %339 = vector.extract_strided_slice %318 {offsets = [0, 40], sizes = [8, 8], strides = [1, 1]} : vector<8x96xf32> to vector<8x8xf32>
    %340 = vector.extract_strided_slice %318 {offsets = [0, 72], sizes = [8, 8], strides = [1, 1]} : vector<8x96xf32> to vector<8x8xf32>
    %341 = arith.truncf %338 : vector<8x8xf32> to vector<8x8xbf16>
    %342 = arith.truncf %339 : vector<8x8xf32> to vector<8x8xbf16>
    %cst_172 = arith.constant dense<0.000000e+00> : vector<8x8xf32>
    %343 = tpu.matmul %341, %342, %cst_172 {dimension_numbers = #tpu.dot_dimension_numbers<[1], [1], [0], [0], [0, 0, 1, 0], [], []>} : vector<8x8xbf16>, vector<8x8xbf16>, vector<8x8xf32> -> vector<8x8xf32>
    %cst_173 = arith.constant dense<0xFF800000> : vector<8xf32>
    %344 = vector.multi_reduction <maximumf>, %343, %cst_173 [1] : vector<8x8xf32> to vector<8xf32>
    %345 = vector.shape_cast %344 : vector<8xf32> to vector<8x1xf32>
    %346 = vector.broadcast %345 : vector<8x1xf32> to vector<8x8xf32>
    %347 = arith.subf %343, %346 : vector<8x8xf32>
    %348 = math.exp %347 : vector<8x8xf32>
    %cst_174 = arith.constant dense<0.000000e+00> : vector<8xf32>
    %349 = vector.multi_reduction <add>, %348, %cst_174 [1] : vector<8x8xf32> to vector<8xf32>
    %350 = vector.shape_cast %349 : vector<8xf32> to vector<8x1xf32>
    %351 = tpu.reciprocal %350 {approx = true} : vector<8x1xf32> -> vector<8x1xf32>
    %352 = vector.broadcast %351 : vector<8x1xf32> to vector<8x8xf32>
    %353 = arith.mulf %348, %352 : vector<8x8xf32>
    %354 = arith.truncf %353 : vector<8x8xf32> to vector<8x8xbf16>
    %355 = arith.truncf %340 : vector<8x8xf32> to vector<8x8xbf16>
    %cst_175 = arith.constant dense<0.000000e+00> : vector<8x8xf32>
    %356 = tpu.matmul %354, %355, %cst_175 {dimension_numbers = #tpu.dot_dimension_numbers<[1], [0], [0], [1], [0, 0, 1, 1], [], []>} : vector<8x8xbf16>, vector<8x8xbf16>, vector<8x8xf32> -> vector<8x8xf32>
    %357 = vector.extract_strided_slice %317 {offsets = [0, 16], sizes = [8, 8], strides = [1, 1]} : vector<8x96xf32> to vector<8x8xf32>
    %358 = vector.extract_strided_slice %318 {offsets = [0, 48], sizes = [8, 8], strides = [1, 1]} : vector<8x96xf32> to vector<8x8xf32>
    %359 = vector.extract_strided_slice %318 {offsets = [0, 80], sizes = [8, 8], strides = [1, 1]} : vector<8x96xf32> to vector<8x8xf32>
    %360 = arith.truncf %357 : vector<8x8xf32> to vector<8x8xbf16>
    %361 = arith.truncf %358 : vector<8x8xf32> to vector<8x8xbf16>
    %cst_176 = arith.constant dense<0.000000e+00> : vector<8x8xf32>
    %362 = tpu.matmul %360, %361, %cst_176 {dimension_numbers = #tpu.dot_dimension_numbers<[1], [1], [0], [0], [0, 0, 1, 0], [], []>} : vector<8x8xbf16>, vector<8x8xbf16>, vector<8x8xf32> -> vector<8x8xf32>
    %cst_177 = arith.constant dense<0xFF800000> : vector<8xf32>
    %363 = vector.multi_reduction <maximumf>, %362, %cst_177 [1] : vector<8x8xf32> to vector<8xf32>
    %364 = vector.shape_cast %363 : vector<8xf32> to vector<8x1xf32>
    %365 = vector.broadcast %364 : vector<8x1xf32> to vector<8x8xf32>
    %366 = arith.subf %362, %365 : vector<8x8xf32>
    %367 = math.exp %366 : vector<8x8xf32>
    %cst_178 = arith.constant dense<0.000000e+00> : vector<8xf32>
    %368 = vector.multi_reduction <add>, %367, %cst_178 [1] : vector<8x8xf32> to vector<8xf32>
    %369 = vector.shape_cast %368 : vector<8xf32> to vector<8x1xf32>
    %370 = tpu.reciprocal %369 {approx = true} : vector<8x1xf32> -> vector<8x1xf32>
    %371 = vector.broadcast %370 : vector<8x1xf32> to vector<8x8xf32>
    %372 = arith.mulf %367, %371 : vector<8x8xf32>
    %373 = arith.truncf %372 : vector<8x8xf32> to vector<8x8xbf16>
    %374 = arith.truncf %359 : vector<8x8xf32> to vector<8x8xbf16>
    %cst_179 = arith.constant dense<0.000000e+00> : vector<8x8xf32>
    %375 = tpu.matmul %373, %374, %cst_179 {dimension_numbers = #tpu.dot_dimension_numbers<[1], [0], [0], [1], [0, 0, 1, 1], [], []>} : vector<8x8xbf16>, vector<8x8xbf16>, vector<8x8xf32> -> vector<8x8xf32>
    %376 = vector.extract_strided_slice %317 {offsets = [0, 24], sizes = [8, 8], strides = [1, 1]} : vector<8x96xf32> to vector<8x8xf32>
    %377 = vector.extract_strided_slice %318 {offsets = [0, 56], sizes = [8, 8], strides = [1, 1]} : vector<8x96xf32> to vector<8x8xf32>
    %378 = vector.extract_strided_slice %318 {offsets = [0, 88], sizes = [8, 8], strides = [1, 1]} : vector<8x96xf32> to vector<8x8xf32>
    %379 = arith.truncf %376 : vector<8x8xf32> to vector<8x8xbf16>
    %380 = arith.truncf %377 : vector<8x8xf32> to vector<8x8xbf16>
    %cst_180 = arith.constant dense<0.000000e+00> : vector<8x8xf32>
    %381 = tpu.matmul %379, %380, %cst_180 {dimension_numbers = #tpu.dot_dimension_numbers<[1], [1], [0], [0], [0, 0, 1, 0], [], []>} : vector<8x8xbf16>, vector<8x8xbf16>, vector<8x8xf32> -> vector<8x8xf32>
    %cst_181 = arith.constant dense<0xFF800000> : vector<8xf32>
    %382 = vector.multi_reduction <maximumf>, %381, %cst_181 [1] : vector<8x8xf32> to vector<8xf32>
    %383 = vector.shape_cast %382 : vector<8xf32> to vector<8x1xf32>
    %384 = vector.broadcast %383 : vector<8x1xf32> to vector<8x8xf32>
    %385 = arith.subf %381, %384 : vector<8x8xf32>
    %386 = math.exp %385 : vector<8x8xf32>
    %cst_182 = arith.constant dense<0.000000e+00> : vector<8xf32>
    %387 = vector.multi_reduction <add>, %386, %cst_182 [1] : vector<8x8xf32> to vector<8xf32>
    %388 = vector.shape_cast %387 : vector<8xf32> to vector<8x1xf32>
    %389 = tpu.reciprocal %388 {approx = true} : vector<8x1xf32> -> vector<8x1xf32>
    %390 = vector.broadcast %389 : vector<8x1xf32> to vector<8x8xf32>
    %391 = arith.mulf %386, %390 : vector<8x8xf32>
    %392 = arith.truncf %391 : vector<8x8xf32> to vector<8x8xbf16>
    %393 = arith.truncf %378 : vector<8x8xf32> to vector<8x8xbf16>
    %cst_183 = arith.constant dense<0.000000e+00> : vector<8x8xf32>
    %394 = tpu.matmul %392, %393, %cst_183 {dimension_numbers = #tpu.dot_dimension_numbers<[1], [0], [0], [1], [0, 0, 1, 1], [], []>} : vector<8x8xbf16>, vector<8x8xbf16>, vector<8x8xf32> -> vector<8x8xf32>
    %395 = tpu.concatenate %337, %356, %375, %394 in 1 : vector<8x8xf32>, vector<8x8xf32>, vector<8x8xf32>, vector<8x8xf32> -> vector<8x32xf32>
    %396 = vector.extract_strided_slice %316 {offsets = [8, 0], sizes = [8, 96], strides = [1, 1]} : vector<16x96xf32> to vector<8x96xf32>
    %397 = vector.extract_strided_slice %316 {offsets = [8, 0], sizes = [8, 96], strides = [1, 1]} : vector<16x96xf32> to vector<8x96xf32>
    %398 = vector.extract_strided_slice %396 {offsets = [0, 0], sizes = [8, 8], strides = [1, 1]} : vector<8x96xf32> to vector<8x8xf32>
    %399 = vector.extract_strided_slice %397 {offsets = [0, 32], sizes = [8, 8], strides = [1, 1]} : vector<8x96xf32> to vector<8x8xf32>
    %400 = vector.extract_strided_slice %397 {offsets = [0, 64], sizes = [8, 8], strides = [1, 1]} : vector<8x96xf32> to vector<8x8xf32>
    %401 = arith.truncf %398 : vector<8x8xf32> to vector<8x8xbf16>
    %402 = arith.truncf %399 : vector<8x8xf32> to vector<8x8xbf16>
    %cst_184 = arith.constant dense<0.000000e+00> : vector<8x8xf32>
    %403 = tpu.matmul %401, %402, %cst_184 {dimension_numbers = #tpu.dot_dimension_numbers<[1], [1], [0], [0], [0, 0, 1, 0], [], []>} : vector<8x8xbf16>, vector<8x8xbf16>, vector<8x8xf32> -> vector<8x8xf32>
    %cst_185 = arith.constant dense<0xFF800000> : vector<8xf32>
    %404 = vector.multi_reduction <maximumf>, %403, %cst_185 [1] : vector<8x8xf32> to vector<8xf32>
    %405 = vector.shape_cast %404 : vector<8xf32> to vector<8x1xf32>
    %406 = vector.broadcast %405 : vector<8x1xf32> to vector<8x8xf32>
    %407 = arith.subf %403, %406 : vector<8x8xf32>
    %408 = math.exp %407 : vector<8x8xf32>
    %cst_186 = arith.constant dense<0.000000e+00> : vector<8xf32>
    %409 = vector.multi_reduction <add>, %408, %cst_186 [1] : vector<8x8xf32> to vector<8xf32>
    %410 = vector.shape_cast %409 : vector<8xf32> to vector<8x1xf32>
    %411 = tpu.reciprocal %410 {approx = true} : vector<8x1xf32> -> vector<8x1xf32>
    %412 = vector.broadcast %411 : vector<8x1xf32> to vector<8x8xf32>
    %413 = arith.mulf %408, %412 : vector<8x8xf32>
    %414 = arith.truncf %413 : vector<8x8xf32> to vector<8x8xbf16>
    %415 = arith.truncf %400 : vector<8x8xf32> to vector<8x8xbf16>
    %cst_187 = arith.constant dense<0.000000e+00> : vector<8x8xf32>
    %416 = tpu.matmul %414, %415, %cst_187 {dimension_numbers = #tpu.dot_dimension_numbers<[1], [0], [0], [1], [0, 0, 1, 1], [], []>} : vector<8x8xbf16>, vector<8x8xbf16>, vector<8x8xf32> -> vector<8x8xf32>
    %417 = vector.extract_strided_slice %396 {offsets = [0, 8], sizes = [8, 8], strides = [1, 1]} : vector<8x96xf32> to vector<8x8xf32>
    %418 = vector.extract_strided_slice %397 {offsets = [0, 40], sizes = [8, 8], strides = [1, 1]} : vector<8x96xf32> to vector<8x8xf32>
    %419 = vector.extract_strided_slice %397 {offsets = [0, 72], sizes = [8, 8], strides = [1, 1]} : vector<8x96xf32> to vector<8x8xf32>
    %420 = arith.truncf %417 : vector<8x8xf32> to vector<8x8xbf16>
    %421 = arith.truncf %418 : vector<8x8xf32> to vector<8x8xbf16>
    %cst_188 = arith.constant dense<0.000000e+00> : vector<8x8xf32>
    %422 = tpu.matmul %420, %421, %cst_188 {dimension_numbers = #tpu.dot_dimension_numbers<[1], [1], [0], [0], [0, 0, 1, 0], [], []>} : vector<8x8xbf16>, vector<8x8xbf16>, vector<8x8xf32> -> vector<8x8xf32>
    %cst_189 = arith.constant dense<0xFF800000> : vector<8xf32>
    %423 = vector.multi_reduction <maximumf>, %422, %cst_189 [1] : vector<8x8xf32> to vector<8xf32>
    %424 = vector.shape_cast %423 : vector<8xf32> to vector<8x1xf32>
    %425 = vector.broadcast %424 : vector<8x1xf32> to vector<8x8xf32>
    %426 = arith.subf %422, %425 : vector<8x8xf32>
    %427 = math.exp %426 : vector<8x8xf32>
    %cst_190 = arith.constant dense<0.000000e+00> : vector<8xf32>
    %428 = vector.multi_reduction <add>, %427, %cst_190 [1] : vector<8x8xf32> to vector<8xf32>
    %429 = vector.shape_cast %428 : vector<8xf32> to vector<8x1xf32>
    %430 = tpu.reciprocal %429 {approx = true} : vector<8x1xf32> -> vector<8x1xf32>
    %431 = vector.broadcast %430 : vector<8x1xf32> to vector<8x8xf32>
    %432 = arith.mulf %427, %431 : vector<8x8xf32>
    %433 = arith.truncf %432 : vector<8x8xf32> to vector<8x8xbf16>
    %434 = arith.truncf %419 : vector<8x8xf32> to vector<8x8xbf16>
    %cst_191 = arith.constant dense<0.000000e+00> : vector<8x8xf32>
    %435 = tpu.matmul %433, %434, %cst_191 {dimension_numbers = #tpu.dot_dimension_numbers<[1], [0], [0], [1], [0, 0, 1, 1], [], []>} : vector<8x8xbf16>, vector<8x8xbf16>, vector<8x8xf32> -> vector<8x8xf32>
    %436 = vector.extract_strided_slice %396 {offsets = [0, 16], sizes = [8, 8], strides = [1, 1]} : vector<8x96xf32> to vector<8x8xf32>
    %437 = vector.extract_strided_slice %397 {offsets = [0, 48], sizes = [8, 8], strides = [1, 1]} : vector<8x96xf32> to vector<8x8xf32>
    %438 = vector.extract_strided_slice %397 {offsets = [0, 80], sizes = [8, 8], strides = [1, 1]} : vector<8x96xf32> to vector<8x8xf32>
    %439 = arith.truncf %436 : vector<8x8xf32> to vector<8x8xbf16>
    %440 = arith.truncf %437 : vector<8x8xf32> to vector<8x8xbf16>
    %cst_192 = arith.constant dense<0.000000e+00> : vector<8x8xf32>
    %441 = tpu.matmul %439, %440, %cst_192 {dimension_numbers = #tpu.dot_dimension_numbers<[1], [1], [0], [0], [0, 0, 1, 0], [], []>} : vector<8x8xbf16>, vector<8x8xbf16>, vector<8x8xf32> -> vector<8x8xf32>
    %cst_193 = arith.constant dense<0xFF800000> : vector<8xf32>
    %442 = vector.multi_reduction <maximumf>, %441, %cst_193 [1] : vector<8x8xf32> to vector<8xf32>
    %443 = vector.shape_cast %442 : vector<8xf32> to vector<8x1xf32>
    %444 = vector.broadcast %443 : vector<8x1xf32> to vector<8x8xf32>
    %445 = arith.subf %441, %444 : vector<8x8xf32>
    %446 = math.exp %445 : vector<8x8xf32>
    %cst_194 = arith.constant dense<0.000000e+00> : vector<8xf32>
    %447 = vector.multi_reduction <add>, %446, %cst_194 [1] : vector<8x8xf32> to vector<8xf32>
    %448 = vector.shape_cast %447 : vector<8xf32> to vector<8x1xf32>
    %449 = tpu.reciprocal %448 {approx = true} : vector<8x1xf32> -> vector<8x1xf32>
    %450 = vector.broadcast %449 : vector<8x1xf32> to vector<8x8xf32>
    %451 = arith.mulf %446, %450 : vector<8x8xf32>
    %452 = arith.truncf %451 : vector<8x8xf32> to vector<8x8xbf16>
    %453 = arith.truncf %438 : vector<8x8xf32> to vector<8x8xbf16>
    %cst_195 = arith.constant dense<0.000000e+00> : vector<8x8xf32>
    %454 = tpu.matmul %452, %453, %cst_195 {dimension_numbers = #tpu.dot_dimension_numbers<[1], [0], [0], [1], [0, 0, 1, 1], [], []>} : vector<8x8xbf16>, vector<8x8xbf16>, vector<8x8xf32> -> vector<8x8xf32>
    %455 = vector.extract_strided_slice %396 {offsets = [0, 24], sizes = [8, 8], strides = [1, 1]} : vector<8x96xf32> to vector<8x8xf32>
    %456 = vector.extract_strided_slice %397 {offsets = [0, 56], sizes = [8, 8], strides = [1, 1]} : vector<8x96xf32> to vector<8x8xf32>
    %457 = vector.extract_strided_slice %397 {offsets = [0, 88], sizes = [8, 8], strides = [1, 1]} : vector<8x96xf32> to vector<8x8xf32>
    %458 = arith.truncf %455 : vector<8x8xf32> to vector<8x8xbf16>
    %459 = arith.truncf %456 : vector<8x8xf32> to vector<8x8xbf16>
    %cst_196 = arith.constant dense<0.000000e+00> : vector<8x8xf32>
    %460 = tpu.matmul %458, %459, %cst_196 {dimension_numbers = #tpu.dot_dimension_numbers<[1], [1], [0], [0], [0, 0, 1, 0], [], []>} : vector<8x8xbf16>, vector<8x8xbf16>, vector<8x8xf32> -> vector<8x8xf32>
    %cst_197 = arith.constant dense<0xFF800000> : vector<8xf32>
    %461 = vector.multi_reduction <maximumf>, %460, %cst_197 [1] : vector<8x8xf32> to vector<8xf32>
    %462 = vector.shape_cast %461 : vector<8xf32> to vector<8x1xf32>
    %463 = vector.broadcast %462 : vector<8x1xf32> to vector<8x8xf32>
    %464 = arith.subf %460, %463 : vector<8x8xf32>
    %465 = math.exp %464 : vector<8x8xf32>
    %cst_198 = arith.constant dense<0.000000e+00> : vector<8xf32>
    %466 = vector.multi_reduction <add>, %465, %cst_198 [1] : vector<8x8xf32> to vector<8xf32>
    %467 = vector.shape_cast %466 : vector<8xf32> to vector<8x1xf32>
    %468 = tpu.reciprocal %467 {approx = true} : vector<8x1xf32> -> vector<8x1xf32>
    %469 = vector.broadcast %468 : vector<8x1xf32> to vector<8x8xf32>
    %470 = arith.mulf %465, %469 : vector<8x8xf32>
    %471 = arith.truncf %470 : vector<8x8xf32> to vector<8x8xbf16>
    %472 = arith.truncf %457 : vector<8x8xf32> to vector<8x8xbf16>
    %cst_199 = arith.constant dense<0.000000e+00> : vector<8x8xf32>
    %473 = tpu.matmul %471, %472, %cst_199 {dimension_numbers = #tpu.dot_dimension_numbers<[1], [0], [0], [1], [0, 0, 1, 1], [], []>} : vector<8x8xbf16>, vector<8x8xbf16>, vector<8x8xf32> -> vector<8x8xf32>
    %474 = tpu.concatenate %416, %435, %454, %473 in 1 : vector<8x8xf32>, vector<8x8xf32>, vector<8x8xf32>, vector<8x8xf32> -> vector<8x32xf32>
    %475 = tpu.concatenate %395, %474 in 0 : vector<8x32xf32>, vector<8x32xf32> -> vector<16x32xf32>
    %476 = vector.broadcast %32 : vector<1x32xf32> to vector<16x32xf32>
    %477 = arith.addf %292, %476 : vector<16x32xf32>
    %478 = arith.truncf %475 : vector<16x32xf32> to vector<16x32xbf16>
    %cst_200 = arith.constant dense<0.000000e+00> : vector<16x32xf32>
    %479 = tpu.matmul %478, %30, %cst_200 {dimension_numbers = #tpu.dot_dimension_numbers<[1], [0], [0], [1], [0, 0, 1, 1], [], []>} : vector<16x32xbf16>, vector<32x32xbf16>, vector<16x32xf32> -> vector<16x32xf32>
    %480 = arith.addf %477, %479 : vector<16x32xf32>
    %cst_201 = arith.constant dense<0.000000e+00> : vector<16xf32>
    %481 = vector.multi_reduction <add>, %480, %cst_201 [1] : vector<16x32xf32> to vector<16xf32>
    %482 = vector.shape_cast %481 : vector<16xf32> to vector<16x1xf32>
    %cst_202 = arith.constant 3.200000e+01 : f32
    %483 = vector.broadcast %cst_202 : f32 to vector<16x1xf32>
    %484 = arith.divf %482, %483 : vector<16x1xf32>
    %485 = vector.broadcast %484 : vector<16x1xf32> to vector<16x32xf32>
    %486 = arith.subf %480, %485 : vector<16x32xf32>
    %487 = arith.mulf %486, %486 : vector<16x32xf32>
    %cst_203 = arith.constant dense<0.000000e+00> : vector<16xf32>
    %488 = vector.multi_reduction <add>, %487, %cst_203 [1] : vector<16x32xf32> to vector<16xf32>
    %489 = vector.shape_cast %488 : vector<16xf32> to vector<16x1xf32>
    %cst_204 = arith.constant 3.200000e+01 : f32
    %490 = vector.broadcast %cst_204 : f32 to vector<16x1xf32>
    %491 = arith.divf %489, %490 : vector<16x1xf32>
    %492 = vector.broadcast %484 : vector<16x1xf32> to vector<16x32xf32>
    %493 = arith.subf %480, %492 : vector<16x32xf32>
    %cst_205 = arith.constant 9.99999974E-6 : f32
    %494 = vector.broadcast %cst_205 : f32 to vector<16x1xf32>
    %495 = arith.addf %491, %494 : vector<16x1xf32>
    %496 = math.rsqrt %495 : vector<16x1xf32>
    %497 = vector.broadcast %496 : vector<16x1xf32> to vector<16x32xf32>
    %498 = arith.mulf %493, %497 : vector<16x32xf32>
    %499 = vector.broadcast %16 : vector<1x32xf32> to vector<16x32xf32>
    %500 = arith.mulf %498, %499 : vector<16x32xf32>
    %501 = vector.broadcast %18 : vector<1x32xf32> to vector<16x32xf32>
    %502 = arith.addf %500, %501 : vector<16x32xf32>
    %503 = arith.truncf %502 : vector<16x32xf32> to vector<16x32xbf16>
    %cst_206 = arith.constant dense<0.000000e+00> : vector<16x128xf32>
    %504 = tpu.matmul %503, %34, %cst_206 {dimension_numbers = #tpu.dot_dimension_numbers<[1], [0], [0], [1], [0, 0, 1, 1], [], []>} : vector<16x32xbf16>, vector<32x128xbf16>, vector<16x128xf32> -> vector<16x128xf32>
    %505 = vector.broadcast %36 : vector<1x128xf32> to vector<16x128xf32>
    %506 = arith.addf %504, %505 : vector<16x128xf32>
    %cst_207 = arith.constant 5.000000e-01 : f32
    %507 = vector.broadcast %cst_207 : f32 to vector<16x128xf32>
    %508 = arith.mulf %507, %506 : vector<16x128xf32>
    %cst_208 = arith.constant 0.707106769 : f32
    %509 = vector.broadcast %cst_208 : f32 to vector<16x128xf32>
    %510 = arith.mulf %506, %509 : vector<16x128xf32>
    %511 = math.erf %510 : vector<16x128xf32>
    %cst_209 = arith.constant 1.000000e+00 : f32
    %512 = vector.broadcast %cst_209 : f32 to vector<16x128xf32>
    %513 = arith.addf %512, %511 : vector<16x128xf32>
    %514 = arith.mulf %508, %513 : vector<16x128xf32>
    %515 = vector.broadcast %40 : vector<1x32xf32> to vector<16x32xf32>
    %516 = arith.addf %480, %515 : vector<16x32xf32>
    %517 = arith.truncf %514 : vector<16x128xf32> to vector<16x128xbf16>
    %cst_210 = arith.constant dense<0.000000e+00> : vector<16x32xf32>
    %518 = tpu.matmul %517, %38, %cst_210 {dimension_numbers = #tpu.dot_dimension_numbers<[1], [0], [0], [1], [0, 0, 1, 1], [], []>} : vector<16x128xbf16>, vector<128x32xbf16>, vector<16x32xf32> -> vector<16x32xf32>
    %519 = arith.addf %516, %518 : vector<16x32xf32>
    %cst_211 = arith.constant dense<0.000000e+00> : vector<12xf32>
    %520 = vector.multi_reduction <add>, %80, %cst_211 [1] : vector<12x64xf32> to vector<12xf32>
    %521 = vector.shape_cast %520 : vector<12xf32> to vector<12x1xf32>
    %cst_212 = arith.constant 6.400000e+01 : f32
    %522 = vector.broadcast %cst_212 : f32 to vector<12x1xf32>
    %523 = arith.divf %521, %522 : vector<12x1xf32>
    %524 = vector.broadcast %523 : vector<12x1xf32> to vector<12x64xf32>
    %525 = arith.subf %80, %524 : vector<12x64xf32>
    %526 = arith.mulf %525, %525 : vector<12x64xf32>
    %cst_213 = arith.constant dense<0.000000e+00> : vector<12xf32>
    %527 = vector.multi_reduction <add>, %526, %cst_213 [1] : vector<12x64xf32> to vector<12xf32>
    %528 = vector.shape_cast %527 : vector<12xf32> to vector<12x1xf32>
    %cst_214 = arith.constant 6.400000e+01 : f32
    %529 = vector.broadcast %cst_214 : f32 to vector<12x1xf32>
    %530 = arith.divf %528, %529 : vector<12x1xf32>
    %531 = vector.broadcast %523 : vector<12x1xf32> to vector<12x64xf32>
    %532 = arith.subf %80, %531 : vector<12x64xf32>
    %cst_215 = arith.constant 9.99999974E-6 : f32
    %533 = vector.broadcast %cst_215 : f32 to vector<12x1xf32>
    %534 = arith.addf %530, %533 : vector<12x1xf32>
    %535 = math.rsqrt %534 : vector<12x1xf32>
    %536 = vector.broadcast %535 : vector<12x1xf32> to vector<12x64xf32>
    %537 = arith.mulf %532, %536 : vector<12x64xf32>
    %538 = vector.broadcast %42 : vector<1x64xf32> to vector<12x64xf32>
    %539 = arith.mulf %537, %538 : vector<12x64xf32>
    %540 = vector.broadcast %44 : vector<1x64xf32> to vector<12x64xf32>
    %541 = arith.addf %539, %540 : vector<12x64xf32>
    %cst_216 = arith.constant dense<0.000000e+00> : vector<16xf32>
    %542 = vector.multi_reduction <add>, %79, %cst_216 [1] : vector<16x32xf32> to vector<16xf32>
    %543 = vector.shape_cast %542 : vector<16xf32> to vector<16x1xf32>
    %cst_217 = arith.constant 3.200000e+01 : f32
    %544 = vector.broadcast %cst_217 : f32 to vector<16x1xf32>
    %545 = arith.divf %543, %544 : vector<16x1xf32>
    %546 = vector.broadcast %545 : vector<16x1xf32> to vector<16x32xf32>
    %547 = arith.subf %79, %546 : vector<16x32xf32>
    %548 = arith.mulf %547, %547 : vector<16x32xf32>
    %cst_218 = arith.constant dense<0.000000e+00> : vector<16xf32>
    %549 = vector.multi_reduction <add>, %548, %cst_218 [1] : vector<16x32xf32> to vector<16xf32>
    %550 = vector.shape_cast %549 : vector<16xf32> to vector<16x1xf32>
    %cst_219 = arith.constant 3.200000e+01 : f32
    %551 = vector.broadcast %cst_219 : f32 to vector<16x1xf32>
    %552 = arith.divf %550, %551 : vector<16x1xf32>
    %553 = vector.broadcast %545 : vector<16x1xf32> to vector<16x32xf32>
    %554 = arith.subf %79, %553 : vector<16x32xf32>
    %cst_220 = arith.constant 9.99999974E-6 : f32
    %555 = vector.broadcast %cst_220 : f32 to vector<16x1xf32>
    %556 = arith.addf %552, %555 : vector<16x1xf32>
    %557 = math.rsqrt %556 : vector<16x1xf32>
    %558 = vector.broadcast %557 : vector<16x1xf32> to vector<16x32xf32>
    %559 = arith.mulf %554, %558 : vector<16x32xf32>
    %560 = vector.broadcast %46 : vector<1x32xf32> to vector<16x32xf32>
    %561 = arith.mulf %559, %560 : vector<16x32xf32>
    %562 = vector.broadcast %48 : vector<1x32xf32> to vector<16x32xf32>
    %563 = arith.addf %561, %562 : vector<16x32xf32>
    %564 = arith.truncf %541 : vector<12x64xf32> to vector<12x64xbf16>
    %cst_221 = arith.constant dense<0.000000e+00> : vector<12x64xf32>
    %565 = tpu.matmul %564, %58, %cst_221 {dimension_numbers = #tpu.dot_dimension_numbers<[1], [0], [0], [1], [0, 0, 1, 1], [], []>} : vector<12x64xbf16>, vector<64x64xbf16>, vector<12x64xf32> -> vector<12x64xf32>
    %566 = arith.truncf %563 : vector<16x32xf32> to vector<16x32xbf16>
    %cst_222 = arith.constant dense<0.000000e+00> : vector<16x128xf32>
    %567 = tpu.matmul %566, %60, %cst_222 {dimension_numbers = #tpu.dot_dimension_numbers<[1], [0], [0], [1], [0, 0, 1, 1], [], []>} : vector<16x32xbf16>, vector<32x128xbf16>, vector<16x128xf32> -> vector<16x128xf32>
    %568 = vector.extract_strided_slice %565 {offsets = [0, 0], sizes = [6, 64], strides = [1, 1]} : vector<12x64xf32> to vector<6x64xf32>
    %569 = vector.extract_strided_slice %567 {offsets = [0, 0], sizes = [8, 128], strides = [1, 1]} : vector<16x128xf32> to vector<8x128xf32>
    %570 = vector.extract_strided_slice %568 {offsets = [0, 0], sizes = [6, 16], strides = [1, 1]} : vector<6x64xf32> to vector<6x16xf32>
    %571 = vector.extract_strided_slice %569 {offsets = [0, 0], sizes = [8, 16], strides = [1, 1]} : vector<8x128xf32> to vector<8x16xf32>
    %572 = vector.extract_strided_slice %569 {offsets = [0, 64], sizes = [8, 16], strides = [1, 1]} : vector<8x128xf32> to vector<8x16xf32>
    %573 = arith.truncf %570 : vector<6x16xf32> to vector<6x16xbf16>
    %574 = arith.truncf %571 : vector<8x16xf32> to vector<8x16xbf16>
    %cst_223 = arith.constant dense<0.000000e+00> : vector<6x8xf32>
    %575 = tpu.matmul %573, %574, %cst_223 {dimension_numbers = #tpu.dot_dimension_numbers<[1], [1], [0], [0], [0, 0, 1, 0], [], []>} : vector<6x16xbf16>, vector<8x16xbf16>, vector<6x8xf32> -> vector<6x8xf32>
    %cst_224 = arith.constant dense<0xFF800000> : vector<6xf32>
    %576 = vector.multi_reduction <maximumf>, %575, %cst_224 [1] : vector<6x8xf32> to vector<6xf32>
    %577 = vector.shape_cast %576 : vector<6xf32> to vector<6x1xf32>
    %578 = vector.broadcast %577 : vector<6x1xf32> to vector<6x8xf32>
    %579 = arith.subf %575, %578 : vector<6x8xf32>
    %580 = math.exp %579 : vector<6x8xf32>
    %cst_225 = arith.constant dense<0.000000e+00> : vector<6xf32>
    %581 = vector.multi_reduction <add>, %580, %cst_225 [1] : vector<6x8xf32> to vector<6xf32>
    %582 = vector.shape_cast %581 : vector<6xf32> to vector<6x1xf32>
    %583 = tpu.reciprocal %582 {approx = true} : vector<6x1xf32> -> vector<6x1xf32>
    %584 = vector.broadcast %583 : vector<6x1xf32> to vector<6x8xf32>
    %585 = arith.mulf %580, %584 : vector<6x8xf32>
    %586 = arith.truncf %585 : vector<6x8xf32> to vector<6x8xbf16>
    %587 = arith.truncf %572 : vector<8x16xf32> to vector<8x16xbf16>
    %cst_226 = arith.constant dense<0.000000e+00> : vector<6x16xf32>
    %588 = tpu.matmul %586, %587, %cst_226 {dimension_numbers = #tpu.dot_dimension_numbers<[1], [0], [0], [1], [0, 0, 1, 1], [], []>} : vector<6x8xbf16>, vector<8x16xbf16>, vector<6x16xf32> -> vector<6x16xf32>
    %589 = vector.extract_strided_slice %568 {offsets = [0, 16], sizes = [6, 16], strides = [1, 1]} : vector<6x64xf32> to vector<6x16xf32>
    %590 = vector.extract_strided_slice %569 {offsets = [0, 16], sizes = [8, 16], strides = [1, 1]} : vector<8x128xf32> to vector<8x16xf32>
    %591 = vector.extract_strided_slice %569 {offsets = [0, 80], sizes = [8, 16], strides = [1, 1]} : vector<8x128xf32> to vector<8x16xf32>
    %592 = arith.truncf %589 : vector<6x16xf32> to vector<6x16xbf16>
    %593 = arith.truncf %590 : vector<8x16xf32> to vector<8x16xbf16>
    %cst_227 = arith.constant dense<0.000000e+00> : vector<6x8xf32>
    %594 = tpu.matmul %592, %593, %cst_227 {dimension_numbers = #tpu.dot_dimension_numbers<[1], [1], [0], [0], [0, 0, 1, 0], [], []>} : vector<6x16xbf16>, vector<8x16xbf16>, vector<6x8xf32> -> vector<6x8xf32>
    %cst_228 = arith.constant dense<0xFF800000> : vector<6xf32>
    %595 = vector.multi_reduction <maximumf>, %594, %cst_228 [1] : vector<6x8xf32> to vector<6xf32>
    %596 = vector.shape_cast %595 : vector<6xf32> to vector<6x1xf32>
    %597 = vector.broadcast %596 : vector<6x1xf32> to vector<6x8xf32>
    %598 = arith.subf %594, %597 : vector<6x8xf32>
    %599 = math.exp %598 : vector<6x8xf32>
    %cst_229 = arith.constant dense<0.000000e+00> : vector<6xf32>
    %600 = vector.multi_reduction <add>, %599, %cst_229 [1] : vector<6x8xf32> to vector<6xf32>
    %601 = vector.shape_cast %600 : vector<6xf32> to vector<6x1xf32>
    %602 = tpu.reciprocal %601 {approx = true} : vector<6x1xf32> -> vector<6x1xf32>
    %603 = vector.broadcast %602 : vector<6x1xf32> to vector<6x8xf32>
    %604 = arith.mulf %599, %603 : vector<6x8xf32>
    %605 = arith.truncf %604 : vector<6x8xf32> to vector<6x8xbf16>
    %606 = arith.truncf %591 : vector<8x16xf32> to vector<8x16xbf16>
    %cst_230 = arith.constant dense<0.000000e+00> : vector<6x16xf32>
    %607 = tpu.matmul %605, %606, %cst_230 {dimension_numbers = #tpu.dot_dimension_numbers<[1], [0], [0], [1], [0, 0, 1, 1], [], []>} : vector<6x8xbf16>, vector<8x16xbf16>, vector<6x16xf32> -> vector<6x16xf32>
    %608 = vector.extract_strided_slice %568 {offsets = [0, 32], sizes = [6, 16], strides = [1, 1]} : vector<6x64xf32> to vector<6x16xf32>
    %609 = vector.extract_strided_slice %569 {offsets = [0, 32], sizes = [8, 16], strides = [1, 1]} : vector<8x128xf32> to vector<8x16xf32>
    %610 = vector.extract_strided_slice %569 {offsets = [0, 96], sizes = [8, 16], strides = [1, 1]} : vector<8x128xf32> to vector<8x16xf32>
    %611 = arith.truncf %608 : vector<6x16xf32> to vector<6x16xbf16>
    %612 = arith.truncf %609 : vector<8x16xf32> to vector<8x16xbf16>
    %cst_231 = arith.constant dense<0.000000e+00> : vector<6x8xf32>
    %613 = tpu.matmul %611, %612, %cst_231 {dimension_numbers = #tpu.dot_dimension_numbers<[1], [1], [0], [0], [0, 0, 1, 0], [], []>} : vector<6x16xbf16>, vector<8x16xbf16>, vector<6x8xf32> -> vector<6x8xf32>
    %cst_232 = arith.constant dense<0xFF800000> : vector<6xf32>
    %614 = vector.multi_reduction <maximumf>, %613, %cst_232 [1] : vector<6x8xf32> to vector<6xf32>
    %615 = vector.shape_cast %614 : vector<6xf32> to vector<6x1xf32>
    %616 = vector.broadcast %615 : vector<6x1xf32> to vector<6x8xf32>
    %617 = arith.subf %613, %616 : vector<6x8xf32>
    %618 = math.exp %617 : vector<6x8xf32>
    %cst_233 = arith.constant dense<0.000000e+00> : vector<6xf32>
    %619 = vector.multi_reduction <add>, %618, %cst_233 [1] : vector<6x8xf32> to vector<6xf32>
    %620 = vector.shape_cast %619 : vector<6xf32> to vector<6x1xf32>
    %621 = tpu.reciprocal %620 {approx = true} : vector<6x1xf32> -> vector<6x1xf32>
    %622 = vector.broadcast %621 : vector<6x1xf32> to vector<6x8xf32>
    %623 = arith.mulf %618, %622 : vector<6x8xf32>
    %624 = arith.truncf %623 : vector<6x8xf32> to vector<6x8xbf16>
    %625 = arith.truncf %610 : vector<8x16xf32> to vector<8x16xbf16>
    %cst_234 = arith.constant dense<0.000000e+00> : vector<6x16xf32>
    %626 = tpu.matmul %624, %625, %cst_234 {dimension_numbers = #tpu.dot_dimension_numbers<[1], [0], [0], [1], [0, 0, 1, 1], [], []>} : vector<6x8xbf16>, vector<8x16xbf16>, vector<6x16xf32> -> vector<6x16xf32>
    %627 = vector.extract_strided_slice %568 {offsets = [0, 48], sizes = [6, 16], strides = [1, 1]} : vector<6x64xf32> to vector<6x16xf32>
    %628 = vector.extract_strided_slice %569 {offsets = [0, 48], sizes = [8, 16], strides = [1, 1]} : vector<8x128xf32> to vector<8x16xf32>
    %629 = vector.extract_strided_slice %569 {offsets = [0, 112], sizes = [8, 16], strides = [1, 1]} : vector<8x128xf32> to vector<8x16xf32>
    %630 = arith.truncf %627 : vector<6x16xf32> to vector<6x16xbf16>
    %631 = arith.truncf %628 : vector<8x16xf32> to vector<8x16xbf16>
    %cst_235 = arith.constant dense<0.000000e+00> : vector<6x8xf32>
    %632 = tpu.matmul %630, %631, %cst_235 {dimension_numbers = #tpu.dot_dimension_numbers<[1], [1], [0], [0], [0, 0, 1, 0], [], []>} : vector<6x16xbf16>, vector<8x16xbf16>, vector<6x8xf32> -> vector<6x8xf32>
    %cst_236 = arith.constant dense<0xFF800000> : vector<6xf32>
    %633 = vector.multi_reduction <maximumf>, %632, %cst_236 [1] : vector<6x8xf32> to vector<6xf32>
    %634 = vector.shape_cast %633 : vector<6xf32> to vector<6x1xf32>
    %635 = vector.broadcast %634 : vector<6x1xf32> to vector<6x8xf32>
    %636 = arith.subf %632, %635 : vector<6x8xf32>
    %637 = math.exp %636 : vector<6x8xf32>
    %cst_237 = arith.constant dense<0.000000e+00> : vector<6xf32>
    %638 = vector.multi_reduction <add>, %637, %cst_237 [1] : vector<6x8xf32> to vector<6xf32>
    %639 = vector.shape_cast %638 : vector<6xf32> to vector<6x1xf32>
    %640 = tpu.reciprocal %639 {approx = true} : vector<6x1xf32> -> vector<6x1xf32>
    %641 = vector.broadcast %640 : vector<6x1xf32> to vector<6x8xf32>
    %642 = arith.mulf %637, %641 : vector<6x8xf32>
    %643 = arith.truncf %642 : vector<6x8xf32> to vector<6x8xbf16>
    %644 = arith.truncf %629 : vector<8x16xf32> to vector<8x16xbf16>
    %cst_238 = arith.constant dense<0.000000e+00> : vector<6x16xf32>
    %645 = tpu.matmul %643, %644, %cst_238 {dimension_numbers = #tpu.dot_dimension_numbers<[1], [0], [0], [1], [0, 0, 1, 1], [], []>} : vector<6x8xbf16>, vector<8x16xbf16>, vector<6x16xf32> -> vector<6x16xf32>
    %646 = tpu.concatenate %588, %607, %626, %645 in 1 : vector<6x16xf32>, vector<6x16xf32>, vector<6x16xf32>, vector<6x16xf32> -> vector<6x64xf32>
    %647 = vector.extract_strided_slice %565 {offsets = [6, 0], sizes = [6, 64], strides = [1, 1]} : vector<12x64xf32> to vector<6x64xf32>
    %648 = vector.extract_strided_slice %567 {offsets = [8, 0], sizes = [8, 128], strides = [1, 1]} : vector<16x128xf32> to vector<8x128xf32>
    %649 = vector.extract_strided_slice %647 {offsets = [0, 0], sizes = [6, 16], strides = [1, 1]} : vector<6x64xf32> to vector<6x16xf32>
    %650 = vector.extract_strided_slice %648 {offsets = [0, 0], sizes = [8, 16], strides = [1, 1]} : vector<8x128xf32> to vector<8x16xf32>
    %651 = vector.extract_strided_slice %648 {offsets = [0, 64], sizes = [8, 16], strides = [1, 1]} : vector<8x128xf32> to vector<8x16xf32>
    %652 = arith.truncf %649 : vector<6x16xf32> to vector<6x16xbf16>
    %653 = arith.truncf %650 : vector<8x16xf32> to vector<8x16xbf16>
    %cst_239 = arith.constant dense<0.000000e+00> : vector<6x8xf32>
    %654 = tpu.matmul %652, %653, %cst_239 {dimension_numbers = #tpu.dot_dimension_numbers<[1], [1], [0], [0], [0, 0, 1, 0], [], []>} : vector<6x16xbf16>, vector<8x16xbf16>, vector<6x8xf32> -> vector<6x8xf32>
    %cst_240 = arith.constant dense<0xFF800000> : vector<6xf32>
    %655 = vector.multi_reduction <maximumf>, %654, %cst_240 [1] : vector<6x8xf32> to vector<6xf32>
    %656 = vector.shape_cast %655 : vector<6xf32> to vector<6x1xf32>
    %657 = vector.broadcast %656 : vector<6x1xf32> to vector<6x8xf32>
    %658 = arith.subf %654, %657 : vector<6x8xf32>
    %659 = math.exp %658 : vector<6x8xf32>
    %cst_241 = arith.constant dense<0.000000e+00> : vector<6xf32>
    %660 = vector.multi_reduction <add>, %659, %cst_241 [1] : vector<6x8xf32> to vector<6xf32>
    %661 = vector.shape_cast %660 : vector<6xf32> to vector<6x1xf32>
    %662 = tpu.reciprocal %661 {approx = true} : vector<6x1xf32> -> vector<6x1xf32>
    %663 = vector.broadcast %662 : vector<6x1xf32> to vector<6x8xf32>
    %664 = arith.mulf %659, %663 : vector<6x8xf32>
    %665 = arith.truncf %664 : vector<6x8xf32> to vector<6x8xbf16>
    %666 = arith.truncf %651 : vector<8x16xf32> to vector<8x16xbf16>
    %cst_242 = arith.constant dense<0.000000e+00> : vector<6x16xf32>
    %667 = tpu.matmul %665, %666, %cst_242 {dimension_numbers = #tpu.dot_dimension_numbers<[1], [0], [0], [1], [0, 0, 1, 1], [], []>} : vector<6x8xbf16>, vector<8x16xbf16>, vector<6x16xf32> -> vector<6x16xf32>
    %668 = vector.extract_strided_slice %647 {offsets = [0, 16], sizes = [6, 16], strides = [1, 1]} : vector<6x64xf32> to vector<6x16xf32>
    %669 = vector.extract_strided_slice %648 {offsets = [0, 16], sizes = [8, 16], strides = [1, 1]} : vector<8x128xf32> to vector<8x16xf32>
    %670 = vector.extract_strided_slice %648 {offsets = [0, 80], sizes = [8, 16], strides = [1, 1]} : vector<8x128xf32> to vector<8x16xf32>
    %671 = arith.truncf %668 : vector<6x16xf32> to vector<6x16xbf16>
    %672 = arith.truncf %669 : vector<8x16xf32> to vector<8x16xbf16>
    %cst_243 = arith.constant dense<0.000000e+00> : vector<6x8xf32>
    %673 = tpu.matmul %671, %672, %cst_243 {dimension_numbers = #tpu.dot_dimension_numbers<[1], [1], [0], [0], [0, 0, 1, 0], [], []>} : vector<6x16xbf16>, vector<8x16xbf16>, vector<6x8xf32> -> vector<6x8xf32>
    %cst_244 = arith.constant dense<0xFF800000> : vector<6xf32>
    %674 = vector.multi_reduction <maximumf>, %673, %cst_244 [1] : vector<6x8xf32> to vector<6xf32>
    %675 = vector.shape_cast %674 : vector<6xf32> to vector<6x1xf32>
    %676 = vector.broadcast %675 : vector<6x1xf32> to vector<6x8xf32>
    %677 = arith.subf %673, %676 : vector<6x8xf32>
    %678 = math.exp %677 : vector<6x8xf32>
    %cst_245 = arith.constant dense<0.000000e+00> : vector<6xf32>
    %679 = vector.multi_reduction <add>, %678, %cst_245 [1] : vector<6x8xf32> to vector<6xf32>
    %680 = vector.shape_cast %679 : vector<6xf32> to vector<6x1xf32>
    %681 = tpu.reciprocal %680 {approx = true} : vector<6x1xf32> -> vector<6x1xf32>
    %682 = vector.broadcast %681 : vector<6x1xf32> to vector<6x8xf32>
    %683 = arith.mulf %678, %682 : vector<6x8xf32>
    %684 = arith.truncf %683 : vector<6x8xf32> to vector<6x8xbf16>
    %685 = arith.truncf %670 : vector<8x16xf32> to vector<8x16xbf16>
    %cst_246 = arith.constant dense<0.000000e+00> : vector<6x16xf32>
    %686 = tpu.matmul %684, %685, %cst_246 {dimension_numbers = #tpu.dot_dimension_numbers<[1], [0], [0], [1], [0, 0, 1, 1], [], []>} : vector<6x8xbf16>, vector<8x16xbf16>, vector<6x16xf32> -> vector<6x16xf32>
    %687 = vector.extract_strided_slice %647 {offsets = [0, 32], sizes = [6, 16], strides = [1, 1]} : vector<6x64xf32> to vector<6x16xf32>
    %688 = vector.extract_strided_slice %648 {offsets = [0, 32], sizes = [8, 16], strides = [1, 1]} : vector<8x128xf32> to vector<8x16xf32>
    %689 = vector.extract_strided_slice %648 {offsets = [0, 96], sizes = [8, 16], strides = [1, 1]} : vector<8x128xf32> to vector<8x16xf32>
    %690 = arith.truncf %687 : vector<6x16xf32> to vector<6x16xbf16>
    %691 = arith.truncf %688 : vector<8x16xf32> to vector<8x16xbf16>
    %cst_247 = arith.constant dense<0.000000e+00> : vector<6x8xf32>
    %692 = tpu.matmul %690, %691, %cst_247 {dimension_numbers = #tpu.dot_dimension_numbers<[1], [1], [0], [0], [0, 0, 1, 0], [], []>} : vector<6x16xbf16>, vector<8x16xbf16>, vector<6x8xf32> -> vector<6x8xf32>
    %cst_248 = arith.constant dense<0xFF800000> : vector<6xf32>
    %693 = vector.multi_reduction <maximumf>, %692, %cst_248 [1] : vector<6x8xf32> to vector<6xf32>
    %694 = vector.shape_cast %693 : vector<6xf32> to vector<6x1xf32>
    %695 = vector.broadcast %694 : vector<6x1xf32> to vector<6x8xf32>
    %696 = arith.subf %692, %695 : vector<6x8xf32>
    %697 = math.exp %696 : vector<6x8xf32>
    %cst_249 = arith.constant dense<0.000000e+00> : vector<6xf32>
    %698 = vector.multi_reduction <add>, %697, %cst_249 [1] : vector<6x8xf32> to vector<6xf32>
    %699 = vector.shape_cast %698 : vector<6xf32> to vector<6x1xf32>
    %700 = tpu.reciprocal %699 {approx = true} : vector<6x1xf32> -> vector<6x1xf32>
    %701 = vector.broadcast %700 : vector<6x1xf32> to vector<6x8xf32>
    %702 = arith.mulf %697, %701 : vector<6x8xf32>
    %703 = arith.truncf %702 : vector<6x8xf32> to vector<6x8xbf16>
    %704 = arith.truncf %689 : vector<8x16xf32> to vector<8x16xbf16>
    %cst_250 = arith.constant dense<0.000000e+00> : vector<6x16xf32>
    %705 = tpu.matmul %703, %704, %cst_250 {dimension_numbers = #tpu.dot_dimension_numbers<[1], [0], [0], [1], [0, 0, 1, 1], [], []>} : vector<6x8xbf16>, vector<8x16xbf16>, vector<6x16xf32> -> vector<6x16xf32>
    %706 = vector.extract_strided_slice %647 {offsets = [0, 48], sizes = [6, 16], strides = [1, 1]} : vector<6x64xf32> to vector<6x16xf32>
    %707 = vector.extract_strided_slice %648 {offsets = [0, 48], sizes = [8, 16], strides = [1, 1]} : vector<8x128xf32> to vector<8x16xf32>
    %708 = vector.extract_strided_slice %648 {offsets = [0, 112], sizes = [8, 16], strides = [1, 1]} : vector<8x128xf32> to vector<8x16xf32>
    %709 = arith.truncf %706 : vector<6x16xf32> to vector<6x16xbf16>
    %710 = arith.truncf %707 : vector<8x16xf32> to vector<8x16xbf16>
    %cst_251 = arith.constant dense<0.000000e+00> : vector<6x8xf32>
    %711 = tpu.matmul %709, %710, %cst_251 {dimension_numbers = #tpu.dot_dimension_numbers<[1], [1], [0], [0], [0, 0, 1, 0], [], []>} : vector<6x16xbf16>, vector<8x16xbf16>, vector<6x8xf32> -> vector<6x8xf32>
    %cst_252 = arith.constant dense<0xFF800000> : vector<6xf32>
    %712 = vector.multi_reduction <maximumf>, %711, %cst_252 [1] : vector<6x8xf32> to vector<6xf32>
    %713 = vector.shape_cast %712 : vector<6xf32> to vector<6x1xf32>
    %714 = vector.broadcast %713 : vector<6x1xf32> to vector<6x8xf32>
    %715 = arith.subf %711, %714 : vector<6x8xf32>
    %716 = math.exp %715 : vector<6x8xf32>
    %cst_253 = arith.constant dense<0.000000e+00> : vector<6xf32>
    %717 = vector.multi_reduction <add>, %716, %cst_253 [1] : vector<6x8xf32> to vector<6xf32>
    %718 = vector.shape_cast %717 : vector<6xf32> to vector<6x1xf32>
    %719 = tpu.reciprocal %718 {approx = true} : vector<6x1xf32> -> vector<6x1xf32>
    %720 = vector.broadcast %719 : vector<6x1xf32> to vector<6x8xf32>
    %721 = arith.mulf %716, %720 : vector<6x8xf32>
    %722 = arith.truncf %721 : vector<6x8xf32> to vector<6x8xbf16>
    %723 = arith.truncf %708 : vector<8x16xf32> to vector<8x16xbf16>
    %cst_254 = arith.constant dense<0.000000e+00> : vector<6x16xf32>
    %724 = tpu.matmul %722, %723, %cst_254 {dimension_numbers = #tpu.dot_dimension_numbers<[1], [0], [0], [1], [0, 0, 1, 1], [], []>} : vector<6x8xbf16>, vector<8x16xbf16>, vector<6x16xf32> -> vector<6x16xf32>
    %725 = tpu.concatenate %667, %686, %705, %724 in 1 : vector<6x16xf32>, vector<6x16xf32>, vector<6x16xf32>, vector<6x16xf32> -> vector<6x64xf32>
    %726 = tpu.concatenate %646, %725 in 0 : vector<6x64xf32>, vector<6x64xf32> -> vector<12x64xf32>
    %727 = vector.broadcast %64 : vector<1x64xf32> to vector<12x64xf32>
    %728 = arith.addf %80, %727 : vector<12x64xf32>
    %729 = arith.truncf %726 : vector<12x64xf32> to vector<12x64xbf16>
    %cst_255 = arith.constant dense<0.000000e+00> : vector<12x64xf32>
    %730 = tpu.matmul %729, %62, %cst_255 {dimension_numbers = #tpu.dot_dimension_numbers<[1], [0], [0], [1], [0, 0, 1, 1], [], []>} : vector<12x64xbf16>, vector<64x64xbf16>, vector<12x64xf32> -> vector<12x64xf32>
    %731 = arith.addf %728, %730 : vector<12x64xf32>
    %cst_256 = arith.constant dense<0.000000e+00> : vector<12xf32>
    %732 = vector.multi_reduction <add>, %731, %cst_256 [1] : vector<12x64xf32> to vector<12xf32>
    %733 = vector.shape_cast %732 : vector<12xf32> to vector<12x1xf32>
    %cst_257 = arith.constant 6.400000e+01 : f32
    %734 = vector.broadcast %cst_257 : f32 to vector<12x1xf32>
    %735 = arith.divf %733, %734 : vector<12x1xf32>
    %736 = vector.broadcast %735 : vector<12x1xf32> to vector<12x64xf32>
    %737 = arith.subf %731, %736 : vector<12x64xf32>
    %738 = arith.mulf %737, %737 : vector<12x64xf32>
    %cst_258 = arith.constant dense<0.000000e+00> : vector<12xf32>
    %739 = vector.multi_reduction <add>, %738, %cst_258 [1] : vector<12x64xf32> to vector<12xf32>
    %740 = vector.shape_cast %739 : vector<12xf32> to vector<12x1xf32>
    %cst_259 = arith.constant 6.400000e+01 : f32
    %741 = vector.broadcast %cst_259 : f32 to vector<12x1xf32>
    %742 = arith.divf %740, %741 : vector<12x1xf32>
    %743 = vector.broadcast %735 : vector<12x1xf32> to vector<12x64xf32>
    %744 = arith.subf %731, %743 : vector<12x64xf32>
    %cst_260 = arith.constant 9.99999974E-6 : f32
    %745 = vector.broadcast %cst_260 : f32 to vector<12x1xf32>
    %746 = arith.addf %742, %745 : vector<12x1xf32>
    %747 = math.rsqrt %746 : vector<12x1xf32>
    %748 = vector.broadcast %747 : vector<12x1xf32> to vector<12x64xf32>
    %749 = arith.mulf %744, %748 : vector<12x64xf32>
    %750 = vector.broadcast %50 : vector<1x64xf32> to vector<12x64xf32>
    %751 = arith.mulf %749, %750 : vector<12x64xf32>
    %752 = vector.broadcast %52 : vector<1x64xf32> to vector<12x64xf32>
    %753 = arith.addf %751, %752 : vector<12x64xf32>
    %754 = arith.truncf %753 : vector<12x64xf32> to vector<12x64xbf16>
    %cst_261 = arith.constant dense<0.000000e+00> : vector<12x192xf32>
    %755 = tpu.matmul %754, %66, %cst_261 {dimension_numbers = #tpu.dot_dimension_numbers<[1], [0], [0], [1], [0, 0, 1, 1], [], []>} : vector<12x64xbf16>, vector<64x192xbf16>, vector<12x192xf32> -> vector<12x192xf32>
    %756 = vector.extract_strided_slice %755 {offsets = [0, 0], sizes = [6, 192], strides = [1, 1]} : vector<12x192xf32> to vector<6x192xf32>
    %757 = vector.extract_strided_slice %755 {offsets = [0, 0], sizes = [6, 192], strides = [1, 1]} : vector<12x192xf32> to vector<6x192xf32>
    %758 = vector.extract_strided_slice %756 {offsets = [0, 0], sizes = [6, 16], strides = [1, 1]} : vector<6x192xf32> to vector<6x16xf32>
    %759 = vector.extract_strided_slice %757 {offsets = [0, 64], sizes = [6, 16], strides = [1, 1]} : vector<6x192xf32> to vector<6x16xf32>
    %760 = vector.extract_strided_slice %757 {offsets = [0, 128], sizes = [6, 16], strides = [1, 1]} : vector<6x192xf32> to vector<6x16xf32>
    %761 = arith.truncf %758 : vector<6x16xf32> to vector<6x16xbf16>
    %762 = arith.truncf %759 : vector<6x16xf32> to vector<6x16xbf16>
    %cst_262 = arith.constant dense<0.000000e+00> : vector<6x6xf32>
    %763 = tpu.matmul %761, %762, %cst_262 {dimension_numbers = #tpu.dot_dimension_numbers<[1], [1], [0], [0], [0, 0, 1, 0], [], []>} : vector<6x16xbf16>, vector<6x16xbf16>, vector<6x6xf32> -> vector<6x6xf32>
    %cst_263 = arith.constant dense<0xFF800000> : vector<6xf32>
    %764 = vector.multi_reduction <maximumf>, %763, %cst_263 [1] : vector<6x6xf32> to vector<6xf32>
    %765 = vector.shape_cast %764 : vector<6xf32> to vector<6x1xf32>
    %766 = vector.broadcast %765 : vector<6x1xf32> to vector<6x6xf32>
    %767 = arith.subf %763, %766 : vector<6x6xf32>
    %768 = math.exp %767 : vector<6x6xf32>
    %cst_264 = arith.constant dense<0.000000e+00> : vector<6xf32>
    %769 = vector.multi_reduction <add>, %768, %cst_264 [1] : vector<6x6xf32> to vector<6xf32>
    %770 = vector.shape_cast %769 : vector<6xf32> to vector<6x1xf32>
    %771 = tpu.reciprocal %770 {approx = true} : vector<6x1xf32> -> vector<6x1xf32>
    %772 = vector.broadcast %771 : vector<6x1xf32> to vector<6x6xf32>
    %773 = arith.mulf %768, %772 : vector<6x6xf32>
    %774 = arith.truncf %773 : vector<6x6xf32> to vector<6x6xbf16>
    %775 = arith.truncf %760 : vector<6x16xf32> to vector<6x16xbf16>
    %cst_265 = arith.constant dense<0.000000e+00> : vector<6x16xf32>
    %776 = tpu.matmul %774, %775, %cst_265 {dimension_numbers = #tpu.dot_dimension_numbers<[1], [0], [0], [1], [0, 0, 1, 1], [], []>} : vector<6x6xbf16>, vector<6x16xbf16>, vector<6x16xf32> -> vector<6x16xf32>
    %777 = vector.extract_strided_slice %756 {offsets = [0, 16], sizes = [6, 16], strides = [1, 1]} : vector<6x192xf32> to vector<6x16xf32>
    %778 = vector.extract_strided_slice %757 {offsets = [0, 80], sizes = [6, 16], strides = [1, 1]} : vector<6x192xf32> to vector<6x16xf32>
    %779 = vector.extract_strided_slice %757 {offsets = [0, 144], sizes = [6, 16], strides = [1, 1]} : vector<6x192xf32> to vector<6x16xf32>
    %780 = arith.truncf %777 : vector<6x16xf32> to vector<6x16xbf16>
    %781 = arith.truncf %778 : vector<6x16xf32> to vector<6x16xbf16>
    %cst_266 = arith.constant dense<0.000000e+00> : vector<6x6xf32>
    %782 = tpu.matmul %780, %781, %cst_266 {dimension_numbers = #tpu.dot_dimension_numbers<[1], [1], [0], [0], [0, 0, 1, 0], [], []>} : vector<6x16xbf16>, vector<6x16xbf16>, vector<6x6xf32> -> vector<6x6xf32>
    %cst_267 = arith.constant dense<0xFF800000> : vector<6xf32>
    %783 = vector.multi_reduction <maximumf>, %782, %cst_267 [1] : vector<6x6xf32> to vector<6xf32>
    %784 = vector.shape_cast %783 : vector<6xf32> to vector<6x1xf32>
    %785 = vector.broadcast %784 : vector<6x1xf32> to vector<6x6xf32>
    %786 = arith.subf %782, %785 : vector<6x6xf32>
    %787 = math.exp %786 : vector<6x6xf32>
    %cst_268 = arith.constant dense<0.000000e+00> : vector<6xf32>
    %788 = vector.multi_reduction <add>, %787, %cst_268 [1] : vector<6x6xf32> to vector<6xf32>
    %789 = vector.shape_cast %788 : vector<6xf32> to vector<6x1xf32>
    %790 = tpu.reciprocal %789 {approx = true} : vector<6x1xf32> -> vector<6x1xf32>
    %791 = vector.broadcast %790 : vector<6x1xf32> to vector<6x6xf32>
    %792 = arith.mulf %787, %791 : vector<6x6xf32>
    %793 = arith.truncf %792 : vector<6x6xf32> to vector<6x6xbf16>
    %794 = arith.truncf %779 : vector<6x16xf32> to vector<6x16xbf16>
    %cst_269 = arith.constant dense<0.000000e+00> : vector<6x16xf32>
    %795 = tpu.matmul %793, %794, %cst_269 {dimension_numbers = #tpu.dot_dimension_numbers<[1], [0], [0], [1], [0, 0, 1, 1], [], []>} : vector<6x6xbf16>, vector<6x16xbf16>, vector<6x16xf32> -> vector<6x16xf32>
    %796 = vector.extract_strided_slice %756 {offsets = [0, 32], sizes = [6, 16], strides = [1, 1]} : vector<6x192xf32> to vector<6x16xf32>
    %797 = vector.extract_strided_slice %757 {offsets = [0, 96], sizes = [6, 16], strides = [1, 1]} : vector<6x192xf32> to vector<6x16xf32>
    %798 = vector.extract_strided_slice %757 {offsets = [0, 160], sizes = [6, 16], strides = [1, 1]} : vector<6x192xf32> to vector<6x16xf32>
    %799 = arith.truncf %796 : vector<6x16xf32> to vector<6x16xbf16>
    %800 = arith.truncf %797 : vector<6x16xf32> to vector<6x16xbf16>
    %cst_270 = arith.constant dense<0.000000e+00> : vector<6x6xf32>
    %801 = tpu.matmul %799, %800, %cst_270 {dimension_numbers = #tpu.dot_dimension_numbers<[1], [1], [0], [0], [0, 0, 1, 0], [], []>} : vector<6x16xbf16>, vector<6x16xbf16>, vector<6x6xf32> -> vector<6x6xf32>
    %cst_271 = arith.constant dense<0xFF800000> : vector<6xf32>
    %802 = vector.multi_reduction <maximumf>, %801, %cst_271 [1] : vector<6x6xf32> to vector<6xf32>
    %803 = vector.shape_cast %802 : vector<6xf32> to vector<6x1xf32>
    %804 = vector.broadcast %803 : vector<6x1xf32> to vector<6x6xf32>
    %805 = arith.subf %801, %804 : vector<6x6xf32>
    %806 = math.exp %805 : vector<6x6xf32>
    %cst_272 = arith.constant dense<0.000000e+00> : vector<6xf32>
    %807 = vector.multi_reduction <add>, %806, %cst_272 [1] : vector<6x6xf32> to vector<6xf32>
    %808 = vector.shape_cast %807 : vector<6xf32> to vector<6x1xf32>
    %809 = tpu.reciprocal %808 {approx = true} : vector<6x1xf32> -> vector<6x1xf32>
    %810 = vector.broadcast %809 : vector<6x1xf32> to vector<6x6xf32>
    %811 = arith.mulf %806, %810 : vector<6x6xf32>
    %812 = arith.truncf %811 : vector<6x6xf32> to vector<6x6xbf16>
    %813 = arith.truncf %798 : vector<6x16xf32> to vector<6x16xbf16>
    %cst_273 = arith.constant dense<0.000000e+00> : vector<6x16xf32>
    %814 = tpu.matmul %812, %813, %cst_273 {dimension_numbers = #tpu.dot_dimension_numbers<[1], [0], [0], [1], [0, 0, 1, 1], [], []>} : vector<6x6xbf16>, vector<6x16xbf16>, vector<6x16xf32> -> vector<6x16xf32>
    %815 = vector.extract_strided_slice %756 {offsets = [0, 48], sizes = [6, 16], strides = [1, 1]} : vector<6x192xf32> to vector<6x16xf32>
    %816 = vector.extract_strided_slice %757 {offsets = [0, 112], sizes = [6, 16], strides = [1, 1]} : vector<6x192xf32> to vector<6x16xf32>
    %817 = vector.extract_strided_slice %757 {offsets = [0, 176], sizes = [6, 16], strides = [1, 1]} : vector<6x192xf32> to vector<6x16xf32>
    %818 = arith.truncf %815 : vector<6x16xf32> to vector<6x16xbf16>
    %819 = arith.truncf %816 : vector<6x16xf32> to vector<6x16xbf16>
    %cst_274 = arith.constant dense<0.000000e+00> : vector<6x6xf32>
    %820 = tpu.matmul %818, %819, %cst_274 {dimension_numbers = #tpu.dot_dimension_numbers<[1], [1], [0], [0], [0, 0, 1, 0], [], []>} : vector<6x16xbf16>, vector<6x16xbf16>, vector<6x6xf32> -> vector<6x6xf32>
    %cst_275 = arith.constant dense<0xFF800000> : vector<6xf32>
    %821 = vector.multi_reduction <maximumf>, %820, %cst_275 [1] : vector<6x6xf32> to vector<6xf32>
    %822 = vector.shape_cast %821 : vector<6xf32> to vector<6x1xf32>
    %823 = vector.broadcast %822 : vector<6x1xf32> to vector<6x6xf32>
    %824 = arith.subf %820, %823 : vector<6x6xf32>
    %825 = math.exp %824 : vector<6x6xf32>
    %cst_276 = arith.constant dense<0.000000e+00> : vector<6xf32>
    %826 = vector.multi_reduction <add>, %825, %cst_276 [1] : vector<6x6xf32> to vector<6xf32>
    %827 = vector.shape_cast %826 : vector<6xf32> to vector<6x1xf32>
    %828 = tpu.reciprocal %827 {approx = true} : vector<6x1xf32> -> vector<6x1xf32>
    %829 = vector.broadcast %828 : vector<6x1xf32> to vector<6x6xf32>
    %830 = arith.mulf %825, %829 : vector<6x6xf32>
    %831 = arith.truncf %830 : vector<6x6xf32> to vector<6x6xbf16>
    %832 = arith.truncf %817 : vector<6x16xf32> to vector<6x16xbf16>
    %cst_277 = arith.constant dense<0.000000e+00> : vector<6x16xf32>
    %833 = tpu.matmul %831, %832, %cst_277 {dimension_numbers = #tpu.dot_dimension_numbers<[1], [0], [0], [1], [0, 0, 1, 1], [], []>} : vector<6x6xbf16>, vector<6x16xbf16>, vector<6x16xf32> -> vector<6x16xf32>
    %834 = tpu.concatenate %776, %795, %814, %833 in 1 : vector<6x16xf32>, vector<6x16xf32>, vector<6x16xf32>, vector<6x16xf32> -> vector<6x64xf32>
    %835 = vector.extract_strided_slice %755 {offsets = [6, 0], sizes = [6, 192], strides = [1, 1]} : vector<12x192xf32> to vector<6x192xf32>
    %836 = vector.extract_strided_slice %755 {offsets = [6, 0], sizes = [6, 192], strides = [1, 1]} : vector<12x192xf32> to vector<6x192xf32>
    %837 = vector.extract_strided_slice %835 {offsets = [0, 0], sizes = [6, 16], strides = [1, 1]} : vector<6x192xf32> to vector<6x16xf32>
    %838 = vector.extract_strided_slice %836 {offsets = [0, 64], sizes = [6, 16], strides = [1, 1]} : vector<6x192xf32> to vector<6x16xf32>
    %839 = vector.extract_strided_slice %836 {offsets = [0, 128], sizes = [6, 16], strides = [1, 1]} : vector<6x192xf32> to vector<6x16xf32>
    %840 = arith.truncf %837 : vector<6x16xf32> to vector<6x16xbf16>
    %841 = arith.truncf %838 : vector<6x16xf32> to vector<6x16xbf16>
    %cst_278 = arith.constant dense<0.000000e+00> : vector<6x6xf32>
    %842 = tpu.matmul %840, %841, %cst_278 {dimension_numbers = #tpu.dot_dimension_numbers<[1], [1], [0], [0], [0, 0, 1, 0], [], []>} : vector<6x16xbf16>, vector<6x16xbf16>, vector<6x6xf32> -> vector<6x6xf32>
    %cst_279 = arith.constant dense<0xFF800000> : vector<6xf32>
    %843 = vector.multi_reduction <maximumf>, %842, %cst_279 [1] : vector<6x6xf32> to vector<6xf32>
    %844 = vector.shape_cast %843 : vector<6xf32> to vector<6x1xf32>
    %845 = vector.broadcast %844 : vector<6x1xf32> to vector<6x6xf32>
    %846 = arith.subf %842, %845 : vector<6x6xf32>
    %847 = math.exp %846 : vector<6x6xf32>
    %cst_280 = arith.constant dense<0.000000e+00> : vector<6xf32>
    %848 = vector.multi_reduction <add>, %847, %cst_280 [1] : vector<6x6xf32> to vector<6xf32>
    %849 = vector.shape_cast %848 : vector<6xf32> to vector<6x1xf32>
    %850 = tpu.reciprocal %849 {approx = true} : vector<6x1xf32> -> vector<6x1xf32>
    %851 = vector.broadcast %850 : vector<6x1xf32> to vector<6x6xf32>
    %852 = arith.mulf %847, %851 : vector<6x6xf32>
    %853 = arith.truncf %852 : vector<6x6xf32> to vector<6x6xbf16>
    %854 = arith.truncf %839 : vector<6x16xf32> to vector<6x16xbf16>
    %cst_281 = arith.constant dense<0.000000e+00> : vector<6x16xf32>
    %855 = tpu.matmul %853, %854, %cst_281 {dimension_numbers = #tpu.dot_dimension_numbers<[1], [0], [0], [1], [0, 0, 1, 1], [], []>} : vector<6x6xbf16>, vector<6x16xbf16>, vector<6x16xf32> -> vector<6x16xf32>
    %856 = vector.extract_strided_slice %835 {offsets = [0, 16], sizes = [6, 16], strides = [1, 1]} : vector<6x192xf32> to vector<6x16xf32>
    %857 = vector.extract_strided_slice %836 {offsets = [0, 80], sizes = [6, 16], strides = [1, 1]} : vector<6x192xf32> to vector<6x16xf32>
    %858 = vector.extract_strided_slice %836 {offsets = [0, 144], sizes = [6, 16], strides = [1, 1]} : vector<6x192xf32> to vector<6x16xf32>
    %859 = arith.truncf %856 : vector<6x16xf32> to vector<6x16xbf16>
    %860 = arith.truncf %857 : vector<6x16xf32> to vector<6x16xbf16>
    %cst_282 = arith.constant dense<0.000000e+00> : vector<6x6xf32>
    %861 = tpu.matmul %859, %860, %cst_282 {dimension_numbers = #tpu.dot_dimension_numbers<[1], [1], [0], [0], [0, 0, 1, 0], [], []>} : vector<6x16xbf16>, vector<6x16xbf16>, vector<6x6xf32> -> vector<6x6xf32>
    %cst_283 = arith.constant dense<0xFF800000> : vector<6xf32>
    %862 = vector.multi_reduction <maximumf>, %861, %cst_283 [1] : vector<6x6xf32> to vector<6xf32>
    %863 = vector.shape_cast %862 : vector<6xf32> to vector<6x1xf32>
    %864 = vector.broadcast %863 : vector<6x1xf32> to vector<6x6xf32>
    %865 = arith.subf %861, %864 : vector<6x6xf32>
    %866 = math.exp %865 : vector<6x6xf32>
    %cst_284 = arith.constant dense<0.000000e+00> : vector<6xf32>
    %867 = vector.multi_reduction <add>, %866, %cst_284 [1] : vector<6x6xf32> to vector<6xf32>
    %868 = vector.shape_cast %867 : vector<6xf32> to vector<6x1xf32>
    %869 = tpu.reciprocal %868 {approx = true} : vector<6x1xf32> -> vector<6x1xf32>
    %870 = vector.broadcast %869 : vector<6x1xf32> to vector<6x6xf32>
    %871 = arith.mulf %866, %870 : vector<6x6xf32>
    %872 = arith.truncf %871 : vector<6x6xf32> to vector<6x6xbf16>
    %873 = arith.truncf %858 : vector<6x16xf32> to vector<6x16xbf16>
    %cst_285 = arith.constant dense<0.000000e+00> : vector<6x16xf32>
    %874 = tpu.matmul %872, %873, %cst_285 {dimension_numbers = #tpu.dot_dimension_numbers<[1], [0], [0], [1], [0, 0, 1, 1], [], []>} : vector<6x6xbf16>, vector<6x16xbf16>, vector<6x16xf32> -> vector<6x16xf32>
    %875 = vector.extract_strided_slice %835 {offsets = [0, 32], sizes = [6, 16], strides = [1, 1]} : vector<6x192xf32> to vector<6x16xf32>
    %876 = vector.extract_strided_slice %836 {offsets = [0, 96], sizes = [6, 16], strides = [1, 1]} : vector<6x192xf32> to vector<6x16xf32>
    %877 = vector.extract_strided_slice %836 {offsets = [0, 160], sizes = [6, 16], strides = [1, 1]} : vector<6x192xf32> to vector<6x16xf32>
    %878 = arith.truncf %875 : vector<6x16xf32> to vector<6x16xbf16>
    %879 = arith.truncf %876 : vector<6x16xf32> to vector<6x16xbf16>
    %cst_286 = arith.constant dense<0.000000e+00> : vector<6x6xf32>
    %880 = tpu.matmul %878, %879, %cst_286 {dimension_numbers = #tpu.dot_dimension_numbers<[1], [1], [0], [0], [0, 0, 1, 0], [], []>} : vector<6x16xbf16>, vector<6x16xbf16>, vector<6x6xf32> -> vector<6x6xf32>
    %cst_287 = arith.constant dense<0xFF800000> : vector<6xf32>
    %881 = vector.multi_reduction <maximumf>, %880, %cst_287 [1] : vector<6x6xf32> to vector<6xf32>
    %882 = vector.shape_cast %881 : vector<6xf32> to vector<6x1xf32>
    %883 = vector.broadcast %882 : vector<6x1xf32> to vector<6x6xf32>
    %884 = arith.subf %880, %883 : vector<6x6xf32>
    %885 = math.exp %884 : vector<6x6xf32>
    %cst_288 = arith.constant dense<0.000000e+00> : vector<6xf32>
    %886 = vector.multi_reduction <add>, %885, %cst_288 [1] : vector<6x6xf32> to vector<6xf32>
    %887 = vector.shape_cast %886 : vector<6xf32> to vector<6x1xf32>
    %888 = tpu.reciprocal %887 {approx = true} : vector<6x1xf32> -> vector<6x1xf32>
    %889 = vector.broadcast %888 : vector<6x1xf32> to vector<6x6xf32>
    %890 = arith.mulf %885, %889 : vector<6x6xf32>
    %891 = arith.truncf %890 : vector<6x6xf32> to vector<6x6xbf16>
    %892 = arith.truncf %877 : vector<6x16xf32> to vector<6x16xbf16>
    %cst_289 = arith.constant dense<0.000000e+00> : vector<6x16xf32>
    %893 = tpu.matmul %891, %892, %cst_289 {dimension_numbers = #tpu.dot_dimension_numbers<[1], [0], [0], [1], [0, 0, 1, 1], [], []>} : vector<6x6xbf16>, vector<6x16xbf16>, vector<6x16xf32> -> vector<6x16xf32>
    %894 = vector.extract_strided_slice %835 {offsets = [0, 48], sizes = [6, 16], strides = [1, 1]} : vector<6x192xf32> to vector<6x16xf32>
    %895 = vector.extract_strided_slice %836 {offsets = [0, 112], sizes = [6, 16], strides = [1, 1]} : vector<6x192xf32> to vector<6x16xf32>
    %896 = vector.extract_strided_slice %836 {offsets = [0, 176], sizes = [6, 16], strides = [1, 1]} : vector<6x192xf32> to vector<6x16xf32>
    %897 = arith.truncf %894 : vector<6x16xf32> to vector<6x16xbf16>
    %898 = arith.truncf %895 : vector<6x16xf32> to vector<6x16xbf16>
    %cst_290 = arith.constant dense<0.000000e+00> : vector<6x6xf32>
    %899 = tpu.matmul %897, %898, %cst_290 {dimension_numbers = #tpu.dot_dimension_numbers<[1], [1], [0], [0], [0, 0, 1, 0], [], []>} : vector<6x16xbf16>, vector<6x16xbf16>, vector<6x6xf32> -> vector<6x6xf32>
    %cst_291 = arith.constant dense<0xFF800000> : vector<6xf32>
    %900 = vector.multi_reduction <maximumf>, %899, %cst_291 [1] : vector<6x6xf32> to vector<6xf32>
    %901 = vector.shape_cast %900 : vector<6xf32> to vector<6x1xf32>
    %902 = vector.broadcast %901 : vector<6x1xf32> to vector<6x6xf32>
    %903 = arith.subf %899, %902 : vector<6x6xf32>
    %904 = math.exp %903 : vector<6x6xf32>
    %cst_292 = arith.constant dense<0.000000e+00> : vector<6xf32>
    %905 = vector.multi_reduction <add>, %904, %cst_292 [1] : vector<6x6xf32> to vector<6xf32>
    %906 = vector.shape_cast %905 : vector<6xf32> to vector<6x1xf32>
    %907 = tpu.reciprocal %906 {approx = true} : vector<6x1xf32> -> vector<6x1xf32>
    %908 = vector.broadcast %907 : vector<6x1xf32> to vector<6x6xf32>
    %909 = arith.mulf %904, %908 : vector<6x6xf32>
    %910 = arith.truncf %909 : vector<6x6xf32> to vector<6x6xbf16>
    %911 = arith.truncf %896 : vector<6x16xf32> to vector<6x16xbf16>
    %cst_293 = arith.constant dense<0.000000e+00> : vector<6x16xf32>
    %912 = tpu.matmul %910, %911, %cst_293 {dimension_numbers = #tpu.dot_dimension_numbers<[1], [0], [0], [1], [0, 0, 1, 1], [], []>} : vector<6x6xbf16>, vector<6x16xbf16>, vector<6x16xf32> -> vector<6x16xf32>
    %913 = tpu.concatenate %855, %874, %893, %912 in 1 : vector<6x16xf32>, vector<6x16xf32>, vector<6x16xf32>, vector<6x16xf32> -> vector<6x64xf32>
    %914 = tpu.concatenate %834, %913 in 0 : vector<6x64xf32>, vector<6x64xf32> -> vector<12x64xf32>
    %915 = vector.broadcast %70 : vector<1x64xf32> to vector<12x64xf32>
    %916 = arith.addf %731, %915 : vector<12x64xf32>
    %917 = arith.truncf %914 : vector<12x64xf32> to vector<12x64xbf16>
    %cst_294 = arith.constant dense<0.000000e+00> : vector<12x64xf32>
    %918 = tpu.matmul %917, %68, %cst_294 {dimension_numbers = #tpu.dot_dimension_numbers<[1], [0], [0], [1], [0, 0, 1, 1], [], []>} : vector<12x64xbf16>, vector<64x64xbf16>, vector<12x64xf32> -> vector<12x64xf32>
    %919 = arith.addf %916, %918 : vector<12x64xf32>
    %cst_295 = arith.constant dense<0.000000e+00> : vector<12xf32>
    %920 = vector.multi_reduction <add>, %919, %cst_295 [1] : vector<12x64xf32> to vector<12xf32>
    %921 = vector.shape_cast %920 : vector<12xf32> to vector<12x1xf32>
    %cst_296 = arith.constant 6.400000e+01 : f32
    %922 = vector.broadcast %cst_296 : f32 to vector<12x1xf32>
    %923 = arith.divf %921, %922 : vector<12x1xf32>
    %924 = vector.broadcast %923 : vector<12x1xf32> to vector<12x64xf32>
    %925 = arith.subf %919, %924 : vector<12x64xf32>
    %926 = arith.mulf %925, %925 : vector<12x64xf32>
    %cst_297 = arith.constant dense<0.000000e+00> : vector<12xf32>
    %927 = vector.multi_reduction <add>, %926, %cst_297 [1] : vector<12x64xf32> to vector<12xf32>
    %928 = vector.shape_cast %927 : vector<12xf32> to vector<12x1xf32>
    %cst_298 = arith.constant 6.400000e+01 : f32
    %929 = vector.broadcast %cst_298 : f32 to vector<12x1xf32>
    %930 = arith.divf %928, %929 : vector<12x1xf32>
    %931 = vector.broadcast %923 : vector<12x1xf32> to vector<12x64xf32>
    %932 = arith.subf %919, %931 : vector<12x64xf32>
    %cst_299 = arith.constant 9.99999974E-6 : f32
    %933 = vector.broadcast %cst_299 : f32 to vector<12x1xf32>
    %934 = arith.addf %930, %933 : vector<12x1xf32>
    %935 = math.rsqrt %934 : vector<12x1xf32>
    %936 = vector.broadcast %935 : vector<12x1xf32> to vector<12x64xf32>
    %937 = arith.mulf %932, %936 : vector<12x64xf32>
    %938 = vector.broadcast %54 : vector<1x64xf32> to vector<12x64xf32>
    %939 = arith.mulf %937, %938 : vector<12x64xf32>
    %940 = vector.broadcast %56 : vector<1x64xf32> to vector<12x64xf32>
    %941 = arith.addf %939, %940 : vector<12x64xf32>
    %942 = arith.truncf %941 : vector<12x64xf32> to vector<12x64xbf16>
    %cst_300 = arith.constant dense<0.000000e+00> : vector<12x256xf32>
    %943 = tpu.matmul %942, %72, %cst_300 {dimension_numbers = #tpu.dot_dimension_numbers<[1], [0], [0], [1], [0, 0, 1, 1], [], []>} : vector<12x64xbf16>, vector<64x256xbf16>, vector<12x256xf32> -> vector<12x256xf32>
    %944 = vector.broadcast %74 : vector<1x256xf32> to vector<12x256xf32>
    %945 = arith.addf %943, %944 : vector<12x256xf32>
    %cst_301 = arith.constant 5.000000e-01 : f32
    %946 = vector.broadcast %cst_301 : f32 to vector<12x256xf32>
    %947 = arith.mulf %946, %945 : vector<12x256xf32>
    %cst_302 = arith.constant 0.707106769 : f32
    %948 = vector.broadcast %cst_302 : f32 to vector<12x256xf32>
    %949 = arith.mulf %945, %948 : vector<12x256xf32>
    %950 = math.erf %949 : vector<12x256xf32>
    %cst_303 = arith.constant 1.000000e+00 : f32
    %951 = vector.broadcast %cst_303 : f32 to vector<12x256xf32>
    %952 = arith.addf %951, %950 : vector<12x256xf32>
    %953 = arith.mulf %947, %952 : vector<12x256xf32>
    %954 = vector.broadcast %78 : vector<1x64xf32> to vector<12x64xf32>
    %955 = arith.addf %919, %954 : vector<12x64xf32>
    %956 = arith.truncf %953 : vector<12x256xf32> to vector<12x256xbf16>
    %cst_304 = arith.constant dense<0.000000e+00> : vector<12x64xf32>
    %957 = tpu.matmul %956, %76, %cst_304 {dimension_numbers = #tpu.dot_dimension_numbers<[1], [0], [0], [1], [0, 0, 1, 1], [], []>} : vector<12x256xbf16>, vector<256x64xbf16>, vector<12x64xf32> -> vector<12x64xf32>
    %958 = arith.addf %955, %957 : vector<12x64xf32>
    %c0_305 = arith.constant 0 : index
    %c0_306 = arith.constant 0 : index
    %959 = vector.load %arg47[%c0_305, %c0_306] : memref<16x32xf32, #tpu.memory_space<vmem>>, vector<16x32xf32>
    tpu.vector_store %arg47[%c0_305, %c0_306], %519 {strides = array<i32>} : memref<16x32xf32, #tpu.memory_space<vmem>>, vector<16x32xf32>,
    %c0_307 = arith.constant 0 : index
    %c0_308 = arith.constant 0 : index
    %960 = vector.load %arg48[%c0_307, %c0_308] : memref<12x64xf32, #tpu.memory_space<vmem>>, vector<12x64xf32>
    tpu.vector_store %arg48[%c0_307, %c0_308], %958 {strides = array<i32>} : memref<12x64xf32, #tpu.memory_space<vmem>>, vector<12x64xf32>,
    %c1_i32 = arith.constant 1 : i32
    %961 = arith.cmpi eq, %arg0, %c1_i32 : i32
    %962 = arith.extui %961 : i1 to i32
    %c0_i32_309 = arith.constant 0 : i32
    %963 = arith.cmpi ne, %962, %c0_i32_309 : i32
    scf.if %963 {
      %c0_310 = arith.constant 0 : index
      %c0_311 = arith.constant 0 : index
      %964 = vector.load %arg41[%c0_310, %c0_311] : memref<1x32xf32, #tpu.memory_space<vmem>>, vector<1x32xf32>
      %c0_312 = arith.constant 0 : index
      %c0_313 = arith.constant 0 : index
      %965 = vector.load %arg42[%c0_312, %c0_313] : memref<1x32xf32, #tpu.memory_space<vmem>>, vector<1x32xf32>
      %cst_314 = arith.constant dense<0.000000e+00> : vector<16xf32>
      %966 = vector.multi_reduction <add>, %519, %cst_314 [1] : vector<16x32xf32> to vector<16xf32>
      %967 = vector.shape_cast %966 : vector<16xf32> to vector<16x1xf32>
      %cst_315 = arith.constant 3.200000e+01 : f32
      %968 = vector.broadcast %cst_315 : f32 to vector<16x1xf32>
      %969 = arith.divf %967, %968 : vector<16x1xf32>
      %970 = vector.broadcast %969 : vector<16x1xf32> to vector<16x32xf32>
      %971 = arith.subf %519, %970 : vector<16x32xf32>
      %972 = arith.mulf %971, %971 : vector<16x32xf32>
      %cst_316 = arith.constant dense<0.000000e+00> : vector<16xf32>
      %973 = vector.multi_reduction <add>, %972, %cst_316 [1] : vector<16x32xf32> to vector<16xf32>
      %974 = vector.shape_cast %973 : vector<16xf32> to vector<16x1xf32>
      %cst_317 = arith.constant 3.200000e+01 : f32
      %975 = vector.broadcast %cst_317 : f32 to vector<16x1xf32>
      %976 = arith.divf %974, %975 : vector<16x1xf32>
      %977 = vector.broadcast %969 : vector<16x1xf32> to vector<16x32xf32>
      %978 = arith.subf %519, %977 : vector<16x32xf32>
      %cst_318 = arith.constant 9.99999974E-6 : f32
      %979 = vector.broadcast %cst_318 : f32 to vector<16x1xf32>
      %980 = arith.addf %976, %979 : vector<16x1xf32>
      %981 = math.rsqrt %980 : vector<16x1xf32>
      %982 = vector.broadcast %981 : vector<16x1xf32> to vector<16x32xf32>
      %983 = arith.mulf %978, %982 : vector<16x32xf32>
      %984 = vector.broadcast %964 : vector<1x32xf32> to vector<16x32xf32>
      %985 = arith.mulf %983, %984 : vector<16x32xf32>
      %986 = vector.broadcast %965 : vector<1x32xf32> to vector<16x32xf32>
      %987 = arith.addf %985, %986 : vector<16x32xf32>
      %c0_319 = arith.constant 0 : index
      %c0_320 = arith.constant 0 : index
      %988 = vector.load %arg45[%c0_319, %c0_320] : memref<16x32xf32, #tpu.memory_space<vmem>>, vector<16x32xf32>
      tpu.vector_store %arg45[%c0_319, %c0_320], %987 {strides = array<i32>} : memref<16x32xf32, #tpu.memory_space<vmem>>, vector<16x32xf32>,
      %c0_321 = arith.constant 0 : index
      %c0_322 = arith.constant 0 : index
      %989 = vector.load %arg43[%c0_321, %c0_322] : memref<1x64xf32, #tpu.memory_space<vmem>>, vector<1x64xf32>
      %c0_323 = arith.constant 0 : index
      %c0_324 = arith.constant 0 : index
      %990 = vector.load %arg44[%c0_323, %c0_324] : memref<1x64xf32, #tpu.memory_space<vmem>>, vector<1x64xf32>
      %cst_325 = arith.constant dense<0.000000e+00> : vector<12xf32>
      %991 = vector.multi_reduction <add>, %958, %cst_325 [1] : vector<12x64xf32> to vector<12xf32>
      %992 = vector.shape_cast %991 : vector<12xf32> to vector<12x1xf32>
      %cst_326 = arith.constant 6.400000e+01 : f32
      %993 = vector.broadcast %cst_326 : f32 to vector<12x1xf32>
      %994 = arith.divf %992, %993 : vector<12x1xf32>
      %995 = vector.broadcast %994 : vector<12x1xf32> to vector<12x64xf32>
      %996 = arith.subf %958, %995 : vector<12x64xf32>
      %997 = arith.mulf %996, %996 : vector<12x64xf32>
      %cst_327 = arith.constant dense<0.000000e+00> : vector<12xf32>
      %998 = vector.multi_reduction <add>, %997, %cst_327 [1] : vector<12x64xf32> to vector<12xf32>
      %999 = vector.shape_cast %998 : vector<12xf32> to vector<12x1xf32>
      %cst_328 = arith.constant 6.400000e+01 : f32
      %1000 = vector.broadcast %cst_328 : f32 to vector<12x1xf32>
      %1001 = arith.divf %999, %1000 : vector<12x1xf32>
      %1002 = vector.broadcast %994 : vector<12x1xf32> to vector<12x64xf32>
      %1003 = arith.subf %958, %1002 : vector<12x64xf32>
      %cst_329 = arith.constant 9.99999974E-6 : f32
      %1004 = vector.broadcast %cst_329 : f32 to vector<12x1xf32>
      %1005 = arith.addf %1001, %1004 : vector<12x1xf32>
      %1006 = math.rsqrt %1005 : vector<12x1xf32>
      %1007 = vector.broadcast %1006 : vector<12x1xf32> to vector<12x64xf32>
      %1008 = arith.mulf %1003, %1007 : vector<12x64xf32>
      %1009 = vector.broadcast %989 : vector<1x64xf32> to vector<12x64xf32>
      %1010 = arith.mulf %1008, %1009 : vector<12x64xf32>
      %1011 = vector.broadcast %990 : vector<1x64xf32> to vector<12x64xf32>
      %1012 = arith.addf %1010, %1011 : vector<12x64xf32>
      %c0_330 = arith.constant 0 : index
      %c0_331 = arith.constant 0 : index
      %1013 = vector.load %arg46[%c0_330, %c0_331] : memref<12x64xf32, #tpu.memory_space<vmem>>, vector<12x64xf32>
      tpu.vector_store %arg46[%c0_330, %c0_331], %1012 {strides = array<i32>} : memref<12x64xf32, #tpu.memory_space<vmem>>, vector<12x64xf32>,
    } else {
    }
    return
  }
  func.func @transform_0(%arg0: i32) -> (i32, i32) {
    %c0_i32 = arith.constant 0 : i32
    %c0_i32_0 = arith.constant 0 : i32
    %c0_i32_1 = arith.constant 0 : i32
    return %c0_i32, %c0_i32_0 : i32, i32
  }
  func.func @transform_1(%arg0: i32) -> (i32, i32) {
    %c0_i32 = arith.constant 0 : i32
    %c0_i32_0 = arith.constant 0 : i32
    %c0_i32_1 = arith.constant 0 : i32
    return %c0_i32, %c0_i32_0 : i32, i32
  }
  func.func @transform_2(%arg0: i32) -> (i32, i32, i32) {
    %c0_i32 = arith.constant 0 : i32
    %c0_i32_0 = arith.constant 0 : i32
    %c0_i32_1 = arith.constant 0 : i32
    return %arg0, %c0_i32, %c0_i32_0 : i32, i32, i32
  }
  func.func @transform_3(%arg0: i32) -> (i32, i32, i32) {
    %c0_i32 = arith.constant 0 : i32
    %c0_i32_0 = arith.constant 0 : i32
    %c0_i32_1 = arith.constant 0 : i32
    return %arg0, %c0_i32, %c0_i32_0 : i32, i32, i32
  }
  func.func @transform_4(%arg0: i32) -> (i32, i32, i32) {
    %c0_i32 = arith.constant 0 : i32
    %c0_i32_0 = arith.constant 0 : i32
    %c0_i32_1 = arith.constant 0 : i32
    return %arg0, %c0_i32, %c0_i32_0 : i32, i32, i32
  }
  func.func @transform_5(%arg0: i32) -> (i32, i32, i32) {
    %c0_i32 = arith.constant 0 : i32
    %c0_i32_0 = arith.constant 0 : i32
    %c0_i32_1 = arith.constant 0 : i32
    return %arg0, %c0_i32, %c0_i32_0 : i32, i32, i32
  }
  func.func @transform_6(%arg0: i32) -> (i32, i32, i32) {
    %c0_i32 = arith.constant 0 : i32
    %c0_i32_0 = arith.constant 0 : i32
    %c0_i32_1 = arith.constant 0 : i32
    return %arg0, %c0_i32, %c0_i32_0 : i32, i32, i32
  }
  func.func @transform_7(%arg0: i32) -> (i32, i32, i32) {
    %c0_i32 = arith.constant 0 : i32
    %c0_i32_0 = arith.constant 0 : i32
    %c0_i32_1 = arith.constant 0 : i32
    return %arg0, %c0_i32, %c0_i32_0 : i32, i32, i32
  }
  func.func @transform_8(%arg0: i32) -> (i32, i32, i32) {
    %c0_i32 = arith.constant 0 : i32
    %c0_i32_0 = arith.constant 0 : i32
    %c0_i32_1 = arith.constant 0 : i32
    return %arg0, %c0_i32, %c0_i32_0 : i32, i32, i32
  }
  func.func @transform_9(%arg0: i32) -> (i32, i32, i32) {
    %c0_i32 = arith.constant 0 : i32
    %c0_i32_0 = arith.constant 0 : i32
    %c0_i32_1 = arith.constant 0 : i32
    return %arg0, %c0_i32, %c0_i32_0 : i32, i32, i32
  }
  func.func @transform_10(%arg0: i32) -> (i32, i32, i32) {
    %c0_i32 = arith.constant 0 : i32
    %c0_i32_0 = arith.constant 0 : i32
    %c0_i32_1 = arith.constant 0 : i32
    return %arg0, %c0_i32, %c0_i32_0 : i32, i32, i32
  }
  func.func @transform_11(%arg0: i32) -> (i32, i32, i32) {
    %c0_i32 = arith.constant 0 : i32
    %c0_i32_0 = arith.constant 0 : i32
    %c0_i32_1 = arith.constant 0 : i32
    return %arg0, %c0_i32, %c0_i32_0 : i32, i32, i32
  }
  func.func @transform_12(%arg0: i32) -> (i32, i32, i32) {
    %c0_i32 = arith.constant 0 : i32
    %c0_i32_0 = arith.constant 0 : i32
    %c0_i32_1 = arith.constant 0 : i32
    return %arg0, %c0_i32, %c0_i32_0 : i32, i32, i32
  }
  func.func @transform_13(%arg0: i32) -> (i32, i32, i32) {
    %c0_i32 = arith.constant 0 : i32
    %c0_i32_0 = arith.constant 0 : i32
    %c0_i32_1 = arith.constant 0 : i32
    return %arg0, %c0_i32, %c0_i32_0 : i32, i32, i32
  }
  func.func @transform_14(%arg0: i32) -> (i32, i32, i32) {
    %c0_i32 = arith.constant 0 : i32
    %c0_i32_0 = arith.constant 0 : i32
    %c0_i32_1 = arith.constant 0 : i32
    return %arg0, %c0_i32, %c0_i32_0 : i32, i32, i32
  }
  func.func @transform_15(%arg0: i32) -> (i32, i32, i32) {
    %c0_i32 = arith.constant 0 : i32
    %c0_i32_0 = arith.constant 0 : i32
    %c0_i32_1 = arith.constant 0 : i32
    return %arg0, %c0_i32, %c0_i32_0 : i32, i32, i32
  }
  func.func @transform_16(%arg0: i32) -> (i32, i32, i32) {
    %c0_i32 = arith.constant 0 : i32
    %c0_i32_0 = arith.constant 0 : i32
    %c0_i32_1 = arith.constant 0 : i32
    return %arg0, %c0_i32, %c0_i32_0 : i32, i32, i32
  }
  func.func @transform_17(%arg0: i32) -> (i32, i32, i32) {
    %c0_i32 = arith.constant 0 : i32
    %c0_i32_0 = arith.constant 0 : i32
    %c0_i32_1 = arith.constant 0 : i32
    return %arg0, %c0_i32, %c0_i32_0 : i32, i32, i32
  }
  func.func @transform_18(%arg0: i32) -> (i32, i32, i32) {
    %c0_i32 = arith.constant 0 : i32
    %c0_i32_0 = arith.constant 0 : i32
    %c0_i32_1 = arith.constant 0 : i32
    return %arg0, %c0_i32, %c0_i32_0 : i32, i32, i32
  }
  func.func @transform_19(%arg0: i32) -> (i32, i32, i32) {
    %c0_i32 = arith.constant 0 : i32
    %c0_i32_0 = arith.constant 0 : i32
    %c0_i32_1 = arith.constant 0 : i32
    return %arg0, %c0_i32, %c0_i32_0 : i32, i32, i32
  }
  func.func @transform_20(%arg0: i32) -> (i32, i32, i32) {
    %c0_i32 = arith.constant 0 : i32
    %c0_i32_0 = arith.constant 0 : i32
    %c0_i32_1 = arith.constant 0 : i32
    return %arg0, %c0_i32, %c0_i32_0 : i32, i32, i32
  }
  func.func @transform_21(%arg0: i32) -> (i32, i32, i32) {
    %c0_i32 = arith.constant 0 : i32
    %c0_i32_0 = arith.constant 0 : i32
    %c0_i32_1 = arith.constant 0 : i32
    return %arg0, %c0_i32, %c0_i32_0 : i32, i32, i32
  }
  func.func @transform_22(%arg0: i32) -> (i32, i32, i32) {
    %c0_i32 = arith.constant 0 : i32
    %c0_i32_0 = arith.constant 0 : i32
    %c0_i32_1 = arith.constant 0 : i32
    return %arg0, %c0_i32, %c0_i32_0 : i32, i32, i32
  }
  func.func @transform_23(%arg0: i32) -> (i32, i32, i32) {
    %c0_i32 = arith.constant 0 : i32
    %c0_i32_0 = arith.constant 0 : i32
    %c0_i32_1 = arith.constant 0 : i32
    return %arg0, %c0_i32, %c0_i32_0 : i32, i32, i32
  }
  func.func @transform_24(%arg0: i32) -> (i32, i32, i32) {
    %c0_i32 = arith.constant 0 : i32
    %c0_i32_0 = arith.constant 0 : i32
    %c0_i32_1 = arith.constant 0 : i32
    return %arg0, %c0_i32, %c0_i32_0 : i32, i32, i32
  }
  func.func @transform_25(%arg0: i32) -> (i32, i32, i32) {
    %c0_i32 = arith.constant 0 : i32
    %c0_i32_0 = arith.constant 0 : i32
    %c0_i32_1 = arith.constant 0 : i32
    return %arg0, %c0_i32, %c0_i32_0 : i32, i32, i32
  }
  func.func @transform_26(%arg0: i32) -> (i32, i32, i32) {
    %c0_i32 = arith.constant 0 : i32
    %c0_i32_0 = arith.constant 0 : i32
    %c0_i32_1 = arith.constant 0 : i32
    return %arg0, %c0_i32, %c0_i32_0 : i32, i32, i32
  }
  func.func @transform_27(%arg0: i32) -> (i32, i32, i32) {
    %c0_i32 = arith.constant 0 : i32
    %c0_i32_0 = arith.constant 0 : i32
    %c0_i32_1 = arith.constant 0 : i32
    return %arg0, %c0_i32, %c0_i32_0 : i32, i32, i32
  }
  func.func @transform_28(%arg0: i32) -> (i32, i32, i32) {
    %c0_i32 = arith.constant 0 : i32
    %c0_i32_0 = arith.constant 0 : i32
    %c0_i32_1 = arith.constant 0 : i32
    return %arg0, %c0_i32, %c0_i32_0 : i32, i32, i32
  }
  func.func @transform_29(%arg0: i32) -> (i32, i32, i32) {
    %c0_i32 = arith.constant 0 : i32
    %c0_i32_0 = arith.constant 0 : i32
    %c0_i32_1 = arith.constant 0 : i32
    return %arg0, %c0_i32, %c0_i32_0 : i32, i32, i32
  }
  func.func @transform_30(%arg0: i32) -> (i32, i32, i32) {
    %c0_i32 = arith.constant 0 : i32
    %c0_i32_0 = arith.constant 0 : i32
    %c0_i32_1 = arith.constant 0 : i32
    return %arg0, %c0_i32, %c0_i32_0 : i32, i32, i32
  }
  func.func @transform_31(%arg0: i32) -> (i32, i32, i32) {
    %c0_i32 = arith.constant 0 : i32
    %c0_i32_0 = arith.constant 0 : i32
    %c0_i32_1 = arith.constant 0 : i32
    return %arg0, %c0_i32, %c0_i32_0 : i32, i32, i32
  }
  func.func @transform_32(%arg0: i32) -> (i32, i32, i32) {
    %c0_i32 = arith.constant 0 : i32
    %c0_i32_0 = arith.constant 0 : i32
    %c0_i32_1 = arith.constant 0 : i32
    return %arg0, %c0_i32, %c0_i32_0 : i32, i32, i32
  }
  func.func @transform_33(%arg0: i32) -> (i32, i32, i32) {
    %c0_i32 = arith.constant 0 : i32
    %c0_i32_0 = arith.constant 0 : i32
    %c0_i32_1 = arith.constant 0 : i32
    return %arg0, %c0_i32, %c0_i32_0 : i32, i32, i32
  }
  func.func @transform_34(%arg0: i32) -> (i32, i32, i32) {
    %c0_i32 = arith.constant 0 : i32
    %c0_i32_0 = arith.constant 0 : i32
    %c0_i32_1 = arith.constant 0 : i32
    return %arg0, %c0_i32, %c0_i32_0 : i32, i32, i32
  }
  func.func @transform_35(%arg0: i32) -> (i32, i32, i32) {
    %c0_i32 = arith.constant 0 : i32
    %c0_i32_0 = arith.constant 0 : i32
    %c0_i32_1 = arith.constant 0 : i32
    return %arg0, %c0_i32, %c0_i32_0 : i32, i32, i32
  }
  func.func @transform_36(%arg0: i32) -> (i32, i32, i32) {
    %c0_i32 = arith.constant 0 : i32
    %c0_i32_0 = arith.constant 0 : i32
    %c0_i32_1 = arith.constant 0 : i32
    return %arg0, %c0_i32, %c0_i32_0 : i32, i32, i32
  }
  func.func @transform_37(%arg0: i32) -> (i32, i32, i32) {
    %c0_i32 = arith.constant 0 : i32
    %c0_i32_0 = arith.constant 0 : i32
    %c0_i32_1 = arith.constant 0 : i32
    return %arg0, %c0_i32, %c0_i32_0 : i32, i32, i32
  }
  func.func @transform_38(%arg0: i32) -> (i32, i32, i32) {
    %c0_i32 = arith.constant 0 : i32
    %c0_i32_0 = arith.constant 0 : i32
    %c0_i32_1 = arith.constant 0 : i32
    return %arg0, %c0_i32, %c0_i32_0 : i32, i32, i32
  }
  func.func @transform_39(%arg0: i32) -> (i32, i32, i32) {
    %c0_i32 = arith.constant 0 : i32
    %c0_i32_0 = arith.constant 0 : i32
    %c0_i32_1 = arith.constant 0 : i32
    return %arg0, %c0_i32, %c0_i32_0 : i32, i32, i32
  }
  func.func @transform_40(%arg0: i32) -> (i32, i32) {
    %c0_i32 = arith.constant 0 : i32
    %c0_i32_0 = arith.constant 0 : i32
    %c0_i32_1 = arith.constant 0 : i32
    return %c0_i32, %c0_i32_0 : i32, i32
  }
  func.func @transform_41(%arg0: i32) -> (i32, i32) {
    %c0_i32 = arith.constant 0 : i32
    %c0_i32_0 = arith.constant 0 : i32
    %c0_i32_1 = arith.constant 0 : i32
    return %c0_i32, %c0_i32_0 : i32, i32
  }
  func.func @transform_42(%arg0: i32) -> (i32, i32) {
    %c0_i32 = arith.constant 0 : i32
    %c0_i32_0 = arith.constant 0 : i32
    %c0_i32_1 = arith.constant 0 : i32
    return %c0_i32, %c0_i32_0 : i32, i32
  }
  func.func @transform_43(%arg0: i32) -> (i32, i32) {
    %c0_i32 = arith.constant 0 : i32
    %c0_i32_0 = arith.constant 0 : i32
    %c0_i32_1 = arith.constant 0 : i32
    return %c0_i32, %c0_i32_0 : i32, i32
  }
  func.func @transform_44(%arg0: i32) -> (i32, i32) {
    %c0_i32 = arith.constant 0 : i32
    %c0_i32_0 = arith.constant 0 : i32
    %c0_i32_1 = arith.constant 0 : i32
    return %c0_i32, %c0_i32_0 : i32, i32
  }
  func.func @transform_45(%arg0: i32) -> (i32, i32) {
    %c0_i32 = arith.constant 0 : i32
    %c0_i32_0 = arith.constant 0 : i32
    %c0_i32_1 = arith.constant 0 : i32
    return %c0_i32, %c0_i32_0 : i32, i32
  }
}

</mosaic_0001>

<llo_original>
// kernel: encoder_forward.1
$region0: #{encoder_forward.1}
  #allocation0 [shape = 'u32[]', space=smem, size = 0x4, offset = 0x4, fixed_abs, tag = 'smem constant byte address 0x4 - core index']
  #allocation1 [shape = 'u32[144,128]{1,0:T(1,128)}', space=vmem, size = 0x12000, scoped, tag = 'internal scratch']
  #allocation2 [shape = 'f32[16,32]{1,0:T(8,128)}', space=vmem, size = 0x2000, scoped, tag = 'scratch operand']
  #allocation3 [shape = 'f32[12,64]{1,0:T(8,128)}', space=vmem, size = 0x2000, scoped, tag = 'scratch operand']
  %s0 = inlined_call_operand.smem [shape: u32[46], index: -1, kind: input, shape index: {}]
  %s1 = sld [smem:[%s0]]
  %s2 = scalar_lea.smem %s0, 1
  %s3 = sld [smem:[%s2]]
  %s4 = scalar_lea.smem %s0, 2
  %s5 = sld [smem:[%s4]]
  %s6 = scalar_lea.smem %s0, 3
  %s7 = sld [smem:[%s6]]
  %s8 = scalar_lea.smem %s0, 4
  %s9 = sld [smem:[%s8]]
  %s10 = scalar_lea.smem %s0, 5
  %s11 = sld [smem:[%s10]]
  %s12 = scalar_lea.smem %s0, 6
  %s13 = sld [smem:[%s12]]
  %s14 = scalar_lea.smem %s0, 7
  %s15 = sld [smem:[%s14]]
  %s16 = scalar_lea.smem %s0, 8
  %s17 = sld [smem:[%s16]]
  %s18 = scalar_lea.smem %s0, 9
  %s19 = sld [smem:[%s18]]
  %s20 = scalar_lea.smem %s0, 10
  %s21 = sld [smem:[%s20]]
  %s22 = scalar_lea.smem %s0, 11
  %s23 = sld [smem:[%s22]]
  %s24 = scalar_lea.smem %s0, 12
  %s25 = sld [smem:[%s24]]
  %s26 = scalar_lea.smem %s0, 13
  %s27 = sld [smem:[%s26]]
  %s28 = scalar_lea.smem %s0, 14
  %s29 = sld [smem:[%s28]]
  %s30 = scalar_lea.smem %s0, 15
  %s31 = sld [smem:[%s30]]
  %s32 = scalar_lea.smem %s0, 16
  %s33 = sld [smem:[%s32]]
  %s34 = scalar_lea.smem %s0, 17
  %s35 = sld [smem:[%s34]]
  %s36 = scalar_lea.smem %s0, 18
  %s37 = sld [smem:[%s36]]
  %s38 = scalar_lea.smem %s0, 19
  %s39 = sld [smem:[%s38]]
  %s40 = scalar_lea.smem %s0, 20
  %s41 = sld [smem:[%s40]]
  %s42 = scalar_lea.smem %s0, 21
  %s43 = sld [smem:[%s42]]
  %s44 = scalar_lea.smem %s0, 22
  %s45 = sld [smem:[%s44]]
  %s46 = scalar_lea.smem %s0, 23
  %s47 = sld [smem:[%s46]]
  %s48 = scalar_lea.smem %s0, 24
  %s49 = sld [smem:[%s48]]
  %s50 = scalar_lea.smem %s0, 25
  %s51 = sld [smem:[%s50]]
  %s52 = scalar_lea.smem %s0, 26
  %s53 = sld [smem:[%s52]]
  %s54 = scalar_lea.smem %s0, 27
  %s55 = sld [smem:[%s54]]
  %s56 = scalar_lea.smem %s0, 28
  %s57 = sld [smem:[%s56]]
  %s58 = scalar_lea.smem %s0, 29
  %s59 = sld [smem:[%s58]]
  %s60 = scalar_lea.smem %s0, 30
  %s61 = sld [smem:[%s60]]
  %s62 = scalar_lea.smem %s0, 31
  %s63 = sld [smem:[%s62]]
  %s64 = scalar_lea.smem %s0, 32
  %s65 = sld [smem:[%s64]]
  %s66 = scalar_lea.smem %s0, 33
  %s67 = sld [smem:[%s66]]
  %s68 = scalar_lea.smem %s0, 34
  %s69 = sld [smem:[%s68]]
  %s70 = scalar_lea.smem %s0, 35
  %s71 = sld [smem:[%s70]]
  %s72 = scalar_lea.smem %s0, 36
  %s73 = sld [smem:[%s72]]
  %s74 = scalar_lea.smem %s0, 37
  %s75 = sld [smem:[%s74]]
  %s76 = scalar_lea.smem %s0, 38
  %s77 = sld [smem:[%s76]]
  %s78 = scalar_lea.smem %s0, 39
  %s79 = sld [smem:[%s78]]
  %s80 = scalar_lea.smem %s0, 40
  %s81 = sld [smem:[%s80]]
  %s82 = scalar_lea.smem %s0, 41
  %s83 = sld [smem:[%s82]]
  %s84 = scalar_lea.smem %s0, 42
  %s85 = sld [smem:[%s84]]
  %s86 = scalar_lea.smem %s0, 43
  %s87 = sld [smem:[%s86]]
  %s88 = scalar_lea.smem %s0, 44
  %s89 = sld [smem:[%s88]]
  %s90 = scalar_lea.smem %s0, 45
  %s91 = sld [smem:[%s90]]
  %92 = xla_tuple %s89, %s91
  %s93 = sld [smem:[#allocation0]]
  $region225: #{encoder_forward.1} parent=0
    _
  %s95 = ssub.s32 1, %s93
  %s96 = scalar_select 0, %s95, %s93
  $region1: #{encoder_forward.1} parent=0
    #allocation4 [shape = 'u8[8192]{0}', space=vmem, size = 0x2000, scoped, tag = 'output window, operand 0, single buffered']
    #allocation5 [shape = 's32[2]{0}', space=sflag, size = 0x8, scoped, tag = 'scoped memory for encoder_forward.1']
    %97 = vsyncpa [#allocation5], 0
    loop: start=0, step=1, limit=4
    $region2: #{encoder_forward.1} parent=1 // loop_pre_header
      _
    $region3: #{encoder_forward.1} parent=1 // loop_header
      %s99 = sphi 0, %s103
      %p100 = scmp.ge.s32.totalorder %s99, 4
      %s107 = sphi 0, %s107
      %s109 = sphi 0, %s107
      %s110 = sphi 0, %s109
      %s124 = sphi 0, %s110
      %s128 = sphi 0, %s128
      %s130 = sphi 0, %s128
      %s131 = sphi 0, %s130
      %s145 = sphi 0, %s131
      %s151 = sphi 0, %s153
      %s154 = sphi 0, %s151
      %s155 = sphi 0, %s154
      %s171 = sphi 0, %s155
      %s177 = sphi 0, %s179
      %s180 = sphi 0, %s177
      %s181 = sphi 0, %s180
      %s197 = sphi 0, %s181
      %s203 = sphi 0, %s205
      %s206 = sphi 0, %s203
      %s207 = sphi 0, %s206
      %s223 = sphi 0, %s207
      %s229 = sphi 0, %s231
      %s232 = sphi 0, %s229
      %s233 = sphi 0, %s232
      %s249 = sphi 0, %s233
      %s255 = sphi 0, %s257
      %s258 = sphi 0, %s255
      %s259 = sphi 0, %s258
      %s275 = sphi 0, %s259
      %s281 = sphi 0, %s283
      %s284 = sphi 0, %s281
      %s285 = sphi 0, %s284
      %s301 = sphi 0, %s285
      %s307 = sphi 0, %s309
      %s310 = sphi 0, %s307
      %s311 = sphi 0, %s310
      %s327 = sphi 0, %s311
      %s333 = sphi 0, %s335
      %s336 = sphi 0, %s333
      %s337 = sphi 0, %s336
      %s353 = sphi 0, %s337
      %s359 = sphi 0, %s361
      %s362 = sphi 0, %s359
      %s363 = sphi 0, %s362
      %s379 = sphi 0, %s363
      %s385 = sphi 0, %s387
      %s388 = sphi 0, %s385
      %s389 = sphi 0, %s388
      %s405 = sphi 0, %s389
      %s411 = sphi 0, %s413
      %s414 = sphi 0, %s411
      %s415 = sphi 0, %s414
      %s431 = sphi 0, %s415
      %s437 = sphi 0, %s439
      %s440 = sphi 0, %s437
      %s441 = sphi 0, %s440
      %s457 = sphi 0, %s441
      %s463 = sphi 0, %s465
      %s466 = sphi 0, %s463
      %s467 = sphi 0, %s466
      %s483 = sphi 0, %s467
      %s489 = sphi 0, %s491
      %s492 = sphi 0, %s489
      %s493 = sphi 0, %s492
      %s509 = sphi 0, %s493
      %s515 = sphi 0, %s517
      %s518 = sphi 0, %s515
      %s519 = sphi 0, %s518
      %s535 = sphi 0, %s519
      %s541 = sphi 0, %s543
      %s544 = sphi 0, %s541
      %s545 = sphi 0, %s544
      %s561 = sphi 0, %s545
      %s567 = sphi 0, %s569
      %s570 = sphi 0, %s567
      %s571 = sphi 0, %s570
      %s587 = sphi 0, %s571
      %s593 = sphi 0, %s595
      %s596 = sphi 0, %s593
      %s597 = sphi 0, %s596
      %s613 = sphi 0, %s597
      %s619 = sphi 0, %s621
      %s622 = sphi 0, %s619
      %s623 = sphi 0, %s622
      %s639 = sphi 0, %s623
      %s645 = sphi 0, %s647
      %s648 = sphi 0, %s645
      %s649 = sphi 0, %s648
      %s665 = sphi 0, %s649
      %s671 = sphi 0, %s673
      %s674 = sphi 0, %s671
      %s675 = sphi 0, %s674
      %s691 = sphi 0, %s675
      %s697 = sphi 0, %s699
      %s700 = sphi 0, %s697
      %s701 = sphi 0, %s700
      %s717 = sphi 0, %s701
      %s723 = sphi 0, %s725
      %s726 = sphi 0, %s723
      %s727 = sphi 0, %s726
      %s743 = sphi 0, %s727
      %s749 = sphi 0, %s751
      %s752 = sphi 0, %s749
      %s753 = sphi 0, %s752
      %s769 = sphi 0, %s753
      %s775 = sphi 0, %s777
      %s778 = sphi 0, %s775
      %s779 = sphi 0, %s778
      %s795 = sphi 0, %s779
      %s801 = sphi 0, %s803
      %s804 = sphi 0, %s801
      %s805 = sphi 0, %s804
      %s821 = sphi 0, %s805
      %s827 = sphi 0, %s829
      %s830 = sphi 0, %s827
      %s831 = sphi 0, %s830
      %s847 = sphi 0, %s831
      %s853 = sphi 0, %s855
      %s856 = sphi 0, %s853
      %s857 = sphi 0, %s856
      %s873 = sphi 0, %s857
      %s879 = sphi 0, %s881
      %s882 = sphi 0, %s879
      %s883 = sphi 0, %s882
      %s899 = sphi 0, %s883
      %s905 = sphi 0, %s907
      %s908 = sphi 0, %s905
      %s909 = sphi 0, %s908
      %s925 = sphi 0, %s909
      %s931 = sphi 0, %s933
      %s934 = sphi 0, %s931
      %s935 = sphi 0, %s934
      %s951 = sphi 0, %s935
      %s957 = sphi 0, %s959
      %s960 = sphi 0, %s957
      %s961 = sphi 0, %s960
      %s977 = sphi 0, %s961
      %s983 = sphi 0, %s985
      %s986 = sphi 0, %s983
      %s987 = sphi 0, %s986
      %s1003 = sphi 0, %s987
      %s1009 = sphi 0, %s1011
      %s1012 = sphi 0, %s1009
      %s1013 = sphi 0, %s1012
      %s1029 = sphi 0, %s1013
      %s1035 = sphi 0, %s1037
      %s1038 = sphi 0, %s1035
      %s1039 = sphi 0, %s1038
      %s1055 = sphi 0, %s1039
      %s1061 = sphi 0, %s1063
      %s1064 = sphi 0, %s1061
      %s1065 = sphi 0, %s1064
      %s1081 = sphi 0, %s1065
      %s1087 = sphi 0, %s1089
      %s1090 = sphi 0, %s1087
      %s1091 = sphi 0, %s1090
      %s1107 = sphi 0, %s1091
      %s1113 = sphi 0, %s1115
      %s1116 = sphi 0, %s1113
      %s1117 = sphi 0, %s1116
      %s1133 = sphi 0, %s1117
      %s1137 = sphi 0, %s1137
      %s1139 = sphi 0, %s1137
      %s1140 = sphi 0, %s1139
      %s1154 = sphi 0, %s1140
      %s1158 = sphi 0, %s1158
      %s1160 = sphi 0, %s1158
      %s1161 = sphi 0, %s1160
      %s1175 = sphi 0, %s1161
      %s1179 = sphi 0, %s1179
      %s1181 = sphi 0, %s1179
      %s1182 = sphi 0, %s1181
      %s1196 = sphi 0, %s1182
      %s1200 = sphi 0, %s1200
      %s1202 = sphi 0, %s1200
      %s1203 = sphi 0, %s1202
      %s1217 = sphi 0, %s1203
      %s1221 = sphi 0, %s1221
      %s1223 = sphi 0, %s1221
      %s1224 = sphi 0, %s1223
      %s1238 = sphi 0, %s1224
      %s1242 = sphi 0, %s1242
      %s1244 = sphi 0, %s1242
      %s1245 = sphi 0, %s1244
      %s1259 = sphi 0, %s1245
    $region4: #{encoder_forward.1} parent=1 // loop_header_branch
      %102 = sbr.rel (%p100) target = $region8
    $region5: #{encoder_forward.1} parent=1 // loop_body
      %s104 = ssub.s32 %s99, 1
      %s105 = ssub.s32 %s99, 2
      %s106 = sadd.s32 %s99, 1
      %s108 = sadd.s32 %s107, 1
      %p111 = scmp.eq.s32.totalorder %s99, 1
      %p112 = scmp.ne.s32.totalorder %s107, %s109
      %p113 = scmp.eq.s32.totalorder %s99, 0
      %p114 = por %p112, %p113
      %p115 = scmp.ne.s32.totalorder %s107, %s109
      %p116 = scmp.eq.s32.totalorder %s104, 1
      %p117 = por %p115, %p116
      %p118 = scmp.ne.s32.totalorder %s109, %s110
      %p119 = scmp.eq.s32.totalorder %s104, 0
      %p120 = por %p118, %p119
      %p121 = scmp.ne.s32.totalorder %s109, %s110
      %p122 = scmp.eq.s32.totalorder %s105, 1
      %p123 = por %p121, %p122
      %p125 = scmp.ne.s32.totalorder %s110, %s124
      %p126 = scmp.eq.s32.totalorder %s105, 0
      %p127 = por %p125, %p126
      %s129 = sadd.s32 %s128, 1
      %p132 = scmp.eq.s32.totalorder %s99, 1
      %p133 = scmp.ne.s32.totalorder %s128, %s130
      %p134 = scmp.eq.s32.totalorder %s99, 0
      %p135 = por %p133, %p134
      %p136 = scmp.ne.s32.totalorder %s128, %s130
      %p137 = scmp.eq.s32.totalorder %s104, 1
      %p138 = por %p136, %p137
      %p139 = scmp.ne.s32.totalorder %s130, %s131
      %p140 = scmp.eq.s32.totalorder %s104, 0
      %p141 = por %p139, %p140
      %p142 = scmp.ne.s32.totalorder %s130, %s131
      %p143 = scmp.eq.s32.totalorder %s105, 1
      %p144 = por %p142, %p143
      %p146 = scmp.ne.s32.totalorder %s131, %s145
      %p147 = scmp.eq.s32.totalorder %s105, 0
      %p148 = por %p146, %p147
      %s149 = ssub.s32 %s99, %s106
      %p150 = scmp.eq.s32.totalorder %s149, 0
      %s152 = sadd.s32 %s151, 1
      %s153 = scalar_select %p150, %s151, %s152
      %p156 = pneg %p150
      %p157 = scmp.eq.s32.totalorder %s99, 1
      %p158 = por %p156, %p157
      %p159 = scmp.ne.s32.totalorder %s151, %s154
      %p160 = scmp.eq.s32.totalorder %s99, 0
      %p161 = por %p159, %p160
      %p162 = scmp.ne.s32.totalorder %s151, %s154
      %p163 = scmp.eq.s32.totalorder %s104, 1
      %p164 = por %p162, %p163
      %p165 = scmp.ne.s32.totalorder %s154, %s155
      %p166 = scmp.eq.s32.totalorder %s104, 0
      %p167 = por %p165, %p166
      %p168 = scmp.ne.s32.totalorder %s154, %s155
      %p169 = scmp.eq.s32.totalorder %s105, 1
      %p170 = por %p168, %p169
      %p172 = scmp.ne.s32.totalorder %s155, %s171
      %p173 = scmp.eq.s32.totalorder %s105, 0
      %p174 = por %p172, %p173
      %s175 = ssub.s32 %s99, %s106
      %p176 = scmp.eq.s32.totalorder %s175, 0
      %s178 = sadd.s32 %s177, 1
      %s179 = scalar_select %p176, %s177, %s178
      %p182 = pneg %p176
      %p183 = scmp.eq.s32.totalorder %s99, 1
      %p184 = por %p182, %p183
      %p185 = scmp.ne.s32.totalorder %s177, %s180
      %p186 = scmp.eq.s32.totalorder %s99, 0
      %p187 = por %p185, %p186
      %p188 = scmp.ne.s32.totalorder %s177, %s180
      %p189 = scmp.eq.s32.totalorder %s104, 1
      %p190 = por %p188, %p189
      %p191 = scmp.ne.s32.totalorder %s180, %s181
      %p192 = scmp.eq.s32.totalorder %s104, 0
      %p193 = por %p191, %p192
      %p194 = scmp.ne.s32.totalorder %s180, %s181
      %p195 = scmp.eq.s32.totalorder %s105, 1
      %p196 = por %p194, %p195
      %p198 = scmp.ne.s32.totalorder %s181, %s197
      %p199 = scmp.eq.s32.totalorder %s105, 0
      %p200 = por %p198, %p199
      %s201 = ssub.s32 %s99, %s106
      %p202 = scmp.eq.s32.totalorder %s201, 0
      %s204 = sadd.s32 %s203, 1
      %s205 = scalar_select %p202, %s203, %s204
      %p208 = pneg %p202
      %p209 = scmp.eq.s32.totalorder %s99, 1
      %p210 = por %p208, %p209
      %p211 = scmp.ne.s32.totalorder %s203, %s206
      %p212 = scmp.eq.s32.totalorder %s99, 0
      %p213 = por %p211, %p212
      %p214 = scmp.ne.s32.totalorder %s203, %s206
      %p215 = scmp.eq.s32.totalorder %s104, 1
      %p216 = por %p214, %p215
      %p217 = scmp.ne.s32.totalorder %s206, %s207
      %p218 = scmp.eq.s32.totalorder %s104, 0
      %p219 = por %p217, %p218
      %p220 = scmp.ne.s32.totalorder %s206, %s207
      %p221 = scmp.eq.s32.totalorder %s105, 1
      %p222 = por %p220, %p221
      %p224 = scmp.ne.s32.totalorder %s207, %s223
      %p225 = scmp.eq.s32.totalorder %s105, 0
      %p226 = por %p224, %p225
      %s227 = ssub.s32 %s99, %s106
      %p228 = scmp.eq.s32.totalorder %s227, 0
      %s230 = sadd.s32 %s229, 1
      %s231 = scalar_select %p228, %s229, %s230
      %p234 = pneg %p228
      %p235 = scmp.eq.s32.totalorder %s99, 1
      %p236 = por %p234, %p235
      %p237 = scmp.ne.s32.totalorder %s229, %s232
      %p238 = scmp.eq.s32.totalorder %s99, 0
      %p239 = por %p237, %p238
      %p240 = scmp.ne.s32.totalorder %s229, %s232
      %p241 = scmp.eq.s32.totalorder %s104, 1
      %p242 = por %p240, %p241
      %p243 = scmp.ne.s32.totalorder %s232, %s233
      %p244 = scmp.eq.s32.totalorder %s104, 0
      %p245 = por %p243, %p244
      %p246 = scmp.ne.s32.totalorder %s232, %s233
      %p247 = scmp.eq.s32.totalorder %s105, 1
      %p248 = por %p246, %p247
      %p250 = scmp.ne.s32.totalorder %s233, %s249
      %p251 = scmp.eq.s32.totalorder %s105, 0
      %p252 = por %p250, %p251
      %s253 = ssub.s32 %s99, %s106
      %p254 = scmp.eq.s32.totalorder %s253, 0
      %s256 = sadd.s32 %s255, 1
      %s257 = scalar_select %p254, %s255, %s256
      %p260 = pneg %p254
      %p261 = scmp.eq.s32.totalorder %s99, 1
      %p262 = por %p260, %p261
      %p263 = scmp.ne.s32.totalorder %s255, %s258
      %p264 = scmp.eq.s32.totalorder %s99, 0
      %p265 = por %p263, %p264
      %p266 = scmp.ne.s32.totalorder %s255, %s258
      %p267 = scmp.eq.s32.totalorder %s104, 1
      %p268 = por %p266, %p267
      %p269 = scmp.ne.s32.totalorder %s258, %s259
      %p270 = scmp.eq.s32.totalorder %s104, 0
      %p271 = por %p269, %p270
      %p272 = scmp.ne.s32.totalorder %s258, %s259
      %p273 = scmp.eq.s32.totalorder %s105, 1
      %p274 = por %p272, %p273
      %p276 = scmp.ne.s32.totalorder %s259, %s275
      %p277 = scmp.eq.s32.totalorder %s105, 0
      %p278 = por %p276, %p277
      %s279 = ssub.s32 %s99, %s106
      %p280 = scmp.eq.s32.totalorder %s279, 0
      %s282 = sadd.s32 %s281, 1
      %s283 = scalar_select %p280, %s281, %s282
      %p286 = pneg %p280
      %p287 = scmp.eq.s32.totalorder %s99, 1
      %p288 = por %p286, %p287
      %p289 = scmp.ne.s32.totalorder %s281, %s284
      %p290 = scmp.eq.s32.totalorder %s99, 0
      %p291 = por %p289, %p290
      %p292 = scmp.ne.s32.totalorder %s281, %s284
      %p293 = scmp.eq.s32.totalorder %s104, 1
      %p294 = por %p292, %p293
      %p295 = scmp.ne.s32.totalorder %s284, %s285
      %p296 = scmp.eq.s32.totalorder %s104, 0
      %p297 = por %p295, %p296
      %p298 = scmp.ne.s32.totalorder %s284, %s285
      %p299 = scmp.eq.s32.totalorder %s105, 1
      %p300 = por %p298, %p299
      %p302 = scmp.ne.s32.totalorder %s285, %s301
      %p303 = scmp.eq.s32.totalorder %s105, 0
      %p304 = por %p302, %p303
      %s305 = ssub.s32 %s99, %s106
      %p306 = scmp.eq.s32.totalorder %s305, 0
      %s308 = sadd.s32 %s307, 1
      %s309 = scalar_select %p306, %s307, %s308
      %p312 = pneg %p306
      %p313 = scmp.eq.s32.totalorder %s99, 1
      %p314 = por %p312, %p313
      %p315 = scmp.ne.s32.totalorder %s307, %s310
      %p316 = scmp.eq.s32.totalorder %s99, 0
      %p317 = por %p315, %p316
      %p318 = scmp.ne.s32.totalorder %s307, %s310
      %p319 = scmp.eq.s32.totalorder %s104, 1
      %p320 = por %p318, %p319
      %p321 = scmp.ne.s32.totalorder %s310, %s311
      %p322 = scmp.eq.s32.totalorder %s104, 0
      %p323 = por %p321, %p322
      %p324 = scmp.ne.s32.totalorder %s310, %s311
      %p325 = scmp.eq.s32.totalorder %s105, 1
      %p326 = por %p324, %p325
      %p328 = scmp.ne.s32.totalorder %s311, %s327
      %p329 = scmp.eq.s32.totalorder %s105, 0
      %p330 = por %p328, %p329
      %s331 = ssub.s32 %s99, %s106
      %p332 = scmp.eq.s32.totalorder %s331, 0
      %s334 = sadd.s32 %s333, 1
      %s335 = scalar_select %p332, %s333, %s334
      %p338 = pneg %p332
      %p339 = scmp.eq.s32.totalorder %s99, 1
      %p340 = por %p338, %p339
      %p341 = scmp.ne.s32.totalorder %s333, %s336
      %p342 = scmp.eq.s32.totalorder %s99, 0
      %p343 = por %p341, %p342
      %p344 = scmp.ne.s32.totalorder %s333, %s336
      %p345 = scmp.eq.s32.totalorder %s104, 1
      %p346 = por %p344, %p345
      %p347 = scmp.ne.s32.totalorder %s336, %s337
      %p348 = scmp.eq.s32.totalorder %s104, 0
      %p349 = por %p347, %p348
      %p350 = scmp.ne.s32.totalorder %s336, %s337
      %p351 = scmp.eq.s32.totalorder %s105, 1
      %p352 = por %p350, %p351
      %p354 = scmp.ne.s32.totalorder %s337, %s353
      %p355 = scmp.eq.s32.totalorder %s105, 0
      %p356 = por %p354, %p355
      %s357 = ssub.s32 %s99, %s106
      %p358 = scmp.eq.s32.totalorder %s357, 0
      %s360 = sadd.s32 %s359, 1
      %s361 = scalar_select %p358, %s359, %s360
      %p364 = pneg %p358
      %p365 = scmp.eq.s32.totalorder %s99, 1
      %p366 = por %p364, %p365
      %p367 = scmp.ne.s32.totalorder %s359, %s362
      %p368 = scmp.eq.s32.totalorder %s99, 0
      %p369 = por %p367, %p368
      %p370 = scmp.ne.s32.totalorder %s359, %s362
      %p371 = scmp.eq.s32.totalorder %s104, 1
      %p372 = por %p370, %p371
      %p373 = scmp.ne.s32.totalorder %s362, %s363
      %p374 = scmp.eq.s32.totalorder %s104, 0
      %p375 = por %p373, %p374
      %p376 = scmp.ne.s32.totalorder %s362, %s363
      %p377 = scmp.eq.s32.totalorder %s105, 1
      %p378 = por %p376, %p377
      %p380 = scmp.ne.s32.totalorder %s363, %s379
      %p381 = scmp.eq.s32.totalorder %s105, 0
      %p382 = por %p380, %p381
      %s383 = ssub.s32 %s99, %s106
      %p384 = scmp.eq.s32.totalorder %s383, 0
      %s386 = sadd.s32 %s385, 1
      %s387 = scalar_select %p384, %s385, %s386
      %p390 = pneg %p384
      %p391 = scmp.eq.s32.totalorder %s99, 1
      %p392 = por %p390, %p391
      %p393 = scmp.ne.s32.totalorder %s385, %s388
      %p394 = scmp.eq.s32.totalorder %s99, 0
      %p395 = por %p393, %p394
      %p396 = scmp.ne.s32.totalorder %s385, %s388
      %p397 = scmp.eq.s32.totalorder %s104, 1
      %p398 = por %p396, %p397
      %p399 = scmp.ne.s32.totalorder %s388, %s389
      %p400 = scmp.eq.s32.totalorder %s104, 0
      %p401 = por %p399, %p400
      %p402 = scmp.ne.s32.totalorder %s388, %s389
      %p403 = scmp.eq.s32.totalorder %s105, 1
      %p404 = por %p402, %p403
      %p406 = scmp.ne.s32.totalorder %s389, %s405
      %p407 = scmp.eq.s32.totalorder %s105, 0
      %p408 = por %p406, %p407
      %s409 = ssub.s32 %s99, %s106
      %p410 = scmp.eq.s32.totalorder %s409, 0
      %s412 = sadd.s32 %s411, 1
      %s413 = scalar_select %p410, %s411, %s412
      %p416 = pneg %p410
      %p417 = scmp.eq.s32.totalorder %s99, 1
      %p418 = por %p416, %p417
      %p419 = scmp.ne.s32.totalorder %s411, %s414
      %p420 = scmp.eq.s32.totalorder %s99, 0
      %p421 = por %p419, %p420
      %p422 = scmp.ne.s32.totalorder %s411, %s414
      %p423 = scmp.eq.s32.totalorder %s104, 1
      %p424 = por %p422, %p423
      %p425 = scmp.ne.s32.totalorder %s414, %s415
      %p426 = scmp.eq.s32.totalorder %s104, 0
      %p427 = por %p425, %p426
      %p428 = scmp.ne.s32.totalorder %s414, %s415
      %p429 = scmp.eq.s32.totalorder %s105, 1
      %p430 = por %p428, %p429
      %p432 = scmp.ne.s32.totalorder %s415, %s431
      %p433 = scmp.eq.s32.totalorder %s105, 0
      %p434 = por %p432, %p433
      %s435 = ssub.s32 %s99, %s106
      %p436 = scmp.eq.s32.totalorder %s435, 0
      %s438 = sadd.s32 %s437, 1
      %s439 = scalar_select %p436, %s437, %s438
      %p442 = pneg %p436
      %p443 = scmp.eq.s32.totalorder %s99, 1
      %p444 = por %p442, %p443
      %p445 = scmp.ne.s32.totalorder %s437, %s440
      %p446 = scmp.eq.s32.totalorder %s99, 0
      %p447 = por %p445, %p446
      %p448 = scmp.ne.s32.totalorder %s437, %s440
      %p449 = scmp.eq.s32.totalorder %s104, 1
      %p450 = por %p448, %p449
      %p451 = scmp.ne.s32.totalorder %s440, %s441
      %p452 = scmp.eq.s32.totalorder %s104, 0
      %p453 = por %p451, %p452
      %p454 = scmp.ne.s32.totalorder %s440, %s441
      %p455 = scmp.eq.s32.totalorder %s105, 1
      %p456 = por %p454, %p455
      %p458 = scmp.ne.s32.totalorder %s441, %s457
      %p459 = scmp.eq.s32.totalorder %s105, 0
      %p460 = por %p458, %p459
      %s461 = ssub.s32 %s99, %s106
      %p462 = scmp.eq.s32.totalorder %s461, 0
      %s464 = sadd.s32 %s463, 1
      %s465 = scalar_select %p462, %s463, %s464
      %p468 = pneg %p462
      %p469 = scmp.eq.s32.totalorder %s99, 1
      %p470 = por %p468, %p469
      %p471 = scmp.ne.s32.totalorder %s463, %s466
      %p472 = scmp.eq.s32.totalorder %s99, 0
      %p473 = por %p471, %p472
      %p474 = scmp.ne.s32.totalorder %s463, %s466
      %p475 = scmp.eq.s32.totalorder %s104, 1
      %p476 = por %p474, %p475
      %p477 = scmp.ne.s32.totalorder %s466, %s467
      %p478 = scmp.eq.s32.totalorder %s104, 0
      %p479 = por %p477, %p478
      %p480 = scmp.ne.s32.totalorder %s466, %s467
      %p481 = scmp.eq.s32.totalorder %s105, 1
      %p482 = por %p480, %p481
      %p484 = scmp.ne.s32.totalorder %s467, %s483
      %p485 = scmp.eq.s32.totalorder %s105, 0
      %p486 = por %p484, %p485
      %s487 = ssub.s32 %s99, %s106
      %p488 = scmp.eq.s32.totalorder %s487, 0
      %s490 = sadd.s32 %s489, 1
      %s491 = scalar_select %p488, %s489, %s490
      %p494 = pneg %p488
      %p495 = scmp.eq.s32.totalorder %s99, 1
      %p496 = por %p494, %p495
      %p497 = scmp.ne.s32.totalorder %s489, %s492
      %p498 = scmp.eq.s32.totalorder %s99, 0
      %p499 = por %p497, %p498
      %p500 = scmp.ne.s32.totalorder %s489, %s492
      %p501 = scmp.eq.s32.totalorder %s104, 1
      %p502 = por %p500, %p501
      %p503 = scmp.ne.s32.totalorder %s492, %s493
      %p504 = scmp.eq.s32.totalorder %s104, 0
      %p505 = por %p503, %p504
      %p506 = scmp.ne.s32.totalorder %s492, %s493
      %p507 = scmp.eq.s32.totalorder %s105, 1
      %p508 = por %p506, %p507
      %p510 = scmp.ne.s32.totalorder %s493, %s509
      %p511 = scmp.eq.s32.totalorder %s105, 0
      %p512 = por %p510, %p511
      %s513 = ssub.s32 %s99, %s106
      %p514 = scmp.eq.s32.totalorder %s513, 0
      %s516 = sadd.s32 %s515, 1
      %s517 = scalar_select %p514, %s515, %s516
      %p520 = pneg %p514
      %p521 = scmp.eq.s32.totalorder %s99, 1
      %p522 = por %p520, %p521
      %p523 = scmp.ne.s32.totalorder %s515, %s518
      %p524 = scmp.eq.s32.totalorder %s99, 0
      %p525 = por %p523, %p524
      %p526 = scmp.ne.s32.totalorder %s515, %s518
      %p527 = scmp.eq.s32.totalorder %s104, 1
      %p528 = por %p526, %p527
      %p529 = scmp.ne.s32.totalorder %s518, %s519
      %p530 = scmp.eq.s32.totalorder %s104, 0
      %p531 = por %p529, %p530
      %p532 = scmp.ne.s32.totalorder %s518, %s519
      %p533 = scmp.eq.s32.totalorder %s105, 1
      %p534 = por %p532, %p533
      %p536 = scmp.ne.s32.totalorder %s519, %s535
      %p537 = scmp.eq.s32.totalorder %s105, 0
      %p538 = por %p536, %p537
      %s539 = ssub.s32 %s99, %s106
      %p540 = scmp.eq.s32.totalorder %s539, 0
      %s542 = sadd.s32 %s541, 1
      %s543 = scalar_select %p540, %s541, %s542
      %p546 = pneg %p540
      %p547 = scmp.eq.s32.totalorder %s99, 1
      %p548 = por %p546, %p547
      %p549 = scmp.ne.s32.totalorder %s541, %s544
      %p550 = scmp.eq.s32.totalorder %s99, 0
      %p551 = por %p549, %p550
      %p552 = scmp.ne.s32.totalorder %s541, %s544
      %p553 = scmp.eq.s32.totalorder %s104, 1
      %p554 = por %p552, %p553
      %p555 = scmp.ne.s32.totalorder %s544, %s545
      %p556 = scmp.eq.s32.totalorder %s104, 0
      %p557 = por %p555, %p556
      %p558 = scmp.ne.s32.totalorder %s544, %s545
      %p559 = scmp.eq.s32.totalorder %s105, 1
      %p560 = por %p558, %p559
      %p562 = scmp.ne.s32.totalorder %s545, %s561
      %p563 = scmp.eq.s32.totalorder %s105, 0
      %p564 = por %p562, %p563
      %s565 = ssub.s32 %s99, %s106
      %p566 = scmp.eq.s32.totalorder %s565, 0
      %s568 = sadd.s32 %s567, 1
      %s569 = scalar_select %p566, %s567, %s568
      %p572 = pneg %p566
      %p573 = scmp.eq.s32.totalorder %s99, 1
      %p574 = por %p572, %p573
      %p575 = scmp.ne.s32.totalorder %s567, %s570
      %p576 = scmp.eq.s32.totalorder %s99, 0
      %p577 = por %p575, %p576
      %p578 = scmp.ne.s32.totalorder %s567, %s570
      %p579 = scmp.eq.s32.totalorder %s104, 1
      %p580 = por %p578, %p579
      %p581 = scmp.ne.s32.totalorder %s570, %s571
      %p582 = scmp.eq.s32.totalorder %s104, 0
      %p583 = por %p581, %p582
      %p584 = scmp.ne.s32.totalorder %s570, %s571
      %p585 = scmp.eq.s32.totalorder %s105, 1
      %p586 = por %p584, %p585
      %p588 = scmp.ne.s32.totalorder %s571, %s587
      %p589 = scmp.eq.s32.totalorder %s105, 0
      %p590 = por %p588, %p589
      %s591 = ssub.s32 %s99, %s106
      %p592 = scmp.eq.s32.totalorder %s591, 0
      %s594 = sadd.s32 %s593, 1
      %s595 = scalar_select %p592, %s593, %s594
      %p598 = pneg %p592
      %p599 = scmp.eq.s32.totalorder %s99, 1
      %p600 = por %p598, %p599
      %p601 = scmp.ne.s32.totalorder %s593, %s596
      %p602 = scmp.eq.s32.totalorder %s99, 0
      %p603 = por %p601, %p602
      %p604 = scmp.ne.s32.totalorder %s593, %s596
      %p605 = scmp.eq.s32.totalorder %s104, 1
      %p606 = por %p604, %p605
      %p607 = scmp.ne.s32.totalorder %s596, %s597
      %p608 = scmp.eq.s32.totalorder %s104, 0
      %p609 = por %p607, %p608
      %p610 = scmp.ne.s32.totalorder %s596, %s597
      %p611 = scmp.eq.s32.totalorder %s105, 1
      %p612 = por %p610, %p611
      %p614 = scmp.ne.s32.totalorder %s597, %s613
      %p615 = scmp.eq.s32.totalorder %s105, 0
      %p616 = por %p614, %p615
      %s617 = ssub.s32 %s99, %s106
      %p618 = scmp.eq.s32.totalorder %s617, 0
      %s620 = sadd.s32 %s619, 1
      %s621 = scalar_select %p618, %s619, %s620
      %p624 = pneg %p618
      %p625 = scmp.eq.s32.totalorder %s99, 1
      %p626 = por %p624, %p625
      %p627 = scmp.ne.s32.totalorder %s619, %s622
      %p628 = scmp.eq.s32.totalorder %s99, 0
      %p629 = por %p627, %p628
      %p630 = scmp.ne.s32.totalorder %s619, %s622
      %p631 = scmp.eq.s32.totalorder %s104, 1
      %p632 = por %p630, %p631
      %p633 = scmp.ne.s32.totalorder %s622, %s623
      %p634 = scmp.eq.s32.totalorder %s104, 0
      %p635 = por %p633, %p634
      %p636 = scmp.ne.s32.totalorder %s622, %s623
      %p637 = scmp.eq.s32.totalorder %s105, 1
      %p638 = por %p636, %p637
      %p640 = scmp.ne.s32.totalorder %s623, %s639
      %p641 = scmp.eq.s32.totalorder %s105, 0
      %p642 = por %p640, %p641
      %s643 = ssub.s32 %s99, %s106
      %p644 = scmp.eq.s32.totalorder %s643, 0
      %s646 = sadd.s32 %s645, 1
      %s647 = scalar_select %p644, %s645, %s646
      %p650 = pneg %p644
      %p651 = scmp.eq.s32.totalorder %s99, 1
      %p652 = por %p650, %p651
      %p653 = scmp.ne.s32.totalorder %s645, %s648
      %p654 = scmp.eq.s32.totalorder %s99, 0
      %p655 = por %p653, %p654
      %p656 = scmp.ne.s32.totalorder %s645, %s648
      %p657 = scmp.eq.s32.totalorder %s104, 1
      %p658 = por %p656, %p657
      %p659 = scmp.ne.s32.totalorder %s648, %s649
      %p660 = scmp.eq.s32.totalorder %s104, 0
      %p661 = por %p659, %p660
      %p662 = scmp.ne.s32.totalorder %s648, %s649
      %p663 = scmp.eq.s32.totalorder %s105, 1
      %p664 = por %p662, %p663
      %p666 = scmp.ne.s32.totalorder %s649, %s665
      %p667 = scmp.eq.s32.totalorder %s105, 0
      %p668 = por %p666, %p667
      %s669 = ssub.s32 %s99, %s106
      %p670 = scmp.eq.s32.totalorder %s669, 0
      %s672 = sadd.s32 %s671, 1
      %s673 = scalar_select %p670, %s671, %s672
      %p676 = pneg %p670
      %p677 = scmp.eq.s32.totalorder %s99, 1
      %p678 = por %p676, %p677
      %p679 = scmp.ne.s32.totalorder %s671, %s674
      %p680 = scmp.eq.s32.totalorder %s99, 0
      %p681 = por %p679, %p680
      %p682 = scmp.ne.s32.totalorder %s671, %s674
      %p683 = scmp.eq.s32.totalorder %s104, 1
      %p684 = por %p682, %p683
      %p685 = scmp.ne.s32.totalorder %s674, %s675
      %p686 = scmp.eq.s32.totalorder %s104, 0
      %p687 = por %p685, %p686
      %p688 = scmp.ne.s32.totalorder %s674, %s675
      %p689 = scmp.eq.s32.totalorder %s105, 1
      %p690 = por %p688, %p689
      %p692 = scmp.ne.s32.totalorder %s675, %s691
      %p693 = scmp.eq.s32.totalorder %s105, 0
      %p694 = por %p692, %p693
      %s695 = ssub.s32 %s99, %s106
      %p696 = scmp.eq.s32.totalorder %s695, 0
      %s698 = sadd.s32 %s697, 1
      %s699 = scalar_select %p696, %s697, %s698
      %p702 = pneg %p696
      %p703 = scmp.eq.s32.totalorder %s99, 1
      %p704 = por %p702, %p703
      %p705 = scmp.ne.s32.totalorder %s697, %s700
      %p706 = scmp.eq.s32.totalorder %s99, 0
      %p707 = por %p705, %p706
      %p708 = scmp.ne.s32.totalorder %s697, %s700
      %p709 = scmp.eq.s32.totalorder %s104, 1
      %p710 = por %p708, %p709
      %p711 = scmp.ne.s32.totalorder %s700, %s701
      %p712 = scmp.eq.s32.totalorder %s104, 0
      %p713 = por %p711, %p712
      %p714 = scmp.ne.s32.totalorder %s700, %s701
      %p715 = scmp.eq.s32.totalorder %s105, 1
      %p716 = por %p714, %p715
      %p718 = scmp.ne.s32.totalorder %s701, %s717
      %p719 = scmp.eq.s32.totalorder %s105, 0
      %p720 = por %p718, %p719
      %s721 = ssub.s32 %s99, %s106
      %p722 = scmp.eq.s32.totalorder %s721, 0
      %s724 = sadd.s32 %s723, 1
      %s725 = scalar_select %p722, %s723, %s724
      %p728 = pneg %p722
      %p729 = scmp.eq.s32.totalorder %s99, 1
      %p730 = por %p728, %p729
      %p731 = scmp.ne.s32.totalorder %s723, %s726
      %p732 = scmp.eq.s32.totalorder %s99, 0
      %p733 = por %p731, %p732
      %p734 = scmp.ne.s32.totalorder %s723, %s726
      %p735 = scmp.eq.s32.totalorder %s104, 1
      %p736 = por %p734, %p735
      %p737 = scmp.ne.s32.totalorder %s726, %s727
      %p738 = scmp.eq.s32.totalorder %s104, 0
      %p739 = por %p737, %p738
      %p740 = scmp.ne.s32.totalorder %s726, %s727
      %p741 = scmp.eq.s32.totalorder %s105, 1
      %p742 = por %p740, %p741
      %p744 = scmp.ne.s32.totalorder %s727, %s743
      %p745 = scmp.eq.s32.totalorder %s105, 0
      %p746 = por %p744, %p745
      %s747 = ssub.s32 %s99, %s106
      %p748 = scmp.eq.s32.totalorder %s747, 0
      %s750 = sadd.s32 %s749, 1
      %s751 = scalar_select %p748, %s749, %s750
      %p754 = pneg %p748
      %p755 = scmp.eq.s32.totalorder %s99, 1
      %p756 = por %p754, %p755
      %p757 = scmp.ne.s32.totalorder %s749, %s752
      %p758 = scmp.eq.s32.totalorder %s99, 0
      %p759 = por %p757, %p758
      %p760 = scmp.ne.s32.totalorder %s749, %s752
      %p761 = scmp.eq.s32.totalorder %s104, 1
      %p762 = por %p760, %p761
      %p763 = scmp.ne.s32.totalorder %s752, %s753
      %p764 = scmp.eq.s32.totalorder %s104, 0
      %p765 = por %p763, %p764
      %p766 = scmp.ne.s32.totalorder %s752, %s753
      %p767 = scmp.eq.s32.totalorder %s105, 1
      %p768 = por %p766, %p767
      %p770 = scmp.ne.s32.totalorder %s753, %s769
      %p771 = scmp.eq.s32.totalorder %s105, 0
      %p772 = por %p770, %p771
      %s773 = ssub.s32 %s99, %s106
      %p774 = scmp.eq.s32.totalorder %s773, 0
      %s776 = sadd.s32 %s775, 1
      %s777 = scalar_select %p774, %s775, %s776
      %p780 = pneg %p774
      %p781 = scmp.eq.s32.totalorder %s99, 1
      %p782 = por %p780, %p781
      %p783 = scmp.ne.s32.totalorder %s775, %s778
      %p784 = scmp.eq.s32.totalorder %s99, 0
      %p785 = por %p783, %p784
      %p786 = scmp.ne.s32.totalorder %s775, %s778
      %p787 = scmp.eq.s32.totalorder %s104, 1
      %p788 = por %p786, %p787
      %p789 = scmp.ne.s32.totalorder %s778, %s779
      %p790 = scmp.eq.s32.totalorder %s104, 0
      %p791 = por %p789, %p790
      %p792 = scmp.ne.s32.totalorder %s778, %s779
      %p793 = scmp.eq.s32.totalorder %s105, 1
      %p794 = por %p792, %p793
      %p796 = scmp.ne.s32.totalorder %s779, %s795
      %p797 = scmp.eq.s32.totalorder %s105, 0
      %p798 = por %p796, %p797
      %s799 = ssub.s32 %s99, %s106
      %p800 = scmp.eq.s32.totalorder %s799, 0
      %s802 = sadd.s32 %s801, 1
      %s803 = scalar_select %p800, %s801, %s802
      %p806 = pneg %p800
      %p807 = scmp.eq.s32.totalorder %s99, 1
      %p808 = por %p806, %p807
      %p809 = scmp.ne.s32.totalorder %s801, %s804
      %p810 = scmp.eq.s32.totalorder %s99, 0
      %p811 = por %p809, %p810
      %p812 = scmp.ne.s32.totalorder %s801, %s804
      %p813 = scmp.eq.s32.totalorder %s104, 1
      %p814 = por %p812, %p813
      %p815 = scmp.ne.s32.totalorder %s804, %s805
      %p816 = scmp.eq.s32.totalorder %s104, 0
      %p817 = por %p815, %p816
      %p818 = scmp.ne.s32.totalorder %s804, %s805
      %p819 = scmp.eq.s32.totalorder %s105, 1
      %p820 = por %p818, %p819
      %p822 = scmp.ne.s32.totalorder %s805, %s821
      %p823 = scmp.eq.s32.totalorder %s105, 0
      %p824 = por %p822, %p823
      %s825 = ssub.s32 %s99, %s106
      %p826 = scmp.eq.s32.totalorder %s825, 0
      %s828 = sadd.s32 %s827, 1
      %s829 = scalar_select %p826, %s827, %s828
      %p832 = pneg %p826
      %p833 = scmp.eq.s32.totalorder %s99, 1
      %p834 = por %p832, %p833
      %p835 = scmp.ne.s32.totalorder %s827, %s830
      %p836 = scmp.eq.s32.totalorder %s99, 0
      %p837 = por %p835, %p836
      %p838 = scmp.ne.s32.totalorder %s827, %s830
      %p839 = scmp.eq.s32.totalorder %s104, 1
      %p840 = por %p838, %p839
      %p841 = scmp.ne.s32.totalorder %s830, %s831
      %p842 = scmp.eq.s32.totalorder %s104, 0
      %p843 = por %p841, %p842
      %p844 = scmp.ne.s32.totalorder %s830, %s831
      %p845 = scmp.eq.s32.totalorder %s105, 1
      %p846 = por %p844, %p845
      %p848 = scmp.ne.s32.totalorder %s831, %s847
      %p849 = scmp.eq.s32.totalorder %s105, 0
      %p850 = por %p848, %p849
      %s851 = ssub.s32 %s99, %s106
      %p852 = scmp.eq.s32.totalorder %s851, 0
      %s854 = sadd.s32 %s853, 1
      %s855 = scalar_select %p852, %s853, %s854
      %p858 = pneg %p852
      %p859 = scmp.eq.s32.totalorder %s99, 1
      %p860 = por %p858, %p859
      %p861 = scmp.ne.s32.totalorder %s853, %s856
      %p862 = scmp.eq.s32.totalorder %s99, 0
      %p863 = por %p861, %p862
      %p864 = scmp.ne.s32.totalorder %s853, %s856
      %p865 = scmp.eq.s32.totalorder %s104, 1
      %p866 = por %p864, %p865
      %p867 = scmp.ne.s32.totalorder %s856, %s857
      %p868 = scmp.eq.s32.totalorder %s104, 0
      %p869 = por %p867, %p868
      %p870 = scmp.ne.s32.totalorder %s856, %s857
      %p871 = scmp.eq.s32.totalorder %s105, 1
      %p872 = por %p870, %p871
      %p874 = scmp.ne.s32.totalorder %s857, %s873
      %p875 = scmp.eq.s32.totalorder %s105, 0
      %p876 = por %p874, %p875
      %s877 = ssub.s32 %s99, %s106
      %p878 = scmp.eq.s32.totalorder %s877, 0
      %s880 = sadd.s32 %s879, 1
      %s881 = scalar_select %p878, %s879, %s880
      %p884 = pneg %p878
      %p885 = scmp.eq.s32.totalorder %s99, 1
      %p886 = por %p884, %p885
      %p887 = scmp.ne.s32.totalorder %s879, %s882
      %p888 = scmp.eq.s32.totalorder %s99, 0
      %p889 = por %p887, %p888
      %p890 = scmp.ne.s32.totalorder %s879, %s882
      %p891 = scmp.eq.s32.totalorder %s104, 1
      %p892 = por %p890, %p891
      %p893 = scmp.ne.s32.totalorder %s882, %s883
      %p894 = scmp.eq.s32.totalorder %s104, 0
      %p895 = por %p893, %p894
      %p896 = scmp.ne.s32.totalorder %s882, %s883
      %p897 = scmp.eq.s32.totalorder %s105, 1
      %p898 = por %p896, %p897
      %p900 = scmp.ne.s32.totalorder %s883, %s899
      %p901 = scmp.eq.s32.totalorder %s105, 0
      %p902 = por %p900, %p901
      %s903 = ssub.s32 %s99, %s106
      %p904 = scmp.eq.s32.totalorder %s903, 0
      %s906 = sadd.s32 %s905, 1
      %s907 = scalar_select %p904, %s905, %s906
      %p910 = pneg %p904
      %p911 = scmp.eq.s32.totalorder %s99, 1
      %p912 = por %p910, %p911
      %p913 = scmp.ne.s32.totalorder %s905, %s908
      %p914 = scmp.eq.s32.totalorder %s99, 0
      %p915 = por %p913, %p914
      %p916 = scmp.ne.s32.totalorder %s905, %s908
      %p917 = scmp.eq.s32.totalorder %s104, 1
      %p918 = por %p916, %p917
      %p919 = scmp.ne.s32.totalorder %s908, %s909
      %p920 = scmp.eq.s32.totalorder %s104, 0
      %p921 = por %p919, %p920
      %p922 = scmp.ne.s32.totalorder %s908, %s909
      %p923 = scmp.eq.s32.totalorder %s105, 1
      %p924 = por %p922, %p923
      %p926 = scmp.ne.s32.totalorder %s909, %s925
      %p927 = scmp.eq.s32.totalorder %s105, 0
      %p928 = por %p926, %p927
      %s929 = ssub.s32 %s99, %s106
      %p930 = scmp.eq.s32.totalorder %s929, 0
      %s932 = sadd.s32 %s931, 1
      %s933 = scalar_select %p930, %s931, %s932
      %p936 = pneg %p930
      %p937 = scmp.eq.s32.totalorder %s99, 1
      %p938 = por %p936, %p937
      %p939 = scmp.ne.s32.totalorder %s931, %s934
      %p940 = scmp.eq.s32.totalorder %s99, 0
      %p941 = por %p939, %p940
      %p942 = scmp.ne.s32.totalorder %s931, %s934
      %p943 = scmp.eq.s32.totalorder %s104, 1
      %p944 = por %p942, %p943
      %p945 = scmp.ne.s32.totalorder %s934, %s935
      %p946 = scmp.eq.s32.totalorder %s104, 0
      %p947 = por %p945, %p946
      %p948 = scmp.ne.s32.totalorder %s934, %s935
      %p949 = scmp.eq.s32.totalorder %s105, 1
      %p950 = por %p948, %p949
      %p952 = scmp.ne.s32.totalorder %s935, %s951
      %p953 = scmp.eq.s32.totalorder %s105, 0
      %p954 = por %p952, %p953
      %s955 = ssub.s32 %s99, %s106
      %p956 = scmp.eq.s32.totalorder %s955, 0
      %s958 = sadd.s32 %s957, 1
      %s959 = scalar_select %p956, %s957, %s958
      %p962 = pneg %p956
      %p963 = scmp.eq.s32.totalorder %s99, 1
      %p964 = por %p962, %p963
      %p965 = scmp.ne.s32.totalorder %s957, %s960
      %p966 = scmp.eq.s32.totalorder %s99, 0
      %p967 = por %p965, %p966
      %p968 = scmp.ne.s32.totalorder %s957, %s960
      %p969 = scmp.eq.s32.totalorder %s104, 1
      %p970 = por %p968, %p969
      %p971 = scmp.ne.s32.totalorder %s960, %s961
      %p972 = scmp.eq.s32.totalorder %s104, 0
      %p973 = por %p971, %p972
      %p974 = scmp.ne.s32.totalorder %s960, %s961
      %p975 = scmp.eq.s32.totalorder %s105, 1
      %p976 = por %p974, %p975
      %p978 = scmp.ne.s32.totalorder %s961, %s977
      %p979 = scmp.eq.s32.totalorder %s105, 0
      %p980 = por %p978, %p979
      %s981 = ssub.s32 %s99, %s106
      %p982 = scmp.eq.s32.totalorder %s981, 0
      %s984 = sadd.s32 %s983, 1
      %s985 = scalar_select %p982, %s983, %s984
      %p988 = pneg %p982
      %p989 = scmp.eq.s32.totalorder %s99, 1
      %p990 = por %p988, %p989
      %p991 = scmp.ne.s32.totalorder %s983, %s986
      %p992 = scmp.eq.s32.totalorder %s99, 0
      %p993 = por %p991, %p992
      %p994 = scmp.ne.s32.totalorder %s983, %s986
      %p995 = scmp.eq.s32.totalorder %s104, 1
      %p996 = por %p994, %p995
      %p997 = scmp.ne.s32.totalorder %s986, %s987
      %p998 = scmp.eq.s32.totalorder %s104, 0
      %p999 = por %p997, %p998
      %p1000 = scmp.ne.s32.totalorder %s986, %s987
      %p1001 = scmp.eq.s32.totalorder %s105, 1
      %p1002 = por %p1000, %p1001
      %p1004 = scmp.ne.s32.totalorder %s987, %s1003
      %p1005 = scmp.eq.s32.totalorder %s105, 0
      %p1006 = por %p1004, %p1005
      %s1007 = ssub.s32 %s99, %s106
      %p1008 = scmp.eq.s32.totalorder %s1007, 0
      %s1010 = sadd.s32 %s1009, 1
      %s1011 = scalar_select %p1008, %s1009, %s1010
      %p1014 = pneg %p1008
      %p1015 = scmp.eq.s32.totalorder %s99, 1
      %p1016 = por %p1014, %p1015
      %p1017 = scmp.ne.s32.totalorder %s1009, %s1012
      %p1018 = scmp.eq.s32.totalorder %s99, 0
      %p1019 = por %p1017, %p1018
      %p1020 = scmp.ne.s32.totalorder %s1009, %s1012
      %p1021 = scmp.eq.s32.totalorder %s104, 1
      %p1022 = por %p1020, %p1021
      %p1023 = scmp.ne.s32.totalorder %s1012, %s1013
      %p1024 = scmp.eq.s32.totalorder %s104, 0
      %p1025 = por %p1023, %p1024
      %p1026 = scmp.ne.s32.totalorder %s1012, %s1013
      %p1027 = scmp.eq.s32.totalorder %s105, 1
      %p1028 = por %p1026, %p1027
      %p1030 = scmp.ne.s32.totalorder %s1013, %s1029
      %p1031 = scmp.eq.s32.totalorder %s105, 0
      %p1032 = por %p1030, %p1031
      %s1033 = ssub.s32 %s99, %s106
      %p1034 = scmp.eq.s32.totalorder %s1033, 0
      %s1036 = sadd.s32 %s1035, 1
      %s1037 = scalar_select %p1034, %s1035, %s1036
      %p1040 = pneg %p1034
      %p1041 = scmp.eq.s32.totalorder %s99, 1
      %p1042 = por %p1040, %p1041
      %p1043 = scmp.ne.s32.totalorder %s1035, %s1038
      %p1044 = scmp.eq.s32.totalorder %s99, 0
      %p1045 = por %p1043, %p1044
      %p1046 = scmp.ne.s32.totalorder %s1035, %s1038
      %p1047 = scmp.eq.s32.totalorder %s104, 1
      %p1048 = por %p1046, %p1047
      %p1049 = scmp.ne.s32.totalorder %s1038, %s1039
      %p1050 = scmp.eq.s32.totalorder %s104, 0
      %p1051 = por %p1049, %p1050
      %p1052 = scmp.ne.s32.totalorder %s1038, %s1039
      %p1053 = scmp.eq.s32.totalorder %s105, 1
      %p1054 = por %p1052, %p1053
      %p1056 = scmp.ne.s32.totalorder %s1039, %s1055
      %p1057 = scmp.eq.s32.totalorder %s105, 0
      %p1058 = por %p1056, %p1057
      %s1059 = ssub.s32 %s99, %s106
      %p1060 = scmp.eq.s32.totalorder %s1059, 0
      %s1062 = sadd.s32 %s1061, 1
      %s1063 = scalar_select %p1060, %s1061, %s1062
      %p1066 = pneg %p1060
      %p1067 = scmp.eq.s32.totalorder %s99, 1
      %p1068 = por %p1066, %p1067
      %p1069 = scmp.ne.s32.totalorder %s1061, %s1064
      %p1070 = scmp.eq.s32.totalorder %s99, 0
      %p1071 = por %p1069, %p1070
      %p1072 = scmp.ne.s32.totalorder %s1061, %s1064
      %p1073 = scmp.eq.s32.totalorder %s104, 1
      %p1074 = por %p1072, %p1073
      %p1075 = scmp.ne.s32.totalorder %s1064, %s1065
      %p1076 = scmp.eq.s32.totalorder %s104, 0
      %p1077 = por %p1075, %p1076
      %p1078 = scmp.ne.s32.totalorder %s1064, %s1065
      %p1079 = scmp.eq.s32.totalorder %s105, 1
      %p1080 = por %p1078, %p1079
      %p1082 = scmp.ne.s32.totalorder %s1065, %s1081
      %p1083 = scmp.eq.s32.totalorder %s105, 0
      %p1084 = por %p1082, %p1083
      %s1085 = ssub.s32 %s99, %s106
      %p1086 = scmp.eq.s32.totalorder %s1085, 0
      %s1088 = sadd.s32 %s1087, 1
      %s1089 = scalar_select %p1086, %s1087, %s1088
      %p1092 = pneg %p1086
      %p1093 = scmp.eq.s32.totalorder %s99, 1
      %p1094 = por %p1092, %p1093
      %p1095 = scmp.ne.s32.totalorder %s1087, %s1090
      %p1096 = scmp.eq.s32.totalorder %s99, 0
      %p1097 = por %p1095, %p1096
      %p1098 = scmp.ne.s32.totalorder %s1087, %s1090
      %p1099 = scmp.eq.s32.totalorder %s104, 1
      %p1100 = por %p1098, %p1099
      %p1101 = scmp.ne.s32.totalorder %s1090, %s1091
      %p1102 = scmp.eq.s32.totalorder %s104, 0
      %p1103 = por %p1101, %p1102
      %p1104 = scmp.ne.s32.totalorder %s1090, %s1091
      %p1105 = scmp.eq.s32.totalorder %s105, 1
      %p1106 = por %p1104, %p1105
      %p1108 = scmp.ne.s32.totalorder %s1091, %s1107
      %p1109 = scmp.eq.s32.totalorder %s105, 0
      %p1110 = por %p1108, %p1109
      %s1111 = ssub.s32 %s99, %s106
      %p1112 = scmp.eq.s32.totalorder %s1111, 0
      %s1114 = sadd.s32 %s1113, 1
      %s1115 = scalar_select %p1112, %s1113, %s1114
      %p1118 = pneg %p1112
      %p1119 = scmp.eq.s32.totalorder %s99, 1
      %p1120 = por %p1118, %p1119
      %p1121 = scmp.ne.s32.totalorder %s1113, %s1116
      %p1122 = scmp.eq.s32.totalorder %s99, 0
      %p1123 = por %p1121, %p1122
      %p1124 = scmp.ne.s32.totalorder %s1113, %s1116
      %p1125 = scmp.eq.s32.totalorder %s104, 1
      %p1126 = por %p1124, %p1125
      %p1127 = scmp.ne.s32.totalorder %s1116, %s1117
      %p1128 = scmp.eq.s32.totalorder %s104, 0
      %p1129 = por %p1127, %p1128
      %p1130 = scmp.ne.s32.totalorder %s1116, %s1117
      %p1131 = scmp.eq.s32.totalorder %s105, 1
      %p1132 = por %p1130, %p1131
      %p1134 = scmp.ne.s32.totalorder %s1117, %s1133
      %p1135 = scmp.eq.s32.totalorder %s105, 0
      %p1136 = por %p1134, %p1135
      %s1138 = sadd.s32 %s1137, 1
      %p1141 = scmp.eq.s32.totalorder %s99, 1
      %p1142 = scmp.ne.s32.totalorder %s1137, %s1139
      %p1143 = scmp.eq.s32.totalorder %s99, 0
      %p1144 = por %p1142, %p1143
      %p1145 = scmp.ne.s32.totalorder %s1137, %s1139
      %p1146 = scmp.eq.s32.totalorder %s104, 1
      %p1147 = por %p1145, %p1146
      %p1148 = scmp.ne.s32.totalorder %s1139, %s1140
      %p1149 = scmp.eq.s32.totalorder %s104, 0
      %p1150 = por %p1148, %p1149
      %p1151 = scmp.ne.s32.totalorder %s1139, %s1140
      %p1152 = scmp.eq.s32.totalorder %s105, 1
      %p1153 = por %p1151, %p1152
      %p1155 = scmp.ne.s32.totalorder %s1140, %s1154
      %p1156 = scmp.eq.s32.totalorder %s105, 0
      %p1157 = por %p1155, %p1156
      %s1159 = sadd.s32 %s1158, 1
      %p1162 = scmp.eq.s32.totalorder %s99, 1
      %p1163 = scmp.ne.s32.totalorder %s1158, %s1160
      %p1164 = scmp.eq.s32.totalorder %s99, 0
      %p1165 = por %p1163, %p1164
      %p1166 = scmp.ne.s32.totalorder %s1158, %s1160
      %p1167 = scmp.eq.s32.totalorder %s104, 1
      %p1168 = por %p1166, %p1167
      %p1169 = scmp.ne.s32.totalorder %s1160, %s1161
      %p1170 = scmp.eq.s32.totalorder %s104, 0
      %p1171 = por %p1169, %p1170
      %p1172 = scmp.ne.s32.totalorder %s1160, %s1161
      %p1173 = scmp.eq.s32.totalorder %s105, 1
      %p1174 = por %p1172, %p1173
      %p1176 = scmp.ne.s32.totalorder %s1161, %s1175
      %p1177 = scmp.eq.s32.totalorder %s105, 0
      %p1178 = por %p1176, %p1177
      %s1180 = sadd.s32 %s1179, 1
      %p1183 = scmp.eq.s32.totalorder %s99, 1
      %p1184 = scmp.ne.s32.totalorder %s1179, %s1181
      %p1185 = scmp.eq.s32.totalorder %s99, 0
      %p1186 = por %p1184, %p1185
      %p1187 = scmp.ne.s32.totalorder %s1179, %s1181
      %p1188 = scmp.eq.s32.totalorder %s104, 1
      %p1189 = por %p1187, %p1188
      %p1190 = scmp.ne.s32.totalorder %s1181, %s1182
      %p1191 = scmp.eq.s32.totalorder %s104, 0
      %p1192 = por %p1190, %p1191
      %p1193 = scmp.ne.s32.totalorder %s1181, %s1182
      %p1194 = scmp.eq.s32.totalorder %s105, 1
      %p1195 = por %p1193, %p1194
      %p1197 = scmp.ne.s32.totalorder %s1182, %s1196
      %p1198 = scmp.eq.s32.totalorder %s105, 0
      %p1199 = por %p1197, %p1198
      %s1201 = sadd.s32 %s1200, 1
      %p1204 = scmp.eq.s32.totalorder %s99, 1
      %p1205 = scmp.ne.s32.totalorder %s1200, %s1202
      %p1206 = scmp.eq.s32.totalorder %s99, 0
      %p1207 = por %p1205, %p1206
      %p1208 = scmp.ne.s32.totalorder %s1200, %s1202
      %p1209 = scmp.eq.s32.totalorder %s104, 1
      %p1210 = por %p1208, %p1209
      %p1211 = scmp.ne.s32.totalorder %s1202, %s1203
      %p1212 = scmp.eq.s32.totalorder %s104, 0
      %p1213 = por %p1211, %p1212
      %p1214 = scmp.ne.s32.totalorder %s1202, %s1203
      %p1215 = scmp.eq.s32.totalorder %s105, 1
      %p1216 = por %p1214, %p1215
      %p1218 = scmp.ne.s32.totalorder %s1203, %s1217
      %p1219 = scmp.eq.s32.totalorder %s105, 0
      %p1220 = por %p1218, %p1219
      %s1222 = sadd.s32 %s1221, 1
      %p1225 = scmp.eq.s32.totalorder %s99, 1
      %p1226 = scmp.ne.s32.totalorder %s1221, %s1223
      %p1227 = scmp.eq.s32.totalorder %s99, 0
      %p1228 = por %p1226, %p1227
      %p1229 = scmp.ne.s32.totalorder %s1221, %s1223
      %p1230 = scmp.eq.s32.totalorder %s104, 1
      %p1231 = por %p1229, %p1230
      %p1232 = scmp.ne.s32.totalorder %s1223, %s1224
      %p1233 = scmp.eq.s32.totalorder %s104, 0
      %p1234 = por %p1232, %p1233
      %p1235 = scmp.ne.s32.totalorder %s1223, %s1224
      %p1236 = scmp.eq.s32.totalorder %s105, 1
      %p1237 = por %p1235, %p1236
      %p1239 = scmp.ne.s32.totalorder %s1224, %s1238
      %p1240 = scmp.eq.s32.totalorder %s105, 0
      %p1241 = por %p1239, %p1240
      %s1243 = sadd.s32 %s1242, 1
      %p1246 = scmp.eq.s32.totalorder %s99, 1
      %p1247 = scmp.ne.s32.totalorder %s1242, %s1244
      %p1248 = scmp.eq.s32.totalorder %s99, 0
      %p1249 = por %p1247, %p1248
      %p1250 = scmp.ne.s32.totalorder %s1242, %s1244
      %p1251 = scmp.eq.s32.totalorder %s104, 1
      %p1252 = por %p1250, %p1251
      %p1253 = scmp.ne.s32.totalorder %s1244, %s1245
      %p1254 = scmp.eq.s32.totalorder %s104, 0
      %p1255 = por %p1253, %p1254
      %p1256 = scmp.ne.s32.totalorder %s1244, %s1245
      %p1257 = scmp.eq.s32.totalorder %s105, 1
      %p1258 = por %p1256, %p1257
      %p1260 = scmp.ne.s32.totalorder %s1245, %s1259
      %p1261 = scmp.eq.s32.totalorder %s105, 0
      %p1262 = por %p1260, %p1261
      %p1263 = scmp.le.s32.totalorder 1, %s99
      %p1264 = scmp.lt.s32.totalorder %s99, 3
      %p1265 = pnand %p1263, %p1264
      %p1266 = pneg %p1265
      // Predicated region
      $region9: #{encoder_forward.1} parent=5 // pred_check
        _
      $region10: #{encoder_forward.1} parent=5 // pred_check_branch
        %1268 = sbr.rel (%p1265) target = $region12
      $region11: #{encoder_forward.1} parent=5 // pred_region
        %s1269 = ssub.s32 %s99, 1
        // Predicated region
        $region13: #{encoder_forward.1} parent=11 // pred_check
          %p1270 = pneg %p120
        $region14: #{encoder_forward.1} parent=11 // pred_check_branch
          %1272 = sbr.rel (%p1270) target = $region16
        $region15: #{encoder_forward.1} parent=11 // pred_region
          _
        $region16: #{encoder_forward.1} parent=11 // pred_fallthru
          _
        // Predicated region
        $region17: #{encoder_forward.1} parent=11 // pred_check
          %p1273 = pneg %p141
        $region18: #{encoder_forward.1} parent=11 // pred_check_branch
          %1275 = sbr.rel (%p1273) target = $region20
        $region19: #{encoder_forward.1} parent=11 // pred_region
          _
        $region20: #{encoder_forward.1} parent=11 // pred_fallthru
          _
        // Predicated region
        $region21: #{encoder_forward.1} parent=11 // pred_check
          %p1276 = pneg %p1150
        $region22: #{encoder_forward.1} parent=11 // pred_check_branch
          %1278 = sbr.rel (%p1276) target = $region24
        $region23: #{encoder_forward.1} parent=11 // pred_region
          _
        $region24: #{encoder_forward.1} parent=11 // pred_fallthru
          _
        // Predicated region
        $region25: #{encoder_forward.1} parent=11 // pred_check
          %p1279 = pneg %p1171
        $region26: #{encoder_forward.1} parent=11 // pred_check_branch
          %1281 = sbr.rel (%p1279) target = $region28
        $region27: #{encoder_forward.1} parent=11 // pred_region
          _
        $region28: #{encoder_forward.1} parent=11 // pred_fallthru
          _
        // Predicated region
        $region29: #{encoder_forward.1} parent=11 // pred_check
          %p1282 = pneg %p1192
        $region30: #{encoder_forward.1} parent=11 // pred_check_branch
          %1284 = sbr.rel (%p1282) target = $region32
        $region31: #{encoder_forward.1} parent=11 // pred_region
          _
        $region32: #{encoder_forward.1} parent=11 // pred_fallthru
          _
        // Predicated region
        $region33: #{encoder_forward.1} parent=11 // pred_check
          %p1285 = pneg %p1213
        $region34: #{encoder_forward.1} parent=11 // pred_check_branch
          %1287 = sbr.rel (%p1285) target = $region36
        $region35: #{encoder_forward.1} parent=11 // pred_region
          _
        $region36: #{encoder_forward.1} parent=11 // pred_fallthru
          _
      $region12: #{encoder_forward.1} parent=5 // pred_fallthru
        _
      %p1288 = scmp.lt.s32.totalorder %s99, 2
      // Predicated region
      $region37: #{encoder_forward.1} parent=5 // pred_check
        %p1289 = pneg %p1288
      $region38: #{encoder_forward.1} parent=5 // pred_check_branch
        %1291 = sbr.rel (%p1289) target = $region40
      $region39: #{encoder_forward.1} parent=5 // pred_region
        // Predicated region
        $region41: #{encoder_forward.1} parent=39 // pred_check
          %p1292 = pneg %p161
        $region42: #{encoder_forward.1} parent=39 // pred_check_branch
          %1294 = sbr.rel (%p1292) target = $region44
        $region43: #{encoder_forward.1} parent=39 // pred_region
          %p1295 = scmp.lt.s32.totalorder %s99, 1
          %s1296 = scalar_select %p1295, %s99, 1
          %s1297 = scalar_lea.vmem %s5, %s1296
        $region44: #{encoder_forward.1} parent=39 // pred_fallthru
          _
        // Predicated region
        $region45: #{encoder_forward.1} parent=39 // pred_check
          %p1298 = pneg %p187
        $region46: #{encoder_forward.1} parent=39 // pred_check_branch
          %1300 = sbr.rel (%p1298) target = $region48
        $region47: #{encoder_forward.1} parent=39 // pred_region
          %p1301 = scmp.lt.s32.totalorder %s99, 1
          %s1302 = scalar_select %p1301, %s99, 1
          %s1303 = scalar_lea.vmem %s7, %s1302
        $region48: #{encoder_forward.1} parent=39 // pred_fallthru
          _
        // Predicated region
        $region49: #{encoder_forward.1} parent=39 // pred_check
          %p1304 = pneg %p213
        $region50: #{encoder_forward.1} parent=39 // pred_check_branch
          %1306 = sbr.rel (%p1304) target = $region52
        $region51: #{encoder_forward.1} parent=39 // pred_region
          %p1307 = scmp.lt.s32.totalorder %s99, 1
          %s1308 = scalar_select %p1307, %s99, 1
          %s1309 = scalar_lea.vmem %s9, %s1308
        $region52: #{encoder_forward.1} parent=39 // pred_fallthru
          _
        // Predicated region
        $region53: #{encoder_forward.1} parent=39 // pred_check
          %p1310 = pneg %p239
        $region54: #{encoder_forward.1} parent=39 // pred_check_branch
          %1312 = sbr.rel (%p1310) target = $region56
        $region55: #{encoder_forward.1} parent=39 // pred_region
          %p1313 = scmp.lt.s32.totalorder %s99, 1
          %s1314 = scalar_select %p1313, %s99, 1
          %s1315 = scalar_lea.vmem %s11, %s1314
        $region56: #{encoder_forward.1} parent=39 // pred_fallthru
          _
        // Predicated region
        $region57: #{encoder_forward.1} parent=39 // pred_check
          %p1316 = pneg %p265
        $region58: #{encoder_forward.1} parent=39 // pred_check_branch
          %1318 = sbr.rel (%p1316) target = $region60
        $region59: #{encoder_forward.1} parent=39 // pred_region
          %p1319 = scmp.lt.s32.totalorder %s99, 1
          %s1320 = scalar_select %p1319, %s99, 1
          %s1321 = scalar_lea.vmem %s13, %s1320
        $region60: #{encoder_forward.1} parent=39 // pred_fallthru
          _
        // Predicated region
        $region61: #{encoder_forward.1} parent=39 // pred_check
          %p1322 = pneg %p291
        $region62: #{encoder_forward.1} parent=39 // pred_check_branch
          %1324 = sbr.rel (%p1322) target = $region64
        $region63: #{encoder_forward.1} parent=39 // pred_region
          %p1325 = scmp.lt.s32.totalorder %s99, 1
          %s1326 = scalar_select %p1325, %s99, 1
          %s1327 = scalar_lea.vmem %s15, %s1326
        $region64: #{encoder_forward.1} parent=39 // pred_fallthru
          _
        // Predicated region
        $region65: #{encoder_forward.1} parent=39 // pred_check
          %p1328 = pneg %p317
        $region66: #{encoder_forward.1} parent=39 // pred_check_branch
          %1330 = sbr.rel (%p1328) target = $region68
        $region67: #{encoder_forward.1} parent=39 // pred_region
          %p1331 = scmp.lt.s32.totalorder %s99, 1
          %s1332 = scalar_select %p1331, %s99, 1
          %s1333 = scalar_lea.vmem %s17, %s1332
        $region68: #{encoder_forward.1} parent=39 // pred_fallthru
          _
        // Predicated region
        $region69: #{encoder_forward.1} parent=39 // pred_check
          %p1334 = pneg %p343
        $region70: #{encoder_forward.1} parent=39 // pred_check_branch
          %1336 = sbr.rel (%p1334) target = $region72
        $region71: #{encoder_forward.1} parent=39 // pred_region
          %p1337 = scmp.lt.s32.totalorder %s99, 1
          %s1338 = scalar_select %p1337, %s99, 1
          %s1339 = scalar_lea.vmem %s19, %s1338
        $region72: #{encoder_forward.1} parent=39 // pred_fallthru
          _
        // Predicated region
        $region73: #{encoder_forward.1} parent=39 // pred_check
          %p1340 = pneg %p369
        $region74: #{encoder_forward.1} parent=39 // pred_check_branch
          %1342 = sbr.rel (%p1340) target = $region76
        $region75: #{encoder_forward.1} parent=39 // pred_region
          %p1343 = scmp.lt.s32.totalorder %s99, 1
          %s1344 = scalar_select %p1343, %s99, 1
          %s1345 = smul.addr %s1344, 4
          %s1346 = smul.addr %s1345, 4
          %s1347 = scalar_lea.vmem %s21, %s1346
        $region76: #{encoder_forward.1} parent=39 // pred_fallthru
          _
        // Predicated region
        $region77: #{encoder_forward.1} parent=39 // pred_check
          %p1348 = pneg %p395
        $region78: #{encoder_forward.1} parent=39 // pred_check_branch
          %1350 = sbr.rel (%p1348) target = $region80
        $region79: #{encoder_forward.1} parent=39 // pred_region
          %p1351 = scmp.lt.s32.totalorder %s99, 1
          %s1352 = scalar_select %p1351, %s99, 1
          %s1353 = smul.addr %s1352, 8
          %s1354 = smul.addr %s1353, 4
          %s1355 = scalar_lea.vmem %s23, %s1354
        $region80: #{encoder_forward.1} parent=39 // pred_fallthru
          _
        // Predicated region
        $region81: #{encoder_forward.1} parent=39 // pred_check
          %p1356 = pneg %p421
        $region82: #{encoder_forward.1} parent=39 // pred_check_branch
          %1358 = sbr.rel (%p1356) target = $region84
        $region83: #{encoder_forward.1} parent=39 // pred_region
          %p1359 = scmp.lt.s32.totalorder %s99, 1
          %s1360 = scalar_select %p1359, %s99, 1
          %s1361 = smul.addr %s1360, 4
          %s1362 = smul.addr %s1361, 4
          %s1363 = scalar_lea.vmem %s25, %s1362
        $region84: #{encoder_forward.1} parent=39 // pred_fallthru
          _
        // Predicated region
        $region85: #{encoder_forward.1} parent=39 // pred_check
          %p1364 = pneg %p447
        $region86: #{encoder_forward.1} parent=39 // pred_check_branch
          %1366 = sbr.rel (%p1364) target = $region88
        $region87: #{encoder_forward.1} parent=39 // pred_region
          %p1367 = scmp.lt.s32.totalorder %s99, 1
          %s1368 = scalar_select %p1367, %s99, 1
          %s1369 = scalar_lea.vmem %s27, %s1368
        $region88: #{encoder_forward.1} parent=39 // pred_fallthru
          _
        // Predicated region
        $region89: #{encoder_forward.1} parent=39 // pred_check
          %p1370 = pneg %p473
        $region90: #{encoder_forward.1} parent=39 // pred_check_branch
          %1372 = sbr.rel (%p1370) target = $region92
        $region91: #{encoder_forward.1} parent=39 // pred_region
          %p1373 = scmp.lt.s32.totalorder %s99, 1
          %s1374 = scalar_select %p1373, %s99, 1
          %s1375 = smul.addr %s1374, 4
          %s1376 = smul.addr %s1375, 4
          %s1377 = scalar_lea.vmem %s29, %s1376
        $region92: #{encoder_forward.1} parent=39 // pred_fallthru
          _
        // Predicated region
        $region93: #{encoder_forward.1} parent=39 // pred_check
          %p1378 = pneg %p499
        $region94: #{encoder_forward.1} parent=39 // pred_check_branch
          %1380 = sbr.rel (%p1378) target = $region96
        $region95: #{encoder_forward.1} parent=39 // pred_region
          %p1381 = scmp.lt.s32.totalorder %s99, 1
          %s1382 = scalar_select %p1381, %s99, 1
          %s1383 = smul.addr %s1382, 4
          %s1384 = smul.addr %s1383, 4
          %s1385 = scalar_lea.vmem %s31, %s1384
        $region96: #{encoder_forward.1} parent=39 // pred_fallthru
          _
        // Predicated region
        $region97: #{encoder_forward.1} parent=39 // pred_check
          %p1386 = pneg %p525
        $region98: #{encoder_forward.1} parent=39 // pred_check_branch
          %1388 = sbr.rel (%p1386) target = $region100
        $region99: #{encoder_forward.1} parent=39 // pred_region
          %p1389 = scmp.lt.s32.totalorder %s99, 1
          %s1390 = scalar_select %p1389, %s99, 1
          %s1391 = scalar_lea.vmem %s33, %s1390
        $region100: #{encoder_forward.1} parent=39 // pred_fallthru
          _
        // Predicated region
        $region101: #{encoder_forward.1} parent=39 // pred_check
          %p1392 = pneg %p551
        $region102: #{encoder_forward.1} parent=39 // pred_check_branch
          %1394 = sbr.rel (%p1392) target = $region104
        $region103: #{encoder_forward.1} parent=39 // pred_region
          %p1395 = scmp.lt.s32.totalorder %s99, 1
          %s1396 = scalar_select %p1395, %s99, 1
          %s1397 = smul.addr %s1396, 4
          %s1398 = smul.addr %s1397, 4
          %s1399 = scalar_lea.vmem %s35, %s1398
        $region104: #{encoder_forward.1} parent=39 // pred_fallthru
          _
        // Predicated region
        $region105: #{encoder_forward.1} parent=39 // pred_check
          %p1400 = pneg %p577
        $region106: #{encoder_forward.1} parent=39 // pred_check_branch
          %1402 = sbr.rel (%p1400) target = $region108
        $region107: #{encoder_forward.1} parent=39 // pred_region
          %p1403 = scmp.lt.s32.totalorder %s99, 1
          %s1404 = scalar_select %p1403, %s99, 1
          %s1405 = scalar_lea.vmem %s37, %s1404
        $region108: #{encoder_forward.1} parent=39 // pred_fallthru
          _
        // Predicated region
        $region109: #{encoder_forward.1} parent=39 // pred_check
          %p1406 = pneg %p603
        $region110: #{encoder_forward.1} parent=39 // pred_check_branch
          %1408 = sbr.rel (%p1406) target = $region112
        $region111: #{encoder_forward.1} parent=39 // pred_region
          %p1409 = scmp.lt.s32.totalorder %s99, 1
          %s1410 = scalar_select %p1409, %s99, 1
          %s1411 = smul.addr %s1410, 16
          %s1412 = smul.addr %s1411, 4
          %s1413 = scalar_lea.vmem %s39, %s1412
        $region112: #{encoder_forward.1} parent=39 // pred_fallthru
          _
        // Predicated region
        $region113: #{encoder_forward.1} parent=39 // pred_check
          %p1414 = pneg %p629
        $region114: #{encoder_forward.1} parent=39 // pred_check_branch
          %1416 = sbr.rel (%p1414) target = $region116
        $region115: #{encoder_forward.1} parent=39 // pred_region
          %p1417 = scmp.lt.s32.totalorder %s99, 1
          %s1418 = scalar_select %p1417, %s99, 1
          %s1419 = scalar_lea.vmem %s41, %s1418
        $region116: #{encoder_forward.1} parent=39 // pred_fallthru
          _
        // Predicated region
        $region117: #{encoder_forward.1} parent=39 // pred_check
          %p1420 = pneg %p655
        $region118: #{encoder_forward.1} parent=39 // pred_check_branch
          %1422 = sbr.rel (%p1420) target = $region120
        $region119: #{encoder_forward.1} parent=39 // pred_region
          %p1423 = scmp.lt.s32.totalorder %s99, 1
          %s1424 = scalar_select %p1423, %s99, 1
          %s1425 = scalar_lea.vmem %s43, %s1424
        $region120: #{encoder_forward.1} parent=39 // pred_fallthru
          _
        // Predicated region
        $region121: #{encoder_forward.1} parent=39 // pred_check
          %p1426 = pneg %p681
        $region122: #{encoder_forward.1} parent=39 // pred_check_branch
          %1428 = sbr.rel (%p1426) target = $region124
        $region123: #{encoder_forward.1} parent=39 // pred_region
          %p1429 = scmp.lt.s32.totalorder %s99, 1
          %s1430 = scalar_select %p1429, %s99, 1
          %s1431 = scalar_lea.vmem %s45, %s1430
        $region124: #{encoder_forward.1} parent=39 // pred_fallthru
          _
        // Predicated region
        $region125: #{encoder_forward.1} parent=39 // pred_check
          %p1432 = pneg %p707
        $region126: #{encoder_forward.1} parent=39 // pred_check_branch
          %1434 = sbr.rel (%p1432) target = $region128
        $region127: #{encoder_forward.1} parent=39 // pred_region
          %p1435 = scmp.lt.s32.totalorder %s99, 1
          %s1436 = scalar_select %p1435, %s99, 1
          %s1437 = scalar_lea.vmem %s47, %s1436
        $region128: #{encoder_forward.1} parent=39 // pred_fallthru
          _
        // Predicated region
        $region129: #{encoder_forward.1} parent=39 // pred_check
          %p1438 = pneg %p733
        $region130: #{encoder_forward.1} parent=39 // pred_check_branch
          %1440 = sbr.rel (%p1438) target = $region132
        $region131: #{encoder_forward.1} parent=39 // pred_region
          %p1441 = scmp.lt.s32.totalorder %s99, 1
          %s1442 = scalar_select %p1441, %s99, 1
          %s1443 = scalar_lea.vmem %s49, %s1442
        $region132: #{encoder_forward.1} parent=39 // pred_fallthru
          _
        // Predicated region
        $region133: #{encoder_forward.1} parent=39 // pred_check
          %p1444 = pneg %p759
        $region134: #{encoder_forward.1} parent=39 // pred_check_branch
          %1446 = sbr.rel (%p1444) target = $region136
        $region135: #{encoder_forward.1} parent=39 // pred_region
          %p1447 = scmp.lt.s32.totalorder %s99, 1
          %s1448 = scalar_select %p1447, %s99, 1
          %s1449 = scalar_lea.vmem %s51, %s1448
        $region136: #{encoder_forward.1} parent=39 // pred_fallthru
          _
        // Predicated region
        $region137: #{encoder_forward.1} parent=39 // pred_check
          %p1450 = pneg %p785
        $region138: #{encoder_forward.1} parent=39 // pred_check_branch
          %1452 = sbr.rel (%p1450) target = $region140
        $region139: #{encoder_forward.1} parent=39 // pred_region
          %p1453 = scmp.lt.s32.totalorder %s99, 1
          %s1454 = scalar_select %p1453, %s99, 1
          %s1455 = scalar_lea.vmem %s53, %s1454
        $region140: #{encoder_forward.1} parent=39 // pred_fallthru
          _
        // Predicated region
        $region141: #{encoder_forward.1} parent=39 // pred_check
          %p1456 = pneg %p811
        $region142: #{encoder_forward.1} parent=39 // pred_check_branch
          %1458 = sbr.rel (%p1456) target = $region144
        $region143: #{encoder_forward.1} parent=39 // pred_region
          %p1459 = scmp.lt.s32.totalorder %s99, 1
          %s1460 = scalar_select %p1459, %s99, 1
          %s1461 = scalar_lea.vmem %s55, %s1460
        $region144: #{encoder_forward.1} parent=39 // pred_fallthru
          _
        // Predicated region
        $region145: #{encoder_forward.1} parent=39 // pred_check
          %p1462 = pneg %p837
        $region146: #{encoder_forward.1} parent=39 // pred_check_branch
          %1464 = sbr.rel (%p1462) target = $region148
        $region147: #{encoder_forward.1} parent=39 // pred_region
          %p1465 = scmp.lt.s32.totalorder %s99, 1
          %s1466 = scalar_select %p1465, %s99, 1
          %s1467 = scalar_lea.vmem %s57, %s1466
        $region148: #{encoder_forward.1} parent=39 // pred_fallthru
          _
        // Predicated region
        $region149: #{encoder_forward.1} parent=39 // pred_check
          %p1468 = pneg %p863
        $region150: #{encoder_forward.1} parent=39 // pred_check_branch
          %1470 = sbr.rel (%p1468) target = $region152
        $region151: #{encoder_forward.1} parent=39 // pred_region
          %p1471 = scmp.lt.s32.totalorder %s99, 1
          %s1472 = scalar_select %p1471, %s99, 1
          %s1473 = smul.addr %s1472, 8
          %s1474 = smul.addr %s1473, 4
          %s1475 = scalar_lea.vmem %s59, %s1474
        $region152: #{encoder_forward.1} parent=39 // pred_fallthru
          _
        // Predicated region
        $region153: #{encoder_forward.1} parent=39 // pred_check
          %p1476 = pneg %p889
        $region154: #{encoder_forward.1} parent=39 // pred_check_branch
          %1478 = sbr.rel (%p1476) target = $region156
        $region155: #{encoder_forward.1} parent=39 // pred_region
          %p1479 = scmp.lt.s32.totalorder %s99, 1
          %s1480 = scalar_select %p1479, %s99, 1
          %s1481 = smul.addr %s1480, 4
          %s1482 = smul.addr %s1481, 4
          %s1483 = scalar_lea.vmem %s61, %s1482
        $region156: #{encoder_forward.1} parent=39 // pred_fallthru
          _
        // Predicated region
        $region157: #{encoder_forward.1} parent=39 // pred_check
          %p1484 = pneg %p915
        $region158: #{encoder_forward.1} parent=39 // pred_check_branch
          %1486 = sbr.rel (%p1484) target = $region160
        $region159: #{encoder_forward.1} parent=39 // pred_region
          %p1487 = scmp.lt.s32.totalorder %s99, 1
          %s1488 = scalar_select %p1487, %s99, 1
          %s1489 = smul.addr %s1488, 8
          %s1490 = smul.addr %s1489, 4
          %s1491 = scalar_lea.vmem %s63, %s1490
        $region160: #{encoder_forward.1} parent=39 // pred_fallthru
          _
        // Predicated region
        $region161: #{encoder_forward.1} parent=39 // pred_check
          %p1492 = pneg %p941
        $region162: #{encoder_forward.1} parent=39 // pred_check_branch
          %1494 = sbr.rel (%p1492) target = $region164
        $region163: #{encoder_forward.1} parent=39 // pred_region
          %p1495 = scmp.lt.s32.totalorder %s99, 1
          %s1496 = scalar_select %p1495, %s99, 1
          %s1497 = scalar_lea.vmem %s65, %s1496
        $region164: #{encoder_forward.1} parent=39 // pred_fallthru
          _
        // Predicated region
        $region165: #{encoder_forward.1} parent=39 // pred_check
          %p1498 = pneg %p967
        $region166: #{encoder_forward.1} parent=39 // pred_check_branch
          %1500 = sbr.rel (%p1498) target = $region168
        $region167: #{encoder_forward.1} parent=39 // pred_region
          %p1501 = scmp.lt.s32.totalorder %s99, 1
          %s1502 = scalar_select %p1501, %s99, 1
          %s1503 = smul.addr %s1502, 16
          %s1504 = smul.addr %s1503, 4
          %s1505 = scalar_lea.vmem %s67, %s1504
        $region168: #{encoder_forward.1} parent=39 // pred_fallthru
          _
        // Predicated region
        $region169: #{encoder_forward.1} parent=39 // pred_check
          %p1506 = pneg %p993
        $region170: #{encoder_forward.1} parent=39 // pred_check_branch
          %1508 = sbr.rel (%p1506) target = $region172
        $region171: #{encoder_forward.1} parent=39 // pred_region
          %p1509 = scmp.lt.s32.totalorder %s99, 1
          %s1510 = scalar_select %p1509, %s99, 1
          %s1511 = smul.addr %s1510, 8
          %s1512 = smul.addr %s1511, 4
          %s1513 = scalar_lea.vmem %s69, %s1512
        $region172: #{encoder_forward.1} parent=39 // pred_fallthru
          _
        // Predicated region
        $region173: #{encoder_forward.1} parent=39 // pred_check
          %p1514 = pneg %p1019
        $region174: #{encoder_forward.1} parent=39 // pred_check_branch
          %1516 = sbr.rel (%p1514) target = $region176
        $region175: #{encoder_forward.1} parent=39 // pred_region
          %p1517 = scmp.lt.s32.totalorder %s99, 1
          %s1518 = scalar_select %p1517, %s99, 1
          %s1519 = scalar_lea.vmem %s71, %s1518
        $region176: #{encoder_forward.1} parent=39 // pred_fallthru
          _
        // Predicated region
        $region177: #{encoder_forward.1} parent=39 // pred_check
          %p1520 = pneg %p1045
        $region178: #{encoder_forward.1} parent=39 // pred_check_branch
          %1522 = sbr.rel (%p1520) target = $region180
        $region179: #{encoder_forward.1} parent=39 // pred_region
          %p1523 = scmp.lt.s32.totalorder %s99, 1
          %s1524 = scalar_select %p1523, %s99, 1
          %s1525 = smul.addr %s1524, 16
          %s1526 = smul.addr %s1525, 4
          %s1527 = scalar_lea.vmem %s73, %s1526
        $region180: #{encoder_forward.1} parent=39 // pred_fallthru
          _
        // Predicated region
        $region181: #{encoder_forward.1} parent=39 // pred_check
          %p1528 = pneg %p1071
        $region182: #{encoder_forward.1} parent=39 // pred_check_branch
          %1530 = sbr.rel (%p1528) target = $region184
        $region183: #{encoder_forward.1} parent=39 // pred_region
          %p1531 = scmp.lt.s32.totalorder %s99, 1
          %s1532 = scalar_select %p1531, %s99, 1
          %s1533 = smul.addr %s1532, 2
          %s1534 = scalar_lea.vmem %s75, %s1533
        $region184: #{encoder_forward.1} parent=39 // pred_fallthru
          _
        // Predicated region
        $region185: #{encoder_forward.1} parent=39 // pred_check
          %p1535 = pneg %p1097
        $region186: #{encoder_forward.1} parent=39 // pred_check_branch
          %1537 = sbr.rel (%p1535) target = $region188
        $region187: #{encoder_forward.1} parent=39 // pred_region
          %p1538 = scmp.lt.s32.totalorder %s99, 1
          %s1539 = scalar_select %p1538, %s99, 1
          %s1540 = smul.addr %s1539, 32
          %s1541 = smul.addr %s1540, 4
          %s1542 = scalar_lea.vmem %s77, %s1541
        $region188: #{encoder_forward.1} parent=39 // pred_fallthru
          _
        // Predicated region
        $region189: #{encoder_forward.1} parent=39 // pred_check
          %p1543 = pneg %p1123
        $region190: #{encoder_forward.1} parent=39 // pred_check_branch
          %1545 = sbr.rel (%p1543) target = $region192
        $region191: #{encoder_forward.1} parent=39 // pred_region
          %p1546 = scmp.lt.s32.totalorder %s99, 1
          %s1547 = scalar_select %p1546, %s99, 1
          %s1548 = scalar_lea.vmem %s79, %s1547
        $region192: #{encoder_forward.1} parent=39 // pred_fallthru
          _
      $region40: #{encoder_forward.1} parent=5 // pred_fallthru
        _
      %p1549 = scmp.le.s32.totalorder 1, %s99
      %p1550 = scmp.lt.s32.totalorder %s99, 3
      %p1551 = pnand %p1549, %p1550
      %p1552 = pneg %p1551
      // Predicated region
      $region193: #{encoder_forward.1} parent=5 // pred_check
        _
      $region194: #{encoder_forward.1} parent=5 // pred_check_branch
        %1554 = sbr.rel (%p1551) target = $region196
      $region195: #{encoder_forward.1} parent=5 // pred_region
        %s1555 = ssub.s32 %s99, 1
        %p1556 = pneg %p120
        %p1557 = pneg %p117
        %p1558 = pneg %p141
        %p1559 = pneg %p138
        %p1560 = scmp.lt.s32.totalorder %s104, 1
        %s1561 = scalar_select %p1560, %s104, 1
        %s1562 = scalar_lea.vmem %s5, %s1561
        %p1563 = pneg %p167
        %p1564 = pneg %p164
        %p1565 = scmp.lt.s32.totalorder %s104, 1
        %s1566 = scalar_select %p1565, %s104, 1
        %s1567 = scalar_lea.vmem %s7, %s1566
        %p1568 = pneg %p193
        %p1569 = pneg %p190
        %p1570 = scmp.lt.s32.totalorder %s104, 1
        %s1571 = scalar_select %p1570, %s104, 1
        %s1572 = scalar_lea.vmem %s9, %s1571
        %p1573 = pneg %p219
        %p1574 = pneg %p216
        %p1575 = scmp.lt.s32.totalorder %s104, 1
        %s1576 = scalar_select %p1575, %s104, 1
        %s1577 = scalar_lea.vmem %s11, %s1576
        %p1578 = pneg %p245
        %p1579 = pneg %p242
        %p1580 = scmp.lt.s32.totalorder %s104, 1
        %s1581 = scalar_select %p1580, %s104, 1
        %s1582 = scalar_lea.vmem %s13, %s1581
        %p1583 = pneg %p271
        %p1584 = pneg %p268
        %p1585 = scmp.lt.s32.totalorder %s104, 1
        %s1586 = scalar_select %p1585, %s104, 1
        %s1587 = scalar_lea.vmem %s15, %s1586
        %p1588 = pneg %p297
        %p1589 = pneg %p294
        %p1590 = scmp.lt.s32.totalorder %s104, 1
        %s1591 = scalar_select %p1590, %s104, 1
        %s1592 = scalar_lea.vmem %s17, %s1591
        %p1593 = pneg %p323
        %p1594 = pneg %p320
        %p1595 = scmp.lt.s32.totalorder %s104, 1
        %s1596 = scalar_select %p1595, %s104, 1
        %s1597 = scalar_lea.vmem %s19, %s1596
        %p1598 = pneg %p349
        %p1599 = pneg %p346
        %p1600 = scmp.lt.s32.totalorder %s104, 1
        %s1601 = scalar_select %p1600, %s104, 1
        %s1602 = smul.addr %s1601, 4
        %s1603 = smul.addr %s1602, 4
        %s1604 = scalar_lea.vmem %s21, %s1603
        %p1605 = pneg %p375
        %p1606 = pneg %p372
        %p1607 = scmp.lt.s32.totalorder %s104, 1
        %s1608 = scalar_select %p1607, %s104, 1
        %s1609 = smul.addr %s1608, 8
        %s1610 = smul.addr %s1609, 4
        %s1611 = scalar_lea.vmem %s23, %s1610
        %p1612 = pneg %p401
        %p1613 = pneg %p398
        %p1614 = scmp.lt.s32.totalorder %s104, 1
        %s1615 = scalar_select %p1614, %s104, 1
        %s1616 = smul.addr %s1615, 4
        %s1617 = smul.addr %s1616, 4
        %s1618 = scalar_lea.vmem %s25, %s1617
        %p1619 = pneg %p427
        %p1620 = pneg %p424
        %p1621 = scmp.lt.s32.totalorder %s104, 1
        %s1622 = scalar_select %p1621, %s104, 1
        %s1623 = scalar_lea.vmem %s27, %s1622
        %p1624 = pneg %p453
        %p1625 = pneg %p450
        %p1626 = scmp.lt.s32.totalorder %s104, 1
        %s1627 = scalar_select %p1626, %s104, 1
        %s1628 = smul.addr %s1627, 4
        %s1629 = smul.addr %s1628, 4
        %s1630 = scalar_lea.vmem %s29, %s1629
        %p1631 = pneg %p479
        %p1632 = pneg %p476
        %p1633 = scmp.lt.s32.totalorder %s104, 1
        %s1634 = scalar_select %p1633, %s104, 1
        %s1635 = smul.addr %s1634, 4
        %s1636 = smul.addr %s1635, 4
        %s1637 = scalar_lea.vmem %s31, %s1636
        %p1638 = pneg %p505
        %p1639 = pneg %p502
        %p1640 = scmp.lt.s32.totalorder %s104, 1
        %s1641 = scalar_select %p1640, %s104, 1
        %s1642 = scalar_lea.vmem %s33, %s1641
        %p1643 = pneg %p531
        %p1644 = pneg %p528
        %p1645 = scmp.lt.s32.totalorder %s104, 1
        %s1646 = scalar_select %p1645, %s104, 1
        %s1647 = smul.addr %s1646, 4
        %s1648 = smul.addr %s1647, 4
        %s1649 = scalar_lea.vmem %s35, %s1648
        %p1650 = pneg %p557
        %p1651 = pneg %p554
        %p1652 = scmp.lt.s32.totalorder %s104, 1
        %s1653 = scalar_select %p1652, %s104, 1
        %s1654 = scalar_lea.vmem %s37, %s1653
        %p1655 = pneg %p583
        %p1656 = pneg %p580
        %p1657 = scmp.lt.s32.totalorder %s104, 1
        %s1658 = scalar_select %p1657, %s104, 1
        %s1659 = smul.addr %s1658, 16
        %s1660 = smul.addr %s1659, 4
        %s1661 = scalar_lea.vmem %s39, %s1660
        %p1662 = pneg %p609
        %p1663 = pneg %p606
        %p1664 = scmp.lt.s32.totalorder %s104, 1
        %s1665 = scalar_select %p1664, %s104, 1
        %s1666 = scalar_lea.vmem %s41, %s1665
        %p1667 = pneg %p635
        %p1668 = pneg %p632
        %p1669 = scmp.lt.s32.totalorder %s104, 1
        %s1670 = scalar_select %p1669, %s104, 1
        %s1671 = scalar_lea.vmem %s43, %s1670
        %p1672 = pneg %p661
        %p1673 = pneg %p658
        %p1674 = scmp.lt.s32.totalorder %s104, 1
        %s1675 = scalar_select %p1674, %s104, 1
        %s1676 = scalar_lea.vmem %s45, %s1675
        %p1677 = pneg %p687
        %p1678 = pneg %p684
        %p1679 = scmp.lt.s32.totalorder %s104, 1
        %s1680 = scalar_select %p1679, %s104, 1
        %s1681 = scalar_lea.vmem %s47, %s1680
        %p1682 = pneg %p713
        %p1683 = pneg %p710
        %p1684 = scmp.lt.s32.totalorder %s104, 1
        %s1685 = scalar_select %p1684, %s104, 1
        %s1686 = scalar_lea.vmem %s49, %s1685
        %p1687 = pneg %p739
        %p1688 = pneg %p736
        %p1689 = scmp.lt.s32.totalorder %s104, 1
        %s1690 = scalar_select %p1689, %s104, 1
        %s1691 = scalar_lea.vmem %s51, %s1690
        %p1692 = pneg %p765
        %p1693 = pneg %p762
        %p1694 = scmp.lt.s32.totalorder %s104, 1
        %s1695 = scalar_select %p1694, %s104, 1
        %s1696 = scalar_lea.vmem %s53, %s1695
        %p1697 = pneg %p791
        %p1698 = pneg %p788
        %p1699 = scmp.lt.s32.totalorder %s104, 1
        %s1700 = scalar_select %p1699, %s104, 1
        %s1701 = scalar_lea.vmem %s55, %s1700
        %p1702 = pneg %p817
        %p1703 = pneg %p814
        %p1704 = scmp.lt.s32.totalorder %s104, 1
        %s1705 = scalar_select %p1704, %s104, 1
        %s1706 = scalar_lea.vmem %s57, %s1705
        %p1707 = pneg %p843
        %p1708 = pneg %p840
        %p1709 = scmp.lt.s32.totalorder %s104, 1
        %s1710 = scalar_select %p1709, %s104, 1
        %s1711 = smul.addr %s1710, 8
        %s1712 = smul.addr %s1711, 4
        %s1713 = scalar_lea.vmem %s59, %s1712
        %p1714 = pneg %p869
        %p1715 = pneg %p866
        %p1716 = scmp.lt.s32.totalorder %s104, 1
        %s1717 = scalar_select %p1716, %s104, 1
        %s1718 = smul.addr %s1717, 4
        %s1719 = smul.addr %s1718, 4
        %s1720 = scalar_lea.vmem %s61, %s1719
        %p1721 = pneg %p895
        %p1722 = pneg %p892
        %p1723 = scmp.lt.s32.totalorder %s104, 1
        %s1724 = scalar_select %p1723, %s104, 1
        %s1725 = smul.addr %s1724, 8
        %s1726 = smul.addr %s1725, 4
        %s1727 = scalar_lea.vmem %s63, %s1726
        %p1728 = pneg %p921
        %p1729 = pneg %p918
        %p1730 = scmp.lt.s32.totalorder %s104, 1
        %s1731 = scalar_select %p1730, %s104, 1
        %s1732 = scalar_lea.vmem %s65, %s1731
        %p1733 = pneg %p947
        %p1734 = pneg %p944
        %p1735 = scmp.lt.s32.totalorder %s104, 1
        %s1736 = scalar_select %p1735, %s104, 1
        %s1737 = smul.addr %s1736, 16
        %s1738 = smul.addr %s1737, 4
        %s1739 = scalar_lea.vmem %s67, %s1738
        %p1740 = pneg %p973
        %p1741 = pneg %p970
        %p1742 = scmp.lt.s32.totalorder %s104, 1
        %s1743 = scalar_select %p1742, %s104, 1
        %s1744 = smul.addr %s1743, 8
        %s1745 = smul.addr %s1744, 4
        %s1746 = scalar_lea.vmem %s69, %s1745
        %p1747 = pneg %p999
        %p1748 = pneg %p996
        %p1749 = scmp.lt.s32.totalorder %s104, 1
        %s1750 = scalar_select %p1749, %s104, 1
        %s1751 = scalar_lea.vmem %s71, %s1750
        %p1752 = pneg %p1025
        %p1753 = pneg %p1022
        %p1754 = scmp.lt.s32.totalorder %s104, 1
        %s1755 = scalar_select %p1754, %s104, 1
        %s1756 = smul.addr %s1755, 16
        %s1757 = smul.addr %s1756, 4
        %s1758 = scalar_lea.vmem %s73, %s1757
        %p1759 = pneg %p1051
        %p1760 = pneg %p1048
        %p1761 = scmp.lt.s32.totalorder %s104, 1
        %s1762 = scalar_select %p1761, %s104, 1
        %s1763 = smul.addr %s1762, 2
        %s1764 = scalar_lea.vmem %s75, %s1763
        %p1765 = pneg %p1077
        %p1766 = pneg %p1074
        %p1767 = scmp.lt.s32.totalorder %s104, 1
        %s1768 = scalar_select %p1767, %s104, 1
        %s1769 = smul.addr %s1768, 32
        %s1770 = smul.addr %s1769, 4
        %s1771 = scalar_lea.vmem %s77, %s1770
        %p1772 = pneg %p1103
        %p1773 = pneg %p1100
        %p1774 = scmp.lt.s32.totalorder %s104, 1
        %s1775 = scalar_select %p1774, %s104, 1
        %s1776 = scalar_lea.vmem %s79, %s1775
        %p1777 = pneg %p1129
        %p1778 = pneg %p1126
        %p1779 = pneg %p1150
        %p1780 = pneg %p1147
        %p1781 = pneg %p1171
        %p1782 = pneg %p1168
        %p1783 = pneg %p1192
        %p1784 = pneg %p1189
        %p1785 = pneg %p1213
        %p1786 = pneg %p1210
        %p1787 = pneg %p1234
        %p1788 = pneg %p1231
        %p1789 = pneg %p1255
        %p1790 = pneg %p1252
        %p1791 = scmp.lt.s32.totalorder %s104, 1
        %s1792 = scalar_select %p1791, %s104, 1
        %s1793 = scalar_lea.vmem %s5, %s1792
        %p1794 = scmp.lt.s32.totalorder %s104, 1
        %s1795 = scalar_select %p1794, %s104, 1
        %s1796 = scalar_lea.vmem %s7, %s1795
        %p1797 = scmp.lt.s32.totalorder %s104, 1
        %s1798 = scalar_select %p1797, %s104, 1
        %s1799 = scalar_lea.vmem %s9, %s1798
        %p1800 = scmp.lt.s32.totalorder %s104, 1
        %s1801 = scalar_select %p1800, %s104, 1
        %s1802 = scalar_lea.vmem %s11, %s1801
        %p1803 = scmp.lt.s32.totalorder %s104, 1
        %s1804 = scalar_select %p1803, %s104, 1
        %s1805 = scalar_lea.vmem %s13, %s1804
        %p1806 = scmp.lt.s32.totalorder %s104, 1
        %s1807 = scalar_select %p1806, %s104, 1
        %s1808 = scalar_lea.vmem %s15, %s1807
        %p1809 = scmp.lt.s32.totalorder %s104, 1
        %s1810 = scalar_select %p1809, %s104, 1
        %s1811 = scalar_lea.vmem %s17, %s1810
        %p1812 = scmp.lt.s32.totalorder %s104, 1
        %s1813 = scalar_select %p1812, %s104, 1
        %s1814 = scalar_lea.vmem %s19, %s1813
        %p1815 = scmp.lt.s32.totalorder %s104, 1
        %s1816 = scalar_select %p1815, %s104, 1
        %s1817 = smul.addr %s1816, 4
        %s1818 = smul.addr %s1817, 4
        %s1819 = scalar_lea.vmem %s21, %s1818
        %p1820 = scmp.lt.s32.totalorder %s104, 1
        %s1821 = scalar_select %p1820, %s104, 1
        %s1822 = smul.addr %s1821, 8
        %s1823 = smul.addr %s1822, 4
        %s1824 = scalar_lea.vmem %s23, %s1823
        %p1825 = scmp.lt.s32.totalorder %s104, 1
        %s1826 = scalar_select %p1825, %s104, 1
        %s1827 = smul.addr %s1826, 4
        %s1828 = smul.addr %s1827, 4
        %s1829 = scalar_lea.vmem %s25, %s1828
        %p1830 = scmp.lt.s32.totalorder %s104, 1
        %s1831 = scalar_select %p1830, %s104, 1
        %s1832 = scalar_lea.vmem %s27, %s1831
        %p1833 = scmp.lt.s32.totalorder %s104, 1
        %s1834 = scalar_select %p1833, %s104, 1
        %s1835 = smul.addr %s1834, 4
        %s1836 = smul.addr %s1835, 4
        %s1837 = scalar_lea.vmem %s29, %s1836
        %p1838 = scmp.lt.s32.totalorder %s104, 1
        %s1839 = scalar_select %p1838, %s104, 1
        %s1840 = smul.addr %s1839, 4
        %s1841 = smul.addr %s1840, 4
        %s1842 = scalar_lea.vmem %s31, %s1841
        %p1843 = scmp.lt.s32.totalorder %s104, 1
        %s1844 = scalar_select %p1843, %s104, 1
        %s1845 = scalar_lea.vmem %s33, %s1844
        %p1846 = scmp.lt.s32.totalorder %s104, 1
        %s1847 = scalar_select %p1846, %s104, 1
        %s1848 = smul.addr %s1847, 4
        %s1849 = smul.addr %s1848, 4
        %s1850 = scalar_lea.vmem %s35, %s1849
        %p1851 = scmp.lt.s32.totalorder %s104, 1
        %s1852 = scalar_select %p1851, %s104, 1
        %s1853 = scalar_lea.vmem %s37, %s1852
        %p1854 = scmp.lt.s32.totalorder %s104, 1
        %s1855 = scalar_select %p1854, %s104, 1
        %s1856 = smul.addr %s1855, 16
        %s1857 = smul.addr %s1856, 4
        %s1858 = scalar_lea.vmem %s39, %s1857
        %p1859 = scmp.lt.s32.totalorder %s104, 1
        %s1860 = scalar_select %p1859, %s104, 1
        %s1861 = scalar_lea.vmem %s41, %s1860
        %p1862 = scmp.lt.s32.totalorder %s104, 1
        %s1863 = scalar_select %p1862, %s104, 1
        %s1864 = scalar_lea.vmem %s43, %s1863
        %p1865 = scmp.lt.s32.totalorder %s104, 1
        %s1866 = scalar_select %p1865, %s104, 1
        %s1867 = scalar_lea.vmem %s45, %s1866
        %p1868 = scmp.lt.s32.totalorder %s104, 1
        %s1869 = scalar_select %p1868, %s104, 1
        %s1870 = scalar_lea.vmem %s47, %s1869
        %p1871 = scmp.lt.s32.totalorder %s104, 1
        %s1872 = scalar_select %p1871, %s104, 1
        %s1873 = scalar_lea.vmem %s49, %s1872
        %p1874 = scmp.lt.s32.totalorder %s104, 1
        %s1875 = scalar_select %p1874, %s104, 1
        %s1876 = scalar_lea.vmem %s51, %s1875
        %p1877 = scmp.lt.s32.totalorder %s104, 1
        %s1878 = scalar_select %p1877, %s104, 1
        %s1879 = scalar_lea.vmem %s53, %s1878
        %p1880 = scmp.lt.s32.totalorder %s104, 1
        %s1881 = scalar_select %p1880, %s104, 1
        %s1882 = scalar_lea.vmem %s55, %s1881
        %p1883 = scmp.lt.s32.totalorder %s104, 1
        %s1884 = scalar_select %p1883, %s104, 1
        %s1885 = scalar_lea.vmem %s57, %s1884
        %p1886 = scmp.lt.s32.totalorder %s104, 1
        %s1887 = scalar_select %p1886, %s104, 1
        %s1888 = smul.addr %s1887, 8
        %s1889 = smul.addr %s1888, 4
        %s1890 = scalar_lea.vmem %s59, %s1889
        %p1891 = scmp.lt.s32.totalorder %s104, 1
        %s1892 = scalar_select %p1891, %s104, 1
        %s1893 = smul.addr %s1892, 4
        %s1894 = smul.addr %s1893, 4
        %s1895 = scalar_lea.vmem %s61, %s1894
        %p1896 = scmp.lt.s32.totalorder %s104, 1
        %s1897 = scalar_select %p1896, %s104, 1
        %s1898 = smul.addr %s1897, 8
        %s1899 = smul.addr %s1898, 4
        %s1900 = scalar_lea.vmem %s63, %s1899
        %p1901 = scmp.lt.s32.totalorder %s104, 1
        %s1902 = scalar_select %p1901, %s104, 1
        %s1903 = scalar_lea.vmem %s65, %s1902
        %p1904 = scmp.lt.s32.totalorder %s104, 1
        %s1905 = scalar_select %p1904, %s104, 1
        %s1906 = smul.addr %s1905, 16
        %s1907 = smul.addr %s1906, 4
        %s1908 = scalar_lea.vmem %s67, %s1907
        %p1909 = scmp.lt.s32.totalorder %s104, 1
        %s1910 = scalar_select %p1909, %s104, 1
        %s1911 = smul.addr %s1910, 8
        %s1912 = smul.addr %s1911, 4
        %s1913 = scalar_lea.vmem %s69, %s1912
        %p1914 = scmp.lt.s32.totalorder %s104, 1
        %s1915 = scalar_select %p1914, %s104, 1
        %s1916 = scalar_lea.vmem %s71, %s1915
        %p1917 = scmp.lt.s32.totalorder %s104, 1
        %s1918 = scalar_select %p1917, %s104, 1
        %s1919 = smul.addr %s1918, 16
        %s1920 = smul.addr %s1919, 4
        %s1921 = scalar_lea.vmem %s73, %s1920
        %p1922 = scmp.lt.s32.totalorder %s104, 1
        %s1923 = scalar_select %p1922, %s104, 1
        %s1924 = smul.addr %s1923, 2
        %s1925 = scalar_lea.vmem %s75, %s1924
        %p1926 = scmp.lt.s32.totalorder %s104, 1
        %s1927 = scalar_select %p1926, %s104, 1
        %s1928 = smul.addr %s1927, 32
        %s1929 = smul.addr %s1928, 4
        %s1930 = scalar_lea.vmem %s77, %s1929
        %p1931 = scmp.lt.s32.totalorder %s104, 1
        %s1932 = scalar_select %p1931, %s104, 1
        %s1933 = scalar_lea.vmem %s79, %s1932
        %p1935 = scmp.eq.s32.totalorder %s104, 0
        // Predicated region
        $region197: #{encoder_forward.1} parent=195 // pred_check
          %p1936 = pneg %p1935
        $region198: #{encoder_forward.1} parent=195 // pred_check_branch
          %1938 = sbr.rel (%p1936) target = $region200
        $region199: #{encoder_forward.1} parent=195 // pred_region
          %v1939 = vld [vmem:[%s1] sm:$0xff]
          %v1940 = vld [vmem:[%s1 + $0x8] sm:$0xff]
          %vm1941 = vcmask 261120
          %1942 = vst.msk [vmem:[#allocation2] sm:$0xff] %vm1941, %v1939
          %1943 = vst.msk [vmem:[#allocation2 + $0x8] sm:$0xff] %vm1941, %v1940
          %v1944 = vld [vmem:[%s3] sm:$0xff]
          %v1945 = vld [vmem:[%s3 + $0x8] sm:$0xf]
          %vm1946 = vcmask 523264
          %1947 = vst.msk [vmem:[#allocation3] sm:$0xff] %vm1946, %v1944
          %vm1948 = vcmask 519168
          %1949 = vst.msk [vmem:[#allocation3 + $0x8] sm:$0xf] %vm1948, %v1945
        $region200: #{encoder_forward.1} parent=195 // pred_fallthru
          _
        %v1950 = vld [vmem:[%s1793] sm:$0x1]
        %v1951 = vld [vmem:[%s1796] sm:$0x1]
        %v1952 = vld [vmem:[%s1799] sm:$0x1]
        %v1953 = vld [vmem:[%s1802] sm:$0x1]
        %v1954 = vld [vmem:[%s1805] sm:$0x1]
        %v1955 = vld [vmem:[%s1808] sm:$0x1]
        %v1956 = vld [vmem:[%s1811] sm:$0x1]
        %v1957 = vld [vmem:[%s1814] sm:$0x1]
        %v1958 = vld [vmem:[%s1819] sm:$0xf]
        %v1959 = vld [vmem:[%s1819 + $0x4] sm:$0xf]
        %v1960 = vld [vmem:[%s1819 + $0x8] sm:$0xf]
        %v1961 = vld [vmem:[%s1819 + $0xc] sm:$0xf]
        %v1962 = vld [vmem:[%s1824] sm:$0xf]
        %v1963 = vld [vmem:[%s1824 + $0x4] sm:$0xf]
        %v1964 = vld [vmem:[%s1824 + $0x8] sm:$0xf]
        %v1965 = vld [vmem:[%s1824 + $0xc] sm:$0xf]
        %v1966 = vld [vmem:[%s1824 + $0x10] sm:$0xf]
        %v1967 = vld [vmem:[%s1824 + $0x14] sm:$0xf]
        %v1968 = vld [vmem:[%s1824 + $0x18] sm:$0xf]
        %v1969 = vld [vmem:[%s1824 + $0x1c] sm:$0xf]
        %v1970 = vld [vmem:[%s1829] sm:$0xf]
        %v1971 = vld [vmem:[%s1829 + $0x4] sm:$0xf]
        %v1972 = vld [vmem:[%s1829 + $0x8] sm:$0xf]
        %v1973 = vld [vmem:[%s1829 + $0xc] sm:$0xf]
        %v1974 = vld [vmem:[%s1832] sm:$0x1]
        %v1975 = vld [vmem:[%s1837] sm:$0xf]
        %v1976 = vld [vmem:[%s1837 + $0x4] sm:$0xf]
        %v1977 = vld [vmem:[%s1837 + $0x8] sm:$0xf]
        %v1978 = vld [vmem:[%s1837 + $0xc] sm:$0xf]
        %v1979 = vld [vmem:[%s1842] sm:$0xf]
        %v1980 = vld [vmem:[%s1842 + $0x4] sm:$0xf]
        %v1981 = vld [vmem:[%s1842 + $0x8] sm:$0xf]
        %v1982 = vld [vmem:[%s1842 + $0xc] sm:$0xf]
        %v1983 = vld [vmem:[%s1845] sm:$0x1]
        %v1984 = vld [vmem:[%s1850] sm:$0xf]
        %v1985 = vld [vmem:[%s1850 + $0x4] sm:$0xf]
        %v1986 = vld [vmem:[%s1850 + $0x8] sm:$0xf]
        %v1987 = vld [vmem:[%s1850 + $0xc] sm:$0xf]
        %v1988 = vld [vmem:[%s1853] sm:$0x1]
        %v1989 = vld [vmem:[%s1858] sm:$0xf]
        %v1990 = vld [vmem:[%s1858 + $0x4] sm:$0xf]
        %v1991 = vld [vmem:[%s1858 + $0x8] sm:$0xf]
        %v1992 = vld [vmem:[%s1858 + $0xc] sm:$0xf]
        %v1993 = vld [vmem:[%s1858 + $0x10] sm:$0xf]
        %v1994 = vld [vmem:[%s1858 + $0x14] sm:$0xf]
        %v1995 = vld [vmem:[%s1858 + $0x18] sm:$0xf]
        %v1996 = vld [vmem:[%s1858 + $0x1c] sm:$0xf]
        %v1997 = vld [vmem:[%s1858 + $0x20] sm:$0xf]
        %v1998 = vld [vmem:[%s1858 + $0x24] sm:$0xf]
        %v1999 = vld [vmem:[%s1858 + $0x28] sm:$0xf]
        %v2000 = vld [vmem:[%s1858 + $0x2c] sm:$0xf]
        %v2001 = vld [vmem:[%s1858 + $0x30] sm:$0xf]
        %v2002 = vld [vmem:[%s1858 + $0x34] sm:$0xf]
        %v2003 = vld [vmem:[%s1858 + $0x38] sm:$0xf]
        %v2004 = vld [vmem:[%s1858 + $0x3c] sm:$0xf]
        %v2005 = vld [vmem:[%s1861] sm:$0x1]
        %v2006 = vld [vmem:[%s1864] sm:$0x1]
        %v2007 = vld [vmem:[%s1867] sm:$0x1]
        %v2008 = vld [vmem:[%s1870] sm:$0x1]
        %v2009 = vld [vmem:[%s1873] sm:$0x1]
        %v2010 = vld [vmem:[%s1876] sm:$0x1]
        %v2011 = vld [vmem:[%s1879] sm:$0x1]
        %v2012 = vld [vmem:[%s1882] sm:$0x1]
        %v2013 = vld [vmem:[%s1885] sm:$0x1]
        %v2014 = vld [vmem:[%s1890] sm:$0xf]
        %v2015 = vld [vmem:[%s1890 + $0x4] sm:$0xf]
        %v2016 = vld [vmem:[%s1890 + $0x8] sm:$0xf]
        %v2017 = vld [vmem:[%s1890 + $0xc] sm:$0xf]
        %v2018 = vld [vmem:[%s1890 + $0x10] sm:$0xf]
        %v2019 = vld [vmem:[%s1890 + $0x14] sm:$0xf]
        %v2020 = vld [vmem:[%s1890 + $0x18] sm:$0xf]
        %v2021 = vld [vmem:[%s1890 + $0x1c] sm:$0xf]
        %v2022 = vld [vmem:[%s1895] sm:$0xf]
        %v2023 = vld [vmem:[%s1895 + $0x4] sm:$0xf]
        %v2024 = vld [vmem:[%s1895 + $0x8] sm:$0xf]
        %v2025 = vld [vmem:[%s1895 + $0xc] sm:$0xf]
        %v2026 = vld [vmem:[%s1900] sm:$0xf]
        %v2027 = vld [vmem:[%s1900 + $0x4] sm:$0xf]
        %v2028 = vld [vmem:[%s1900 + $0x8] sm:$0xf]
        %v2029 = vld [vmem:[%s1900 + $0xc] sm:$0xf]
        %v2030 = vld [vmem:[%s1900 + $0x10] sm:$0xf]
        %v2031 = vld [vmem:[%s1900 + $0x14] sm:$0xf]
        %v2032 = vld [vmem:[%s1900 + $0x18] sm:$0xf]
        %v2033 = vld [vmem:[%s1900 + $0x1c] sm:$0xf]
        %v2034 = vld [vmem:[%s1903] sm:$0x1]
        %v2035 = vld [vmem:[%s1908] sm:$0xff]
        %v2036 = vld [vmem:[%s1908 + $0x8] sm:$0xff]
        %v2037 = vld [vmem:[%s1908 + $0x10] sm:$0xff]
        %v2038 = vld [vmem:[%s1908 + $0x18] sm:$0xff]
        %v2039 = vld [vmem:[%s1908 + $0x20] sm:$0xff]
        %v2040 = vld [vmem:[%s1908 + $0x28] sm:$0xff]
        %v2041 = vld [vmem:[%s1908 + $0x30] sm:$0xff]
        %v2042 = vld [vmem:[%s1908 + $0x38] sm:$0xff]
        %v2043 = vld [vmem:[%s1913] sm:$0xf]
        %v2044 = vld [vmem:[%s1913 + $0x4] sm:$0xf]
        %v2045 = vld [vmem:[%s1913 + $0x8] sm:$0xf]
        %v2046 = vld [vmem:[%s1913 + $0xc] sm:$0xf]
        %v2047 = vld [vmem:[%s1913 + $0x10] sm:$0xf]
        %v2048 = vld [vmem:[%s1913 + $0x14] sm:$0xf]
        %v2049 = vld [vmem:[%s1913 + $0x18] sm:$0xf]
        %v2050 = vld [vmem:[%s1913 + $0x1c] sm:$0xf]
        %v2051 = vld [vmem:[%s1916] sm:$0x1]
        %v2052 = vld [vmem:[%s1921] sm:$0xff]
        %v2053 = vld [vmem:[%s1921 + $0x8] sm:$0xff]
        %v2054 = vld [vmem:[%s1921 + $0x10] sm:$0xff]
        %v2055 = vld [vmem:[%s1921 + $0x18] sm:$0xff]
        %v2056 = vld [vmem:[%s1921 + $0x20] sm:$0xff]
        %v2057 = vld [vmem:[%s1921 + $0x28] sm:$0xff]
        %v2058 = vld [vmem:[%s1921 + $0x30] sm:$0xff]
        %v2059 = vld [vmem:[%s1921 + $0x38] sm:$0xff]
        %v2060 = vld [vmem:[%s1925] sm:$0x3]
        %v2061 = vld [vmem:[%s1930] sm:$0xf]
        %v2062 = vld [vmem:[%s1930 + $0x4] sm:$0xf]
        %v2063 = vld [vmem:[%s1930 + $0x8] sm:$0xf]
        %v2064 = vld [vmem:[%s1930 + $0xc] sm:$0xf]
        %v2065 = vld [vmem:[%s1930 + $0x10] sm:$0xf]
        %v2066 = vld [vmem:[%s1930 + $0x14] sm:$0xf]
        %v2067 = vld [vmem:[%s1930 + $0x18] sm:$0xf]
        %v2068 = vld [vmem:[%s1930 + $0x1c] sm:$0xf]
        %v2069 = vld [vmem:[%s1930 + $0x20] sm:$0xf]
        %v2070 = vld [vmem:[%s1930 + $0x24] sm:$0xf]
        %v2071 = vld [vmem:[%s1930 + $0x28] sm:$0xf]
        %v2072 = vld [vmem:[%s1930 + $0x2c] sm:$0xf]
        %v2073 = vld [vmem:[%s1930 + $0x30] sm:$0xf]
        %v2074 = vld [vmem:[%s1930 + $0x34] sm:$0xf]
        %v2075 = vld [vmem:[%s1930 + $0x38] sm:$0xf]
        %v2076 = vld [vmem:[%s1930 + $0x3c] sm:$0xf]
        %v2077 = vld [vmem:[%s1930 + $0x40] sm:$0xf]
        %v2078 = vld [vmem:[%s1930 + $0x44] sm:$0xf]
        %v2079 = vld [vmem:[%s1930 + $0x48] sm:$0xf]
        %v2080 = vld [vmem:[%s1930 + $0x4c] sm:$0xf]
        %v2081 = vld [vmem:[%s1930 + $0x50] sm:$0xf]
        %v2082 = vld [vmem:[%s1930 + $0x54] sm:$0xf]
        %v2083 = vld [vmem:[%s1930 + $0x58] sm:$0xf]
        %v2084 = vld [vmem:[%s1930 + $0x5c] sm:$0xf]
        %v2085 = vld [vmem:[%s1930 + $0x60] sm:$0xf]
        %v2086 = vld [vmem:[%s1930 + $0x64] sm:$0xf]
        %v2087 = vld [vmem:[%s1930 + $0x68] sm:$0xf]
        %v2088 = vld [vmem:[%s1930 + $0x6c] sm:$0xf]
        %v2089 = vld [vmem:[%s1930 + $0x70] sm:$0xf]
        %v2090 = vld [vmem:[%s1930 + $0x74] sm:$0xf]
        %v2091 = vld [vmem:[%s1930 + $0x78] sm:$0xf]
        %v2092 = vld [vmem:[%s1930 + $0x7c] sm:$0xf]
        %v2093 = vld [vmem:[%s1933] sm:$0x1]
        %v2094 = vld [vmem:[#allocation2] sm:$0xff]
        %v2095 = vld [vmem:[#allocation2 + $0x8] sm:$0xff]
        %v2096 = vld [vmem:[#allocation3] sm:$0xff]
        %v2097 = vld [vmem:[#allocation3 + $0x8] sm:$0xf]
        %vm2098 = vcmask 261120
        %v2099 = vsel %vm2098, %v2094, 0.0
        %2100 = vadd.xlane.f32.xlu0 %v2099
        %v2101 = vpop.xlane.xlu0 %2100
        %v2102 = vsel %vm2098, %v2095, 0.0
        %2103 = vadd.xlane.f32.xlu0 %v2102
        %v2104 = vpop.xlane.xlu0 %2103
        %v2105 = vrcp.pop 32.0
        %v2106 = vmul.f32 %v2101, %v2105
        %v2107 = vmul.f32 %v2104, %v2105
        %v2108 = vsub.f32 %v2094, %v2106
        %v2109 = vsub.f32 %v2095, %v2107
        %v2110 = vmul.f32 %v2108, %v2108
        %v2111 = vmul.f32 %v2109, %v2109
        %v2112 = vsel %vm2098, %v2110, 0.0
        %2113 = vadd.xlane.f32.xlu0 %v2112
        %v2114 = vpop.xlane.xlu0 %2113
        %v2115 = vsel %vm2098, %v2111, 0.0
        %2116 = vadd.xlane.f32.xlu0 %v2115
        %v2117 = vpop.xlane.xlu0 %2116
        %v2118 = vmul.f32 %v2114, %v2105
        %v2119 = vmul.f32 %v2117, %v2105
        %v2120 = vadd.f32 %v2118, 1e-05
        %v2121 = vadd.f32 %v2119, 1e-05
        %v2122 = vrsqrt.pop %v2120
        %v2123 = vrsqrt.pop %v2121
        %v2124 = vmul.f32 %v2108, %v2122
        %v2125 = vmul.f32 %v2109, %v2123
        %v2127 = vlaneseq
        %v2128 = vshrl.u32 %v2127, 7
        %v2129 = vsub.s32 0, %v2128
        %v2130 = vrot.slane %v1950, %v2129
        %v2132 = vmul.f32 %v2124, %v2130
        %v2133 = vmul.f32 %v2125, %v2130
        %v2135 = vlaneseq
        %v2136 = vshrl.u32 %v2135, 7
        %v2137 = vsub.s32 0, %v2136
        %v2138 = vrot.slane %v1951, %v2137
        %v2140 = vadd.f32 %v2132, %v2138
        %v2141 = vadd.f32 %v2133, %v2138
        %vm2142 = vcmask 523264
        %v2143 = vsel %vm2142, %v2096, 0.0
        %2144 = vadd.xlane.f32.xlu0 %v2143
        %v2145 = vpop.xlane.xlu0 %2144
        %vm2146 = vcmask 519168
        %v2147 = vsel %vm2146, %v2097, 0.0
        %2148 = vadd.xlane.f32.xlu0 %v2147
        %v2149 = vpop.xlane.xlu0 %2148
        %v2150 = vrcp.pop 64.0
        %v2151 = vmul.f32 %v2145, %v2150
        %v2152 = vmul.f32 %v2149, %v2150
        %v2153 = vsub.f32 %v2096, %v2151
        %v2154 = vsub.f32 %v2097, %v2152
        %v2155 = vmul.f32 %v2153, %v2153
        %v2156 = vmul.f32 %v2154, %v2154
        %v2157 = vsel %vm2142, %v2155, 0.0
        %2158 = vadd.xlane.f32.xlu0 %v2157
        %v2159 = vpop.xlane.xlu0 %2158
        %v2160 = vsel %vm2146, %v2156, 0.0
        %2161 = vadd.xlane.f32.xlu0 %v2160
        %v2162 = vpop.xlane.xlu0 %2161
        %v2163 = vmul.f32 %v2159, %v2150
        %v2164 = vmul.f32 %v2162, %v2150
        %v2165 = vadd.f32 %v2163, 1e-05
        %v2166 = vadd.f32 %v2164, 1e-05
        %v2167 = vrsqrt.pop %v2165
        %v2168 = vrsqrt.pop %v2166
        %v2169 = vmul.f32 %v2153, %v2167
        %v2170 = vmul.f32 %v2154, %v2168
        %v2172 = vlaneseq
        %v2173 = vshrl.u32 %v2172, 7
        %v2174 = vsub.s32 0, %v2173
        %v2175 = vrot.slane %v1952, %v2174
        %v2177 = vmul.f32 %v2169, %v2175
        %v2178 = vmul.f32 %v2170, %v2175
        %v2180 = vlaneseq
        %v2181 = vshrl.u32 %v2180, 7
        %v2182 = vsub.s32 0, %v2181
        %v2183 = vrot.slane %v1953, %v2182
        %v2185 = vadd.f32 %v2177, %v2183
        %v2186 = vadd.f32 %v2178, %v2183
        %v2187 = vpack.c.bf16 %v2141, %v2140
        %v2192 = vunpack.c.l.b16 %v1958
        %v2193 = vunpack.c.l.b16 %v1959
        %v2194 = vunpack.c.l.b16 %v1960
        %v2195 = vunpack.c.l.b16 %v1961
        %v2196 = vpack.c.b16 %v2193, %v2192
        %v2197 = vpack.c.b16 %v2195, %v2194
        %v2201 = vsel %vm2098, %v2187, 0
        %2203 = vmatprep.subr.bf16.mxu0 0
        %2204 = vmatpush1.bf16.msra.mxu0 %v2196
        %2205 = vmatprep.subr.bf16.mxu0 0
        %2206 = vmatpush1.bf16.msra.mxu0 %v2197
        %2207 = vmatprep.subr.bf16.mxu0 0
        %2208 = vmatpush1.bf16.msra.mxu0 0
        %2209 = vmatprep.subr.bf16.mxu0 0
        %2210 = vmatpush1.bf16.msra.mxu0 0
        %2211 = vmatprep.subr.bf16.mxu0 0
        %2212 = vmatpush1.bf16.msra.mxu0 0
        %2213 = vmatprep.subr.bf16.mxu0 0
        %2214 = vmatpush1.bf16.msra.mxu0 0
        %2215 = vmatprep.subr.bf16.mxu0 0
        %2216 = vmatpush1.bf16.msra.mxu0 0
        %2217 = vmatprep.subr.bf16.mxu0 0
        %2218 = vmatpush1.bf16.msra.mxu0 0
        %2219 = vmatprep.subr.bf16.mxu0 0
        %2220 = vmatpush1.bf16.msra.mxu0 0
        %2221 = vmatprep.subr.bf16.mxu0 0
        %2222 = vmatpush1.bf16.msra.mxu0 0
        %2223 = vmatprep.subr.bf16.mxu0 0
        %2224 = vmatpush1.bf16.msra.mxu0 0
        %2225 = vmatprep.subr.bf16.mxu0 0
        %2226 = vmatpush1.bf16.msra.mxu0 0
        %2227 = vmatprep.subr.bf16.mxu0 0
        %2228 = vmatpush1.bf16.msra.mxu0 0
        %2229 = vmatprep.subr.bf16.mxu0 0
        %2230 = vmatpush1.bf16.msra.mxu0 0
        %2231 = vmatprep.subr.bf16.mxu0 0
        %2232 = vmatpush1.bf16.msra.mxu0 0
        %2233 = vmatprep.subr.bf16.mxu0 0
        %2234 = vmatpush1.bf16.msra.mxu0 0
        %2235 = vmatprep.mubr.bf16.mxu0 0
        %2236 = vmatmul.mubr.bf16.gmra.mrb[0].mxu0 %v2201
        %v2237 = vpop.f32.mrb[0].mxu0
        %v2238 = vadd.f32 0.0, %v2237
        %v2239 = vpop.f32.mrb[0].mxu0
        %v2240 = vpop.f32.mrb[0].mxu0
        %v2241 = vadd.f32 0.0, %v2240
        %v2242 = vpop.f32.mrb[0].mxu0
        %2243 = vdwg.mxu0
        %v2244 = vpack.c.bf16 %v2186, %v2185
        %v2253 = vunpack.c.l.b16 %v1962
        %v2254 = vunpack.c.l.b16 %v1963
        %v2255 = vunpack.c.l.b16 %v1964
        %v2256 = vunpack.c.l.b16 %v1965
        %v2257 = vunpack.c.l.b16 %v1966
        %v2258 = vunpack.c.l.b16 %v1967
        %v2259 = vunpack.c.l.b16 %v1968
        %v2260 = vunpack.c.l.b16 %v1969
        %v2261 = vpack.c.b16 %v2254, %v2253
        %v2262 = vpack.c.b16 %v2256, %v2255
        %v2263 = vpack.c.b16 %v2258, %v2257
        %v2264 = vpack.c.b16 %v2260, %v2259
        %v2270 = vsel %vm2142, %v2244, 0
        %2272 = vmatprep.subr.bf16.mxu0 0
        %2273 = vmatpush1.bf16.msra.mxu0 %v2261
        %2274 = vmatprep.subr.bf16.mxu0 0
        %2275 = vmatpush1.bf16.msra.mxu0 %v2262
        %2276 = vmatprep.subr.bf16.mxu0 0
        %2277 = vmatpush1.bf16.msra.mxu0 %v2263
        %2278 = vmatprep.subr.bf16.mxu0 0
        %2279 = vmatpush1.bf16.msra.mxu0 %v2264
        %2280 = vmatprep.subr.bf16.mxu0 0
        %2281 = vmatpush1.bf16.msra.mxu0 0
        %2282 = vmatprep.subr.bf16.mxu0 0
        %2283 = vmatpush1.bf16.msra.mxu0 0
        %2284 = vmatprep.subr.bf16.mxu0 0
        %2285 = vmatpush1.bf16.msra.mxu0 0
        %2286 = vmatprep.subr.bf16.mxu0 0
        %2287 = vmatpush1.bf16.msra.mxu0 0
        %2288 = vmatprep.subr.bf16.mxu0 0
        %2289 = vmatpush1.bf16.msra.mxu0 0
        %2290 = vmatprep.subr.bf16.mxu0 0
        %2291 = vmatpush1.bf16.msra.mxu0 0
        %2292 = vmatprep.subr.bf16.mxu0 0
        %2293 = vmatpush1.bf16.msra.mxu0 0
        %2294 = vmatprep.subr.bf16.mxu0 0
        %2295 = vmatpush1.bf16.msra.mxu0 0
        %2296 = vmatprep.subr.bf16.mxu0 0
        %2297 = vmatpush1.bf16.msra.mxu0 0
        %2298 = vmatprep.subr.bf16.mxu0 0
        %2299 = vmatpush1.bf16.msra.mxu0 0
        %2300 = vmatprep.subr.bf16.mxu0 0
        %2301 = vmatpush1.bf16.msra.mxu0 0
        %2302 = vmatprep.subr.bf16.mxu0 0
        %2303 = vmatpush1.bf16.msra.mxu0 0
        %2304 = vmatprep.mubr.bf16.mxu0 0
        %2305 = vmatmul.mubr.bf16.gmra.mrb[0].mxu0 %v2270
        %v2306 = vpop.f32.mrb[0].mxu0
        %v2307 = vadd.f32 0.0, %v2306
        %v2308 = vpop.f32.mrb[0].mxu0
        %v2309 = vpop.f32.mrb[0].mxu0
        %v2310 = vadd.f32 0.0, %v2309
        %v2311 = vpop.f32.mrb[0].mxu0
        %2312 = vdwg.mxu0
        %v2313 = vpack.c.bf16 %v2238, %v2238
        %v2314 = vpack.c.bf16 %v2307, %v2307
        %vm2315 = vcmask 64512
        %v2317 = vsel %vm2315, %v2313, 0
        %v2320 = vsel %vm2315, %v2314, 0
        %2322 = vmatprep.subr.bf16.mxu0 0
        %2323 = vmatpush1.bf16.xpose.msra.mxu0 %v2320
        %2324 = vmatprep.subr.bf16.mxu0 0
        %2325 = vmatpush1.bf16.xpose.msra.mxu0 0
        %2326 = vmatprep.subr.bf16.mxu0 0
        %2327 = vmatpush1.bf16.xpose.msra.mxu0 0
        %2328 = vmatprep.subr.bf16.mxu0 0
        %2329 = vmatpush1.bf16.xpose.msra.mxu0 0
        %2330 = vmatprep.subr.bf16.mxu0 0
        %2331 = vmatpush1.bf16.xpose.msra.mxu0 0
        %2332 = vmatprep.subr.bf16.mxu0 0
        %2333 = vmatpush1.bf16.xpose.msra.mxu0 0
        %2334 = vmatprep.subr.bf16.mxu0 0
        %2335 = vmatpush1.bf16.xpose.msra.mxu0 0
        %2336 = vmatprep.subr.bf16.mxu0 0
        %2337 = vmatpush1.bf16.xpose.msra.mxu0 0
        %2338 = vmatprep.subr.bf16.mxu0 0
        %2339 = vmatpush1.bf16.xpose.msra.mxu0 0
        %2340 = vmatprep.subr.bf16.mxu0 0
        %2341 = vmatpush1.bf16.xpose.msra.mxu0 0
        %2342 = vmatprep.subr.bf16.mxu0 0
        %2343 = vmatpush1.bf16.xpose.msra.mxu0 0
        %2344 = vmatprep.subr.bf16.mxu0 0
        %2345 = vmatpush1.bf16.xpose.msra.mxu0 0
        %2346 = vmatprep.subr.bf16.mxu0 0
        %2347 = vmatpush1.bf16.xpose.msra.mxu0 0
        %2348 = vmatprep.subr.bf16.mxu0 0
        %2349 = vmatpush1.bf16.xpose.msra.mxu0 0
        %2350 = vmatprep.subr.bf16.mxu0 0
        %2351 = vmatpush1.bf16.xpose.msra.mxu0 0
        %2352 = vmatprep.subr.bf16.mxu0 0
        %2353 = vmatpush1.bf16.xpose.msra.mxu0 0
        %2354 = vmatprep.mubr.bf16.mxu0 0
        %2355 = vmatmul.mubr.bf16.gmra.mrb[0].mxu0 %v2317
        %v2356 = vpop.f32.mrb[0].mxu0
        %v2357 = vadd.f32 0.0, %v2356
        %v2358 = vpop.f32.mrb[0].mxu0
        %v2359 = vpop.f32.mrb[0].mxu0
        %v2360 = vpop.f32.mrb[0].mxu0
        %2361 = vdwg.mxu0
        %vm2362 = vcmask 48128
        %v2363 = vsel %vm2362, %v2357, -inf
        %2364 = vmax.xlane.f32.xlu0 %v2363
        %v2365 = vpop.xlane.xlu0 %2364
        %v2366 = vsub.f32 %v2357, %v2365
        %v2367 = vmul.f32 %v2366, 1.442695
        %v2368 = vpow.pop %v2367
        %v2369 = vsel %vm2362, %v2368, 0.0
        %2370 = vadd.xlane.f32.xlu0 %v2369
        %v2371 = vpop.xlane.xlu0 %2370
        %v2372 = vrcp.pop %v2371
        %v2373 = vmul.f32 %v2368, %v2372
        %v2374 = vpack.c.bf16 %v2373, %v2373
        %2376 = vrot.lane.b32.xlu0 %v2314, 96
        %v2377 = vpop.permute.xlu0 %2376
        %v2379 = vsel %vm2362, %v2374, 0
        %vm2381 = vcmask 1042432
        %v2383 = vsel %vm2381, %v2377, 0
        %2385 = vmatprep.subr.bf16.mxu0 0
        %2386 = vmatpush1.bf16.msra.mxu0 %v2383
        %2387 = vmatprep.subr.bf16.mxu0 0
        %2388 = vmatpush1.bf16.msra.mxu0 0
        %2389 = vmatprep.subr.bf16.mxu0 0
        %2390 = vmatpush1.bf16.msra.mxu0 0
        %2391 = vmatprep.subr.bf16.mxu0 0
        %2392 = vmatpush1.bf16.msra.mxu0 0
        %2393 = vmatprep.subr.bf16.mxu0 0
        %2394 = vmatpush1.bf16.msra.mxu0 0
        %2395 = vmatprep.subr.bf16.mxu0 0
        %2396 = vmatpush1.bf16.msra.mxu0 0
        %2397 = vmatprep.subr.bf16.mxu0 0
        %2398 = vmatpush1.bf16.msra.mxu0 0
        %2399 = vmatprep.subr.bf16.mxu0 0
        %2400 = vmatpush1.bf16.msra.mxu0 0
        %2401 = vmatprep.subr.bf16.mxu0 0
        %2402 = vmatpush1.bf16.msra.mxu0 0
        %2403 = vmatprep.subr.bf16.mxu0 0
        %2404 = vmatpush1.bf16.msra.mxu0 0
        %2405 = vmatprep.subr.bf16.mxu0 0
        %2406 = vmatpush1.bf16.msra.mxu0 0
        %2407 = vmatprep.subr.bf16.mxu0 0
        %2408 = vmatpush1.bf16.msra.mxu0 0
        %2409 = vmatprep.subr.bf16.mxu0 0
        %2410 = vmatpush1.bf16.msra.mxu0 0
        %2411 = vmatprep.subr.bf16.mxu0 0
        %2412 = vmatpush1.bf16.msra.mxu0 0
        %2413 = vmatprep.subr.bf16.mxu0 0
        %2414 = vmatpush1.bf16.msra.mxu0 0
        %2415 = vmatprep.subr.bf16.mxu0 0
        %2416 = vmatpush1.bf16.msra.mxu0 0
        %2417 = vmatprep.mubr.bf16.mxu0 0
        %2418 = vmatmul.mubr.bf16.gmra.mrb[0].mxu0 %v2379
        %v2419 = vpop.f32.mrb[0].mxu0
        %v2420 = vadd.f32 0.0, %v2419
        %v2421 = vpop.f32.mrb[0].mxu0
        %v2422 = vpop.f32.mrb[0].mxu0
        %v2423 = vpop.f32.mrb[0].mxu0
        %2424 = vdwg.mxu0
        %2426 = vrot.lane.b32.xlu0 %v2313, 120
        %v2427 = vpop.permute.xlu0 %2426
        %2428 = vrot.lane.b32.xlu0 %v2314, 120
        %v2429 = vpop.permute.xlu0 %2428
        %v2431 = vsel %vm2315, %v2427, 0
        %v2434 = vsel %vm2315, %v2429, 0
        %2436 = vmatprep.subr.bf16.mxu0 0
        %2437 = vmatpush1.bf16.xpose.msra.mxu0 %v2434
        %2438 = vmatprep.subr.bf16.mxu0 0
        %2439 = vmatpush1.bf16.xpose.msra.mxu0 0
        %2440 = vmatprep.subr.bf16.mxu0 0
        %2441 = vmatpush1.bf16.xpose.msra.mxu0 0
        %2442 = vmatprep.subr.bf16.mxu0 0
        %2443 = vmatpush1.bf16.xpose.msra.mxu0 0
        %2444 = vmatprep.subr.bf16.mxu0 0
        %2445 = vmatpush1.bf16.xpose.msra.mxu0 0
        %2446 = vmatprep.subr.bf16.mxu0 0
        %2447 = vmatpush1.bf16.xpose.msra.mxu0 0
        %2448 = vmatprep.subr.bf16.mxu0 0
        %2449 = vmatpush1.bf16.xpose.msra.mxu0 0
        %2450 = vmatprep.subr.bf16.mxu0 0
        %2451 = vmatpush1.bf16.xpose.msra.mxu0 0
        %2452 = vmatprep.subr.bf16.mxu0 0
        %2453 = vmatpush1.bf16.xpose.msra.mxu0 0
        %2454 = vmatprep.subr.bf16.mxu0 0
        %2455 = vmatpush1.bf16.xpose.msra.mxu0 0
        %2456 = vmatprep.subr.bf16.mxu0 0
        %2457 = vmatpush1.bf16.xpose.msra.mxu0 0
        %2458 = vmatprep.subr.bf16.mxu0 0
        %2459 = vmatpush1.bf16.xpose.msra.mxu0 0
        %2460 = vmatprep.subr.bf16.mxu0 0
        %2461 = vmatpush1.bf16.xpose.msra.mxu0 0
        %2462 = vmatprep.subr.bf16.mxu0 0
        %2463 = vmatpush1.bf16.xpose.msra.mxu0 0
        %2464 = vmatprep.subr.bf16.mxu0 0
        %2465 = vmatpush1.bf16.xpose.msra.mxu0 0
        %2466 = vmatprep.subr.bf16.mxu0 0
        %2467 = vmatpush1.bf16.xpose.msra.mxu0 0
        %2468 = vmatprep.mubr.bf16.mxu0 0
        %2469 = vmatmul.mubr.bf16.gmra.mrb[0].mxu0 %v2431
        %v2470 = vpop.f32.mrb[0].mxu0
        %v2471 = vadd.f32 0.0, %v2470
        %v2472 = vpop.f32.mrb[0].mxu0
        %v2473 = vpop.f32.mrb[0].mxu0
        %v2474 = vpop.f32.mrb[0].mxu0
        %2475 = vdwg.mxu0
        %v2476 = vsel %vm2362, %v2471, -inf
        %2477 = vmax.xlane.f32.xlu0 %v2476
        %v2478 = vpop.xlane.xlu0 %2477
        %v2479 = vsub.f32 %v2471, %v2478
        %v2480 = vmul.f32 %v2479, 1.442695
        %v2481 = vpow.pop %v2480
        %v2482 = vsel %vm2362, %v2481, 0.0
        %2483 = vadd.xlane.f32.xlu0 %v2482
        %v2484 = vpop.xlane.xlu0 %2483
        %v2485 = vrcp.pop %v2484
        %v2486 = vmul.f32 %v2481, %v2485
        %v2487 = vpack.c.bf16 %v2486, %v2486
        %2488 = vrot.lane.b32.xlu0 %v2314, 88
        %v2489 = vpop.permute.xlu0 %2488
        %v2491 = vsel %vm2362, %v2487, 0
        %v2494 = vsel %vm2381, %v2489, 0
        %2496 = vmatprep.subr.bf16.mxu0 0
        %2497 = vmatpush1.bf16.msra.mxu0 %v2494
        %2498 = vmatprep.subr.bf16.mxu0 0
        %2499 = vmatpush1.bf16.msra.mxu0 0
        %2500 = vmatprep.subr.bf16.mxu0 0
        %2501 = vmatpush1.bf16.msra.mxu0 0
        %2502 = vmatprep.subr.bf16.mxu0 0
        %2503 = vmatpush1.bf16.msra.mxu0 0
        %2504 = vmatprep.subr.bf16.mxu0 0
        %2505 = vmatpush1.bf16.msra.mxu0 0
        %2506 = vmatprep.subr.bf16.mxu0 0
        %2507 = vmatpush1.bf16.msra.mxu0 0
        %2508 = vmatprep.subr.bf16.mxu0 0
        %2509 = vmatpush1.bf16.msra.mxu0 0
        %2510 = vmatprep.subr.bf16.mxu0 0
        %2511 = vmatpush1.bf16.msra.mxu0 0
        %2512 = vmatprep.subr.bf16.mxu0 0
        %2513 = vmatpush1.bf16.msra.mxu0 0
        %2514 = vmatprep.subr.bf16.mxu0 0
        %2515 = vmatpush1.bf16.msra.mxu0 0
        %2516 = vmatprep.subr.bf16.mxu0 0
        %2517 = vmatpush1.bf16.msra.mxu0 0
        %2518 = vmatprep.subr.bf16.mxu0 0
        %2519 = vmatpush1.bf16.msra.mxu0 0
        %2520 = vmatprep.subr.bf16.mxu0 0
        %2521 = vmatpush1.bf16.msra.mxu0 0
        %2522 = vmatprep.subr.bf16.mxu0 0
        %2523 = vmatpush1.bf16.msra.mxu0 0
        %2524 = vmatprep.subr.bf16.mxu0 0
        %2525 = vmatpush1.bf16.msra.mxu0 0
        %2526 = vmatprep.subr.bf16.mxu0 0
        %2527 = vmatpush1.bf16.msra.mxu0 0
        %2528 = vmatprep.mubr.bf16.mxu0 0
        %2529 = vmatmul.mubr.bf16.gmra.mrb[0].mxu0 %v2491
        %v2530 = vpop.f32.mrb[0].mxu0
        %v2531 = vadd.f32 0.0, %v2530
        %v2532 = vpop.f32.mrb[0].mxu0
        %v2533 = vpop.f32.mrb[0].mxu0
        %v2534 = vpop.f32.mrb[0].mxu0
        %2535 = vdwg.mxu0
        %2536 = vrot.lane.b32.xlu0 %v2313, 112
        %v2537 = vpop.permute.xlu0 %2536
        %2538 = vrot.lane.b32.xlu0 %v2314, 112
        %v2539 = vpop.permute.xlu0 %2538
        %v2541 = vsel %vm2315, %v2537, 0
        %v2544 = vsel %vm2315, %v2539, 0
        %2546 = vmatprep.subr.bf16.mxu0 0
        %2547 = vmatpush1.bf16.xpose.msra.mxu0 %v2544
        %2548 = vmatprep.subr.bf16.mxu0 0
        %2549 = vmatpush1.bf16.xpose.msra.mxu0 0
        %2550 = vmatprep.subr.bf16.mxu0 0
        %2551 = vmatpush1.bf16.xpose.msra.mxu0 0
        %2552 = vmatprep.subr.bf16.mxu0 0
        %2553 = vmatpush1.bf16.xpose.msra.mxu0 0
        %2554 = vmatprep.subr.bf16.mxu0 0
        %2555 = vmatpush1.bf16.xpose.msra.mxu0 0
        %2556 = vmatprep.subr.bf16.mxu0 0
        %2557 = vmatpush1.bf16.xpose.msra.mxu0 0
        %2558 = vmatprep.subr.bf16.mxu0 0
        %2559 = vmatpush1.bf16.xpose.msra.mxu0 0
        %2560 = vmatprep.subr.bf16.mxu0 0
        %2561 = vmatpush1.bf16.xpose.msra.mxu0 0
        %2562 = vmatprep.subr.bf16.mxu0 0
        %2563 = vmatpush1.bf16.xpose.msra.mxu0 0
        %2564 = vmatprep.subr.bf16.mxu0 0
        %2565 = vmatpush1.bf16.xpose.msra.mxu0 0
        %2566 = vmatprep.subr.bf16.mxu0 0
        %2567 = vmatpush1.bf16.xpose.msra.mxu0 0
        %2568 = vmatprep.subr.bf16.mxu0 0
        %2569 = vmatpush1.bf16.xpose.msra.mxu0 0
        %2570 = vmatprep.subr.bf16.mxu0 0
        %2571 = vmatpush1.bf16.xpose.msra.mxu0 0
        %2572 = vmatprep.subr.bf16.mxu0 0
        %2573 = vmatpush1.bf16.xpose.msra.mxu0 0
        %2574 = vmatprep.subr.bf16.mxu0 0
        %2575 = vmatpush1.bf16.xpose.msra.mxu0 0
        %2576 = vmatprep.subr.bf16.mxu0 0
        %2577 = vmatpush1.bf16.xpose.msra.mxu0 0
        %2578 = vmatprep.mubr.bf16.mxu0 0
        %2579 = vmatmul.mubr.bf16.gmra.mrb[0].mxu0 %v2541
        %v2580 = vpop.f32.mrb[0].mxu0
        %v2581 = vadd.f32 0.0, %v2580
        %v2582 = vpop.f32.mrb[0].mxu0
        %v2583 = vpop.f32.mrb[0].mxu0
        %v2584 = vpop.f32.mrb[0].mxu0
        %2585 = vdwg.mxu0
        %v2586 = vsel %vm2362, %v2581, -inf
        %2587 = vmax.xlane.f32.xlu0 %v2586
        %v2588 = vpop.xlane.xlu0 %2587
        %v2589 = vsub.f32 %v2581, %v2588
        %v2590 = vmul.f32 %v2589, 1.442695
        %v2591 = vpow.pop %v2590
        %v2592 = vsel %vm2362, %v2591, 0.0
        %2593 = vadd.xlane.f32.xlu0 %v2592
        %v2594 = vpop.xlane.xlu0 %2593
        %v2595 = vrcp.pop %v2594
        %v2596 = vmul.f32 %v2591, %v2595
        %v2597 = vpack.c.bf16 %v2596, %v2596
        %2598 = vrot.lane.b32.xlu0 %v2314, 80
        %v2599 = vpop.permute.xlu0 %2598
        %v2601 = vsel %vm2362, %v2597, 0
        %v2604 = vsel %vm2381, %v2599, 0
        %2606 = vmatprep.subr.bf16.mxu0 0
        %2607 = vmatpush1.bf16.msra.mxu0 %v2604
        %2608 = vmatprep.subr.bf16.mxu0 0
        %2609 = vmatpush1.bf16.msra.mxu0 0
        %2610 = vmatprep.subr.bf16.mxu0 0
        %2611 = vmatpush1.bf16.msra.mxu0 0
        %2612 = vmatprep.subr.bf16.mxu0 0
        %2613 = vmatpush1.bf16.msra.mxu0 0
        %2614 = vmatprep.subr.bf16.mxu0 0
        %2615 = vmatpush1.bf16.msra.mxu0 0
        %2616 = vmatprep.subr.bf16.mxu0 0
        %2617 = vmatpush1.bf16.msra.mxu0 0
        %2618 = vmatprep.subr.bf16.mxu0 0
        %2619 = vmatpush1.bf16.msra.mxu0 0
        %2620 = vmatprep.subr.bf16.mxu0 0
        %2621 = vmatpush1.bf16.msra.mxu0 0
        %2622 = vmatprep.subr.bf16.mxu0 0
        %2623 = vmatpush1.bf16.msra.mxu0 0
        %2624 = vmatprep.subr.bf16.mxu0 0
        %2625 = vmatpush1.bf16.msra.mxu0 0
        %2626 = vmatprep.subr.bf16.mxu0 0
        %2627 = vmatpush1.bf16.msra.mxu0 0
        %2628 = vmatprep.subr.bf16.mxu0 0
        %2629 = vmatpush1.bf16.msra.mxu0 0
        %2630 = vmatprep.subr.bf16.mxu0 0
        %2631 = vmatpush1.bf16.msra.mxu0 0
        %2632 = vmatprep.subr.bf16.mxu0 0
        %2633 = vmatpush1.bf16.msra.mxu0 0
        %2634 = vmatprep.subr.bf16.mxu0 0
        %2635 = vmatpush1.bf16.msra.mxu0 0
        %2636 = vmatprep.subr.bf16.mxu0 0
        %2637 = vmatpush1.bf16.msra.mxu0 0
        %2638 = vmatprep.mubr.bf16.mxu0 0
        %2639 = vmatmul.mubr.bf16.gmra.mrb[0].mxu0 %v2601
        %v2640 = vpop.f32.mrb[0].mxu0
        %v2641 = vadd.f32 0.0, %v2640
        %v2642 = vpop.f32.mrb[0].mxu0
        %v2643 = vpop.f32.mrb[0].mxu0
        %v2644 = vpop.f32.mrb[0].mxu0
        %2645 = vdwg.mxu0
        %2646 = vrot.lane.b32.xlu0 %v2313, 104
        %v2647 = vpop.permute.xlu0 %2646
        %2648 = vrot.lane.b32.xlu0 %v2314, 104
        %v2649 = vpop.permute.xlu0 %2648
        %v2651 = vsel %vm2315, %v2647, 0
        %v2654 = vsel %vm2315, %v2649, 0
        %2656 = vmatprep.subr.bf16.mxu0 0
        %2657 = vmatpush1.bf16.xpose.msra.mxu0 %v2654
        %2658 = vmatprep.subr.bf16.mxu0 0
        %2659 = vmatpush1.bf16.xpose.msra.mxu0 0
        %2660 = vmatprep.subr.bf16.mxu0 0
        %2661 = vmatpush1.bf16.xpose.msra.mxu0 0
        %2662 = vmatprep.subr.bf16.mxu0 0
        %2663 = vmatpush1.bf16.xpose.msra.mxu0 0
        %2664 = vmatprep.subr.bf16.mxu0 0
        %2665 = vmatpush1.bf16.xpose.msra.mxu0 0
        %2666 = vmatprep.subr.bf16.mxu0 0
        %2667 = vmatpush1.bf16.xpose.msra.mxu0 0
        %2668 = vmatprep.subr.bf16.mxu0 0
        %2669 = vmatpush1.bf16.xpose.msra.mxu0 0
        %2670 = vmatprep.subr.bf16.mxu0 0
        %2671 = vmatpush1.bf16.xpose.msra.mxu0 0
        %2672 = vmatprep.subr.bf16.mxu0 0
        %2673 = vmatpush1.bf16.xpose.msra.mxu0 0
        %2674 = vmatprep.subr.bf16.mxu0 0
        %2675 = vmatpush1.bf16.xpose.msra.mxu0 0
        %2676 = vmatprep.subr.bf16.mxu0 0
        %2677 = vmatpush1.bf16.xpose.msra.mxu0 0
        %2678 = vmatprep.subr.bf16.mxu0 0
        %2679 = vmatpush1.bf16.xpose.msra.mxu0 0
        %2680 = vmatprep.subr.bf16.mxu0 0
        %2681 = vmatpush1.bf16.xpose.msra.mxu0 0
        %2682 = vmatprep.subr.bf16.mxu0 0
        %2683 = vmatpush1.bf16.xpose.msra.mxu0 0
        %2684 = vmatprep.subr.bf16.mxu0 0
        %2685 = vmatpush1.bf16.xpose.msra.mxu0 0
        %2686 = vmatprep.subr.bf16.mxu0 0
        %2687 = vmatpush1.bf16.xpose.msra.mxu0 0
        %2688 = vmatprep.mubr.bf16.mxu0 0
        %2689 = vmatmul.mubr.bf16.gmra.mrb[0].mxu0 %v2651
        %v2690 = vpop.f32.mrb[0].mxu0
        %v2691 = vadd.f32 0.0, %v2690
        %v2692 = vpop.f32.mrb[0].mxu0
        %v2693 = vpop.f32.mrb[0].mxu0
        %v2694 = vpop.f32.mrb[0].mxu0
        %2695 = vdwg.mxu0
        %v2696 = vsel %vm2362, %v2691, -inf
        %2697 = vmax.xlane.f32.xlu0 %v2696
        %v2698 = vpop.xlane.xlu0 %2697
        %v2699 = vsub.f32 %v2691, %v2698
        %v2700 = vmul.f32 %v2699, 1.442695
        %v2701 = vpow.pop %v2700
        %v2702 = vsel %vm2362, %v2701, 0.0
        %2703 = vadd.xlane.f32.xlu0 %v2702
        %v2704 = vpop.xlane.xlu0 %2703
        %v2705 = vrcp.pop %v2704
        %v2706 = vmul.f32 %v2701, %v2705
        %v2707 = vpack.c.bf16 %v2706, %v2706
        %2708 = vrot.lane.b32.xlu0 %v2314, 72
        %v2709 = vpop.permute.xlu0 %2708
        %v2711 = vsel %vm2362, %v2707, 0
        %v2714 = vsel %vm2381, %v2709, 0
        %2716 = vmatprep.subr.bf16.mxu0 0
        %2717 = vmatpush1.bf16.msra.mxu0 %v2714
        %2718 = vmatprep.subr.bf16.mxu0 0
        %2719 = vmatpush1.bf16.msra.mxu0 0
        %2720 = vmatprep.subr.bf16.mxu0 0
        %2721 = vmatpush1.bf16.msra.mxu0 0
        %2722 = vmatprep.subr.bf16.mxu0 0
        %2723 = vmatpush1.bf16.msra.mxu0 0
        %2724 = vmatprep.subr.bf16.mxu0 0
        %2725 = vmatpush1.bf16.msra.mxu0 0
        %2726 = vmatprep.subr.bf16.mxu0 0
        %2727 = vmatpush1.bf16.msra.mxu0 0
        %2728 = vmatprep.subr.bf16.mxu0 0
        %2729 = vmatpush1.bf16.msra.mxu0 0
        %2730 = vmatprep.subr.bf16.mxu0 0
        %2731 = vmatpush1.bf16.msra.mxu0 0
        %2732 = vmatprep.subr.bf16.mxu0 0
        %2733 = vmatpush1.bf16.msra.mxu0 0
        %2734 = vmatprep.subr.bf16.mxu0 0
        %2735 = vmatpush1.bf16.msra.mxu0 0
        %2736 = vmatprep.subr.bf16.mxu0 0
        %2737 = vmatpush1.bf16.msra.mxu0 0
        %2738 = vmatprep.subr.bf16.mxu0 0
        %2739 = vmatpush1.bf16.msra.mxu0 0
        %2740 = vmatprep.subr.bf16.mxu0 0
        %2741 = vmatpush1.bf16.msra.mxu0 0
        %2742 = vmatprep.subr.bf16.mxu0 0
        %2743 = vmatpush1.bf16.msra.mxu0 0
        %2744 = vmatprep.subr.bf16.mxu0 0
        %2745 = vmatpush1.bf16.msra.mxu0 0
        %2746 = vmatprep.subr.bf16.mxu0 0
        %2747 = vmatpush1.bf16.msra.mxu0 0
        %2748 = vmatprep.mubr.bf16.mxu0 0
        %2749 = vmatmul.mubr.bf16.gmra.mrb[0].mxu0 %v2711
        %v2750 = vpop.f32.mrb[0].mxu0
        %v2751 = vadd.f32 0.0, %v2750
        %v2752 = vpop.f32.mrb[0].mxu0
        %v2753 = vpop.f32.mrb[0].mxu0
        %v2754 = vpop.f32.mrb[0].mxu0
        %2755 = vdwg.mxu0
        %2757 = vrot.lane.b32.xlu0 %v2531, 8
        %v2758 = vpop.permute.xlu0 %2757
        %2761 = vrot.lane.b32.xlu0 %v2641, 16
        %v2762 = vpop.permute.xlu0 %2761
        %2765 = vrot.lane.b32.xlu0 %v2751, 24
        %v2766 = vpop.permute.xlu0 %2765
        %v2768 = vsel %vm2315, %v2420, %v2758
        %vm2769 = vcmask 130048
        %v2770 = vsel %vm2769, %v2768, %v2762
        %vm2771 = vcmask 195584
        %v2772 = vsel %vm2771, %v2770, %v2766
        %v2773 = vpack.c.bf16 %v2241, %v2241
        %v2774 = vpack.c.bf16 %v2310, %v2307
        %v2776 = vrot.slane %v2774, 3
        %v2778 = vsel %vm2315, %v2773, 0
        %v2781 = vsel %vm2315, %v2776, 0
        %2783 = vmatprep.subr.bf16.mxu0 0
        %2784 = vmatpush1.bf16.xpose.msra.mxu0 %v2781
        %2785 = vmatprep.subr.bf16.mxu0 0
        %2786 = vmatpush1.bf16.xpose.msra.mxu0 0
        %2787 = vmatprep.subr.bf16.mxu0 0
        %2788 = vmatpush1.bf16.xpose.msra.mxu0 0
        %2789 = vmatprep.subr.bf16.mxu0 0
        %2790 = vmatpush1.bf16.xpose.msra.mxu0 0
        %2791 = vmatprep.subr.bf16.mxu0 0
        %2792 = vmatpush1.bf16.xpose.msra.mxu0 0
        %2793 = vmatprep.subr.bf16.mxu0 0
        %2794 = vmatpush1.bf16.xpose.msra.mxu0 0
        %2795 = vmatprep.subr.bf16.mxu0 0
        %2796 = vmatpush1.bf16.xpose.msra.mxu0 0
        %2797 = vmatprep.subr.bf16.mxu0 0
        %2798 = vmatpush1.bf16.xpose.msra.mxu0 0
        %2799 = vmatprep.subr.bf16.mxu0 0
        %2800 = vmatpush1.bf16.xpose.msra.mxu0 0
        %2801 = vmatprep.subr.bf16.mxu0 0
        %2802 = vmatpush1.bf16.xpose.msra.mxu0 0
        %2803 = vmatprep.subr.bf16.mxu0 0
        %2804 = vmatpush1.bf16.xpose.msra.mxu0 0
        %2805 = vmatprep.subr.bf16.mxu0 0
        %2806 = vmatpush1.bf16.xpose.msra.mxu0 0
        %2807 = vmatprep.subr.bf16.mxu0 0
        %2808 = vmatpush1.bf16.xpose.msra.mxu0 0
        %2809 = vmatprep.subr.bf16.mxu0 0
        %2810 = vmatpush1.bf16.xpose.msra.mxu0 0
        %2811 = vmatprep.subr.bf16.mxu0 0
        %2812 = vmatpush1.bf16.xpose.msra.mxu0 0
        %2813 = vmatprep.subr.bf16.mxu0 0
        %2814 = vmatpush1.bf16.xpose.msra.mxu0 0
        %2815 = vmatprep.mubr.bf16.mxu0 0
        %2816 = vmatmul.mubr.bf16.gmra.mrb[0].mxu0 %v2778
        %v2817 = vpop.f32.mrb[0].mxu0
        %v2818 = vadd.f32 0.0, %v2817
        %v2819 = vpop.f32.mrb[0].mxu0
        %v2820 = vpop.f32.mrb[0].mxu0
        %v2821 = vpop.f32.mrb[0].mxu0
        %2822 = vdwg.mxu0
        %v2823 = vsel %vm2362, %v2818, -inf
        %2824 = vmax.xlane.f32.xlu0 %v2823
        %v2825 = vpop.xlane.xlu0 %2824
        %v2826 = vsub.f32 %v2818, %v2825
        %v2827 = vmul.f32 %v2826, 1.442695
        %v2828 = vpow.pop %v2827
        %v2829 = vsel %vm2362, %v2828, 0.0
        %2830 = vadd.xlane.f32.xlu0 %v2829
        %v2831 = vpop.xlane.xlu0 %2830
        %v2832 = vrcp.pop %v2831
        %v2833 = vmul.f32 %v2828, %v2832
        %v2834 = vpack.c.bf16 %v2833, %v2833
        %2835 = vrot.lane.b32.xlu0 %v2776, 96
        %v2836 = vpop.permute.xlu0 %2835
        %v2838 = vsel %vm2362, %v2834, 0
        %v2841 = vsel %vm2381, %v2836, 0
        %2843 = vmatprep.subr.bf16.mxu0 0
        %2844 = vmatpush1.bf16.msra.mxu0 %v2841
        %2845 = vmatprep.subr.bf16.mxu0 0
        %2846 = vmatpush1.bf16.msra.mxu0 0
        %2847 = vmatprep.subr.bf16.mxu0 0
        %2848 = vmatpush1.bf16.msra.mxu0 0
        %2849 = vmatprep.subr.bf16.mxu0 0
        %2850 = vmatpush1.bf16.msra.mxu0 0
        %2851 = vmatprep.subr.bf16.mxu0 0
        %2852 = vmatpush1.bf16.msra.mxu0 0
        %2853 = vmatprep.subr.bf16.mxu0 0
        %2854 = vmatpush1.bf16.msra.mxu0 0
        %2855 = vmatprep.subr.bf16.mxu0 0
        %2856 = vmatpush1.bf16.msra.mxu0 0
        %2857 = vmatprep.subr.bf16.mxu0 0
        %2858 = vmatpush1.bf16.msra.mxu0 0
        %2859 = vmatprep.subr.bf16.mxu0 0
        %2860 = vmatpush1.bf16.msra.mxu0 0
        %2861 = vmatprep.subr.bf16.mxu0 0
        %2862 = vmatpush1.bf16.msra.mxu0 0
        %2863 = vmatprep.subr.bf16.mxu0 0
        %2864 = vmatpush1.bf16.msra.mxu0 0
        %2865 = vmatprep.subr.bf16.mxu0 0
        %2866 = vmatpush1.bf16.msra.mxu0 0
        %2867 = vmatprep.subr.bf16.mxu0 0
        %2868 = vmatpush1.bf16.msra.mxu0 0
        %2869 = vmatprep.subr.bf16.mxu0 0
        %2870 = vmatpush1.bf16.msra.mxu0 0
        %2871 = vmatprep.subr.bf16.mxu0 0
        %2872 = vmatpush1.bf16.msra.mxu0 0
        %2873 = vmatprep.subr.bf16.mxu0 0
        %2874 = vmatpush1.bf16.msra.mxu0 0
        %2875 = vmatprep.mubr.bf16.mxu0 0
        %2876 = vmatmul.mubr.bf16.gmra.mrb[0].mxu0 %v2838
        %v2877 = vpop.f32.mrb[0].mxu0
        %v2878 = vadd.f32 0.0, %v2877
        %v2879 = vpop.f32.mrb[0].mxu0
        %v2880 = vpop.f32.mrb[0].mxu0
        %v2881 = vpop.f32.mrb[0].mxu0
        %2882 = vdwg.mxu0
        %2884 = vrot.lane.b32.xlu0 %v2773, 120
        %v2885 = vpop.permute.xlu0 %2884
        %2886 = vrot.lane.b32.xlu0 %v2776, 120
        %v2887 = vpop.permute.xlu0 %2886
        %v2889 = vsel %vm2315, %v2885, 0
        %v2892 = vsel %vm2315, %v2887, 0
        %2894 = vmatprep.subr.bf16.mxu0 0
        %2895 = vmatpush1.bf16.xpose.msra.mxu0 %v2892
        %2896 = vmatprep.subr.bf16.mxu0 0
        %2897 = vmatpush1.bf16.xpose.msra.mxu0 0
        %2898 = vmatprep.subr.bf16.mxu0 0
        %2899 = vmatpush1.bf16.xpose.msra.mxu0 0
        %2900 = vmatprep.subr.bf16.mxu0 0
        %2901 = vmatpush1.bf16.xpose.msra.mxu0 0
        %2902 = vmatprep.subr.bf16.mxu0 0
        %2903 = vmatpush1.bf16.xpose.msra.mxu0 0
        %2904 = vmatprep.subr.bf16.mxu0 0
        %2905 = vmatpush1.bf16.xpose.msra.mxu0 0
        %2906 = vmatprep.subr.bf16.mxu0 0
        %2907 = vmatpush1.bf16.xpose.msra.mxu0 0
        %2908 = vmatprep.subr.bf16.mxu0 0
        %2909 = vmatpush1.bf16.xpose.msra.mxu0 0
        %2910 = vmatprep.subr.bf16.mxu0 0
        %2911 = vmatpush1.bf16.xpose.msra.mxu0 0
        %2912 = vmatprep.subr.bf16.mxu0 0
        %2913 = vmatpush1.bf16.xpose.msra.mxu0 0
        %2914 = vmatprep.subr.bf16.mxu0 0
        %2915 = vmatpush1.bf16.xpose.msra.mxu0 0
        %2916 = vmatprep.subr.bf16.mxu0 0
        %2917 = vmatpush1.bf16.xpose.msra.mxu0 0
        %2918 = vmatprep.subr.bf16.mxu0 0
        %2919 = vmatpush1.bf16.xpose.msra.mxu0 0
        %2920 = vmatprep.subr.bf16.mxu0 0
        %2921 = vmatpush1.bf16.xpose.msra.mxu0 0
        %2922 = vmatprep.subr.bf16.mxu0 0
        %2923 = vmatpush1.bf16.xpose.msra.mxu0 0
        %2924 = vmatprep.subr.bf16.mxu0 0
        %2925 = vmatpush1.bf16.xpose.msra.mxu0 0
        %2926 = vmatprep.mubr.bf16.mxu0 0
        %2927 = vmatmul.mubr.bf16.gmra.mrb[0].mxu0 %v2889
        %v2928 = vpop.f32.mrb[0].mxu0
        %v2929 = vadd.f32 0.0, %v2928
        %v2930 = vpop.f32.mrb[0].mxu0
        %v2931 = vpop.f32.mrb[0].mxu0
        %v2932 = vpop.f32.mrb[0].mxu0
        %2933 = vdwg.mxu0
        %v2934 = vsel %vm2362, %v2929, -inf
        %2935 = vmax.xlane.f32.xlu0 %v2934
        %v2936 = vpop.xlane.xlu0 %2935
        %v2937 = vsub.f32 %v2929, %v2936
        %v2938 = vmul.f32 %v2937, 1.442695
        %v2939 = vpow.pop %v2938
        %v2940 = vsel %vm2362, %v2939, 0.0
        %2941 = vadd.xlane.f32.xlu0 %v2940
        %v2942 = vpop.xlane.xlu0 %2941
        %v2943 = vrcp.pop %v2942
        %v2944 = vmul.f32 %v2939, %v2943
        %v2945 = vpack.c.bf16 %v2944, %v2944
        %2946 = vrot.lane.b32.xlu0 %v2776, 88
        %v2947 = vpop.permute.xlu0 %2946
        %v2949 = vsel %vm2362, %v2945, 0
        %v2952 = vsel %vm2381, %v2947, 0
        %2954 = vmatprep.subr.bf16.mxu0 0
        %2955 = vmatpush1.bf16.msra.mxu0 %v2952
        %2956 = vmatprep.subr.bf16.mxu0 0
        %2957 = vmatpush1.bf16.msra.mxu0 0
        %2958 = vmatprep.subr.bf16.mxu0 0
        %2959 = vmatpush1.bf16.msra.mxu0 0
        %2960 = vmatprep.subr.bf16.mxu0 0
        %2961 = vmatpush1.bf16.msra.mxu0 0
        %2962 = vmatprep.subr.bf16.mxu0 0
        %2963 = vmatpush1.bf16.msra.mxu0 0
        %2964 = vmatprep.subr.bf16.mxu0 0
        %2965 = vmatpush1.bf16.msra.mxu0 0
        %2966 = vmatprep.subr.bf16.mxu0 0
        %2967 = vmatpush1.bf16.msra.mxu0 0
        %2968 = vmatprep.subr.bf16.mxu0 0
        %2969 = vmatpush1.bf16.msra.mxu0 0
        %2970 = vmatprep.subr.bf16.mxu0 0
        %2971 = vmatpush1.bf16.msra.mxu0 0
        %2972 = vmatprep.subr.bf16.mxu0 0
        %2973 = vmatpush1.bf16.msra.mxu0 0
        %2974 = vmatprep.subr.bf16.mxu0 0
        %2975 = vmatpush1.bf16.msra.mxu0 0
        %2976 = vmatprep.subr.bf16.mxu0 0
        %2977 = vmatpush1.bf16.msra.mxu0 0
        %2978 = vmatprep.subr.bf16.mxu0 0
        %2979 = vmatpush1.bf16.msra.mxu0 0
        %2980 = vmatprep.subr.bf16.mxu0 0
        %2981 = vmatpush1.bf16.msra.mxu0 0
        %2982 = vmatprep.subr.bf16.mxu0 0
        %2983 = vmatpush1.bf16.msra.mxu0 0
        %2984 = vmatprep.subr.bf16.mxu0 0
        %2985 = vmatpush1.bf16.msra.mxu0 0
        %2986 = vmatprep.mubr.bf16.mxu0 0
        %2987 = vmatmul.mubr.bf16.gmra.mrb[0].mxu0 %v2949
        %v2988 = vpop.f32.mrb[0].mxu0
        %v2989 = vadd.f32 0.0, %v2988
        %v2990 = vpop.f32.mrb[0].mxu0
        %v2991 = vpop.f32.mrb[0].mxu0
        %v2992 = vpop.f32.mrb[0].mxu0
        %2993 = vdwg.mxu0
        %2994 = vrot.lane.b32.xlu0 %v2773, 112
        %v2995 = vpop.permute.xlu0 %2994
        %2996 = vrot.lane.b32.xlu0 %v2776, 112
        %v2997 = vpop.permute.xlu0 %2996
        %v2999 = vsel %vm2315, %v2995, 0
        %v3002 = vsel %vm2315, %v2997, 0
        %3004 = vmatprep.subr.bf16.mxu0 0
        %3005 = vmatpush1.bf16.xpose.msra.mxu0 %v3002
        %3006 = vmatprep.subr.bf16.mxu0 0
        %3007 = vmatpush1.bf16.xpose.msra.mxu0 0
        %3008 = vmatprep.subr.bf16.mxu0 0
        %3009 = vmatpush1.bf16.xpose.msra.mxu0 0
        %3010 = vmatprep.subr.bf16.mxu0 0
        %3011 = vmatpush1.bf16.xpose.msra.mxu0 0
        %3012 = vmatprep.subr.bf16.mxu0 0
        %3013 = vmatpush1.bf16.xpose.msra.mxu0 0
        %3014 = vmatprep.subr.bf16.mxu0 0
        %3015 = vmatpush1.bf16.xpose.msra.mxu0 0
        %3016 = vmatprep.subr.bf16.mxu0 0
        %3017 = vmatpush1.bf16.xpose.msra.mxu0 0
        %3018 = vmatprep.subr.bf16.mxu0 0
        %3019 = vmatpush1.bf16.xpose.msra.mxu0 0
        %3020 = vmatprep.subr.bf16.mxu0 0
        %3021 = vmatpush1.bf16.xpose.msra.mxu0 0
        %3022 = vmatprep.subr.bf16.mxu0 0
        %3023 = vmatpush1.bf16.xpose.msra.mxu0 0
        %3024 = vmatprep.subr.bf16.mxu0 0
        %3025 = vmatpush1.bf16.xpose.msra.mxu0 0
        %3026 = vmatprep.subr.bf16.mxu0 0
        %3027 = vmatpush1.bf16.xpose.msra.mxu0 0
        %3028 = vmatprep.subr.bf16.mxu0 0
        %3029 = vmatpush1.bf16.xpose.msra.mxu0 0
        %3030 = vmatprep.subr.bf16.mxu0 0
        %3031 = vmatpush1.bf16.xpose.msra.mxu0 0
        %3032 = vmatprep.subr.bf16.mxu0 0
        %3033 = vmatpush1.bf16.xpose.msra.mxu0 0
        %3034 = vmatprep.subr.bf16.mxu0 0
        %3035 = vmatpush1.bf16.xpose.msra.mxu0 0
        %3036 = vmatprep.mubr.bf16.mxu0 0
        %3037 = vmatmul.mubr.bf16.gmra.mrb[0].mxu0 %v2999
        %v3038 = vpop.f32.mrb[0].mxu0
        %v3039 = vadd.f32 0.0, %v3038
        %v3040 = vpop.f32.mrb[0].mxu0
        %v3041 = vpop.f32.mrb[0].mxu0
        %v3042 = vpop.f32.mrb[0].mxu0
        %3043 = vdwg.mxu0
        %v3044 = vsel %vm2362, %v3039, -inf
        %3045 = vmax.xlane.f32.xlu0 %v3044
        %v3046 = vpop.xlane.xlu0 %3045
        %v3047 = vsub.f32 %v3039, %v3046
        %v3048 = vmul.f32 %v3047, 1.442695
        %v3049 = vpow.pop %v3048
        %v3050 = vsel %vm2362, %v3049, 0.0
        %3051 = vadd.xlane.f32.xlu0 %v3050
        %v3052 = vpop.xlane.xlu0 %3051
        %v3053 = vrcp.pop %v3052
        %v3054 = vmul.f32 %v3049, %v3053
        %v3055 = vpack.c.bf16 %v3054, %v3054
        %3056 = vrot.lane.b32.xlu0 %v2776, 80
        %v3057 = vpop.permute.xlu0 %3056
        %v3059 = vsel %vm2362, %v3055, 0
        %v3062 = vsel %vm2381, %v3057, 0
        %3064 = vmatprep.subr.bf16.mxu0 0
        %3065 = vmatpush1.bf16.msra.mxu0 %v3062
        %3066 = vmatprep.subr.bf16.mxu0 0
        %3067 = vmatpush1.bf16.msra.mxu0 0
        %3068 = vmatprep.subr.bf16.mxu0 0
        %3069 = vmatpush1.bf16.msra.mxu0 0
        %3070 = vmatprep.subr.bf16.mxu0 0
        %3071 = vmatpush1.bf16.msra.mxu0 0
        %3072 = vmatprep.subr.bf16.mxu0 0
        %3073 = vmatpush1.bf16.msra.mxu0 0
        %3074 = vmatprep.subr.bf16.mxu0 0
        %3075 = vmatpush1.bf16.msra.mxu0 0
        %3076 = vmatprep.subr.bf16.mxu0 0
        %3077 = vmatpush1.bf16.msra.mxu0 0
        %3078 = vmatprep.subr.bf16.mxu0 0
        %3079 = vmatpush1.bf16.msra.mxu0 0
        %3080 = vmatprep.subr.bf16.mxu0 0
        %3081 = vmatpush1.bf16.msra.mxu0 0
        %3082 = vmatprep.subr.bf16.mxu0 0
        %3083 = vmatpush1.bf16.msra.mxu0 0
        %3084 = vmatprep.subr.bf16.mxu0 0
        %3085 = vmatpush1.bf16.msra.mxu0 0
        %3086 = vmatprep.subr.bf16.mxu0 0
        %3087 = vmatpush1.bf16.msra.mxu0 0
        %3088 = vmatprep.subr.bf16.mxu0 0
        %3089 = vmatpush1.bf16.msra.mxu0 0
        %3090 = vmatprep.subr.bf16.mxu0 0
        %3091 = vmatpush1.bf16.msra.mxu0 0
        %3092 = vmatprep.subr.bf16.mxu0 0
        %3093 = vmatpush1.bf16.msra.mxu0 0
        %3094 = vmatprep.subr.bf16.mxu0 0
        %3095 = vmatpush1.bf16.msra.mxu0 0
        %3096 = vmatprep.mubr.bf16.mxu0 0
        %3097 = vmatmul.mubr.bf16.gmra.mrb[0].mxu0 %v3059
        %v3098 = vpop.f32.mrb[0].mxu0
        %v3099 = vadd.f32 0.0, %v3098
        %v3100 = vpop.f32.mrb[0].mxu0
        %v3101 = vpop.f32.mrb[0].mxu0
        %v3102 = vpop.f32.mrb[0].mxu0
        %3103 = vdwg.mxu0
        %3104 = vrot.lane.b32.xlu0 %v2773, 104
        %v3105 = vpop.permute.xlu0 %3104
        %3106 = vrot.lane.b32.xlu0 %v2776, 104
        %v3107 = vpop.permute.xlu0 %3106
        %v3109 = vsel %vm2315, %v3105, 0
        %v3112 = vsel %vm2315, %v3107, 0
        %3114 = vmatprep.subr.bf16.mxu0 0
        %3115 = vmatpush1.bf16.xpose.msra.mxu0 %v3112
        %3116 = vmatprep.subr.bf16.mxu0 0
        %3117 = vmatpush1.bf16.xpose.msra.mxu0 0
        %3118 = vmatprep.subr.bf16.mxu0 0
        %3119 = vmatpush1.bf16.xpose.msra.mxu0 0
        %3120 = vmatprep.subr.bf16.mxu0 0
        %3121 = vmatpush1.bf16.xpose.msra.mxu0 0
        %3122 = vmatprep.subr.bf16.mxu0 0
        %3123 = vmatpush1.bf16.xpose.msra.mxu0 0
        %3124 = vmatprep.subr.bf16.mxu0 0
        %3125 = vmatpush1.bf16.xpose.msra.mxu0 0
        %3126 = vmatprep.subr.bf16.mxu0 0
        %3127 = vmatpush1.bf16.xpose.msra.mxu0 0
        %3128 = vmatprep.subr.bf16.mxu0 0
        %3129 = vmatpush1.bf16.xpose.msra.mxu0 0
        %3130 = vmatprep.subr.bf16.mxu0 0
        %3131 = vmatpush1.bf16.xpose.msra.mxu0 0
        %3132 = vmatprep.subr.bf16.mxu0 0
        %3133 = vmatpush1.bf16.xpose.msra.mxu0 0
        %3134 = vmatprep.subr.bf16.mxu0 0
        %3135 = vmatpush1.bf16.xpose.msra.mxu0 0
        %3136 = vmatprep.subr.bf16.mxu0 0
        %3137 = vmatpush1.bf16.xpose.msra.mxu0 0
        %3138 = vmatprep.subr.bf16.mxu0 0
        %3139 = vmatpush1.bf16.xpose.msra.mxu0 0
        %3140 = vmatprep.subr.bf16.mxu0 0
        %3141 = vmatpush1.bf16.xpose.msra.mxu0 0
        %3142 = vmatprep.subr.bf16.mxu0 0
        %3143 = vmatpush1.bf16.xpose.msra.mxu0 0
        %3144 = vmatprep.subr.bf16.mxu0 0
        %3145 = vmatpush1.bf16.xpose.msra.mxu0 0
        %3146 = vmatprep.mubr.bf16.mxu0 0
        %3147 = vmatmul.mubr.bf16.gmra.mrb[0].mxu0 %v3109
        %v3148 = vpop.f32.mrb[0].mxu0
        %v3149 = vadd.f32 0.0, %v3148
        %v3150 = vpop.f32.mrb[0].mxu0
        %v3151 = vpop.f32.mrb[0].mxu0
        %v3152 = vpop.f32.mrb[0].mxu0
        %3153 = vdwg.mxu0
        %v3154 = vsel %vm2362, %v3149, -inf
        %3155 = vmax.xlane.f32.xlu0 %v3154
        %v3156 = vpop.xlane.xlu0 %3155
        %v3157 = vsub.f32 %v3149, %v3156
        %v3158 = vmul.f32 %v3157, 1.442695
        %v3159 = vpow.pop %v3158
        %v3160 = vsel %vm2362, %v3159, 0.0
        %3161 = vadd.xlane.f32.xlu0 %v3160
        %v3162 = vpop.xlane.xlu0 %3161
        %v3163 = vrcp.pop %v3162
        %v3164 = vmul.f32 %v3159, %v3163
        %v3165 = vpack.c.bf16 %v3164, %v3164
        %3166 = vrot.lane.b32.xlu0 %v2776, 72
        %v3167 = vpop.permute.xlu0 %3166
        %v3169 = vsel %vm2362, %v3165, 0
        %v3172 = vsel %vm2381, %v3167, 0
        %3174 = vmatprep.subr.bf16.mxu0 0
        %3175 = vmatpush1.bf16.msra.mxu0 %v3172
        %3176 = vmatprep.subr.bf16.mxu0 0
        %3177 = vmatpush1.bf16.msra.mxu0 0
        %3178 = vmatprep.subr.bf16.mxu0 0
        %3179 = vmatpush1.bf16.msra.mxu0 0
        %3180 = vmatprep.subr.bf16.mxu0 0
        %3181 = vmatpush1.bf16.msra.mxu0 0
        %3182 = vmatprep.subr.bf16.mxu0 0
        %3183 = vmatpush1.bf16.msra.mxu0 0
        %3184 = vmatprep.subr.bf16.mxu0 0
        %3185 = vmatpush1.bf16.msra.mxu0 0
        %3186 = vmatprep.subr.bf16.mxu0 0
        %3187 = vmatpush1.bf16.msra.mxu0 0
        %3188 = vmatprep.subr.bf16.mxu0 0
        %3189 = vmatpush1.bf16.msra.mxu0 0
        %3190 = vmatprep.subr.bf16.mxu0 0
        %3191 = vmatpush1.bf16.msra.mxu0 0
        %3192 = vmatprep.subr.bf16.mxu0 0
        %3193 = vmatpush1.bf16.msra.mxu0 0
        %3194 = vmatprep.subr.bf16.mxu0 0
        %3195 = vmatpush1.bf16.msra.mxu0 0
        %3196 = vmatprep.subr.bf16.mxu0 0
        %3197 = vmatpush1.bf16.msra.mxu0 0
        %3198 = vmatprep.subr.bf16.mxu0 0
        %3199 = vmatpush1.bf16.msra.mxu0 0
        %3200 = vmatprep.subr.bf16.mxu0 0
        %3201 = vmatpush1.bf16.msra.mxu0 0
        %3202 = vmatprep.subr.bf16.mxu0 0
        %3203 = vmatpush1.bf16.msra.mxu0 0
        %3204 = vmatprep.subr.bf16.mxu0 0
        %3205 = vmatpush1.bf16.msra.mxu0 0
        %3206 = vmatprep.mubr.bf16.mxu0 0
        %3207 = vmatmul.mubr.bf16.gmra.mrb[0].mxu0 %v3169
        %v3208 = vpop.f32.mrb[0].mxu0
        %v3209 = vadd.f32 0.0, %v3208
        %v3210 = vpop.f32.mrb[0].mxu0
        %v3211 = vpop.f32.mrb[0].mxu0
        %v3212 = vpop.f32.mrb[0].mxu0
        %3213 = vdwg.mxu0
        %3215 = vrot.lane.b32.xlu0 %v2989, 8
        %v3216 = vpop.permute.xlu0 %3215
        %3219 = vrot.lane.b32.xlu0 %v3099, 16
        %v3220 = vpop.permute.xlu0 %3219
        %3223 = vrot.lane.b32.xlu0 %v3209, 24
        %v3224 = vpop.permute.xlu0 %3223
        %v3226 = vsel %vm2315, %v2878, %v3216
        %v3227 = vsel %vm2769, %v3226, %v3220
        %v3228 = vsel %vm2771, %v3227, %v3224
        %v3230 = vlaneseq
        %v3231 = vshrl.u32 %v3230, 7
        %v3232 = vsub.s32 0, %v3231
        %v3233 = vrot.slane %v1974, %v3232
        %v3235 = vadd.f32 %v2094, %v3233
        %v3236 = vadd.f32 %v2095, %v3233
        %v3237 = vpack.c.bf16 %v3228, %v2772
        %v3242 = vunpack.c.l.b16 %v1970
        %v3243 = vunpack.c.l.b16 %v1971
        %v3244 = vunpack.c.l.b16 %v1972
        %v3245 = vunpack.c.l.b16 %v1973
        %v3246 = vpack.c.b16 %v3243, %v3242
        %v3247 = vpack.c.b16 %v3245, %v3244
        %v3251 = vsel %vm2098, %v3237, 0
        %3253 = vmatprep.subr.bf16.mxu0 0
        %3254 = vmatpush1.bf16.msra.mxu0 %v3246
        %3255 = vmatprep.subr.bf16.mxu0 0
        %3256 = vmatpush1.bf16.msra.mxu0 %v3247
        %3257 = vmatprep.subr.bf16.mxu0 0
        %3258 = vmatpush1.bf16.msra.mxu0 0
        %3259 = vmatprep.subr.bf16.mxu0 0
        %3260 = vmatpush1.bf16.msra.mxu0 0
        %3261 = vmatprep.subr.bf16.mxu0 0
        %3262 = vmatpush1.bf16.msra.mxu0 0
        %3263 = vmatprep.subr.bf16.mxu0 0
        %3264 = vmatpush1.bf16.msra.mxu0 0
        %3265 = vmatprep.subr.bf16.mxu0 0
        %3266 = vmatpush1.bf16.msra.mxu0 0
        %3267 = vmatprep.subr.bf16.mxu0 0
        %3268 = vmatpush1.bf16.msra.mxu0 0
        %3269 = vmatprep.subr.bf16.mxu0 0
        %3270 = vmatpush1.bf16.msra.mxu0 0
        %3271 = vmatprep.subr.bf16.mxu0 0
        %3272 = vmatpush1.bf16.msra.mxu0 0
        %3273 = vmatprep.subr.bf16.mxu0 0
        %3274 = vmatpush1.bf16.msra.mxu0 0
        %3275 = vmatprep.subr.bf16.mxu0 0
        %3276 = vmatpush1.bf16.msra.mxu0 0
        %3277 = vmatprep.subr.bf16.mxu0 0
        %3278 = vmatpush1.bf16.msra.mxu0 0
        %3279 = vmatprep.subr.bf16.mxu0 0
        %3280 = vmatpush1.bf16.msra.mxu0 0
        %3281 = vmatprep.subr.bf16.mxu0 0
        %3282 = vmatpush1.bf16.msra.mxu0 0
        %3283 = vmatprep.subr.bf16.mxu0 0
        %3284 = vmatpush1.bf16.msra.mxu0 0
        %3285 = vmatprep.mubr.bf16.mxu0 0
        %3286 = vmatmul.mubr.bf16.gmra.mrb[0].mxu0 %v3251
        %v3287 = vpop.f32.mrb[0].mxu0
        %v3288 = vadd.f32 0.0, %v3287
        %v3289 = vpop.f32.mrb[0].mxu0
        %v3290 = vpop.f32.mrb[0].mxu0
        %v3291 = vadd.f32 0.0, %v3290
        %v3292 = vpop.f32.mrb[0].mxu0
        %3293 = vdwg.mxu0
        %v3294 = vadd.f32 %v3235, %v3288
        %v3295 = vadd.f32 %v3236, %v3291
        %v3296 = vsel %vm2098, %v3294, 0.0
        %3297 = vadd.xlane.f32.xlu0 %v3296
        %v3298 = vpop.xlane.xlu0 %3297
        %v3299 = vsel %vm2098, %v3295, 0.0
        %3300 = vadd.xlane.f32.xlu0 %v3299
        %v3301 = vpop.xlane.xlu0 %3300
        %v3302 = vmul.f32 %v3298, %v2105
        %v3303 = vmul.f32 %v3301, %v2105
        %v3304 = vsub.f32 %v3294, %v3302
        %v3305 = vsub.f32 %v3295, %v3303
        %v3306 = vmul.f32 %v3304, %v3304
        %v3307 = vmul.f32 %v3305, %v3305
        %v3308 = vsel %vm2098, %v3306, 0.0
        %3309 = vadd.xlane.f32.xlu0 %v3308
        %v3310 = vpop.xlane.xlu0 %3309
        %v3311 = vsel %vm2098, %v3307, 0.0
        %3312 = vadd.xlane.f32.xlu0 %v3311
        %v3313 = vpop.xlane.xlu0 %3312
        %v3314 = vmul.f32 %v3310, %v2105
        %v3315 = vmul.f32 %v3313, %v2105
        %v3316 = vadd.f32 %v3314, 1e-05
        %v3317 = vadd.f32 %v3315, 1e-05
        %v3318 = vrsqrt.pop %v3316
        %v3319 = vrsqrt.pop %v3317
        %v3320 = vmul.f32 %v3304, %v3318
        %v3321 = vmul.f32 %v3305, %v3319
        %v3323 = vlaneseq
        %v3324 = vshrl.u32 %v3323, 7
        %v3325 = vsub.s32 0, %v3324
        %v3326 = vrot.slane %v1954, %v3325
        %v3328 = vmul.f32 %v3320, %v3326
        %v3329 = vmul.f32 %v3321, %v3326
        %v3331 = vlaneseq
        %v3332 = vshrl.u32 %v3331, 7
        %v3333 = vsub.s32 0, %v3332
        %v3334 = vrot.slane %v1955, %v3333
        %v3336 = vadd.f32 %v3328, %v3334
        %v3337 = vadd.f32 %v3329, %v3334
        %v3338 = vpack.c.bf16 %v3337, %v3336
        %v3343 = vunpack.c.l.b16 %v1975
        %v3344 = vunpack.c.l.b16 %v1976
        %v3345 = vunpack.c.l.b16 %v1977
        %v3346 = vunpack.c.l.b16 %v1978
        %v3347 = vpack.c.b16 %v3344, %v3343
        %v3348 = vpack.c.b16 %v3346, %v3345
        %v3352 = vsel %vm2098, %v3338, 0
        %3354 = vmatprep.subr.bf16.mxu0 0
        %3355 = vmatpush1.bf16.msra.mxu0 %v3347
        %3356 = vmatprep.subr.bf16.mxu0 0
        %3357 = vmatpush1.bf16.msra.mxu0 %v3348
        %3358 = vmatprep.subr.bf16.mxu0 0
        %3359 = vmatpush1.bf16.msra.mxu0 0
        %3360 = vmatprep.subr.bf16.mxu0 0
        %3361 = vmatpush1.bf16.msra.mxu0 0
        %3362 = vmatprep.subr.bf16.mxu0 0
        %3363 = vmatpush1.bf16.msra.mxu0 0
        %3364 = vmatprep.subr.bf16.mxu0 0
        %3365 = vmatpush1.bf16.msra.mxu0 0
        %3366 = vmatprep.subr.bf16.mxu0 0
        %3367 = vmatpush1.bf16.msra.mxu0 0
        %3368 = vmatprep.subr.bf16.mxu0 0
        %3369 = vmatpush1.bf16.msra.mxu0 0
        %3370 = vmatprep.subr.bf16.mxu0 0
        %3371 = vmatpush1.bf16.msra.mxu0 0
        %3372 = vmatprep.subr.bf16.mxu0 0
        %3373 = vmatpush1.bf16.msra.mxu0 0
        %3374 = vmatprep.subr.bf16.mxu0 0
        %3375 = vmatpush1.bf16.msra.mxu0 0
        %3376 = vmatprep.subr.bf16.mxu0 0
        %3377 = vmatpush1.bf16.msra.mxu0 0
        %3378 = vmatprep.subr.bf16.mxu0 0
        %3379 = vmatpush1.bf16.msra.mxu0 0
        %3380 = vmatprep.subr.bf16.mxu0 0
        %3381 = vmatpush1.bf16.msra.mxu0 0
        %3382 = vmatprep.subr.bf16.mxu0 0
        %3383 = vmatpush1.bf16.msra.mxu0 0
        %3384 = vmatprep.subr.bf16.mxu0 0
        %3385 = vmatpush1.bf16.msra.mxu0 0
        %3386 = vmatprep.mubr.bf16.mxu0 0
        %3387 = vmatmul.mubr.bf16.gmra.mrb[0].mxu0 %v3352
        %v3388 = vpop.f32.mrb[0].mxu0
        %v3389 = vadd.f32 0.0, %v3388
        %v3390 = vpop.f32.mrb[0].mxu0
        %v3391 = vpop.f32.mrb[0].mxu0
        %v3392 = vadd.f32 0.0, %v3391
        %v3393 = vpop.f32.mrb[0].mxu0
        %3394 = vdwg.mxu0
        %v3395 = vpack.c.bf16 %v3389, %v3389
        %3397 = vrot.lane.b32.xlu0 %v3395, 96
        %v3398 = vpop.permute.xlu0 %3397
        %v3400 = vsel %vm2315, %v3395, 0
        %v3403 = vsel %vm2315, %v3398, 0
        %3405 = vmatprep.subr.bf16.mxu0 0
        %3406 = vmatpush1.bf16.xpose.msra.mxu0 %v3403
        %3407 = vmatprep.subr.bf16.mxu0 0
        %3408 = vmatpush1.bf16.xpose.msra.mxu0 0
        %3409 = vmatprep.subr.bf16.mxu0 0
        %3410 = vmatpush1.bf16.xpose.msra.mxu0 0
        %3411 = vmatprep.subr.bf16.mxu0 0
        %3412 = vmatpush1.bf16.xpose.msra.mxu0 0
        %3413 = vmatprep.subr.bf16.mxu0 0
        %3414 = vmatpush1.bf16.xpose.msra.mxu0 0
        %3415 = vmatprep.subr.bf16.mxu0 0
        %3416 = vmatpush1.bf16.xpose.msra.mxu0 0
        %3417 = vmatprep.subr.bf16.mxu0 0
        %3418 = vmatpush1.bf16.xpose.msra.mxu0 0
        %3419 = vmatprep.subr.bf16.mxu0 0
        %3420 = vmatpush1.bf16.xpose.msra.mxu0 0
        %3421 = vmatprep.subr.bf16.mxu0 0
        %3422 = vmatpush1.bf16.xpose.msra.mxu0 0
        %3423 = vmatprep.subr.bf16.mxu0 0
        %3424 = vmatpush1.bf16.xpose.msra.mxu0 0
        %3425 = vmatprep.subr.bf16.mxu0 0
        %3426 = vmatpush1.bf16.xpose.msra.mxu0 0
        %3427 = vmatprep.subr.bf16.mxu0 0
        %3428 = vmatpush1.bf16.xpose.msra.mxu0 0
        %3429 = vmatprep.subr.bf16.mxu0 0
        %3430 = vmatpush1.bf16.xpose.msra.mxu0 0
        %3431 = vmatprep.subr.bf16.mxu0 0
        %3432 = vmatpush1.bf16.xpose.msra.mxu0 0
        %3433 = vmatprep.subr.bf16.mxu0 0
        %3434 = vmatpush1.bf16.xpose.msra.mxu0 0
        %3435 = vmatprep.subr.bf16.mxu0 0
        %3436 = vmatpush1.bf16.xpose.msra.mxu0 0
        %3437 = vmatprep.mubr.bf16.mxu0 0
        %3438 = vmatmul.mubr.bf16.gmra.mrb[0].mxu0 %v3400
        %v3439 = vpop.f32.mrb[0].mxu0
        %v3440 = vadd.f32 0.0, %v3439
        %v3441 = vpop.f32.mrb[0].mxu0
        %v3442 = vpop.f32.mrb[0].mxu0
        %v3443 = vpop.f32.mrb[0].mxu0
        %3444 = vdwg.mxu0
        %v3445 = vsel %vm2315, %v3440, -inf
        %3446 = vmax.xlane.f32.xlu0 %v3445
        %v3447 = vpop.xlane.xlu0 %3446
        %v3448 = vsub.f32 %v3440, %v3447
        %v3449 = vmul.f32 %v3448, 1.442695
        %v3450 = vpow.pop %v3449
        %v3451 = vsel %vm2315, %v3450, 0.0
        %3452 = vadd.xlane.f32.xlu0 %v3451
        %v3453 = vpop.xlane.xlu0 %3452
        %v3454 = vrcp.pop %v3453
        %v3455 = vmul.f32 %v3450, %v3454
        %v3456 = vpack.c.bf16 %v3455, %v3455
        %3457 = vrot.lane.b32.xlu0 %v3395, 64
        %v3458 = vpop.permute.xlu0 %3457
        %v3460 = vsel %vm2315, %v3456, 0
        %vm3462 = vcmask 1043456
        %v3464 = vsel %vm3462, %v3458, 0
        %3466 = vmatprep.subr.bf16.mxu0 0
        %3467 = vmatpush1.bf16.msra.mxu0 %v3464
        %3468 = vmatprep.subr.bf16.mxu0 0
        %3469 = vmatpush1.bf16.msra.mxu0 0
        %3470 = vmatprep.subr.bf16.mxu0 0
        %3471 = vmatpush1.bf16.msra.mxu0 0
        %3472 = vmatprep.subr.bf16.mxu0 0
        %3473 = vmatpush1.bf16.msra.mxu0 0
        %3474 = vmatprep.subr.bf16.mxu0 0
        %3475 = vmatpush1.bf16.msra.mxu0 0
        %3476 = vmatprep.subr.bf16.mxu0 0
        %3477 = vmatpush1.bf16.msra.mxu0 0
        %3478 = vmatprep.subr.bf16.mxu0 0
        %3479 = vmatpush1.bf16.msra.mxu0 0
        %3480 = vmatprep.subr.bf16.mxu0 0
        %3481 = vmatpush1.bf16.msra.mxu0 0
        %3482 = vmatprep.subr.bf16.mxu0 0
        %3483 = vmatpush1.bf16.msra.mxu0 0
        %3484 = vmatprep.subr.bf16.mxu0 0
        %3485 = vmatpush1.bf16.msra.mxu0 0
        %3486 = vmatprep.subr.bf16.mxu0 0
        %3487 = vmatpush1.bf16.msra.mxu0 0
        %3488 = vmatprep.subr.bf16.mxu0 0
        %3489 = vmatpush1.bf16.msra.mxu0 0
        %3490 = vmatprep.subr.bf16.mxu0 0
        %3491 = vmatpush1.bf16.msra.mxu0 0
        %3492 = vmatprep.subr.bf16.mxu0 0
        %3493 = vmatpush1.bf16.msra.mxu0 0
        %3494 = vmatprep.subr.bf16.mxu0 0
        %3495 = vmatpush1.bf16.msra.mxu0 0
        %3496 = vmatprep.subr.bf16.mxu0 0
        %3497 = vmatpush1.bf16.msra.mxu0 0
        %3498 = vmatprep.mubr.bf16.mxu0 0
        %3499 = vmatmul.mubr.bf16.gmra.mrb[0].mxu0 %v3460
        %v3500 = vpop.f32.mrb[0].mxu0
        %v3501 = vadd.f32 0.0, %v3500
        %v3502 = vpop.f32.mrb[0].mxu0
        %v3503 = vpop.f32.mrb[0].mxu0
        %v3504 = vpop.f32.mrb[0].mxu0
        %3505 = vdwg.mxu0
        %3506 = vrot.lane.b32.xlu0 %v3395, 120
        %v3507 = vpop.permute.xlu0 %3506
        %3508 = vrot.lane.b32.xlu0 %v3395, 88
        %v3509 = vpop.permute.xlu0 %3508
        %v3511 = vsel %vm2315, %v3507, 0
        %v3514 = vsel %vm2315, %v3509, 0
        %3516 = vmatprep.subr.bf16.mxu0 0
        %3517 = vmatpush1.bf16.xpose.msra.mxu0 %v3514
        %3518 = vmatprep.subr.bf16.mxu0 0
        %3519 = vmatpush1.bf16.xpose.msra.mxu0 0
        %3520 = vmatprep.subr.bf16.mxu0 0
        %3521 = vmatpush1.bf16.xpose.msra.mxu0 0
        %3522 = vmatprep.subr.bf16.mxu0 0
        %3523 = vmatpush1.bf16.xpose.msra.mxu0 0
        %3524 = vmatprep.subr.bf16.mxu0 0
        %3525 = vmatpush1.bf16.xpose.msra.mxu0 0
        %3526 = vmatprep.subr.bf16.mxu0 0
        %3527 = vmatpush1.bf16.xpose.msra.mxu0 0
        %3528 = vmatprep.subr.bf16.mxu0 0
        %3529 = vmatpush1.bf16.xpose.msra.mxu0 0
        %3530 = vmatprep.subr.bf16.mxu0 0
        %3531 = vmatpush1.bf16.xpose.msra.mxu0 0
        %3532 = vmatprep.subr.bf16.mxu0 0
        %3533 = vmatpush1.bf16.xpose.msra.mxu0 0
        %3534 = vmatprep.subr.bf16.mxu0 0
        %3535 = vmatpush1.bf16.xpose.msra.mxu0 0
        %3536 = vmatprep.subr.bf16.mxu0 0
        %3537 = vmatpush1.bf16.xpose.msra.mxu0 0
        %3538 = vmatprep.subr.bf16.mxu0 0
        %3539 = vmatpush1.bf16.xpose.msra.mxu0 0
        %3540 = vmatprep.subr.bf16.mxu0 0
        %3541 = vmatpush1.bf16.xpose.msra.mxu0 0
        %3542 = vmatprep.subr.bf16.mxu0 0
        %3543 = vmatpush1.bf16.xpose.msra.mxu0 0
        %3544 = vmatprep.subr.bf16.mxu0 0
        %3545 = vmatpush1.bf16.xpose.msra.mxu0 0
        %3546 = vmatprep.subr.bf16.mxu0 0
        %3547 = vmatpush1.bf16.xpose.msra.mxu0 0
        %3548 = vmatprep.mubr.bf16.mxu0 0
        %3549 = vmatmul.mubr.bf16.gmra.mrb[0].mxu0 %v3511
        %v3550 = vpop.f32.mrb[0].mxu0
        %v3551 = vadd.f32 0.0, %v3550
        %v3552 = vpop.f32.mrb[0].mxu0
        %v3553 = vpop.f32.mrb[0].mxu0
        %v3554 = vpop.f32.mrb[0].mxu0
        %3555 = vdwg.mxu0
        %v3556 = vsel %vm2315, %v3551, -inf
        %3557 = vmax.xlane.f32.xlu0 %v3556
        %v3558 = vpop.xlane.xlu0 %3557
        %v3559 = vsub.f32 %v3551, %v3558
        %v3560 = vmul.f32 %v3559, 1.442695
        %v3561 = vpow.pop %v3560
        %v3562 = vsel %vm2315, %v3561, 0.0
        %3563 = vadd.xlane.f32.xlu0 %v3562
        %v3564 = vpop.xlane.xlu0 %3563
        %v3565 = vrcp.pop %v3564
        %v3566 = vmul.f32 %v3561, %v3565
        %v3567 = vpack.c.bf16 %v3566, %v3566
        %3568 = vrot.lane.b32.xlu0 %v3395, 56
        %v3569 = vpop.permute.xlu0 %3568
        %v3571 = vsel %vm2315, %v3567, 0
        %v3574 = vsel %vm3462, %v3569, 0
        %3576 = vmatprep.subr.bf16.mxu0 0
        %3577 = vmatpush1.bf16.msra.mxu0 %v3574
        %3578 = vmatprep.subr.bf16.mxu0 0
        %3579 = vmatpush1.bf16.msra.mxu0 0
        %3580 = vmatprep.subr.bf16.mxu0 0
        %3581 = vmatpush1.bf16.msra.mxu0 0
        %3582 = vmatprep.subr.bf16.mxu0 0
        %3583 = vmatpush1.bf16.msra.mxu0 0
        %3584 = vmatprep.subr.bf16.mxu0 0
        %3585 = vmatpush1.bf16.msra.mxu0 0
        %3586 = vmatprep.subr.bf16.mxu0 0
        %3587 = vmatpush1.bf16.msra.mxu0 0
        %3588 = vmatprep.subr.bf16.mxu0 0
        %3589 = vmatpush1.bf16.msra.mxu0 0
        %3590 = vmatprep.subr.bf16.mxu0 0
        %3591 = vmatpush1.bf16.msra.mxu0 0
        %3592 = vmatprep.subr.bf16.mxu0 0
        %3593 = vmatpush1.bf16.msra.mxu0 0
        %3594 = vmatprep.subr.bf16.mxu0 0
        %3595 = vmatpush1.bf16.msra.mxu0 0
        %3596 = vmatprep.subr.bf16.mxu0 0
        %3597 = vmatpush1.bf16.msra.mxu0 0
        %3598 = vmatprep.subr.bf16.mxu0 0
        %3599 = vmatpush1.bf16.msra.mxu0 0
        %3600 = vmatprep.subr.bf16.mxu0 0
        %3601 = vmatpush1.bf16.msra.mxu0 0
        %3602 = vmatprep.subr.bf16.mxu0 0
        %3603 = vmatpush1.bf16.msra.mxu0 0
        %3604 = vmatprep.subr.bf16.mxu0 0
        %3605 = vmatpush1.bf16.msra.mxu0 0
        %3606 = vmatprep.subr.bf16.mxu0 0
        %3607 = vmatpush1.bf16.msra.mxu0 0
        %3608 = vmatprep.mubr.bf16.mxu0 0
        %3609 = vmatmul.mubr.bf16.gmra.mrb[0].mxu0 %v3571
        %v3610 = vpop.f32.mrb[0].mxu0
        %v3611 = vadd.f32 0.0, %v3610
        %v3612 = vpop.f32.mrb[0].mxu0
        %v3613 = vpop.f32.mrb[0].mxu0
        %v3614 = vpop.f32.mrb[0].mxu0
        %3615 = vdwg.mxu0
        %3616 = vrot.lane.b32.xlu0 %v3395, 112
        %v3617 = vpop.permute.xlu0 %3616
        %3618 = vrot.lane.b32.xlu0 %v3395, 80
        %v3619 = vpop.permute.xlu0 %3618
        %v3621 = vsel %vm2315, %v3617, 0
        %v3624 = vsel %vm2315, %v3619, 0
        %3626 = vmatprep.subr.bf16.mxu0 0
        %3627 = vmatpush1.bf16.xpose.msra.mxu0 %v3624
        %3628 = vmatprep.subr.bf16.mxu0 0
        %3629 = vmatpush1.bf16.xpose.msra.mxu0 0
        %3630 = vmatprep.subr.bf16.mxu0 0
        %3631 = vmatpush1.bf16.xpose.msra.mxu0 0
        %3632 = vmatprep.subr.bf16.mxu0 0
        %3633 = vmatpush1.bf16.xpose.msra.mxu0 0
        %3634 = vmatprep.subr.bf16.mxu0 0
        %3635 = vmatpush1.bf16.xpose.msra.mxu0 0
        %3636 = vmatprep.subr.bf16.mxu0 0
        %3637 = vmatpush1.bf16.xpose.msra.mxu0 0
        %3638 = vmatprep.subr.bf16.mxu0 0
        %3639 = vmatpush1.bf16.xpose.msra.mxu0 0
        %3640 = vmatprep.subr.bf16.mxu0 0
        %3641 = vmatpush1.bf16.xpose.msra.mxu0 0
        %3642 = vmatprep.subr.bf16.mxu0 0
        %3643 = vmatpush1.bf16.xpose.msra.mxu0 0
        %3644 = vmatprep.subr.bf16.mxu0 0
        %3645 = vmatpush1.bf16.xpose.msra.mxu0 0
        %3646 = vmatprep.subr.bf16.mxu0 0
        %3647 = vmatpush1.bf16.xpose.msra.mxu0 0
        %3648 = vmatprep.subr.bf16.mxu0 0
        %3649 = vmatpush1.bf16.xpose.msra.mxu0 0
        %3650 = vmatprep.subr.bf16.mxu0 0
        %3651 = vmatpush1.bf16.xpose.msra.mxu0 0
        %3652 = vmatprep.subr.bf16.mxu0 0
        %3653 = vmatpush1.bf16.xpose.msra.mxu0 0
        %3654 = vmatprep.subr.bf16.mxu0 0
        %3655 = vmatpush1.bf16.xpose.msra.mxu0 0
        %3656 = vmatprep.subr.bf16.mxu0 0
        %3657 = vmatpush1.bf16.xpose.msra.mxu0 0
        %3658 = vmatprep.mubr.bf16.mxu0 0
        %3659 = vmatmul.mubr.bf16.gmra.mrb[0].mxu0 %v3621
        %v3660 = vpop.f32.mrb[0].mxu0
        %v3661 = vadd.f32 0.0, %v3660
        %v3662 = vpop.f32.mrb[0].mxu0
        %v3663 = vpop.f32.mrb[0].mxu0
        %v3664 = vpop.f32.mrb[0].mxu0
        %3665 = vdwg.mxu0
        %v3666 = vsel %vm2315, %v3661, -inf
        %3667 = vmax.xlane.f32.xlu0 %v3666
        %v3668 = vpop.xlane.xlu0 %3667
        %v3669 = vsub.f32 %v3661, %v3668
        %v3670 = vmul.f32 %v3669, 1.442695
        %v3671 = vpow.pop %v3670
        %v3672 = vsel %vm2315, %v3671, 0.0
        %3673 = vadd.xlane.f32.xlu0 %v3672
        %v3674 = vpop.xlane.xlu0 %3673
        %v3675 = vrcp.pop %v3674
        %v3676 = vmul.f32 %v3671, %v3675
        %v3677 = vpack.c.bf16 %v3676, %v3676
        %3678 = vrot.lane.b32.xlu0 %v3395, 48
        %v3679 = vpop.permute.xlu0 %3678
        %v3681 = vsel %vm2315, %v3677, 0
        %v3684 = vsel %vm3462, %v3679, 0
        %3686 = vmatprep.subr.bf16.mxu0 0
        %3687 = vmatpush1.bf16.msra.mxu0 %v3684
        %3688 = vmatprep.subr.bf16.mxu0 0
        %3689 = vmatpush1.bf16.msra.mxu0 0
        %3690 = vmatprep.subr.bf16.mxu0 0
        %3691 = vmatpush1.bf16.msra.mxu0 0
        %3692 = vmatprep.subr.bf16.mxu0 0
        %3693 = vmatpush1.bf16.msra.mxu0 0
        %3694 = vmatprep.subr.bf16.mxu0 0
        %3695 = vmatpush1.bf16.msra.mxu0 0
        %3696 = vmatprep.subr.bf16.mxu0 0
        %3697 = vmatpush1.bf16.msra.mxu0 0
        %3698 = vmatprep.subr.bf16.mxu0 0
        %3699 = vmatpush1.bf16.msra.mxu0 0
        %3700 = vmatprep.subr.bf16.mxu0 0
        %3701 = vmatpush1.bf16.msra.mxu0 0
        %3702 = vmatprep.subr.bf16.mxu0 0
        %3703 = vmatpush1.bf16.msra.mxu0 0
        %3704 = vmatprep.subr.bf16.mxu0 0
        %3705 = vmatpush1.bf16.msra.mxu0 0
        %3706 = vmatprep.subr.bf16.mxu0 0
        %3707 = vmatpush1.bf16.msra.mxu0 0
        %3708 = vmatprep.subr.bf16.mxu0 0
        %3709 = vmatpush1.bf16.msra.mxu0 0
        %3710 = vmatprep.subr.bf16.mxu0 0
        %3711 = vmatpush1.bf16.msra.mxu0 0
        %3712 = vmatprep.subr.bf16.mxu0 0
        %3713 = vmatpush1.bf16.msra.mxu0 0
        %3714 = vmatprep.subr.bf16.mxu0 0
        %3715 = vmatpush1.bf16.msra.mxu0 0
        %3716 = vmatprep.subr.bf16.mxu0 0
        %3717 = vmatpush1.bf16.msra.mxu0 0
        %3718 = vmatprep.mubr.bf16.mxu0 0
        %3719 = vmatmul.mubr.bf16.gmra.mrb[0].mxu0 %v3681
        %v3720 = vpop.f32.mrb[0].mxu0
        %v3721 = vadd.f32 0.0, %v3720
        %v3722 = vpop.f32.mrb[0].mxu0
        %v3723 = vpop.f32.mrb[0].mxu0
        %v3724 = vpop.f32.mrb[0].mxu0
        %3725 = vdwg.mxu0
        %3726 = vrot.lane.b32.xlu0 %v3395, 104
        %v3727 = vpop.permute.xlu0 %3726
        %3728 = vrot.lane.b32.xlu0 %v3395, 72
        %v3729 = vpop.permute.xlu0 %3728
        %v3731 = vsel %vm2315, %v3727, 0
        %v3734 = vsel %vm2315, %v3729, 0
        %3736 = vmatprep.subr.bf16.mxu0 0
        %3737 = vmatpush1.bf16.xpose.msra.mxu0 %v3734
        %3738 = vmatprep.subr.bf16.mxu0 0
        %3739 = vmatpush1.bf16.xpose.msra.mxu0 0
        %3740 = vmatprep.subr.bf16.mxu0 0
        %3741 = vmatpush1.bf16.xpose.msra.mxu0 0
        %3742 = vmatprep.subr.bf16.mxu0 0
        %3743 = vmatpush1.bf16.xpose.msra.mxu0 0
        %3744 = vmatprep.subr.bf16.mxu0 0
        %3745 = vmatpush1.bf16.xpose.msra.mxu0 0
        %3746 = vmatprep.subr.bf16.mxu0 0
        %3747 = vmatpush1.bf16.xpose.msra.mxu0 0
        %3748 = vmatprep.subr.bf16.mxu0 0
        %3749 = vmatpush1.bf16.xpose.msra.mxu0 0
        %3750 = vmatprep.subr.bf16.mxu0 0
        %3751 = vmatpush1.bf16.xpose.msra.mxu0 0
        %3752 = vmatprep.subr.bf16.mxu0 0
        %3753 = vmatpush1.bf16.xpose.msra.mxu0 0
        %3754 = vmatprep.subr.bf16.mxu0 0
        %3755 = vmatpush1.bf16.xpose.msra.mxu0 0
        %3756 = vmatprep.subr.bf16.mxu0 0
        %3757 = vmatpush1.bf16.xpose.msra.mxu0 0
        %3758 = vmatprep.subr.bf16.mxu0 0
        %3759 = vmatpush1.bf16.xpose.msra.mxu0 0
        %3760 = vmatprep.subr.bf16.mxu0 0
        %3761 = vmatpush1.bf16.xpose.msra.mxu0 0
        %3762 = vmatprep.subr.bf16.mxu0 0
        %3763 = vmatpush1.bf16.xpose.msra.mxu0 0
        %3764 = vmatprep.subr.bf16.mxu0 0
        %3765 = vmatpush1.bf16.xpose.msra.mxu0 0
        %3766 = vmatprep.subr.bf16.mxu0 0
        %3767 = vmatpush1.bf16.xpose.msra.mxu0 0
        %3768 = vmatprep.mubr.bf16.mxu0 0
        %3769 = vmatmul.mubr.bf16.gmra.mrb[0].mxu0 %v3731
        %v3770 = vpop.f32.mrb[0].mxu0
        %v3771 = vadd.f32 0.0, %v3770
        %v3772 = vpop.f32.mrb[0].mxu0
        %v3773 = vpop.f32.mrb[0].mxu0
        %v3774 = vpop.f32.mrb[0].mxu0
        %3775 = vdwg.mxu0
        %v3776 = vsel %vm2315, %v3771, -inf
        %3777 = vmax.xlane.f32.xlu0 %v3776
        %v3778 = vpop.xlane.xlu0 %3777
        %v3779 = vsub.f32 %v3771, %v3778
        %v3780 = vmul.f32 %v3779, 1.442695
        %v3781 = vpow.pop %v3780
        %v3782 = vsel %vm2315, %v3781, 0.0
        %3783 = vadd.xlane.f32.xlu0 %v3782
        %v3784 = vpop.xlane.xlu0 %3783
        %v3785 = vrcp.pop %v3784
        %v3786 = vmul.f32 %v3781, %v3785
        %v3787 = vpack.c.bf16 %v3786, %v3786
        %3788 = vrot.lane.b32.xlu0 %v3395, 40
        %v3789 = vpop.permute.xlu0 %3788
        %v3791 = vsel %vm2315, %v3787, 0
        %v3794 = vsel %vm3462, %v3789, 0
        %3796 = vmatprep.subr.bf16.mxu0 0
        %3797 = vmatpush1.bf16.msra.mxu0 %v3794
        %3798 = vmatprep.subr.bf16.mxu0 0
        %3799 = vmatpush1.bf16.msra.mxu0 0
        %3800 = vmatprep.subr.bf16.mxu0 0
        %3801 = vmatpush1.bf16.msra.mxu0 0
        %3802 = vmatprep.subr.bf16.mxu0 0
        %3803 = vmatpush1.bf16.msra.mxu0 0
        %3804 = vmatprep.subr.bf16.mxu0 0
        %3805 = vmatpush1.bf16.msra.mxu0 0
        %3806 = vmatprep.subr.bf16.mxu0 0
        %3807 = vmatpush1.bf16.msra.mxu0 0
        %3808 = vmatprep.subr.bf16.mxu0 0
        %3809 = vmatpush1.bf16.msra.mxu0 0
        %3810 = vmatprep.subr.bf16.mxu0 0
        %3811 = vmatpush1.bf16.msra.mxu0 0
        %3812 = vmatprep.subr.bf16.mxu0 0
        %3813 = vmatpush1.bf16.msra.mxu0 0
        %3814 = vmatprep.subr.bf16.mxu0 0
        %3815 = vmatpush1.bf16.msra.mxu0 0
        %3816 = vmatprep.subr.bf16.mxu0 0
        %3817 = vmatpush1.bf16.msra.mxu0 0
        %3818 = vmatprep.subr.bf16.mxu0 0
        %3819 = vmatpush1.bf16.msra.mxu0 0
        %3820 = vmatprep.subr.bf16.mxu0 0
        %3821 = vmatpush1.bf16.msra.mxu0 0
        %3822 = vmatprep.subr.bf16.mxu0 0
        %3823 = vmatpush1.bf16.msra.mxu0 0
        %3824 = vmatprep.subr.bf16.mxu0 0
        %3825 = vmatpush1.bf16.msra.mxu0 0
        %3826 = vmatprep.subr.bf16.mxu0 0
        %3827 = vmatpush1.bf16.msra.mxu0 0
        %3828 = vmatprep.mubr.bf16.mxu0 0
        %3829 = vmatmul.mubr.bf16.gmra.mrb[0].mxu0 %v3791
        %v3830 = vpop.f32.mrb[0].mxu0
        %v3831 = vadd.f32 0.0, %v3830
        %v3832 = vpop.f32.mrb[0].mxu0
        %v3833 = vpop.f32.mrb[0].mxu0
        %v3834 = vpop.f32.mrb[0].mxu0
        %3835 = vdwg.mxu0
        %3837 = vrot.lane.b32.xlu0 %v3611, 8
        %v3838 = vpop.permute.xlu0 %3837
        %3841 = vrot.lane.b32.xlu0 %v3721, 16
        %v3842 = vpop.permute.xlu0 %3841
        %3845 = vrot.lane.b32.xlu0 %v3831, 24
        %v3846 = vpop.permute.xlu0 %3845
        %v3848 = vsel %vm2315, %v3501, %v3838
        %v3849 = vsel %vm2769, %v3848, %v3842
        %v3850 = vsel %vm2771, %v3849, %v3846
        %v3851 = vpack.c.bf16 %v3392, %v3392
        %3853 = vrot.lane.b32.xlu0 %v3851, 96
        %v3854 = vpop.permute.xlu0 %3853
        %v3856 = vsel %vm2315, %v3851, 0
        %v3859 = vsel %vm2315, %v3854, 0
        %3861 = vmatprep.subr.bf16.mxu0 0
        %3862 = vmatpush1.bf16.xpose.msra.mxu0 %v3859
        %3863 = vmatprep.subr.bf16.mxu0 0
        %3864 = vmatpush1.bf16.xpose.msra.mxu0 0
        %3865 = vmatprep.subr.bf16.mxu0 0
        %3866 = vmatpush1.bf16.xpose.msra.mxu0 0
        %3867 = vmatprep.subr.bf16.mxu0 0
        %3868 = vmatpush1.bf16.xpose.msra.mxu0 0
        %3869 = vmatprep.subr.bf16.mxu0 0
        %3870 = vmatpush1.bf16.xpose.msra.mxu0 0
        %3871 = vmatprep.subr.bf16.mxu0 0
        %3872 = vmatpush1.bf16.xpose.msra.mxu0 0
        %3873 = vmatprep.subr.bf16.mxu0 0
        %3874 = vmatpush1.bf16.xpose.msra.mxu0 0
        %3875 = vmatprep.subr.bf16.mxu0 0
        %3876 = vmatpush1.bf16.xpose.msra.mxu0 0
        %3877 = vmatprep.subr.bf16.mxu0 0
        %3878 = vmatpush1.bf16.xpose.msra.mxu0 0
        %3879 = vmatprep.subr.bf16.mxu0 0
        %3880 = vmatpush1.bf16.xpose.msra.mxu0 0
        %3881 = vmatprep.subr.bf16.mxu0 0
        %3882 = vmatpush1.bf16.xpose.msra.mxu0 0
        %3883 = vmatprep.subr.bf16.mxu0 0
        %3884 = vmatpush1.bf16.xpose.msra.mxu0 0
        %3885 = vmatprep.subr.bf16.mxu0 0
        %3886 = vmatpush1.bf16.xpose.msra.mxu0 0
        %3887 = vmatprep.subr.bf16.mxu0 0
        %3888 = vmatpush1.bf16.xpose.msra.mxu0 0
        %3889 = vmatprep.subr.bf16.mxu0 0
        %3890 = vmatpush1.bf16.xpose.msra.mxu0 0
        %3891 = vmatprep.subr.bf16.mxu0 0
        %3892 = vmatpush1.bf16.xpose.msra.mxu0 0
        %3893 = vmatprep.mubr.bf16.mxu0 0
        %3894 = vmatmul.mubr.bf16.gmra.mrb[0].mxu0 %v3856
        %v3895 = vpop.f32.mrb[0].mxu0
        %v3896 = vadd.f32 0.0, %v3895
        %v3897 = vpop.f32.mrb[0].mxu0
        %v3898 = vpop.f32.mrb[0].mxu0
        %v3899 = vpop.f32.mrb[0].mxu0
        %3900 = vdwg.mxu0
        %v3901 = vsel %vm2315, %v3896, -inf
        %3902 = vmax.xlane.f32.xlu0 %v3901
        %v3903 = vpop.xlane.xlu0 %3902
        %v3904 = vsub.f32 %v3896, %v3903
        %v3905 = vmul.f32 %v3904, 1.442695
        %v3906 = vpow.pop %v3905
        %v3907 = vsel %vm2315, %v3906, 0.0
        %3908 = vadd.xlane.f32.xlu0 %v3907
        %v3909 = vpop.xlane.xlu0 %3908
        %v3910 = vrcp.pop %v3909
        %v3911 = vmul.f32 %v3906, %v3910
        %v3912 = vpack.c.bf16 %v3911, %v3911
        %3913 = vrot.lane.b32.xlu0 %v3851, 64
        %v3914 = vpop.permute.xlu0 %3913
        %v3916 = vsel %vm2315, %v3912, 0
        %v3919 = vsel %vm3462, %v3914, 0
        %3921 = vmatprep.subr.bf16.mxu0 0
        %3922 = vmatpush1.bf16.msra.mxu0 %v3919
        %3923 = vmatprep.subr.bf16.mxu0 0
        %3924 = vmatpush1.bf16.msra.mxu0 0
        %3925 = vmatprep.subr.bf16.mxu0 0
        %3926 = vmatpush1.bf16.msra.mxu0 0
        %3927 = vmatprep.subr.bf16.mxu0 0
        %3928 = vmatpush1.bf16.msra.mxu0 0
        %3929 = vmatprep.subr.bf16.mxu0 0
        %3930 = vmatpush1.bf16.msra.mxu0 0
        %3931 = vmatprep.subr.bf16.mxu0 0
        %3932 = vmatpush1.bf16.msra.mxu0 0
        %3933 = vmatprep.subr.bf16.mxu0 0
        %3934 = vmatpush1.bf16.msra.mxu0 0
        %3935 = vmatprep.subr.bf16.mxu0 0
        %3936 = vmatpush1.bf16.msra.mxu0 0
        %3937 = vmatprep.subr.bf16.mxu0 0
        %3938 = vmatpush1.bf16.msra.mxu0 0
        %3939 = vmatprep.subr.bf16.mxu0 0
        %3940 = vmatpush1.bf16.msra.mxu0 0
        %3941 = vmatprep.subr.bf16.mxu0 0
        %3942 = vmatpush1.bf16.msra.mxu0 0
        %3943 = vmatprep.subr.bf16.mxu0 0
        %3944 = vmatpush1.bf16.msra.mxu0 0
        %3945 = vmatprep.subr.bf16.mxu0 0
        %3946 = vmatpush1.bf16.msra.mxu0 0
        %3947 = vmatprep.subr.bf16.mxu0 0
        %3948 = vmatpush1.bf16.msra.mxu0 0
        %3949 = vmatprep.subr.bf16.mxu0 0
        %3950 = vmatpush1.bf16.msra.mxu0 0
        %3951 = vmatprep.subr.bf16.mxu0 0
        %3952 = vmatpush1.bf16.msra.mxu0 0
        %3953 = vmatprep.mubr.bf16.mxu0 0
        %3954 = vmatmul.mubr.bf16.gmra.mrb[0].mxu0 %v3916
        %v3955 = vpop.f32.mrb[0].mxu0
        %v3956 = vadd.f32 0.0, %v3955
        %v3957 = vpop.f32.mrb[0].mxu0
        %v3958 = vpop.f32.mrb[0].mxu0
        %v3959 = vpop.f32.mrb[0].mxu0
        %3960 = vdwg.mxu0
        %3961 = vrot.lane.b32.xlu0 %v3851, 120
        %v3962 = vpop.permute.xlu0 %3961
        %3963 = vrot.lane.b32.xlu0 %v3851, 88
        %v3964 = vpop.permute.xlu0 %3963
        %v3966 = vsel %vm2315, %v3962, 0
        %v3969 = vsel %vm2315, %v3964, 0
        %3971 = vmatprep.subr.bf16.mxu0 0
        %3972 = vmatpush1.bf16.xpose.msra.mxu0 %v3969
        %3973 = vmatprep.subr.bf16.mxu0 0
        %3974 = vmatpush1.bf16.xpose.msra.mxu0 0
        %3975 = vmatprep.subr.bf16.mxu0 0
        %3976 = vmatpush1.bf16.xpose.msra.mxu0 0
        %3977 = vmatprep.subr.bf16.mxu0 0
        %3978 = vmatpush1.bf16.xpose.msra.mxu0 0
        %3979 = vmatprep.subr.bf16.mxu0 0
        %3980 = vmatpush1.bf16.xpose.msra.mxu0 0
        %3981 = vmatprep.subr.bf16.mxu0 0
        %3982 = vmatpush1.bf16.xpose.msra.mxu0 0
        %3983 = vmatprep.subr.bf16.mxu0 0
        %3984 = vmatpush1.bf16.xpose.msra.mxu0 0
        %3985 = vmatprep.subr.bf16.mxu0 0
        %3986 = vmatpush1.bf16.xpose.msra.mxu0 0
        %3987 = vmatprep.subr.bf16.mxu0 0
        %3988 = vmatpush1.bf16.xpose.msra.mxu0 0
        %3989 = vmatprep.subr.bf16.mxu0 0
        %3990 = vmatpush1.bf16.xpose.msra.mxu0 0
        %3991 = vmatprep.subr.bf16.mxu0 0
        %3992 = vmatpush1.bf16.xpose.msra.mxu0 0
        %3993 = vmatprep.subr.bf16.mxu0 0
        %3994 = vmatpush1.bf16.xpose.msra.mxu0 0
        %3995 = vmatprep.subr.bf16.mxu0 0
        %3996 = vmatpush1.bf16.xpose.msra.mxu0 0
        %3997 = vmatprep.subr.bf16.mxu0 0
        %3998 = vmatpush1.bf16.xpose.msra.mxu0 0
        %3999 = vmatprep.subr.bf16.mxu0 0
        %4000 = vmatpush1.bf16.xpose.msra.mxu0 0
        %4001 = vmatprep.subr.bf16.mxu0 0
        %4002 = vmatpush1.bf16.xpose.msra.mxu0 0
        %4003 = vmatprep.mubr.bf16.mxu0 0
        %4004 = vmatmul.mubr.bf16.gmra.mrb[0].mxu0 %v3966
        %v4005 = vpop.f32.mrb[0].mxu0
        %v4006 = vadd.f32 0.0, %v4005
        %v4007 = vpop.f32.mrb[0].mxu0
        %v4008 = vpop.f32.mrb[0].mxu0
        %v4009 = vpop.f32.mrb[0].mxu0
        %4010 = vdwg.mxu0
        %v4011 = vsel %vm2315, %v4006, -inf
        %4012 = vmax.xlane.f32.xlu0 %v4011
        %v4013 = vpop.xlane.xlu0 %4012
        %v4014 = vsub.f32 %v4006, %v4013
        %v4015 = vmul.f32 %v4014, 1.442695
        %v4016 = vpow.pop %v4015
        %v4017 = vsel %vm2315, %v4016, 0.0
        %4018 = vadd.xlane.f32.xlu0 %v4017
        %v4019 = vpop.xlane.xlu0 %4018
        %v4020 = vrcp.pop %v4019
        %v4021 = vmul.f32 %v4016, %v4020
        %v4022 = vpack.c.bf16 %v4021, %v4021
        %4023 = vrot.lane.b32.xlu0 %v3851, 56
        %v4024 = vpop.permute.xlu0 %4023
        %v4026 = vsel %vm2315, %v4022, 0
        %v4029 = vsel %vm3462, %v4024, 0
        %4031 = vmatprep.subr.bf16.mxu0 0
        %4032 = vmatpush1.bf16.msra.mxu0 %v4029
        %4033 = vmatprep.subr.bf16.mxu0 0
        %4034 = vmatpush1.bf16.msra.mxu0 0
        %4035 = vmatprep.subr.bf16.mxu0 0
        %4036 = vmatpush1.bf16.msra.mxu0 0
        %4037 = vmatprep.subr.bf16.mxu0 0
        %4038 = vmatpush1.bf16.msra.mxu0 0
        %4039 = vmatprep.subr.bf16.mxu0 0
        %4040 = vmatpush1.bf16.msra.mxu0 0
        %4041 = vmatprep.subr.bf16.mxu0 0
        %4042 = vmatpush1.bf16.msra.mxu0 0
        %4043 = vmatprep.subr.bf16.mxu0 0
        %4044 = vmatpush1.bf16.msra.mxu0 0
        %4045 = vmatprep.subr.bf16.mxu0 0
        %4046 = vmatpush1.bf16.msra.mxu0 0
        %4047 = vmatprep.subr.bf16.mxu0 0
        %4048 = vmatpush1.bf16.msra.mxu0 0
        %4049 = vmatprep.subr.bf16.mxu0 0
        %4050 = vmatpush1.bf16.msra.mxu0 0
        %4051 = vmatprep.subr.bf16.mxu0 0
        %4052 = vmatpush1.bf16.msra.mxu0 0
        %4053 = vmatprep.subr.bf16.mxu0 0
        %4054 = vmatpush1.bf16.msra.mxu0 0
        %4055 = vmatprep.subr.bf16.mxu0 0
        %4056 = vmatpush1.bf16.msra.mxu0 0
        %4057 = vmatprep.subr.bf16.mxu0 0
        %4058 = vmatpush1.bf16.msra.mxu0 0
        %4059 = vmatprep.subr.bf16.mxu0 0
        %4060 = vmatpush1.bf16.msra.mxu0 0
        %4061 = vmatprep.subr.bf16.mxu0 0
        %4062 = vmatpush1.bf16.msra.mxu0 0
        %4063 = vmatprep.mubr.bf16.mxu0 0
        %4064 = vmatmul.mubr.bf16.gmra.mrb[0].mxu0 %v4026
        %v4065 = vpop.f32.mrb[0].mxu0
        %v4066 = vadd.f32 0.0, %v4065
        %v4067 = vpop.f32.mrb[0].mxu0
        %v4068 = vpop.f32.mrb[0].mxu0
        %v4069 = vpop.f32.mrb[0].mxu0
        %4070 = vdwg.mxu0
        %4071 = vrot.lane.b32.xlu0 %v3851, 112
        %v4072 = vpop.permute.xlu0 %4071
        %4073 = vrot.lane.b32.xlu0 %v3851, 80
        %v4074 = vpop.permute.xlu0 %4073
        %v4076 = vsel %vm2315, %v4072, 0
        %v4079 = vsel %vm2315, %v4074, 0
        %4081 = vmatprep.subr.bf16.mxu0 0
        %4082 = vmatpush1.bf16.xpose.msra.mxu0 %v4079
        %4083 = vmatprep.subr.bf16.mxu0 0
        %4084 = vmatpush1.bf16.xpose.msra.mxu0 0
        %4085 = vmatprep.subr.bf16.mxu0 0
        %4086 = vmatpush1.bf16.xpose.msra.mxu0 0
        %4087 = vmatprep.subr.bf16.mxu0 0
        %4088 = vmatpush1.bf16.xpose.msra.mxu0 0
        %4089 = vmatprep.subr.bf16.mxu0 0
        %4090 = vmatpush1.bf16.xpose.msra.mxu0 0
        %4091 = vmatprep.subr.bf16.mxu0 0
        %4092 = vmatpush1.bf16.xpose.msra.mxu0 0
        %4093 = vmatprep.subr.bf16.mxu0 0
        %4094 = vmatpush1.bf16.xpose.msra.mxu0 0
        %4095 = vmatprep.subr.bf16.mxu0 0
        %4096 = vmatpush1.bf16.xpose.msra.mxu0 0
        %4097 = vmatprep.subr.bf16.mxu0 0
        %4098 = vmatpush1.bf16.xpose.msra.mxu0 0
        %4099 = vmatprep.subr.bf16.mxu0 0
        %4100 = vmatpush1.bf16.xpose.msra.mxu0 0
        %4101 = vmatprep.subr.bf16.mxu0 0
        %4102 = vmatpush1.bf16.xpose.msra.mxu0 0
        %4103 = vmatprep.subr.bf16.mxu0 0
        %4104 = vmatpush1.bf16.xpose.msra.mxu0 0
        %4105 = vmatprep.subr.bf16.mxu0 0
        %4106 = vmatpush1.bf16.xpose.msra.mxu0 0
        %4107 = vmatprep.subr.bf16.mxu0 0
        %4108 = vmatpush1.bf16.xpose.msra.mxu0 0
        %4109 = vmatprep.subr.bf16.mxu0 0
        %4110 = vmatpush1.bf16.xpose.msra.mxu0 0
        %4111 = vmatprep.subr.bf16.mxu0 0
        %4112 = vmatpush1.bf16.xpose.msra.mxu0 0
        %4113 = vmatprep.mubr.bf16.mxu0 0
        %4114 = vmatmul.mubr.bf16.gmra.mrb[0].mxu0 %v4076
        %v4115 = vpop.f32.mrb[0].mxu0
        %v4116 = vadd.f32 0.0, %v4115
        %v4117 = vpop.f32.mrb[0].mxu0
        %v4118 = vpop.f32.mrb[0].mxu0
        %v4119 = vpop.f32.mrb[0].mxu0
        %4120 = vdwg.mxu0
        %v4121 = vsel %vm2315, %v4116, -inf
        %4122 = vmax.xlane.f32.xlu0 %v4121
        %v4123 = vpop.xlane.xlu0 %4122
        %v4124 = vsub.f32 %v4116, %v4123
        %v4125 = vmul.f32 %v4124, 1.442695
        %v4126 = vpow.pop %v4125
        %v4127 = vsel %vm2315, %v4126, 0.0
        %4128 = vadd.xlane.f32.xlu0 %v4127
        %v4129 = vpop.xlane.xlu0 %4128
        %v4130 = vrcp.pop %v4129
        %v4131 = vmul.f32 %v4126, %v4130
        %v4132 = vpack.c.bf16 %v4131, %v4131
        %4133 = vrot.lane.b32.xlu0 %v3851, 48
        %v4134 = vpop.permute.xlu0 %4133
        %v4136 = vsel %vm2315, %v4132, 0
        %v4139 = vsel %vm3462, %v4134, 0
        %4141 = vmatprep.subr.bf16.mxu0 0
        %4142 = vmatpush1.bf16.msra.mxu0 %v4139
        %4143 = vmatprep.subr.bf16.mxu0 0
        %4144 = vmatpush1.bf16.msra.mxu0 0
        %4145 = vmatprep.subr.bf16.mxu0 0
        %4146 = vmatpush1.bf16.msra.mxu0 0
        %4147 = vmatprep.subr.bf16.mxu0 0
        %4148 = vmatpush1.bf16.msra.mxu0 0
        %4149 = vmatprep.subr.bf16.mxu0 0
        %4150 = vmatpush1.bf16.msra.mxu0 0
        %4151 = vmatprep.subr.bf16.mxu0 0
        %4152 = vmatpush1.bf16.msra.mxu0 0
        %4153 = vmatprep.subr.bf16.mxu0 0
        %4154 = vmatpush1.bf16.msra.mxu0 0
        %4155 = vmatprep.subr.bf16.mxu0 0
        %4156 = vmatpush1.bf16.msra.mxu0 0
        %4157 = vmatprep.subr.bf16.mxu0 0
        %4158 = vmatpush1.bf16.msra.mxu0 0
        %4159 = vmatprep.subr.bf16.mxu0 0
        %4160 = vmatpush1.bf16.msra.mxu0 0
        %4161 = vmatprep.subr.bf16.mxu0 0
        %4162 = vmatpush1.bf16.msra.mxu0 0
        %4163 = vmatprep.subr.bf16.mxu0 0
        %4164 = vmatpush1.bf16.msra.mxu0 0
        %4165 = vmatprep.subr.bf16.mxu0 0
        %4166 = vmatpush1.bf16.msra.mxu0 0
        %4167 = vmatprep.subr.bf16.mxu0 0
        %4168 = vmatpush1.bf16.msra.mxu0 0
        %4169 = vmatprep.subr.bf16.mxu0 0
        %4170 = vmatpush1.bf16.msra.mxu0 0
        %4171 = vmatprep.subr.bf16.mxu0 0
        %4172 = vmatpush1.bf16.msra.mxu0 0
        %4173 = vmatprep.mubr.bf16.mxu0 0
        %4174 = vmatmul.mubr.bf16.gmra.mrb[0].mxu0 %v4136
        %v4175 = vpop.f32.mrb[0].mxu0
        %v4176 = vadd.f32 0.0, %v4175
        %v4177 = vpop.f32.mrb[0].mxu0
        %v4178 = vpop.f32.mrb[0].mxu0
        %v4179 = vpop.f32.mrb[0].mxu0
        %4180 = vdwg.mxu0
        %4181 = vrot.lane.b32.xlu0 %v3851, 104
        %v4182 = vpop.permute.xlu0 %4181
        %4183 = vrot.lane.b32.xlu0 %v3851, 72
        %v4184 = vpop.permute.xlu0 %4183
        %v4186 = vsel %vm2315, %v4182, 0
        %v4189 = vsel %vm2315, %v4184, 0
        %4191 = vmatprep.subr.bf16.mxu0 0
        %4192 = vmatpush1.bf16.xpose.msra.mxu0 %v4189
        %4193 = vmatprep.subr.bf16.mxu0 0
        %4194 = vmatpush1.bf16.xpose.msra.mxu0 0
        %4195 = vmatprep.subr.bf16.mxu0 0
        %4196 = vmatpush1.bf16.xpose.msra.mxu0 0
        %4197 = vmatprep.subr.bf16.mxu0 0
        %4198 = vmatpush1.bf16.xpose.msra.mxu0 0
        %4199 = vmatprep.subr.bf16.mxu0 0
        %4200 = vmatpush1.bf16.xpose.msra.mxu0 0
        %4201 = vmatprep.subr.bf16.mxu0 0
        %4202 = vmatpush1.bf16.xpose.msra.mxu0 0
        %4203 = vmatprep.subr.bf16.mxu0 0
        %4204 = vmatpush1.bf16.xpose.msra.mxu0 0
        %4205 = vmatprep.subr.bf16.mxu0 0
        %4206 = vmatpush1.bf16.xpose.msra.mxu0 0
        %4207 = vmatprep.subr.bf16.mxu0 0
        %4208 = vmatpush1.bf16.xpose.msra.mxu0 0
        %4209 = vmatprep.subr.bf16.mxu0 0
        %4210 = vmatpush1.bf16.xpose.msra.mxu0 0
        %4211 = vmatprep.subr.bf16.mxu0 0
        %4212 = vmatpush1.bf16.xpose.msra.mxu0 0
        %4213 = vmatprep.subr.bf16.mxu0 0
        %4214 = vmatpush1.bf16.xpose.msra.mxu0 0
        %4215 = vmatprep.subr.bf16.mxu0 0
        %4216 = vmatpush1.bf16.xpose.msra.mxu0 0
        %4217 = vmatprep.subr.bf16.mxu0 0
        %4218 = vmatpush1.bf16.xpose.msra.mxu0 0
        %4219 = vmatprep.subr.bf16.mxu0 0
        %4220 = vmatpush1.bf16.xpose.msra.mxu0 0
        %4221 = vmatprep.subr.bf16.mxu0 0
        %4222 = vmatpush1.bf16.xpose.msra.mxu0 0
        %4223 = vmatprep.mubr.bf16.mxu0 0
        %4224 = vmatmul.mubr.bf16.gmra.mrb[0].mxu0 %v4186
        %v4225 = vpop.f32.mrb[0].mxu0
        %v4226 = vadd.f32 0.0, %v4225
        %v4227 = vpop.f32.mrb[0].mxu0
        %v4228 = vpop.f32.mrb[0].mxu0
        %v4229 = vpop.f32.mrb[0].mxu0
        %4230 = vdwg.mxu0
        %v4231 = vsel %vm2315, %v4226, -inf
        %4232 = vmax.xlane.f32.xlu0 %v4231
        %v4233 = vpop.xlane.xlu0 %4232
        %v4234 = vsub.f32 %v4226, %v4233
        %v4235 = vmul.f32 %v4234, 1.442695
        %v4236 = vpow.pop %v4235
        %v4237 = vsel %vm2315, %v4236, 0.0
        %4238 = vadd.xlane.f32.xlu0 %v4237
        %v4239 = vpop.xlane.xlu0 %4238
        %v4240 = vrcp.pop %v4239
        %v4241 = vmul.f32 %v4236, %v4240
        %v4242 = vpack.c.bf16 %v4241, %v4241
        %4243 = vrot.lane.b32.xlu0 %v3851, 40
        %v4244 = vpop.permute.xlu0 %4243
        %v4246 = vsel %vm2315, %v4242, 0
        %v4249 = vsel %vm3462, %v4244, 0
        %4251 = vmatprep.subr.bf16.mxu0 0
        %4252 = vmatpush1.bf16.msra.mxu0 %v4249
        %4253 = vmatprep.subr.bf16.mxu0 0
        %4254 = vmatpush1.bf16.msra.mxu0 0
        %4255 = vmatprep.subr.bf16.mxu0 0
        %4256 = vmatpush1.bf16.msra.mxu0 0
        %4257 = vmatprep.subr.bf16.mxu0 0
        %4258 = vmatpush1.bf16.msra.mxu0 0
        %4259 = vmatprep.subr.bf16.mxu0 0
        %4260 = vmatpush1.bf16.msra.mxu0 0
        %4261 = vmatprep.subr.bf16.mxu0 0
        %4262 = vmatpush1.bf16.msra.mxu0 0
        %4263 = vmatprep.subr.bf16.mxu0 0
        %4264 = vmatpush1.bf16.msra.mxu0 0
        %4265 = vmatprep.subr.bf16.mxu0 0
        %4266 = vmatpush1.bf16.msra.mxu0 0
        %4267 = vmatprep.subr.bf16.mxu0 0
        %4268 = vmatpush1.bf16.msra.mxu0 0
        %4269 = vmatprep.subr.bf16.mxu0 0
        %4270 = vmatpush1.bf16.msra.mxu0 0
        %4271 = vmatprep.subr.bf16.mxu0 0
        %4272 = vmatpush1.bf16.msra.mxu0 0
        %4273 = vmatprep.subr.bf16.mxu0 0
        %4274 = vmatpush1.bf16.msra.mxu0 0
        %4275 = vmatprep.subr.bf16.mxu0 0
        %4276 = vmatpush1.bf16.msra.mxu0 0
        %4277 = vmatprep.subr.bf16.mxu0 0
        %4278 = vmatpush1.bf16.msra.mxu0 0
        %4279 = vmatprep.subr.bf16.mxu0 0
        %4280 = vmatpush1.bf16.msra.mxu0 0
        %4281 = vmatprep.subr.bf16.mxu0 0
        %4282 = vmatpush1.bf16.msra.mxu0 0
        %4283 = vmatprep.mubr.bf16.mxu0 0
        %4284 = vmatmul.mubr.bf16.gmra.mrb[0].mxu0 %v4246
        %v4285 = vpop.f32.mrb[0].mxu0
        %v4286 = vadd.f32 0.0, %v4285
        %v4287 = vpop.f32.mrb[0].mxu0
        %v4288 = vpop.f32.mrb[0].mxu0
        %v4289 = vpop.f32.mrb[0].mxu0
        %4290 = vdwg.mxu0
        %4292 = vrot.lane.b32.xlu0 %v4066, 8
        %v4293 = vpop.permute.xlu0 %4292
        %4296 = vrot.lane.b32.xlu0 %v4176, 16
        %v4297 = vpop.permute.xlu0 %4296
        %4300 = vrot.lane.b32.xlu0 %v4286, 24
        %v4301 = vpop.permute.xlu0 %4300
        %v4303 = vsel %vm2315, %v3956, %v4293
        %v4304 = vsel %vm2769, %v4303, %v4297
        %v4305 = vsel %vm2771, %v4304, %v4301
        %v4307 = vlaneseq
        %v4308 = vshrl.u32 %v4307, 7
        %v4309 = vsub.s32 0, %v4308
        %v4310 = vrot.slane %v1983, %v4309
        %v4312 = vadd.f32 %v3294, %v4310
        %v4313 = vadd.f32 %v3295, %v4310
        %v4314 = vpack.c.bf16 %v4305, %v3850
        %v4319 = vunpack.c.l.b16 %v1979
        %v4320 = vunpack.c.l.b16 %v1980
        %v4321 = vunpack.c.l.b16 %v1981
        %v4322 = vunpack.c.l.b16 %v1982
        %v4323 = vpack.c.b16 %v4320, %v4319
        %v4324 = vpack.c.b16 %v4322, %v4321
        %v4328 = vsel %vm2098, %v4314, 0
        %4330 = vmatprep.subr.bf16.mxu0 0
        %4331 = vmatpush1.bf16.msra.mxu0 %v4323
        %4332 = vmatprep.subr.bf16.mxu0 0
        %4333 = vmatpush1.bf16.msra.mxu0 %v4324
        %4334 = vmatprep.subr.bf16.mxu0 0
        %4335 = vmatpush1.bf16.msra.mxu0 0
        %4336 = vmatprep.subr.bf16.mxu0 0
        %4337 = vmatpush1.bf16.msra.mxu0 0
        %4338 = vmatprep.subr.bf16.mxu0 0
        %4339 = vmatpush1.bf16.msra.mxu0 0
        %4340 = vmatprep.subr.bf16.mxu0 0
        %4341 = vmatpush1.bf16.msra.mxu0 0
        %4342 = vmatprep.subr.bf16.mxu0 0
        %4343 = vmatpush1.bf16.msra.mxu0 0
        %4344 = vmatprep.subr.bf16.mxu0 0
        %4345 = vmatpush1.bf16.msra.mxu0 0
        %4346 = vmatprep.subr.bf16.mxu0 0
        %4347 = vmatpush1.bf16.msra.mxu0 0
        %4348 = vmatprep.subr.bf16.mxu0 0
        %4349 = vmatpush1.bf16.msra.mxu0 0
        %4350 = vmatprep.subr.bf16.mxu0 0
        %4351 = vmatpush1.bf16.msra.mxu0 0
        %4352 = vmatprep.subr.bf16.mxu0 0
        %4353 = vmatpush1.bf16.msra.mxu0 0
        %4354 = vmatprep.subr.bf16.mxu0 0
        %4355 = vmatpush1.bf16.msra.mxu0 0
        %4356 = vmatprep.subr.bf16.mxu0 0
        %4357 = vmatpush1.bf16.msra.mxu0 0
        %4358 = vmatprep.subr.bf16.mxu0 0
        %4359 = vmatpush1.bf16.msra.mxu0 0
        %4360 = vmatprep.subr.bf16.mxu0 0
        %4361 = vmatpush1.bf16.msra.mxu0 0
        %4362 = vmatprep.mubr.bf16.mxu0 0
        %4363 = vmatmul.mubr.bf16.gmra.mrb[0].mxu0 %v4328
        %v4364 = vpop.f32.mrb[0].mxu0
        %v4365 = vadd.f32 0.0, %v4364
        %v4366 = vpop.f32.mrb[0].mxu0
        %v4367 = vpop.f32.mrb[0].mxu0
        %v4368 = vadd.f32 0.0, %v4367
        %v4369 = vpop.f32.mrb[0].mxu0
        %4370 = vdwg.mxu0
        %v4371 = vadd.f32 %v4312, %v4365
        %v4372 = vadd.f32 %v4313, %v4368
        %v4373 = vsel %vm2098, %v4371, 0.0
        %4374 = vadd.xlane.f32.xlu0 %v4373
        %v4375 = vpop.xlane.xlu0 %4374
        %v4376 = vsel %vm2098, %v4372, 0.0
        %4377 = vadd.xlane.f32.xlu0 %v4376
        %v4378 = vpop.xlane.xlu0 %4377
        %v4379 = vmul.f32 %v4375, %v2105
        %v4380 = vmul.f32 %v4378, %v2105
        %v4381 = vsub.f32 %v4371, %v4379
        %v4382 = vsub.f32 %v4372, %v4380
        %v4383 = vmul.f32 %v4381, %v4381
        %v4384 = vmul.f32 %v4382, %v4382
        %v4385 = vsel %vm2098, %v4383, 0.0
        %4386 = vadd.xlane.f32.xlu0 %v4385
        %v4387 = vpop.xlane.xlu0 %4386
        %v4388 = vsel %vm2098, %v4384, 0.0
        %4389 = vadd.xlane.f32.xlu0 %v4388
        %v4390 = vpop.xlane.xlu0 %4389
        %v4391 = vmul.f32 %v4387, %v2105
        %v4392 = vmul.f32 %v4390, %v2105
        %v4393 = vadd.f32 %v4391, 1e-05
        %v4394 = vadd.f32 %v4392, 1e-05
        %v4395 = vrsqrt.pop %v4393
        %v4396 = vrsqrt.pop %v4394
        %v4397 = vmul.f32 %v4381, %v4395
        %v4398 = vmul.f32 %v4382, %v4396
        %v4400 = vlaneseq
        %v4401 = vshrl.u32 %v4400, 7
        %v4402 = vsub.s32 0, %v4401
        %v4403 = vrot.slane %v1956, %v4402
        %v4405 = vmul.f32 %v4397, %v4403
        %v4406 = vmul.f32 %v4398, %v4403
        %v4408 = vlaneseq
        %v4409 = vshrl.u32 %v4408, 7
        %v4410 = vsub.s32 0, %v4409
        %v4411 = vrot.slane %v1957, %v4410
        %v4413 = vadd.f32 %v4405, %v4411
        %v4414 = vadd.f32 %v4406, %v4411
        %v4415 = vpack.c.bf16 %v4414, %v4413
        %v4417 = vlaneseq
        %v4418 = vshrl.u32 %v4417, 7
        %v4419 = vsub.s32 0, %v4418
        %v4420 = vrot.slane %v1988, %v4419
        %v4426 = vunpack.c.l.b16 %v1984
        %v4427 = vunpack.c.l.b16 %v1985
        %v4428 = vunpack.c.l.b16 %v1986
        %v4429 = vunpack.c.l.b16 %v1987
        %v4430 = vpack.c.b16 %v4427, %v4426
        %v4431 = vpack.c.b16 %v4429, %v4428
        %v4435 = vsel %vm2098, %v4415, 0
        %4437 = vmatprep.subr.bf16.mxu0 0
        %4438 = vmatpush1.bf16.msra.mxu0 %v4430
        %4439 = vmatprep.subr.bf16.mxu0 0
        %4440 = vmatpush1.bf16.msra.mxu0 %v4431
        %4441 = vmatprep.subr.bf16.mxu0 0
        %4442 = vmatpush1.bf16.msra.mxu0 0
        %4443 = vmatprep.subr.bf16.mxu0 0
        %4444 = vmatpush1.bf16.msra.mxu0 0
        %4445 = vmatprep.subr.bf16.mxu0 0
        %4446 = vmatpush1.bf16.msra.mxu0 0
        %4447 = vmatprep.subr.bf16.mxu0 0
        %4448 = vmatpush1.bf16.msra.mxu0 0
        %4449 = vmatprep.subr.bf16.mxu0 0
        %4450 = vmatpush1.bf16.msra.mxu0 0
        %4451 = vmatprep.subr.bf16.mxu0 0
        %4452 = vmatpush1.bf16.msra.mxu0 0
        %4453 = vmatprep.subr.bf16.mxu0 0
        %4454 = vmatpush1.bf16.msra.mxu0 0
        %4455 = vmatprep.subr.bf16.mxu0 0
        %4456 = vmatpush1.bf16.msra.mxu0 0
        %4457 = vmatprep.subr.bf16.mxu0 0
        %4458 = vmatpush1.bf16.msra.mxu0 0
        %4459 = vmatprep.subr.bf16.mxu0 0
        %4460 = vmatpush1.bf16.msra.mxu0 0
        %4461 = vmatprep.subr.bf16.mxu0 0
        %4462 = vmatpush1.bf16.msra.mxu0 0
        %4463 = vmatprep.subr.bf16.mxu0 0
        %4464 = vmatpush1.bf16.msra.mxu0 0
        %4465 = vmatprep.subr.bf16.mxu0 0
        %4466 = vmatpush1.bf16.msra.mxu0 0
        %4467 = vmatprep.subr.bf16.mxu0 0
        %4468 = vmatpush1.bf16.msra.mxu0 0
        %4469 = vmatprep.mubr.bf16.mxu0 0
        %4470 = vmatmul.mubr.bf16.gmra.mrb[0].mxu0 %v4435
        %v4471 = vpop.f32.mrb[0].mxu0
        %v4472 = vadd.f32 %v4420, %v4471
        %v4473 = vpop.f32.mrb[0].mxu0
        %v4474 = vpop.f32.mrb[0].mxu0
        %v4475 = vadd.f32 %v4420, %v4474
        %v4476 = vpop.f32.mrb[0].mxu0
        %4477 = vdwg.mxu0
        %v4478 = vmul.f32 %v4472, 0.5
        %v4479 = vmul.f32 %v4475, 0.5
        %v4480 = vmul.f32 %v4472, 0.70710677
        %v4481 = vmul.f32 %v4475, 0.70710677
        %v4482 = verf.f32.pop %v4480
        %v4483 = verf.f32.pop %v4481
        %v4484 = vadd.f32 %v4482, 1.0
        %v4485 = vadd.f32 %v4483, 1.0
        %v4486 = vmul.f32 %v4478, %v4484
        %v4487 = vmul.f32 %v4479, %v4485
        %v4489 = vlaneseq
        %v4490 = vshrl.u32 %v4489, 7
        %v4491 = vsub.s32 0, %v4490
        %v4492 = vrot.slane %v2005, %v4491
        %v4494 = vadd.f32 %v4371, %v4492
        %v4495 = vadd.f32 %v4372, %v4492
        %v4496 = vpack.c.bf16 %v4487, %v4486
        %v4513 = vunpack.c.l.b16 %v1989
        %v4514 = vunpack.c.l.b16 %v1990
        %v4515 = vunpack.c.l.b16 %v1991
        %v4516 = vunpack.c.l.b16 %v1992
        %v4517 = vunpack.c.l.b16 %v1993
        %v4518 = vunpack.c.l.b16 %v1994
        %v4519 = vunpack.c.l.b16 %v1995
        %v4520 = vunpack.c.l.b16 %v1996
        %v4521 = vunpack.c.l.b16 %v1997
        %v4522 = vunpack.c.l.b16 %v1998
        %v4523 = vunpack.c.l.b16 %v1999
        %v4524 = vunpack.c.l.b16 %v2000
        %v4525 = vunpack.c.l.b16 %v2001
        %v4526 = vunpack.c.l.b16 %v2002
        %v4527 = vunpack.c.l.b16 %v2003
        %v4528 = vunpack.c.l.b16 %v2004
        %v4529 = vpack.c.b16 %v4514, %v4513
        %v4530 = vpack.c.b16 %v4516, %v4515
        %v4531 = vpack.c.b16 %v4518, %v4517
        %v4532 = vpack.c.b16 %v4520, %v4519
        %v4533 = vpack.c.b16 %v4522, %v4521
        %v4534 = vpack.c.b16 %v4524, %v4523
        %v4535 = vpack.c.b16 %v4526, %v4525
        %v4536 = vpack.c.b16 %v4528, %v4527
        %4545 = vmatprep.subr.bf16.mxu0 0
        %4546 = vmatpush1.bf16.msra.mxu0 %v4529
        %4547 = vmatprep.subr.bf16.mxu0 0
        %4548 = vmatpush1.bf16.msra.mxu0 %v4530
        %4549 = vmatprep.subr.bf16.mxu0 0
        %4550 = vmatpush1.bf16.msra.mxu0 %v4531
        %4551 = vmatprep.subr.bf16.mxu0 0
        %4552 = vmatpush1.bf16.msra.mxu0 %v4532
        %4553 = vmatprep.subr.bf16.mxu0 0
        %4554 = vmatpush1.bf16.msra.mxu0 %v4533
        %4555 = vmatprep.subr.bf16.mxu0 0
        %4556 = vmatpush1.bf16.msra.mxu0 %v4534
        %4557 = vmatprep.subr.bf16.mxu0 0
        %4558 = vmatpush1.bf16.msra.mxu0 %v4535
        %4559 = vmatprep.subr.bf16.mxu0 0
        %4560 = vmatpush1.bf16.msra.mxu0 %v4536
        %4561 = vmatprep.subr.bf16.mxu0 0
        %4562 = vmatpush1.bf16.msra.mxu0 0
        %4563 = vmatprep.subr.bf16.mxu0 0
        %4564 = vmatpush1.bf16.msra.mxu0 0
        %4565 = vmatprep.subr.bf16.mxu0 0
        %4566 = vmatpush1.bf16.msra.mxu0 0
        %4567 = vmatprep.subr.bf16.mxu0 0
        %4568 = vmatpush1.bf16.msra.mxu0 0
        %4569 = vmatprep.subr.bf16.mxu0 0
        %4570 = vmatpush1.bf16.msra.mxu0 0
        %4571 = vmatprep.subr.bf16.mxu0 0
        %4572 = vmatpush1.bf16.msra.mxu0 0
        %4573 = vmatprep.subr.bf16.mxu0 0
        %4574 = vmatpush1.bf16.msra.mxu0 0
        %4575 = vmatprep.subr.bf16.mxu0 0
        %4576 = vmatpush1.bf16.msra.mxu0 0
        %4577 = vmatprep.mubr.bf16.mxu0 0
        %4578 = vmatmul.mubr.bf16.gmra.mrb[0].mxu0 %v4496
        %v4579 = vpop.f32.mrb[0].mxu0
        %v4580 = vadd.f32 0.0, %v4579
        %v4581 = vpop.f32.mrb[0].mxu0
        %v4582 = vpop.f32.mrb[0].mxu0
        %v4583 = vadd.f32 0.0, %v4582
        %v4584 = vpop.f32.mrb[0].mxu0
        %4585 = vdwg.mxu0
        %v4586 = vadd.f32 %v4494, %v4580
        %v4587 = vadd.f32 %v4495, %v4583
        %v4589 = vlaneseq
        %v4590 = vshrl.u32 %v4589, 7
        %v4591 = vsub.s32 0, %v4590
        %v4592 = vrot.slane %v2006, %v4591
        %v4594 = vmul.f32 %v2169, %v4592
        %v4595 = vmul.f32 %v2170, %v4592
        %v4597 = vlaneseq
        %v4598 = vshrl.u32 %v4597, 7
        %v4599 = vsub.s32 0, %v4598
        %v4600 = vrot.slane %v2007, %v4599
        %v4602 = vadd.f32 %v4594, %v4600
        %v4603 = vadd.f32 %v4595, %v4600
        %v4605 = vlaneseq
        %v4606 = vshrl.u32 %v4605, 7
        %v4607 = vsub.s32 0, %v4606
        %v4608 = vrot.slane %v2008, %v4607
        %v4610 = vmul.f32 %v2124, %v4608
        %v4611 = vmul.f32 %v2125, %v4608
        %v4613 = vlaneseq
        %v4614 = vshrl.u32 %v4613, 7
        %v4615 = vsub.s32 0, %v4614
        %v4616 = vrot.slane %v2009, %v4615
        %v4618 = vadd.f32 %v4610, %v4616
        %v4619 = vadd.f32 %v4611, %v4616
        %v4620 = vpack.c.bf16 %v4603, %v4602
        %v4629 = vunpack.c.l.b16 %v2014
        %v4630 = vunpack.c.l.b16 %v2015
        %v4631 = vunpack.c.l.b16 %v2016
        %v4632 = vunpack.c.l.b16 %v2017
        %v4633 = vunpack.c.l.b16 %v2018
        %v4634 = vunpack.c.l.b16 %v2019
        %v4635 = vunpack.c.l.b16 %v2020
        %v4636 = vunpack.c.l.b16 %v2021
        %v4637 = vpack.c.b16 %v4630, %v4629
        %v4638 = vpack.c.b16 %v4632, %v4631
        %v4639 = vpack.c.b16 %v4634, %v4633
        %v4640 = vpack.c.b16 %v4636, %v4635
        %v4646 = vsel %vm2142, %v4620, 0
        %4648 = vmatprep.subr.bf16.mxu0 0
        %4649 = vmatpush1.bf16.msra.mxu0 %v4637
        %4650 = vmatprep.subr.bf16.mxu0 0
        %4651 = vmatpush1.bf16.msra.mxu0 %v4638
        %4652 = vmatprep.subr.bf16.mxu0 0
        %4653 = vmatpush1.bf16.msra.mxu0 %v4639
        %4654 = vmatprep.subr.bf16.mxu0 0
        %4655 = vmatpush1.bf16.msra.mxu0 %v4640
        %4656 = vmatprep.subr.bf16.mxu0 0
        %4657 = vmatpush1.bf16.msra.mxu0 0
        %4658 = vmatprep.subr.bf16.mxu0 0
        %4659 = vmatpush1.bf16.msra.mxu0 0
        %4660 = vmatprep.subr.bf16.mxu0 0
        %4661 = vmatpush1.bf16.msra.mxu0 0
        %4662 = vmatprep.subr.bf16.mxu0 0
        %4663 = vmatpush1.bf16.msra.mxu0 0
        %4664 = vmatprep.subr.bf16.mxu0 0
        %4665 = vmatpush1.bf16.msra.mxu0 0
        %4666 = vmatprep.subr.bf16.mxu0 0
        %4667 = vmatpush1.bf16.msra.mxu0 0
        %4668 = vmatprep.subr.bf16.mxu0 0
        %4669 = vmatpush1.bf16.msra.mxu0 0
        %4670 = vmatprep.subr.bf16.mxu0 0
        %4671 = vmatpush1.bf16.msra.mxu0 0
        %4672 = vmatprep.subr.bf16.mxu0 0
        %4673 = vmatpush1.bf16.msra.mxu0 0
        %4674 = vmatprep.subr.bf16.mxu0 0
        %4675 = vmatpush1.bf16.msra.mxu0 0
        %4676 = vmatprep.subr.bf16.mxu0 0
        %4677 = vmatpush1.bf16.msra.mxu0 0
        %4678 = vmatprep.subr.bf16.mxu0 0
        %4679 = vmatpush1.bf16.msra.mxu0 0
        %4680 = vmatprep.mubr.bf16.mxu0 0
        %4681 = vmatmul.mubr.bf16.gmra.mrb[0].mxu0 %v4646
        %v4682 = vpop.f32.mrb[0].mxu0
        %v4683 = vadd.f32 0.0, %v4682
        %v4684 = vpop.f32.mrb[0].mxu0
        %v4685 = vpop.f32.mrb[0].mxu0
        %v4686 = vadd.f32 0.0, %v4685
        %v4687 = vpop.f32.mrb[0].mxu0
        %4688 = vdwg.mxu0
        %v4689 = vpack.c.bf16 %v4619, %v4618
        %v4694 = vunpack.c.l.b16 %v2022
        %v4695 = vunpack.c.l.b16 %v2023
        %v4696 = vunpack.c.l.b16 %v2024
        %v4697 = vunpack.c.l.b16 %v2025
        %v4698 = vpack.c.b16 %v4695, %v4694
        %v4699 = vpack.c.b16 %v4697, %v4696
        %v4703 = vsel %vm2098, %v4689, 0
        %4705 = vmatprep.subr.bf16.mxu0 0
        %4706 = vmatpush1.bf16.msra.mxu0 %v4698
        %4707 = vmatprep.subr.bf16.mxu0 0
        %4708 = vmatpush1.bf16.msra.mxu0 %v4699
        %4709 = vmatprep.subr.bf16.mxu0 0
        %4710 = vmatpush1.bf16.msra.mxu0 0
        %4711 = vmatprep.subr.bf16.mxu0 0
        %4712 = vmatpush1.bf16.msra.mxu0 0
        %4713 = vmatprep.subr.bf16.mxu0 0
        %4714 = vmatpush1.bf16.msra.mxu0 0
        %4715 = vmatprep.subr.bf16.mxu0 0
        %4716 = vmatpush1.bf16.msra.mxu0 0
        %4717 = vmatprep.subr.bf16.mxu0 0
        %4718 = vmatpush1.bf16.msra.mxu0 0
        %4719 = vmatprep.subr.bf16.mxu0 0
        %4720 = vmatpush1.bf16.msra.mxu0 0
        %4721 = vmatprep.subr.bf16.mxu0 0
        %4722 = vmatpush1.bf16.msra.mxu0 0
        %4723 = vmatprep.subr.bf16.mxu0 0
        %4724 = vmatpush1.bf16.msra.mxu0 0
        %4725 = vmatprep.subr.bf16.mxu0 0
        %4726 = vmatpush1.bf16.msra.mxu0 0
        %4727 = vmatprep.subr.bf16.mxu0 0
        %4728 = vmatpush1.bf16.msra.mxu0 0
        %4729 = vmatprep.subr.bf16.mxu0 0
        %4730 = vmatpush1.bf16.msra.mxu0 0
        %4731 = vmatprep.subr.bf16.mxu0 0
        %4732 = vmatpush1.bf16.msra.mxu0 0
        %4733 = vmatprep.subr.bf16.mxu0 0
        %4734 = vmatpush1.bf16.msra.mxu0 0
        %4735 = vmatprep.subr.bf16.mxu0 0
        %4736 = vmatpush1.bf16.msra.mxu0 0
        %4737 = vmatprep.mubr.bf16.mxu0 0
        %4738 = vmatmul.mubr.bf16.gmra.mrb[0].mxu0 %v4703
        %v4739 = vpop.f32.mrb[0].mxu0
        %v4740 = vadd.f32 0.0, %v4739
        %v4741 = vpop.f32.mrb[0].mxu0
        %v4742 = vpop.f32.mrb[0].mxu0
        %v4743 = vadd.f32 0.0, %v4742
        %v4744 = vpop.f32.mrb[0].mxu0
        %4745 = vdwg.mxu0
        %v4746 = vpack.c.bf16 %v4683, %v4683
        %v4747 = vpack.c.bf16 %v4740, %v4740
        %v4749 = vsel %vm2769, %v4746, 0
        %v4752 = vsel %vm2769, %v4747, 0
        %4754 = vmatprep.subr.bf16.mxu0 0
        %4755 = vmatpush1.bf16.xpose.msra.mxu0 %v4752
        %4756 = vmatprep.subr.bf16.mxu0 0
        %4757 = vmatpush1.bf16.xpose.msra.mxu0 0
        %4758 = vmatprep.subr.bf16.mxu0 0
        %4759 = vmatpush1.bf16.xpose.msra.mxu0 0
        %4760 = vmatprep.subr.bf16.mxu0 0
        %4761 = vmatpush1.bf16.xpose.msra.mxu0 0
        %4762 = vmatprep.subr.bf16.mxu0 0
        %4763 = vmatpush1.bf16.xpose.msra.mxu0 0
        %4764 = vmatprep.subr.bf16.mxu0 0
        %4765 = vmatpush1.bf16.xpose.msra.mxu0 0
        %4766 = vmatprep.subr.bf16.mxu0 0
        %4767 = vmatpush1.bf16.xpose.msra.mxu0 0
        %4768 = vmatprep.subr.bf16.mxu0 0
        %4769 = vmatpush1.bf16.xpose.msra.mxu0 0
        %4770 = vmatprep.subr.bf16.mxu0 0
        %4771 = vmatpush1.bf16.xpose.msra.mxu0 0
        %4772 = vmatprep.subr.bf16.mxu0 0
        %4773 = vmatpush1.bf16.xpose.msra.mxu0 0
        %4774 = vmatprep.subr.bf16.mxu0 0
        %4775 = vmatpush1.bf16.xpose.msra.mxu0 0
        %4776 = vmatprep.subr.bf16.mxu0 0
        %4777 = vmatpush1.bf16.xpose.msra.mxu0 0
        %4778 = vmatprep.subr.bf16.mxu0 0
        %4779 = vmatpush1.bf16.xpose.msra.mxu0 0
        %4780 = vmatprep.subr.bf16.mxu0 0
        %4781 = vmatpush1.bf16.xpose.msra.mxu0 0
        %4782 = vmatprep.subr.bf16.mxu0 0
        %4783 = vmatpush1.bf16.xpose.msra.mxu0 0
        %4784 = vmatprep.subr.bf16.mxu0 0
        %4785 = vmatpush1.bf16.xpose.msra.mxu0 0
        %4786 = vmatprep.mubr.bf16.mxu0 0
        %4787 = vmatmul.mubr.bf16.gmra.mrb[0].mxu0 %v4749
        %v4788 = vpop.f32.mrb[0].mxu0
        %v4789 = vadd.f32 0.0, %v4788
        %v4790 = vpop.f32.mrb[0].mxu0
        %v4791 = vpop.f32.mrb[0].mxu0
        %v4792 = vpop.f32.mrb[0].mxu0
        %4793 = vdwg.mxu0
        %vm4794 = vcmask 62464
        %v4795 = vsel %vm4794, %v4789, -inf
        %4796 = vmax.xlane.f32.xlu0 %v4795
        %v4797 = vpop.xlane.xlu0 %4796
        %v4798 = vsub.f32 %v4789, %v4797
        %v4799 = vmul.f32 %v4798, 1.442695
        %v4800 = vpow.pop %v4799
        %v4801 = vsel %vm4794, %v4800, 0.0
        %4802 = vadd.xlane.f32.xlu0 %v4801
        %v4803 = vpop.xlane.xlu0 %4802
        %v4804 = vrcp.pop %v4803
        %v4805 = vmul.f32 %v4800, %v4804
        %v4806 = vpack.c.bf16 %v4805, %v4805
        %4808 = vrot.lane.b32.xlu0 %v4747, 64
        %v4809 = vpop.permute.xlu0 %4808
        %v4811 = vsel %vm2315, %v4806, 0
        %v4814 = vsel %vm3462, %v4809, 0
        %4816 = vmatprep.subr.bf16.mxu0 0
        %4817 = vmatpush1.bf16.msra.mxu0 %v4814
        %4818 = vmatprep.subr.bf16.mxu0 0
        %4819 = vmatpush1.bf16.msra.mxu0 0
        %4820 = vmatprep.subr.bf16.mxu0 0
        %4821 = vmatpush1.bf16.msra.mxu0 0
        %4822 = vmatprep.subr.bf16.mxu0 0
        %4823 = vmatpush1.bf16.msra.mxu0 0
        %4824 = vmatprep.subr.bf16.mxu0 0
        %4825 = vmatpush1.bf16.msra.mxu0 0
        %4826 = vmatprep.subr.bf16.mxu0 0
        %4827 = vmatpush1.bf16.msra.mxu0 0
        %4828 = vmatprep.subr.bf16.mxu0 0
        %4829 = vmatpush1.bf16.msra.mxu0 0
        %4830 = vmatprep.subr.bf16.mxu0 0
        %4831 = vmatpush1.bf16.msra.mxu0 0
        %4832 = vmatprep.subr.bf16.mxu0 0
        %4833 = vmatpush1.bf16.msra.mxu0 0
        %4834 = vmatprep.subr.bf16.mxu0 0
        %4835 = vmatpush1.bf16.msra.mxu0 0
        %4836 = vmatprep.subr.bf16.mxu0 0
        %4837 = vmatpush1.bf16.msra.mxu0 0
        %4838 = vmatprep.subr.bf16.mxu0 0
        %4839 = vmatpush1.bf16.msra.mxu0 0
        %4840 = vmatprep.subr.bf16.mxu0 0
        %4841 = vmatpush1.bf16.msra.mxu0 0
        %4842 = vmatprep.subr.bf16.mxu0 0
        %4843 = vmatpush1.bf16.msra.mxu0 0
        %4844 = vmatprep.subr.bf16.mxu0 0
        %4845 = vmatpush1.bf16.msra.mxu0 0
        %4846 = vmatprep.subr.bf16.mxu0 0
        %4847 = vmatpush1.bf16.msra.mxu0 0
        %4848 = vmatprep.mubr.bf16.mxu0 0
        %4849 = vmatmul.mubr.bf16.gmra.mrb[0].mxu0 %v4811
        %v4850 = vpop.f32.mrb[0].mxu0
        %v4851 = vadd.f32 0.0, %v4850
        %v4852 = vpop.f32.mrb[0].mxu0
        %v4853 = vpop.f32.mrb[0].mxu0
        %v4854 = vpop.f32.mrb[0].mxu0
        %4855 = vdwg.mxu0
        %4857 = vrot.lane.b32.xlu0 %v4746, 112
        %v4858 = vpop.permute.xlu0 %4857
        %4859 = vrot.lane.b32.xlu0 %v4747, 112
        %v4860 = vpop.permute.xlu0 %4859
        %v4862 = vsel %vm2769, %v4858, 0
        %v4865 = vsel %vm2769, %v4860, 0
        %4867 = vmatprep.subr.bf16.mxu0 0
        %4868 = vmatpush1.bf16.xpose.msra.mxu0 %v4865
        %4869 = vmatprep.subr.bf16.mxu0 0
        %4870 = vmatpush1.bf16.xpose.msra.mxu0 0
        %4871 = vmatprep.subr.bf16.mxu0 0
        %4872 = vmatpush1.bf16.xpose.msra.mxu0 0
        %4873 = vmatprep.subr.bf16.mxu0 0
        %4874 = vmatpush1.bf16.xpose.msra.mxu0 0
        %4875 = vmatprep.subr.bf16.mxu0 0
        %4876 = vmatpush1.bf16.xpose.msra.mxu0 0
        %4877 = vmatprep.subr.bf16.mxu0 0
        %4878 = vmatpush1.bf16.xpose.msra.mxu0 0
        %4879 = vmatprep.subr.bf16.mxu0 0
        %4880 = vmatpush1.bf16.xpose.msra.mxu0 0
        %4881 = vmatprep.subr.bf16.mxu0 0
        %4882 = vmatpush1.bf16.xpose.msra.mxu0 0
        %4883 = vmatprep.subr.bf16.mxu0 0
        %4884 = vmatpush1.bf16.xpose.msra.mxu0 0
        %4885 = vmatprep.subr.bf16.mxu0 0
        %4886 = vmatpush1.bf16.xpose.msra.mxu0 0
        %4887 = vmatprep.subr.bf16.mxu0 0
        %4888 = vmatpush1.bf16.xpose.msra.mxu0 0
        %4889 = vmatprep.subr.bf16.mxu0 0
        %4890 = vmatpush1.bf16.xpose.msra.mxu0 0
        %4891 = vmatprep.subr.bf16.mxu0 0
        %4892 = vmatpush1.bf16.xpose.msra.mxu0 0
        %4893 = vmatprep.subr.bf16.mxu0 0
        %4894 = vmatpush1.bf16.xpose.msra.mxu0 0
        %4895 = vmatprep.subr.bf16.mxu0 0
        %4896 = vmatpush1.bf16.xpose.msra.mxu0 0
        %4897 = vmatprep.subr.bf16.mxu0 0
        %4898 = vmatpush1.bf16.xpose.msra.mxu0 0
        %4899 = vmatprep.mubr.bf16.mxu0 0
        %4900 = vmatmul.mubr.bf16.gmra.mrb[0].mxu0 %v4862
        %v4901 = vpop.f32.mrb[0].mxu0
        %v4902 = vadd.f32 0.0, %v4901
        %v4903 = vpop.f32.mrb[0].mxu0
        %v4904 = vpop.f32.mrb[0].mxu0
        %v4905 = vpop.f32.mrb[0].mxu0
        %4906 = vdwg.mxu0
        %v4907 = vsel %vm4794, %v4902, -inf
        %4908 = vmax.xlane.f32.xlu0 %v4907
        %v4909 = vpop.xlane.xlu0 %4908
        %v4910 = vsub.f32 %v4902, %v4909
        %v4911 = vmul.f32 %v4910, 1.442695
        %v4912 = vpow.pop %v4911
        %v4913 = vsel %vm4794, %v4912, 0.0
        %4914 = vadd.xlane.f32.xlu0 %v4913
        %v4915 = vpop.xlane.xlu0 %4914
        %v4916 = vrcp.pop %v4915
        %v4917 = vmul.f32 %v4912, %v4916
        %v4918 = vpack.c.bf16 %v4917, %v4917
        %4919 = vrot.lane.b32.xlu0 %v4747, 48
        %v4920 = vpop.permute.xlu0 %4919
        %v4922 = vsel %vm2315, %v4918, 0
        %v4925 = vsel %vm3462, %v4920, 0
        %4927 = vmatprep.subr.bf16.mxu0 0
        %4928 = vmatpush1.bf16.msra.mxu0 %v4925
        %4929 = vmatprep.subr.bf16.mxu0 0
        %4930 = vmatpush1.bf16.msra.mxu0 0
        %4931 = vmatprep.subr.bf16.mxu0 0
        %4932 = vmatpush1.bf16.msra.mxu0 0
        %4933 = vmatprep.subr.bf16.mxu0 0
        %4934 = vmatpush1.bf16.msra.mxu0 0
        %4935 = vmatprep.subr.bf16.mxu0 0
        %4936 = vmatpush1.bf16.msra.mxu0 0
        %4937 = vmatprep.subr.bf16.mxu0 0
        %4938 = vmatpush1.bf16.msra.mxu0 0
        %4939 = vmatprep.subr.bf16.mxu0 0
        %4940 = vmatpush1.bf16.msra.mxu0 0
        %4941 = vmatprep.subr.bf16.mxu0 0
        %4942 = vmatpush1.bf16.msra.mxu0 0
        %4943 = vmatprep.subr.bf16.mxu0 0
        %4944 = vmatpush1.bf16.msra.mxu0 0
        %4945 = vmatprep.subr.bf16.mxu0 0
        %4946 = vmatpush1.bf16.msra.mxu0 0
        %4947 = vmatprep.subr.bf16.mxu0 0
        %4948 = vmatpush1.bf16.msra.mxu0 0
        %4949 = vmatprep.subr.bf16.mxu0 0
        %4950 = vmatpush1.bf16.msra.mxu0 0
        %4951 = vmatprep.subr.bf16.mxu0 0
        %4952 = vmatpush1.bf16.msra.mxu0 0
        %4953 = vmatprep.subr.bf16.mxu0 0
        %4954 = vmatpush1.bf16.msra.mxu0 0
        %4955 = vmatprep.subr.bf16.mxu0 0
        %4956 = vmatpush1.bf16.msra.mxu0 0
        %4957 = vmatprep.subr.bf16.mxu0 0
        %4958 = vmatpush1.bf16.msra.mxu0 0
        %4959 = vmatprep.mubr.bf16.mxu0 0
        %4960 = vmatmul.mubr.bf16.gmra.mrb[0].mxu0 %v4922
        %v4961 = vpop.f32.mrb[0].mxu0
        %v4962 = vadd.f32 0.0, %v4961
        %v4963 = vpop.f32.mrb[0].mxu0
        %v4964 = vpop.f32.mrb[0].mxu0
        %v4965 = vpop.f32.mrb[0].mxu0
        %4966 = vdwg.mxu0
        %4967 = vrot.lane.b32.xlu0 %v4746, 96
        %v4968 = vpop.permute.xlu0 %4967
        %4969 = vrot.lane.b32.xlu0 %v4747, 96
        %v4970 = vpop.permute.xlu0 %4969
        %v4972 = vsel %vm2769, %v4968, 0
        %v4975 = vsel %vm2769, %v4970, 0
        %4977 = vmatprep.subr.bf16.mxu0 0
        %4978 = vmatpush1.bf16.xpose.msra.mxu0 %v4975
        %4979 = vmatprep.subr.bf16.mxu0 0
        %4980 = vmatpush1.bf16.xpose.msra.mxu0 0
        %4981 = vmatprep.subr.bf16.mxu0 0
        %4982 = vmatpush1.bf16.xpose.msra.mxu0 0
        %4983 = vmatprep.subr.bf16.mxu0 0
        %4984 = vmatpush1.bf16.xpose.msra.mxu0 0
        %4985 = vmatprep.subr.bf16.mxu0 0
        %4986 = vmatpush1.bf16.xpose.msra.mxu0 0
        %4987 = vmatprep.subr.bf16.mxu0 0
        %4988 = vmatpush1.bf16.xpose.msra.mxu0 0
        %4989 = vmatprep.subr.bf16.mxu0 0
        %4990 = vmatpush1.bf16.xpose.msra.mxu0 0
        %4991 = vmatprep.subr.bf16.mxu0 0
        %4992 = vmatpush1.bf16.xpose.msra.mxu0 0
        %4993 = vmatprep.subr.bf16.mxu0 0
        %4994 = vmatpush1.bf16.xpose.msra.mxu0 0
        %4995 = vmatprep.subr.bf16.mxu0 0
        %4996 = vmatpush1.bf16.xpose.msra.mxu0 0
        %4997 = vmatprep.subr.bf16.mxu0 0
        %4998 = vmatpush1.bf16.xpose.msra.mxu0 0
        %4999 = vmatprep.subr.bf16.mxu0 0
        %5000 = vmatpush1.bf16.xpose.msra.mxu0 0
        %5001 = vmatprep.subr.bf16.mxu0 0
        %5002 = vmatpush1.bf16.xpose.msra.mxu0 0
        %5003 = vmatprep.subr.bf16.mxu0 0
        %5004 = vmatpush1.bf16.xpose.msra.mxu0 0
        %5005 = vmatprep.subr.bf16.mxu0 0
        %5006 = vmatpush1.bf16.xpose.msra.mxu0 0
        %5007 = vmatprep.subr.bf16.mxu0 0
        %5008 = vmatpush1.bf16.xpose.msra.mxu0 0
        %5009 = vmatprep.mubr.bf16.mxu0 0
        %5010 = vmatmul.mubr.bf16.gmra.mrb[0].mxu0 %v4972
        %v5011 = vpop.f32.mrb[0].mxu0
        %v5012 = vadd.f32 0.0, %v5011
        %v5013 = vpop.f32.mrb[0].mxu0
        %v5014 = vpop.f32.mrb[0].mxu0
        %v5015 = vpop.f32.mrb[0].mxu0
        %5016 = vdwg.mxu0
        %v5017 = vsel %vm4794, %v5012, -inf
        %5018 = vmax.xlane.f32.xlu0 %v5017
        %v5019 = vpop.xlane.xlu0 %5018
        %v5020 = vsub.f32 %v5012, %v5019
        %v5021 = vmul.f32 %v5020, 1.442695
        %v5022 = vpow.pop %v5021
        %v5023 = vsel %vm4794, %v5022, 0.0
        %5024 = vadd.xlane.f32.xlu0 %v5023
        %v5025 = vpop.xlane.xlu0 %5024
        %v5026 = vrcp.pop %v5025
        %v5027 = vmul.f32 %v5022, %v5026
        %v5028 = vpack.c.bf16 %v5027, %v5027
        %5029 = vrot.lane.b32.xlu0 %v4747, 32
        %v5030 = vpop.permute.xlu0 %5029
        %v5032 = vsel %vm2315, %v5028, 0
        %v5035 = vsel %vm3462, %v5030, 0
        %5037 = vmatprep.subr.bf16.mxu0 0
        %5038 = vmatpush1.bf16.msra.mxu0 %v5035
        %5039 = vmatprep.subr.bf16.mxu0 0
        %5040 = vmatpush1.bf16.msra.mxu0 0
        %5041 = vmatprep.subr.bf16.mxu0 0
        %5042 = vmatpush1.bf16.msra.mxu0 0
        %5043 = vmatprep.subr.bf16.mxu0 0
        %5044 = vmatpush1.bf16.msra.mxu0 0
        %5045 = vmatprep.subr.bf16.mxu0 0
        %5046 = vmatpush1.bf16.msra.mxu0 0
        %5047 = vmatprep.subr.bf16.mxu0 0
        %5048 = vmatpush1.bf16.msra.mxu0 0
        %5049 = vmatprep.subr.bf16.mxu0 0
        %5050 = vmatpush1.bf16.msra.mxu0 0
        %5051 = vmatprep.subr.bf16.mxu0 0
        %5052 = vmatpush1.bf16.msra.mxu0 0
        %5053 = vmatprep.subr.bf16.mxu0 0
        %5054 = vmatpush1.bf16.msra.mxu0 0
        %5055 = vmatprep.subr.bf16.mxu0 0
        %5056 = vmatpush1.bf16.msra.mxu0 0
        %5057 = vmatprep.subr.bf16.mxu0 0
        %5058 = vmatpush1.bf16.msra.mxu0 0
        %5059 = vmatprep.subr.bf16.mxu0 0
        %5060 = vmatpush1.bf16.msra.mxu0 0
        %5061 = vmatprep.subr.bf16.mxu0 0
        %5062 = vmatpush1.bf16.msra.mxu0 0
        %5063 = vmatprep.subr.bf16.mxu0 0
        %5064 = vmatpush1.bf16.msra.mxu0 0
        %5065 = vmatprep.subr.bf16.mxu0 0
        %5066 = vmatpush1.bf16.msra.mxu0 0
        %5067 = vmatprep.subr.bf16.mxu0 0
        %5068 = vmatpush1.bf16.msra.mxu0 0
        %5069 = vmatprep.mubr.bf16.mxu0 0
        %5070 = vmatmul.mubr.bf16.gmra.mrb[0].mxu0 %v5032
        %v5071 = vpop.f32.mrb[0].mxu0
        %v5072 = vadd.f32 0.0, %v5071
        %v5073 = vpop.f32.mrb[0].mxu0
        %v5074 = vpop.f32.mrb[0].mxu0
        %v5075 = vpop.f32.mrb[0].mxu0
        %5076 = vdwg.mxu0
        %5077 = vrot.lane.b32.xlu0 %v4746, 80
        %v5078 = vpop.permute.xlu0 %5077
        %5079 = vrot.lane.b32.xlu0 %v4747, 80
        %v5080 = vpop.permute.xlu0 %5079
        %v5082 = vsel %vm2769, %v5078, 0
        %v5085 = vsel %vm2769, %v5080, 0
        %5087 = vmatprep.subr.bf16.mxu0 0
        %5088 = vmatpush1.bf16.xpose.msra.mxu0 %v5085
        %5089 = vmatprep.subr.bf16.mxu0 0
        %5090 = vmatpush1.bf16.xpose.msra.mxu0 0
        %5091 = vmatprep.subr.bf16.mxu0 0
        %5092 = vmatpush1.bf16.xpose.msra.mxu0 0
        %5093 = vmatprep.subr.bf16.mxu0 0
        %5094 = vmatpush1.bf16.xpose.msra.mxu0 0
        %5095 = vmatprep.subr.bf16.mxu0 0
        %5096 = vmatpush1.bf16.xpose.msra.mxu0 0
        %5097 = vmatprep.subr.bf16.mxu0 0
        %5098 = vmatpush1.bf16.xpose.msra.mxu0 0
        %5099 = vmatprep.subr.bf16.mxu0 0
        %5100 = vmatpush1.bf16.xpose.msra.mxu0 0
        %5101 = vmatprep.subr.bf16.mxu0 0
        %5102 = vmatpush1.bf16.xpose.msra.mxu0 0
        %5103 = vmatprep.subr.bf16.mxu0 0
        %5104 = vmatpush1.bf16.xpose.msra.mxu0 0
        %5105 = vmatprep.subr.bf16.mxu0 0
        %5106 = vmatpush1.bf16.xpose.msra.mxu0 0
        %5107 = vmatprep.subr.bf16.mxu0 0
        %5108 = vmatpush1.bf16.xpose.msra.mxu0 0
        %5109 = vmatprep.subr.bf16.mxu0 0
        %5110 = vmatpush1.bf16.xpose.msra.mxu0 0
        %5111 = vmatprep.subr.bf16.mxu0 0
        %5112 = vmatpush1.bf16.xpose.msra.mxu0 0
        %5113 = vmatprep.subr.bf16.mxu0 0
        %5114 = vmatpush1.bf16.xpose.msra.mxu0 0
        %5115 = vmatprep.subr.bf16.mxu0 0
        %5116 = vmatpush1.bf16.xpose.msra.mxu0 0
        %5117 = vmatprep.subr.bf16.mxu0 0
        %5118 = vmatpush1.bf16.xpose.msra.mxu0 0
        %5119 = vmatprep.mubr.bf16.mxu0 0
        %5120 = vmatmul.mubr.bf16.gmra.mrb[0].mxu0 %v5082
        %v5121 = vpop.f32.mrb[0].mxu0
        %v5122 = vadd.f32 0.0, %v5121
        %v5123 = vpop.f32.mrb[0].mxu0
        %v5124 = vpop.f32.mrb[0].mxu0
        %v5125 = vpop.f32.mrb[0].mxu0
        %5126 = vdwg.mxu0
        %v5127 = vsel %vm4794, %v5122, -inf
        %5128 = vmax.xlane.f32.xlu0 %v5127
        %v5129 = vpop.xlane.xlu0 %5128
        %v5130 = vsub.f32 %v5122, %v5129
        %v5131 = vmul.f32 %v5130, 1.442695
        %v5132 = vpow.pop %v5131
        %v5133 = vsel %vm4794, %v5132, 0.0
        %5134 = vadd.xlane.f32.xlu0 %v5133
        %v5135 = vpop.xlane.xlu0 %5134
        %v5136 = vrcp.pop %v5135
        %v5137 = vmul.f32 %v5132, %v5136
        %v5138 = vpack.c.bf16 %v5137, %v5137
        %5139 = vrot.lane.b32.xlu0 %v4747, 16
        %v5140 = vpop.permute.xlu0 %5139
        %v5142 = vsel %vm2315, %v5138, 0
        %v5145 = vsel %vm3462, %v5140, 0
        %5147 = vmatprep.subr.bf16.mxu0 0
        %5148 = vmatpush1.bf16.msra.mxu0 %v5145
        %5149 = vmatprep.subr.bf16.mxu0 0
        %5150 = vmatpush1.bf16.msra.mxu0 0
        %5151 = vmatprep.subr.bf16.mxu0 0
        %5152 = vmatpush1.bf16.msra.mxu0 0
        %5153 = vmatprep.subr.bf16.mxu0 0
        %5154 = vmatpush1.bf16.msra.mxu0 0
        %5155 = vmatprep.subr.bf16.mxu0 0
        %5156 = vmatpush1.bf16.msra.mxu0 0
        %5157 = vmatprep.subr.bf16.mxu0 0
        %5158 = vmatpush1.bf16.msra.mxu0 0
        %5159 = vmatprep.subr.bf16.mxu0 0
        %5160 = vmatpush1.bf16.msra.mxu0 0
        %5161 = vmatprep.subr.bf16.mxu0 0
        %5162 = vmatpush1.bf16.msra.mxu0 0
        %5163 = vmatprep.subr.bf16.mxu0 0
        %5164 = vmatpush1.bf16.msra.mxu0 0
        %5165 = vmatprep.subr.bf16.mxu0 0
        %5166 = vmatpush1.bf16.msra.mxu0 0
        %5167 = vmatprep.subr.bf16.mxu0 0
        %5168 = vmatpush1.bf16.msra.mxu0 0
        %5169 = vmatprep.subr.bf16.mxu0 0
        %5170 = vmatpush1.bf16.msra.mxu0 0
        %5171 = vmatprep.subr.bf16.mxu0 0
        %5172 = vmatpush1.bf16.msra.mxu0 0
        %5173 = vmatprep.subr.bf16.mxu0 0
        %5174 = vmatpush1.bf16.msra.mxu0 0
        %5175 = vmatprep.subr.bf16.mxu0 0
        %5176 = vmatpush1.bf16.msra.mxu0 0
        %5177 = vmatprep.subr.bf16.mxu0 0
        %5178 = vmatpush1.bf16.msra.mxu0 0
        %5179 = vmatprep.mubr.bf16.mxu0 0
        %5180 = vmatmul.mubr.bf16.gmra.mrb[0].mxu0 %v5142
        %v5181 = vpop.f32.mrb[0].mxu0
        %v5182 = vadd.f32 0.0, %v5181
        %v5183 = vpop.f32.mrb[0].mxu0
        %v5184 = vpop.f32.mrb[0].mxu0
        %v5185 = vpop.f32.mrb[0].mxu0
        %5186 = vdwg.mxu0
        %5188 = vrot.lane.b32.xlu0 %v4962, 16
        %v5189 = vpop.permute.xlu0 %5188
        %5192 = vrot.lane.b32.xlu0 %v5072, 32
        %v5193 = vpop.permute.xlu0 %5192
        %5196 = vrot.lane.b32.xlu0 %v5182, 48
        %v5197 = vpop.permute.xlu0 %5196
        %v5199 = vsel %vm2769, %v4851, %v5189
        %v5200 = vsel %vm2098, %v5199, %v5193
        %vm5201 = vcmask 392192
        %v5202 = vsel %vm5201, %v5200, %v5197
        %v5203 = vpack.c.bf16 %v4686, %v4683
        %v5204 = vpack.c.bf16 %v4743, %v4743
        %v5206 = vrot.slane %v5203, 3
        %v5208 = vsel %vm2769, %v5206, 0
        %v5211 = vsel %vm2769, %v5204, 0
        %5213 = vmatprep.subr.bf16.mxu0 0
        %5214 = vmatpush1.bf16.xpose.msra.mxu0 %v5211
        %5215 = vmatprep.subr.bf16.mxu0 0
        %5216 = vmatpush1.bf16.xpose.msra.mxu0 0
        %5217 = vmatprep.subr.bf16.mxu0 0
        %5218 = vmatpush1.bf16.xpose.msra.mxu0 0
        %5219 = vmatprep.subr.bf16.mxu0 0
        %5220 = vmatpush1.bf16.xpose.msra.mxu0 0
        %5221 = vmatprep.subr.bf16.mxu0 0
        %5222 = vmatpush1.bf16.xpose.msra.mxu0 0
        %5223 = vmatprep.subr.bf16.mxu0 0
        %5224 = vmatpush1.bf16.xpose.msra.mxu0 0
        %5225 = vmatprep.subr.bf16.mxu0 0
        %5226 = vmatpush1.bf16.xpose.msra.mxu0 0
        %5227 = vmatprep.subr.bf16.mxu0 0
        %5228 = vmatpush1.bf16.xpose.msra.mxu0 0
        %5229 = vmatprep.subr.bf16.mxu0 0
        %5230 = vmatpush1.bf16.xpose.msra.mxu0 0
        %5231 = vmatprep.subr.bf16.mxu0 0
        %5232 = vmatpush1.bf16.xpose.msra.mxu0 0
        %5233 = vmatprep.subr.bf16.mxu0 0
        %5234 = vmatpush1.bf16.xpose.msra.mxu0 0
        %5235 = vmatprep.subr.bf16.mxu0 0
        %5236 = vmatpush1.bf16.xpose.msra.mxu0 0
        %5237 = vmatprep.subr.bf16.mxu0 0
        %5238 = vmatpush1.bf16.xpose.msra.mxu0 0
        %5239 = vmatprep.subr.bf16.mxu0 0
        %5240 = vmatpush1.bf16.xpose.msra.mxu0 0
        %5241 = vmatprep.subr.bf16.mxu0 0
        %5242 = vmatpush1.bf16.xpose.msra.mxu0 0
        %5243 = vmatprep.subr.bf16.mxu0 0
        %5244 = vmatpush1.bf16.xpose.msra.mxu0 0
        %5245 = vmatprep.mubr.bf16.mxu0 0
        %5246 = vmatmul.mubr.bf16.gmra.mrb[0].mxu0 %v5208
        %v5247 = vpop.f32.mrb[0].mxu0
        %v5248 = vadd.f32 0.0, %v5247
        %v5249 = vpop.f32.mrb[0].mxu0
        %v5250 = vpop.f32.mrb[0].mxu0
        %v5251 = vpop.f32.mrb[0].mxu0
        %5252 = vdwg.mxu0
        %v5253 = vsel %vm4794, %v5248, -inf
        %5254 = vmax.xlane.f32.xlu0 %v5253
        %v5255 = vpop.xlane.xlu0 %5254
        %v5256 = vsub.f32 %v5248, %v5255
        %v5257 = vmul.f32 %v5256, 1.442695
        %v5258 = vpow.pop %v5257
        %v5259 = vsel %vm4794, %v5258, 0.0
        %5260 = vadd.xlane.f32.xlu0 %v5259
        %v5261 = vpop.xlane.xlu0 %5260
        %v5262 = vrcp.pop %v5261
        %v5263 = vmul.f32 %v5258, %v5262
        %v5264 = vpack.c.bf16 %v5263, %v5263
        %5266 = vrot.lane.b32.xlu0 %v5204, 64
        %v5267 = vpop.permute.xlu0 %5266
        %v5269 = vsel %vm2315, %v5264, 0
        %v5272 = vsel %vm3462, %v5267, 0
        %5274 = vmatprep.subr.bf16.mxu0 0
        %5275 = vmatpush1.bf16.msra.mxu0 %v5272
        %5276 = vmatprep.subr.bf16.mxu0 0
        %5277 = vmatpush1.bf16.msra.mxu0 0
        %5278 = vmatprep.subr.bf16.mxu0 0
        %5279 = vmatpush1.bf16.msra.mxu0 0
        %5280 = vmatprep.subr.bf16.mxu0 0
        %5281 = vmatpush1.bf16.msra.mxu0 0
        %5282 = vmatprep.subr.bf16.mxu0 0
        %5283 = vmatpush1.bf16.msra.mxu0 0
        %5284 = vmatprep.subr.bf16.mxu0 0
        %5285 = vmatpush1.bf16.msra.mxu0 0
        %5286 = vmatprep.subr.bf16.mxu0 0
        %5287 = vmatpush1.bf16.msra.mxu0 0
        %5288 = vmatprep.subr.bf16.mxu0 0
        %5289 = vmatpush1.bf16.msra.mxu0 0
        %5290 = vmatprep.subr.bf16.mxu0 0
        %5291 = vmatpush1.bf16.msra.mxu0 0
        %5292 = vmatprep.subr.bf16.mxu0 0
        %5293 = vmatpush1.bf16.msra.mxu0 0
        %5294 = vmatprep.subr.bf16.mxu0 0
        %5295 = vmatpush1.bf16.msra.mxu0 0
        %5296 = vmatprep.subr.bf16.mxu0 0
        %5297 = vmatpush1.bf16.msra.mxu0 0
        %5298 = vmatprep.subr.bf16.mxu0 0
        %5299 = vmatpush1.bf16.msra.mxu0 0
        %5300 = vmatprep.subr.bf16.mxu0 0
        %5301 = vmatpush1.bf16.msra.mxu0 0
        %5302 = vmatprep.subr.bf16.mxu0 0
        %5303 = vmatpush1.bf16.msra.mxu0 0
        %5304 = vmatprep.subr.bf16.mxu0 0
        %5305 = vmatpush1.bf16.msra.mxu0 0
        %5306 = vmatprep.mubr.bf16.mxu0 0
        %5307 = vmatmul.mubr.bf16.gmra.mrb[0].mxu0 %v5269
        %v5308 = vpop.f32.mrb[0].mxu0
        %v5309 = vadd.f32 0.0, %v5308
        %v5310 = vpop.f32.mrb[0].mxu0
        %v5311 = vpop.f32.mrb[0].mxu0
        %v5312 = vpop.f32.mrb[0].mxu0
        %5313 = vdwg.mxu0
        %5314 = vrot.lane.b32.xlu0 %v5206, 112
        %v5315 = vpop.permute.xlu0 %5314
        %5316 = vrot.lane.b32.xlu0 %v5204, 112
        %v5317 = vpop.permute.xlu0 %5316
        %v5319 = vsel %vm2769, %v5315, 0
        %v5322 = vsel %vm2769, %v5317, 0
        %5324 = vmatprep.subr.bf16.mxu0 0
        %5325 = vmatpush1.bf16.xpose.msra.mxu0 %v5322
        %5326 = vmatprep.subr.bf16.mxu0 0
        %5327 = vmatpush1.bf16.xpose.msra.mxu0 0
        %5328 = vmatprep.subr.bf16.mxu0 0
        %5329 = vmatpush1.bf16.xpose.msra.mxu0 0
        %5330 = vmatprep.subr.bf16.mxu0 0
        %5331 = vmatpush1.bf16.xpose.msra.mxu0 0
        %5332 = vmatprep.subr.bf16.mxu0 0
        %5333 = vmatpush1.bf16.xpose.msra.mxu0 0
        %5334 = vmatprep.subr.bf16.mxu0 0
        %5335 = vmatpush1.bf16.xpose.msra.mxu0 0
        %5336 = vmatprep.subr.bf16.mxu0 0
        %5337 = vmatpush1.bf16.xpose.msra.mxu0 0
        %5338 = vmatprep.subr.bf16.mxu0 0
        %5339 = vmatpush1.bf16.xpose.msra.mxu0 0
        %5340 = vmatprep.subr.bf16.mxu0 0
        %5341 = vmatpush1.bf16.xpose.msra.mxu0 0
        %5342 = vmatprep.subr.bf16.mxu0 0
        %5343 = vmatpush1.bf16.xpose.msra.mxu0 0
        %5344 = vmatprep.subr.bf16.mxu0 0
        %5345 = vmatpush1.bf16.xpose.msra.mxu0 0
        %5346 = vmatprep.subr.bf16.mxu0 0
        %5347 = vmatpush1.bf16.xpose.msra.mxu0 0
        %5348 = vmatprep.subr.bf16.mxu0 0
        %5349 = vmatpush1.bf16.xpose.msra.mxu0 0
        %5350 = vmatprep.subr.bf16.mxu0 0
        %5351 = vmatpush1.bf16.xpose.msra.mxu0 0
        %5352 = vmatprep.subr.bf16.mxu0 0
        %5353 = vmatpush1.bf16.xpose.msra.mxu0 0
        %5354 = vmatprep.subr.bf16.mxu0 0
        %5355 = vmatpush1.bf16.xpose.msra.mxu0 0
        %5356 = vmatprep.mubr.bf16.mxu0 0
        %5357 = vmatmul.mubr.bf16.gmra.mrb[0].mxu0 %v5319
        %v5358 = vpop.f32.mrb[0].mxu0
        %v5359 = vadd.f32 0.0, %v5358
        %v5360 = vpop.f32.mrb[0].mxu0
        %v5361 = vpop.f32.mrb[0].mxu0
        %v5362 = vpop.f32.mrb[0].mxu0
        %5363 = vdwg.mxu0
        %v5364 = vsel %vm4794, %v5359, -inf
        %5365 = vmax.xlane.f32.xlu0 %v5364
        %v5366 = vpop.xlane.xlu0 %5365
        %v5367 = vsub.f32 %v5359, %v5366
        %v5368 = vmul.f32 %v5367, 1.442695
        %v5369 = vpow.pop %v5368
        %v5370 = vsel %vm4794, %v5369, 0.0
        %5371 = vadd.xlane.f32.xlu0 %v5370
        %v5372 = vpop.xlane.xlu0 %5371
        %v5373 = vrcp.pop %v5372
        %v5374 = vmul.f32 %v5369, %v5373
        %v5375 = vpack.c.bf16 %v5374, %v5374
        %5376 = vrot.lane.b32.xlu0 %v5204, 48
        %v5377 = vpop.permute.xlu0 %5376
        %v5379 = vsel %vm2315, %v5375, 0
        %v5382 = vsel %vm3462, %v5377, 0
        %5384 = vmatprep.subr.bf16.mxu0 0
        %5385 = vmatpush1.bf16.msra.mxu0 %v5382
        %5386 = vmatprep.subr.bf16.mxu0 0
        %5387 = vmatpush1.bf16.msra.mxu0 0
        %5388 = vmatprep.subr.bf16.mxu0 0
        %5389 = vmatpush1.bf16.msra.mxu0 0
        %5390 = vmatprep.subr.bf16.mxu0 0
        %5391 = vmatpush1.bf16.msra.mxu0 0
        %5392 = vmatprep.subr.bf16.mxu0 0
        %5393 = vmatpush1.bf16.msra.mxu0 0
        %5394 = vmatprep.subr.bf16.mxu0 0
        %5395 = vmatpush1.bf16.msra.mxu0 0
        %5396 = vmatprep.subr.bf16.mxu0 0
        %5397 = vmatpush1.bf16.msra.mxu0 0
        %5398 = vmatprep.subr.bf16.mxu0 0
        %5399 = vmatpush1.bf16.msra.mxu0 0
        %5400 = vmatprep.subr.bf16.mxu0 0
        %5401 = vmatpush1.bf16.msra.mxu0 0
        %5402 = vmatprep.subr.bf16.mxu0 0
        %5403 = vmatpush1.bf16.msra.mxu0 0
        %5404 = vmatprep.subr.bf16.mxu0 0
        %5405 = vmatpush1.bf16.msra.mxu0 0
        %5406 = vmatprep.subr.bf16.mxu0 0
        %5407 = vmatpush1.bf16.msra.mxu0 0
        %5408 = vmatprep.subr.bf16.mxu0 0
        %5409 = vmatpush1.bf16.msra.mxu0 0
        %5410 = vmatprep.subr.bf16.mxu0 0
        %5411 = vmatpush1.bf16.msra.mxu0 0
        %5412 = vmatprep.subr.bf16.mxu0 0
        %5413 = vmatpush1.bf16.msra.mxu0 0
        %5414 = vmatprep.subr.bf16.mxu0 0
        %5415 = vmatpush1.bf16.msra.mxu0 0
        %5416 = vmatprep.mubr.bf16.mxu0 0
        %5417 = vmatmul.mubr.bf16.gmra.mrb[0].mxu0 %v5379
        %v5418 = vpop.f32.mrb[0].mxu0
        %v5419 = vadd.f32 0.0, %v5418
        %v5420 = vpop.f32.mrb[0].mxu0
        %v5421 = vpop.f32.mrb[0].mxu0
        %v5422 = vpop.f32.mrb[0].mxu0
        %5423 = vdwg.mxu0
        %5424 = vrot.lane.b32.xlu0 %v5206, 96
        %v5425 = vpop.permute.xlu0 %5424
        %5426 = vrot.lane.b32.xlu0 %v5204, 96
        %v5427 = vpop.permute.xlu0 %5426
        %v5429 = vsel %vm2769, %v5425, 0
        %v5432 = vsel %vm2769, %v5427, 0
        %5434 = vmatprep.subr.bf16.mxu0 0
        %5435 = vmatpush1.bf16.xpose.msra.mxu0 %v5432
        %5436 = vmatprep.subr.bf16.mxu0 0
        %5437 = vmatpush1.bf16.xpose.msra.mxu0 0
        %5438 = vmatprep.subr.bf16.mxu0 0
        %5439 = vmatpush1.bf16.xpose.msra.mxu0 0
        %5440 = vmatprep.subr.bf16.mxu0 0
        %5441 = vmatpush1.bf16.xpose.msra.mxu0 0
        %5442 = vmatprep.subr.bf16.mxu0 0
        %5443 = vmatpush1.bf16.xpose.msra.mxu0 0
        %5444 = vmatprep.subr.bf16.mxu0 0
        %5445 = vmatpush1.bf16.xpose.msra.mxu0 0
        %5446 = vmatprep.subr.bf16.mxu0 0
        %5447 = vmatpush1.bf16.xpose.msra.mxu0 0
        %5448 = vmatprep.subr.bf16.mxu0 0
        %5449 = vmatpush1.bf16.xpose.msra.mxu0 0
        %5450 = vmatprep.subr.bf16.mxu0 0
        %5451 = vmatpush1.bf16.xpose.msra.mxu0 0
        %5452 = vmatprep.subr.bf16.mxu0 0
        %5453 = vmatpush1.bf16.xpose.msra.mxu0 0
        %5454 = vmatprep.subr.bf16.mxu0 0
        %5455 = vmatpush1.bf16.xpose.msra.mxu0 0
        %5456 = vmatprep.subr.bf16.mxu0 0
        %5457 = vmatpush1.bf16.xpose.msra.mxu0 0
        %5458 = vmatprep.subr.bf16.mxu0 0
        %5459 = vmatpush1.bf16.xpose.msra.mxu0 0
        %5460 = vmatprep.subr.bf16.mxu0 0
        %5461 = vmatpush1.bf16.xpose.msra.mxu0 0
        %5462 = vmatprep.subr.bf16.mxu0 0
        %5463 = vmatpush1.bf16.xpose.msra.mxu0 0
        %5464 = vmatprep.subr.bf16.mxu0 0
        %5465 = vmatpush1.bf16.xpose.msra.mxu0 0
        %5466 = vmatprep.mubr.bf16.mxu0 0
        %5467 = vmatmul.mubr.bf16.gmra.mrb[0].mxu0 %v5429
        %v5468 = vpop.f32.mrb[0].mxu0
        %v5469 = vadd.f32 0.0, %v5468
        %v5470 = vpop.f32.mrb[0].mxu0
        %v5471 = vpop.f32.mrb[0].mxu0
        %v5472 = vpop.f32.mrb[0].mxu0
        %5473 = vdwg.mxu0
        %v5474 = vsel %vm4794, %v5469, -inf
        %5475 = vmax.xlane.f32.xlu0 %v5474
        %v5476 = vpop.xlane.xlu0 %5475
        %v5477 = vsub.f32 %v5469, %v5476
        %v5478 = vmul.f32 %v5477, 1.442695
        %v5479 = vpow.pop %v5478
        %v5480 = vsel %vm4794, %v5479, 0.0
        %5481 = vadd.xlane.f32.xlu0 %v5480
        %v5482 = vpop.xlane.xlu0 %5481
        %v5483 = vrcp.pop %v5482
        %v5484 = vmul.f32 %v5479, %v5483
        %v5485 = vpack.c.bf16 %v5484, %v5484
        %5486 = vrot.lane.b32.xlu0 %v5204, 32
        %v5487 = vpop.permute.xlu0 %5486
        %v5489 = vsel %vm2315, %v5485, 0
        %v5492 = vsel %vm3462, %v5487, 0
        %5494 = vmatprep.subr.bf16.mxu0 0
        %5495 = vmatpush1.bf16.msra.mxu0 %v5492
        %5496 = vmatprep.subr.bf16.mxu0 0
        %5497 = vmatpush1.bf16.msra.mxu0 0
        %5498 = vmatprep.subr.bf16.mxu0 0
        %5499 = vmatpush1.bf16.msra.mxu0 0
        %5500 = vmatprep.subr.bf16.mxu0 0
        %5501 = vmatpush1.bf16.msra.mxu0 0
        %5502 = vmatprep.subr.bf16.mxu0 0
        %5503 = vmatpush1.bf16.msra.mxu0 0
        %5504 = vmatprep.subr.bf16.mxu0 0
        %5505 = vmatpush1.bf16.msra.mxu0 0
        %5506 = vmatprep.subr.bf16.mxu0 0
        %5507 = vmatpush1.bf16.msra.mxu0 0
        %5508 = vmatprep.subr.bf16.mxu0 0
        %5509 = vmatpush1.bf16.msra.mxu0 0
        %5510 = vmatprep.subr.bf16.mxu0 0
        %5511 = vmatpush1.bf16.msra.mxu0 0
        %5512 = vmatprep.subr.bf16.mxu0 0
        %5513 = vmatpush1.bf16.msra.mxu0 0
        %5514 = vmatprep.subr.bf16.mxu0 0
        %5515 = vmatpush1.bf16.msra.mxu0 0
        %5516 = vmatprep.subr.bf16.mxu0 0
        %5517 = vmatpush1.bf16.msra.mxu0 0
        %5518 = vmatprep.subr.bf16.mxu0 0
        %5519 = vmatpush1.bf16.msra.mxu0 0
        %5520 = vmatprep.subr.bf16.mxu0 0
        %5521 = vmatpush1.bf16.msra.mxu0 0
        %5522 = vmatprep.subr.bf16.mxu0 0
        %5523 = vmatpush1.bf16.msra.mxu0 0
        %5524 = vmatprep.subr.bf16.mxu0 0
        %5525 = vmatpush1.bf16.msra.mxu0 0
        %5526 = vmatprep.mubr.bf16.mxu0 0
        %5527 = vmatmul.mubr.bf16.gmra.mrb[0].mxu0 %v5489
        %v5528 = vpop.f32.mrb[0].mxu0
        %v5529 = vadd.f32 0.0, %v5528
        %v5530 = vpop.f32.mrb[0].mxu0
        %v5531 = vpop.f32.mrb[0].mxu0
        %v5532 = vpop.f32.mrb[0].mxu0
        %5533 = vdwg.mxu0
        %5534 = vrot.lane.b32.xlu0 %v5206, 80
        %v5535 = vpop.permute.xlu0 %5534
        %5536 = vrot.lane.b32.xlu0 %v5204, 80
        %v5537 = vpop.permute.xlu0 %5536
        %v5539 = vsel %vm2769, %v5535, 0
        %v5542 = vsel %vm2769, %v5537, 0
        %5544 = vmatprep.subr.bf16.mxu0 0
        %5545 = vmatpush1.bf16.xpose.msra.mxu0 %v5542
        %5546 = vmatprep.subr.bf16.mxu0 0
        %5547 = vmatpush1.bf16.xpose.msra.mxu0 0
        %5548 = vmatprep.subr.bf16.mxu0 0
        %5549 = vmatpush1.bf16.xpose.msra.mxu0 0
        %5550 = vmatprep.subr.bf16.mxu0 0
        %5551 = vmatpush1.bf16.xpose.msra.mxu0 0
        %5552 = vmatprep.subr.bf16.mxu0 0
        %5553 = vmatpush1.bf16.xpose.msra.mxu0 0
        %5554 = vmatprep.subr.bf16.mxu0 0
        %5555 = vmatpush1.bf16.xpose.msra.mxu0 0
        %5556 = vmatprep.subr.bf16.mxu0 0
        %5557 = vmatpush1.bf16.xpose.msra.mxu0 0
        %5558 = vmatprep.subr.bf16.mxu0 0
        %5559 = vmatpush1.bf16.xpose.msra.mxu0 0
        %5560 = vmatprep.subr.bf16.mxu0 0
        %5561 = vmatpush1.bf16.xpose.msra.mxu0 0
        %5562 = vmatprep.subr.bf16.mxu0 0
        %5563 = vmatpush1.bf16.xpose.msra.mxu0 0
        %5564 = vmatprep.subr.bf16.mxu0 0
        %5565 = vmatpush1.bf16.xpose.msra.mxu0 0
        %5566 = vmatprep.subr.bf16.mxu0 0
        %5567 = vmatpush1.bf16.xpose.msra.mxu0 0
        %5568 = vmatprep.subr.bf16.mxu0 0
        %5569 = vmatpush1.bf16.xpose.msra.mxu0 0
        %5570 = vmatprep.subr.bf16.mxu0 0
        %5571 = vmatpush1.bf16.xpose.msra.mxu0 0
        %5572 = vmatprep.subr.bf16.mxu0 0
        %5573 = vmatpush1.bf16.xpose.msra.mxu0 0
        %5574 = vmatprep.subr.bf16.mxu0 0
        %5575 = vmatpush1.bf16.xpose.msra.mxu0 0
        %5576 = vmatprep.mubr.bf16.mxu0 0
        %5577 = vmatmul.mubr.bf16.gmra.mrb[0].mxu0 %v5539
        %v5578 = vpop.f32.mrb[0].mxu0
        %v5579 = vadd.f32 0.0, %v5578
        %v5580 = vpop.f32.mrb[0].mxu0
        %v5581 = vpop.f32.mrb[0].mxu0
        %v5582 = vpop.f32.mrb[0].mxu0
        %5583 = vdwg.mxu0
        %v5584 = vsel %vm4794, %v5579, -inf
        %5585 = vmax.xlane.f32.xlu0 %v5584
        %v5586 = vpop.xlane.xlu0 %5585
        %v5587 = vsub.f32 %v5579, %v5586
        %v5588 = vmul.f32 %v5587, 1.442695
        %v5589 = vpow.pop %v5588
        %v5590 = vsel %vm4794, %v5589, 0.0
        %5591 = vadd.xlane.f32.xlu0 %v5590
        %v5592 = vpop.xlane.xlu0 %5591
        %v5593 = vrcp.pop %v5592
        %v5594 = vmul.f32 %v5589, %v5593
        %v5595 = vpack.c.bf16 %v5594, %v5594
        %5596 = vrot.lane.b32.xlu0 %v5204, 16
        %v5597 = vpop.permute.xlu0 %5596
        %v5599 = vsel %vm2315, %v5595, 0
        %v5602 = vsel %vm3462, %v5597, 0
        %5604 = vmatprep.subr.bf16.mxu0 0
        %5605 = vmatpush1.bf16.msra.mxu0 %v5602
        %5606 = vmatprep.subr.bf16.mxu0 0
        %5607 = vmatpush1.bf16.msra.mxu0 0
        %5608 = vmatprep.subr.bf16.mxu0 0
        %5609 = vmatpush1.bf16.msra.mxu0 0
        %5610 = vmatprep.subr.bf16.mxu0 0
        %5611 = vmatpush1.bf16.msra.mxu0 0
        %5612 = vmatprep.subr.bf16.mxu0 0
        %5613 = vmatpush1.bf16.msra.mxu0 0
        %5614 = vmatprep.subr.bf16.mxu0 0
        %5615 = vmatpush1.bf16.msra.mxu0 0
        %5616 = vmatprep.subr.bf16.mxu0 0
        %5617 = vmatpush1.bf16.msra.mxu0 0
        %5618 = vmatprep.subr.bf16.mxu0 0
        %5619 = vmatpush1.bf16.msra.mxu0 0
        %5620 = vmatprep.subr.bf16.mxu0 0
        %5621 = vmatpush1.bf16.msra.mxu0 0
        %5622 = vmatprep.subr.bf16.mxu0 0
        %5623 = vmatpush1.bf16.msra.mxu0 0
        %5624 = vmatprep.subr.bf16.mxu0 0
        %5625 = vmatpush1.bf16.msra.mxu0 0
        %5626 = vmatprep.subr.bf16.mxu0 0
        %5627 = vmatpush1.bf16.msra.mxu0 0
        %5628 = vmatprep.subr.bf16.mxu0 0
        %5629 = vmatpush1.bf16.msra.mxu0 0
        %5630 = vmatprep.subr.bf16.mxu0 0
        %5631 = vmatpush1.bf16.msra.mxu0 0
        %5632 = vmatprep.subr.bf16.mxu0 0
        %5633 = vmatpush1.bf16.msra.mxu0 0
        %5634 = vmatprep.subr.bf16.mxu0 0
        %5635 = vmatpush1.bf16.msra.mxu0 0
        %5636 = vmatprep.mubr.bf16.mxu0 0
        %5637 = vmatmul.mubr.bf16.gmra.mrb[0].mxu0 %v5599
        %v5638 = vpop.f32.mrb[0].mxu0
        %v5639 = vadd.f32 0.0, %v5638
        %v5640 = vpop.f32.mrb[0].mxu0
        %v5641 = vpop.f32.mrb[0].mxu0
        %v5642 = vpop.f32.mrb[0].mxu0
        %5643 = vdwg.mxu0
        %5645 = vrot.lane.b32.xlu0 %v5419, 16
        %v5646 = vpop.permute.xlu0 %5645
        %5649 = vrot.lane.b32.xlu0 %v5529, 32
        %v5650 = vpop.permute.xlu0 %5649
        %5653 = vrot.lane.b32.xlu0 %v5639, 48
        %v5654 = vpop.permute.xlu0 %5653
        %v5656 = vsel %vm2769, %v5309, %v5646
        %v5657 = vsel %vm2098, %v5656, %v5650
        %v5658 = vsel %vm5201, %v5657, %v5654
        %v5660 = vrot.slane %v5658, 2
        %vm5662 = vcmask 1045504
        %v5663 = vsel %vm5662, %v5202, %v5660
        %v5665 = vlaneseq
        %v5666 = vshrl.u32 %v5665, 7
        %v5667 = vsub.s32 0, %v5666
        %v5668 = vrot.slane %v2034, %v5667
        %v5670 = vadd.f32 %v2096, %v5668
        %v5671 = vadd.f32 %v2097, %v5668
        %v5672 = vpack.c.bf16 %v5660, %v5663
        %v5681 = vunpack.c.l.b16 %v2026
        %v5682 = vunpack.c.l.b16 %v2027
        %v5683 = vunpack.c.l.b16 %v2028
        %v5684 = vunpack.c.l.b16 %v2029
        %v5685 = vunpack.c.l.b16 %v2030
        %v5686 = vunpack.c.l.b16 %v2031
        %v5687 = vunpack.c.l.b16 %v2032
        %v5688 = vunpack.c.l.b16 %v2033
        %v5689 = vpack.c.b16 %v5682, %v5681
        %v5690 = vpack.c.b16 %v5684, %v5683
        %v5691 = vpack.c.b16 %v5686, %v5685
        %v5692 = vpack.c.b16 %v5688, %v5687
        %v5698 = vsel %vm2142, %v5672, 0
        %5700 = vmatprep.subr.bf16.mxu0 0
        %5701 = vmatpush1.bf16.msra.mxu0 %v5689
        %5702 = vmatprep.subr.bf16.mxu0 0
        %5703 = vmatpush1.bf16.msra.mxu0 %v5690
        %5704 = vmatprep.subr.bf16.mxu0 0
        %5705 = vmatpush1.bf16.msra.mxu0 %v5691
        %5706 = vmatprep.subr.bf16.mxu0 0
        %5707 = vmatpush1.bf16.msra.mxu0 %v5692
        %5708 = vmatprep.subr.bf16.mxu0 0
        %5709 = vmatpush1.bf16.msra.mxu0 0
        %5710 = vmatprep.subr.bf16.mxu0 0
        %5711 = vmatpush1.bf16.msra.mxu0 0
        %5712 = vmatprep.subr.bf16.mxu0 0
        %5713 = vmatpush1.bf16.msra.mxu0 0
        %5714 = vmatprep.subr.bf16.mxu0 0
        %5715 = vmatpush1.bf16.msra.mxu0 0
        %5716 = vmatprep.subr.bf16.mxu0 0
        %5717 = vmatpush1.bf16.msra.mxu0 0
        %5718 = vmatprep.subr.bf16.mxu0 0
        %5719 = vmatpush1.bf16.msra.mxu0 0
        %5720 = vmatprep.subr.bf16.mxu0 0
        %5721 = vmatpush1.bf16.msra.mxu0 0
        %5722 = vmatprep.subr.bf16.mxu0 0
        %5723 = vmatpush1.bf16.msra.mxu0 0
        %5724 = vmatprep.subr.bf16.mxu0 0
        %5725 = vmatpush1.bf16.msra.mxu0 0
        %5726 = vmatprep.subr.bf16.mxu0 0
        %5727 = vmatpush1.bf16.msra.mxu0 0
        %5728 = vmatprep.subr.bf16.mxu0 0
        %5729 = vmatpush1.bf16.msra.mxu0 0
        %5730 = vmatprep.subr.bf16.mxu0 0
        %5731 = vmatpush1.bf16.msra.mxu0 0
        %5732 = vmatprep.mubr.bf16.mxu0 0
        %5733 = vmatmul.mubr.bf16.gmra.mrb[0].mxu0 %v5698
        %v5734 = vpop.f32.mrb[0].mxu0
        %v5735 = vadd.f32 0.0, %v5734
        %v5736 = vpop.f32.mrb[0].mxu0
        %v5737 = vpop.f32.mrb[0].mxu0
        %v5738 = vadd.f32 0.0, %v5737
        %v5739 = vpop.f32.mrb[0].mxu0
        %5740 = vdwg.mxu0
        %v5741 = vadd.f32 %v5670, %v5735
        %v5742 = vadd.f32 %v5671, %v5738
        %v5743 = vsel %vm2142, %v5741, 0.0
        %5744 = vadd.xlane.f32.xlu0 %v5743
        %v5745 = vpop.xlane.xlu0 %5744
        %v5746 = vsel %vm2146, %v5742, 0.0
        %5747 = vadd.xlane.f32.xlu0 %v5746
        %v5748 = vpop.xlane.xlu0 %5747
        %v5749 = vmul.f32 %v5745, %v2150
        %v5750 = vmul.f32 %v5748, %v2150
        %v5751 = vsub.f32 %v5741, %v5749
        %v5752 = vsub.f32 %v5742, %v5750
        %v5753 = vmul.f32 %v5751, %v5751
        %v5754 = vmul.f32 %v5752, %v5752
        %v5755 = vsel %vm2142, %v5753, 0.0
        %5756 = vadd.xlane.f32.xlu0 %v5755
        %v5757 = vpop.xlane.xlu0 %5756
        %v5758 = vsel %vm2146, %v5754, 0.0
        %5759 = vadd.xlane.f32.xlu0 %v5758
        %v5760 = vpop.xlane.xlu0 %5759
        %v5761 = vmul.f32 %v5757, %v2150
        %v5762 = vmul.f32 %v5760, %v2150
        %v5763 = vadd.f32 %v5761, 1e-05
        %v5764 = vadd.f32 %v5762, 1e-05
        %v5765 = vrsqrt.pop %v5763
        %v5766 = vrsqrt.pop %v5764
        %v5767 = vmul.f32 %v5751, %v5765
        %v5768 = vmul.f32 %v5752, %v5766
        %v5770 = vlaneseq
        %v5771 = vshrl.u32 %v5770, 7
        %v5772 = vsub.s32 0, %v5771
        %v5773 = vrot.slane %v2010, %v5772
        %v5775 = vmul.f32 %v5767, %v5773
        %v5776 = vmul.f32 %v5768, %v5773
        %v5778 = vlaneseq
        %v5779 = vshrl.u32 %v5778, 7
        %v5780 = vsub.s32 0, %v5779
        %v5781 = vrot.slane %v2011, %v5780
        %v5783 = vadd.f32 %v5775, %v5781
        %v5784 = vadd.f32 %v5776, %v5781
        %v5785 = vpack.c.bf16 %v5784, %v5783
        %v5794 = vunpack.c.l.b16 %v2035
        %v5795 = vunpack.c.h.b16 %v2035
        %v5796 = vunpack.c.l.b16 %v2036
        %v5797 = vunpack.c.h.b16 %v2036
        %v5798 = vunpack.c.l.b16 %v2037
        %v5799 = vunpack.c.h.b16 %v2037
        %v5800 = vunpack.c.l.b16 %v2038
        %v5801 = vunpack.c.h.b16 %v2038
        %v5802 = vunpack.c.l.b16 %v2039
        %v5803 = vunpack.c.h.b16 %v2039
        %v5804 = vunpack.c.l.b16 %v2040
        %v5805 = vunpack.c.h.b16 %v2040
        %v5806 = vunpack.c.l.b16 %v2041
        %v5807 = vunpack.c.h.b16 %v2041
        %v5808 = vunpack.c.l.b16 %v2042
        %v5809 = vunpack.c.h.b16 %v2042
        %v5810 = vpack.c.b16 %v5796, %v5794
        %v5811 = vpack.c.b16 %v5797, %v5795
        %v5812 = vpack.c.b16 %v5800, %v5798
        %v5813 = vpack.c.b16 %v5801, %v5799
        %v5814 = vpack.c.b16 %v5804, %v5802
        %v5815 = vpack.c.b16 %v5805, %v5803
        %v5816 = vpack.c.b16 %v5808, %v5806
        %v5817 = vpack.c.b16 %v5809, %v5807
        %v5827 = vsel %vm2142, %v5785, 0
        %5829 = vmatprep.subr.bf16.mxu0 %v5811
        %5830 = vmatpush1.bf16.msra.mxu0 %v5810
        %5831 = vmatprep.subr.bf16.mxu0 %v5813
        %5832 = vmatpush1.bf16.msra.mxu0 %v5812
        %5833 = vmatprep.subr.bf16.mxu0 %v5815
        %5834 = vmatpush1.bf16.msra.mxu0 %v5814
        %5835 = vmatprep.subr.bf16.mxu0 %v5817
        %5836 = vmatpush1.bf16.msra.mxu0 %v5816
        %5837 = vmatprep.subr.bf16.mxu0 0
        %5838 = vmatpush1.bf16.msra.mxu0 0
        %5839 = vmatprep.subr.bf16.mxu0 0
        %5840 = vmatpush1.bf16.msra.mxu0 0
        %5841 = vmatprep.subr.bf16.mxu0 0
        %5842 = vmatpush1.bf16.msra.mxu0 0
        %5843 = vmatprep.subr.bf16.mxu0 0
        %5844 = vmatpush1.bf16.msra.mxu0 0
        %5845 = vmatprep.subr.bf16.mxu0 0
        %5846 = vmatpush1.bf16.msra.mxu0 0
        %5847 = vmatprep.subr.bf16.mxu0 0
        %5848 = vmatpush1.bf16.msra.mxu0 0
        %5849 = vmatprep.subr.bf16.mxu0 0
        %5850 = vmatpush1.bf16.msra.mxu0 0
        %5851 = vmatprep.subr.bf16.mxu0 0
        %5852 = vmatpush1.bf16.msra.mxu0 0
        %5853 = vmatprep.subr.bf16.mxu0 0
        %5854 = vmatpush1.bf16.msra.mxu0 0
        %5855 = vmatprep.subr.bf16.mxu0 0
        %5856 = vmatpush1.bf16.msra.mxu0 0
        %5857 = vmatprep.subr.bf16.mxu0 0
        %5858 = vmatpush1.bf16.msra.mxu0 0
        %5859 = vmatprep.subr.bf16.mxu0 0
        %5860 = vmatpush1.bf16.msra.mxu0 0
        %5861 = vmatprep.mubr.bf16.mxu0 0
        %5862 = vmatmul.mubr.bf16.gmra.mrb[0].mxu0 %v5827
        %v5863 = vpop.f32.mrb[0].mxu0
        %v5864 = vadd.f32 0.0, %v5863
        %v5865 = vpop.f32.mrb[0].mxu0
        %v5866 = vadd.f32 0.0, %v5865
        %v5867 = vpop.f32.mrb[0].mxu0
        %v5868 = vadd.f32 0.0, %v5867
        %v5869 = vpop.f32.mrb[0].mxu0
        %v5870 = vadd.f32 0.0, %v5869
        %5871 = vdwg.mxu0
        %v5872 = vpack.c.bf16 %v5864, %v5864
        %5874 = vrot.lane.b32.xlu0 %v5872, 64
        %v5875 = vpop.permute.xlu0 %5874
        %v5877 = vsel %vm2769, %v5872, 0
        %v5880 = vsel %vm2769, %v5875, 0
        %5882 = vmatprep.subr.bf16.mxu0 0
        %5883 = vmatpush1.bf16.xpose.msra.mxu0 %v5880
        %5884 = vmatprep.subr.bf16.mxu0 0
        %5885 = vmatpush1.bf16.xpose.msra.mxu0 0
        %5886 = vmatprep.subr.bf16.mxu0 0
        %5887 = vmatpush1.bf16.xpose.msra.mxu0 0
        %5888 = vmatprep.subr.bf16.mxu0 0
        %5889 = vmatpush1.bf16.xpose.msra.mxu0 0
        %5890 = vmatprep.subr.bf16.mxu0 0
        %5891 = vmatpush1.bf16.xpose.msra.mxu0 0
        %5892 = vmatprep.subr.bf16.mxu0 0
        %5893 = vmatpush1.bf16.xpose.msra.mxu0 0
        %5894 = vmatprep.subr.bf16.mxu0 0
        %5895 = vmatpush1.bf16.xpose.msra.mxu0 0
        %5896 = vmatprep.subr.bf16.mxu0 0
        %5897 = vmatpush1.bf16.xpose.msra.mxu0 0
        %5898 = vmatprep.subr.bf16.mxu0 0
        %5899 = vmatpush1.bf16.xpose.msra.mxu0 0
        %5900 = vmatprep.subr.bf16.mxu0 0
        %5901 = vmatpush1.bf16.xpose.msra.mxu0 0
        %5902 = vmatprep.subr.bf16.mxu0 0
        %5903 = vmatpush1.bf16.xpose.msra.mxu0 0
        %5904 = vmatprep.subr.bf16.mxu0 0
        %5905 = vmatpush1.bf16.xpose.msra.mxu0 0
        %5906 = vmatprep.subr.bf16.mxu0 0
        %5907 = vmatpush1.bf16.xpose.msra.mxu0 0
        %5908 = vmatprep.subr.bf16.mxu0 0
        %5909 = vmatpush1.bf16.xpose.msra.mxu0 0
        %5910 = vmatprep.subr.bf16.mxu0 0
        %5911 = vmatpush1.bf16.xpose.msra.mxu0 0
        %5912 = vmatprep.subr.bf16.mxu0 0
        %5913 = vmatpush1.bf16.xpose.msra.mxu0 0
        %5914 = vmatprep.mubr.bf16.mxu0 0
        %5915 = vmatmul.mubr.bf16.gmra.mrb[0].mxu0 %v5877
        %v5916 = vpop.f32.mrb[0].mxu0
        %v5917 = vadd.f32 0.0, %v5916
        %v5918 = vpop.f32.mrb[0].mxu0
        %v5919 = vpop.f32.mrb[0].mxu0
        %v5920 = vpop.f32.mrb[0].mxu0
        %5921 = vdwg.mxu0
        %vm5922 = vcmask 46080
        %v5923 = vsel %vm5922, %v5917, -inf
        %5924 = vmax.xlane.f32.xlu0 %v5923
        %v5925 = vpop.xlane.xlu0 %5924
        %v5926 = vsub.f32 %v5917, %v5925
        %v5927 = vmul.f32 %v5926, 1.442695
        %v5928 = vpow.pop %v5927
        %v5929 = vsel %vm5922, %v5928, 0.0
        %5930 = vadd.xlane.f32.xlu0 %v5929
        %v5931 = vpop.xlane.xlu0 %5930
        %v5932 = vrcp.pop %v5931
        %v5933 = vmul.f32 %v5928, %v5932
        %v5934 = vpack.c.bf16 %v5933, %v5933
        %v5935 = vpack.c.bf16 %v5866, %v5866
        %v5937 = vsel %vm2362, %v5934, 0
        %v5940 = vsel %vm2381, %v5935, 0
        %5942 = vmatprep.subr.bf16.mxu0 0
        %5943 = vmatpush1.bf16.msra.mxu0 %v5940
        %5944 = vmatprep.subr.bf16.mxu0 0
        %5945 = vmatpush1.bf16.msra.mxu0 0
        %5946 = vmatprep.subr.bf16.mxu0 0
        %5947 = vmatpush1.bf16.msra.mxu0 0
        %5948 = vmatprep.subr.bf16.mxu0 0
        %5949 = vmatpush1.bf16.msra.mxu0 0
        %5950 = vmatprep.subr.bf16.mxu0 0
        %5951 = vmatpush1.bf16.msra.mxu0 0
        %5952 = vmatprep.subr.bf16.mxu0 0
        %5953 = vmatpush1.bf16.msra.mxu0 0
        %5954 = vmatprep.subr.bf16.mxu0 0
        %5955 = vmatpush1.bf16.msra.mxu0 0
        %5956 = vmatprep.subr.bf16.mxu0 0
        %5957 = vmatpush1.bf16.msra.mxu0 0
        %5958 = vmatprep.subr.bf16.mxu0 0
        %5959 = vmatpush1.bf16.msra.mxu0 0
        %5960 = vmatprep.subr.bf16.mxu0 0
        %5961 = vmatpush1.bf16.msra.mxu0 0
        %5962 = vmatprep.subr.bf16.mxu0 0
        %5963 = vmatpush1.bf16.msra.mxu0 0
        %5964 = vmatprep.subr.bf16.mxu0 0
        %5965 = vmatpush1.bf16.msra.mxu0 0
        %5966 = vmatprep.subr.bf16.mxu0 0
        %5967 = vmatpush1.bf16.msra.mxu0 0
        %5968 = vmatprep.subr.bf16.mxu0 0
        %5969 = vmatpush1.bf16.msra.mxu0 0
        %5970 = vmatprep.subr.bf16.mxu0 0
        %5971 = vmatpush1.bf16.msra.mxu0 0
        %5972 = vmatprep.subr.bf16.mxu0 0
        %5973 = vmatpush1.bf16.msra.mxu0 0
        %5974 = vmatprep.mubr.bf16.mxu0 0
        %5975 = vmatmul.mubr.bf16.gmra.mrb[0].mxu0 %v5937
        %v5976 = vpop.f32.mrb[0].mxu0
        %v5977 = vadd.f32 0.0, %v5976
        %v5978 = vpop.f32.mrb[0].mxu0
        %v5979 = vpop.f32.mrb[0].mxu0
        %v5980 = vpop.f32.mrb[0].mxu0
        %5981 = vdwg.mxu0
        %5982 = vrot.lane.b32.xlu0 %v5872, 112
        %v5983 = vpop.permute.xlu0 %5982
        %5984 = vrot.lane.b32.xlu0 %v5872, 48
        %v5985 = vpop.permute.xlu0 %5984
        %v5987 = vsel %vm2769, %v5983, 0
        %v5990 = vsel %vm2769, %v5985, 0
        %5992 = vmatprep.subr.bf16.mxu0 0
        %5993 = vmatpush1.bf16.xpose.msra.mxu0 %v5990
        %5994 = vmatprep.subr.bf16.mxu0 0
        %5995 = vmatpush1.bf16.xpose.msra.mxu0 0
        %5996 = vmatprep.subr.bf16.mxu0 0
        %5997 = vmatpush1.bf16.xpose.msra.mxu0 0
        %5998 = vmatprep.subr.bf16.mxu0 0
        %5999 = vmatpush1.bf16.xpose.msra.mxu0 0
        %6000 = vmatprep.subr.bf16.mxu0 0
        %6001 = vmatpush1.bf16.xpose.msra.mxu0 0
        %6002 = vmatprep.subr.bf16.mxu0 0
        %6003 = vmatpush1.bf16.xpose.msra.mxu0 0
        %6004 = vmatprep.subr.bf16.mxu0 0
        %6005 = vmatpush1.bf16.xpose.msra.mxu0 0
        %6006 = vmatprep.subr.bf16.mxu0 0
        %6007 = vmatpush1.bf16.xpose.msra.mxu0 0
        %6008 = vmatprep.subr.bf16.mxu0 0
        %6009 = vmatpush1.bf16.xpose.msra.mxu0 0
        %6010 = vmatprep.subr.bf16.mxu0 0
        %6011 = vmatpush1.bf16.xpose.msra.mxu0 0
        %6012 = vmatprep.subr.bf16.mxu0 0
        %6013 = vmatpush1.bf16.xpose.msra.mxu0 0
        %6014 = vmatprep.subr.bf16.mxu0 0
        %6015 = vmatpush1.bf16.xpose.msra.mxu0 0
        %6016 = vmatprep.subr.bf16.mxu0 0
        %6017 = vmatpush1.bf16.xpose.msra.mxu0 0
        %6018 = vmatprep.subr.bf16.mxu0 0
        %6019 = vmatpush1.bf16.xpose.msra.mxu0 0
        %6020 = vmatprep.subr.bf16.mxu0 0
        %6021 = vmatpush1.bf16.xpose.msra.mxu0 0
        %6022 = vmatprep.subr.bf16.mxu0 0
        %6023 = vmatpush1.bf16.xpose.msra.mxu0 0
        %6024 = vmatprep.mubr.bf16.mxu0 0
        %6025 = vmatmul.mubr.bf16.gmra.mrb[0].mxu0 %v5987
        %v6026 = vpop.f32.mrb[0].mxu0
        %v6027 = vadd.f32 0.0, %v6026
        %v6028 = vpop.f32.mrb[0].mxu0
        %v6029 = vpop.f32.mrb[0].mxu0
        %v6030 = vpop.f32.mrb[0].mxu0
        %6031 = vdwg.mxu0
        %v6032 = vsel %vm5922, %v6027, -inf
        %6033 = vmax.xlane.f32.xlu0 %v6032
        %v6034 = vpop.xlane.xlu0 %6033
        %v6035 = vsub.f32 %v6027, %v6034
        %v6036 = vmul.f32 %v6035, 1.442695
        %v6037 = vpow.pop %v6036
        %v6038 = vsel %vm5922, %v6037, 0.0
        %6039 = vadd.xlane.f32.xlu0 %v6038
        %v6040 = vpop.xlane.xlu0 %6039
        %v6041 = vrcp.pop %v6040
        %v6042 = vmul.f32 %v6037, %v6041
        %v6043 = vpack.c.bf16 %v6042, %v6042
        %6045 = vrot.lane.b32.xlu0 %v5935, 112
        %v6046 = vpop.permute.xlu0 %6045
        %v6048 = vsel %vm2362, %v6043, 0
        %v6051 = vsel %vm2381, %v6046, 0
        %6053 = vmatprep.subr.bf16.mxu0 0
        %6054 = vmatpush1.bf16.msra.mxu0 %v6051
        %6055 = vmatprep.subr.bf16.mxu0 0
        %6056 = vmatpush1.bf16.msra.mxu0 0
        %6057 = vmatprep.subr.bf16.mxu0 0
        %6058 = vmatpush1.bf16.msra.mxu0 0
        %6059 = vmatprep.subr.bf16.mxu0 0
        %6060 = vmatpush1.bf16.msra.mxu0 0
        %6061 = vmatprep.subr.bf16.mxu0 0
        %6062 = vmatpush1.bf16.msra.mxu0 0
        %6063 = vmatprep.subr.bf16.mxu0 0
        %6064 = vmatpush1.bf16.msra.mxu0 0
        %6065 = vmatprep.subr.bf16.mxu0 0
        %6066 = vmatpush1.bf16.msra.mxu0 0
        %6067 = vmatprep.subr.bf16.mxu0 0
        %6068 = vmatpush1.bf16.msra.mxu0 0
        %6069 = vmatprep.subr.bf16.mxu0 0
        %6070 = vmatpush1.bf16.msra.mxu0 0
        %6071 = vmatprep.subr.bf16.mxu0 0
        %6072 = vmatpush1.bf16.msra.mxu0 0
        %6073 = vmatprep.subr.bf16.mxu0 0
        %6074 = vmatpush1.bf16.msra.mxu0 0
        %6075 = vmatprep.subr.bf16.mxu0 0
        %6076 = vmatpush1.bf16.msra.mxu0 0
        %6077 = vmatprep.subr.bf16.mxu0 0
        %6078 = vmatpush1.bf16.msra.mxu0 0
        %6079 = vmatprep.subr.bf16.mxu0 0
        %6080 = vmatpush1.bf16.msra.mxu0 0
        %6081 = vmatprep.subr.bf16.mxu0 0
        %6082 = vmatpush1.bf16.msra.mxu0 0
        %6083 = vmatprep.subr.bf16.mxu0 0
        %6084 = vmatpush1.bf16.msra.mxu0 0
        %6085 = vmatprep.mubr.bf16.mxu0 0
        %6086 = vmatmul.mubr.bf16.gmra.mrb[0].mxu0 %v6048
        %v6087 = vpop.f32.mrb[0].mxu0
        %v6088 = vadd.f32 0.0, %v6087
        %v6089 = vpop.f32.mrb[0].mxu0
        %v6090 = vpop.f32.mrb[0].mxu0
        %v6091 = vpop.f32.mrb[0].mxu0
        %6092 = vdwg.mxu0
        %6093 = vrot.lane.b32.xlu0 %v5872, 96
        %v6094 = vpop.permute.xlu0 %6093
        %6095 = vrot.lane.b32.xlu0 %v5872, 32
        %v6096 = vpop.permute.xlu0 %6095
        %v6098 = vsel %vm2769, %v6094, 0
        %v6101 = vsel %vm2769, %v6096, 0
        %6103 = vmatprep.subr.bf16.mxu0 0
        %6104 = vmatpush1.bf16.xpose.msra.mxu0 %v6101
        %6105 = vmatprep.subr.bf16.mxu0 0
        %6106 = vmatpush1.bf16.xpose.msra.mxu0 0
        %6107 = vmatprep.subr.bf16.mxu0 0
        %6108 = vmatpush1.bf16.xpose.msra.mxu0 0
        %6109 = vmatprep.subr.bf16.mxu0 0
        %6110 = vmatpush1.bf16.xpose.msra.mxu0 0
        %6111 = vmatprep.subr.bf16.mxu0 0
        %6112 = vmatpush1.bf16.xpose.msra.mxu0 0
        %6113 = vmatprep.subr.bf16.mxu0 0
        %6114 = vmatpush1.bf16.xpose.msra.mxu0 0
        %6115 = vmatprep.subr.bf16.mxu0 0
        %6116 = vmatpush1.bf16.xpose.msra.mxu0 0
        %6117 = vmatprep.subr.bf16.mxu0 0
        %6118 = vmatpush1.bf16.xpose.msra.mxu0 0
        %6119 = vmatprep.subr.bf16.mxu0 0
        %6120 = vmatpush1.bf16.xpose.msra.mxu0 0
        %6121 = vmatprep.subr.bf16.mxu0 0
        %6122 = vmatpush1.bf16.xpose.msra.mxu0 0
        %6123 = vmatprep.subr.bf16.mxu0 0
        %6124 = vmatpush1.bf16.xpose.msra.mxu0 0
        %6125 = vmatprep.subr.bf16.mxu0 0
        %6126 = vmatpush1.bf16.xpose.msra.mxu0 0
        %6127 = vmatprep.subr.bf16.mxu0 0
        %6128 = vmatpush1.bf16.xpose.msra.mxu0 0
        %6129 = vmatprep.subr.bf16.mxu0 0
        %6130 = vmatpush1.bf16.xpose.msra.mxu0 0
        %6131 = vmatprep.subr.bf16.mxu0 0
        %6132 = vmatpush1.bf16.xpose.msra.mxu0 0
        %6133 = vmatprep.subr.bf16.mxu0 0
        %6134 = vmatpush1.bf16.xpose.msra.mxu0 0
        %6135 = vmatprep.mubr.bf16.mxu0 0
        %6136 = vmatmul.mubr.bf16.gmra.mrb[0].mxu0 %v6098
        %v6137 = vpop.f32.mrb[0].mxu0
        %v6138 = vadd.f32 0.0, %v6137
        %v6139 = vpop.f32.mrb[0].mxu0
        %v6140 = vpop.f32.mrb[0].mxu0
        %v6141 = vpop.f32.mrb[0].mxu0
        %6142 = vdwg.mxu0
        %v6143 = vsel %vm5922, %v6138, -inf
        %6144 = vmax.xlane.f32.xlu0 %v6143
        %v6145 = vpop.xlane.xlu0 %6144
        %v6146 = vsub.f32 %v6138, %v6145
        %v6147 = vmul.f32 %v6146, 1.442695
        %v6148 = vpow.pop %v6147
        %v6149 = vsel %vm5922, %v6148, 0.0
        %6150 = vadd.xlane.f32.xlu0 %v6149
        %v6151 = vpop.xlane.xlu0 %6150
        %v6152 = vrcp.pop %v6151
        %v6153 = vmul.f32 %v6148, %v6152
        %v6154 = vpack.c.bf16 %v6153, %v6153
        %6155 = vrot.lane.b32.xlu0 %v5935, 96
        %v6156 = vpop.permute.xlu0 %6155
        %v6158 = vsel %vm2362, %v6154, 0
        %v6161 = vsel %vm2381, %v6156, 0
        %6163 = vmatprep.subr.bf16.mxu0 0
        %6164 = vmatpush1.bf16.msra.mxu0 %v6161
        %6165 = vmatprep.subr.bf16.mxu0 0
        %6166 = vmatpush1.bf16.msra.mxu0 0
        %6167 = vmatprep.subr.bf16.mxu0 0
        %6168 = vmatpush1.bf16.msra.mxu0 0
        %6169 = vmatprep.subr.bf16.mxu0 0
        %6170 = vmatpush1.bf16.msra.mxu0 0
        %6171 = vmatprep.subr.bf16.mxu0 0
        %6172 = vmatpush1.bf16.msra.mxu0 0
        %6173 = vmatprep.subr.bf16.mxu0 0
        %6174 = vmatpush1.bf16.msra.mxu0 0
        %6175 = vmatprep.subr.bf16.mxu0 0
        %6176 = vmatpush1.bf16.msra.mxu0 0
        %6177 = vmatprep.subr.bf16.mxu0 0
        %6178 = vmatpush1.bf16.msra.mxu0 0
        %6179 = vmatprep.subr.bf16.mxu0 0
        %6180 = vmatpush1.bf16.msra.mxu0 0
        %6181 = vmatprep.subr.bf16.mxu0 0
        %6182 = vmatpush1.bf16.msra.mxu0 0
        %6183 = vmatprep.subr.bf16.mxu0 0
        %6184 = vmatpush1.bf16.msra.mxu0 0
        %6185 = vmatprep.subr.bf16.mxu0 0
        %6186 = vmatpush1.bf16.msra.mxu0 0
        %6187 = vmatprep.subr.bf16.mxu0 0
        %6188 = vmatpush1.bf16.msra.mxu0 0
        %6189 = vmatprep.subr.bf16.mxu0 0
        %6190 = vmatpush1.bf16.msra.mxu0 0
        %6191 = vmatprep.subr.bf16.mxu0 0
        %6192 = vmatpush1.bf16.msra.mxu0 0
        %6193 = vmatprep.subr.bf16.mxu0 0
        %6194 = vmatpush1.bf16.msra.mxu0 0
        %6195 = vmatprep.mubr.bf16.mxu0 0
        %6196 = vmatmul.mubr.bf16.gmra.mrb[0].mxu0 %v6158
        %v6197 = vpop.f32.mrb[0].mxu0
        %v6198 = vadd.f32 0.0, %v6197
        %v6199 = vpop.f32.mrb[0].mxu0
        %v6200 = vpop.f32.mrb[0].mxu0
        %v6201 = vpop.f32.mrb[0].mxu0
        %6202 = vdwg.mxu0
        %6203 = vrot.lane.b32.xlu0 %v5872, 80
        %v6204 = vpop.permute.xlu0 %6203
        %6205 = vrot.lane.b32.xlu0 %v5872, 16
        %v6206 = vpop.permute.xlu0 %6205
        %v6208 = vsel %vm2769, %v6204, 0
        %v6211 = vsel %vm2769, %v6206, 0
        %6213 = vmatprep.subr.bf16.mxu0 0
        %6214 = vmatpush1.bf16.xpose.msra.mxu0 %v6211
        %6215 = vmatprep.subr.bf16.mxu0 0
        %6216 = vmatpush1.bf16.xpose.msra.mxu0 0
        %6217 = vmatprep.subr.bf16.mxu0 0
        %6218 = vmatpush1.bf16.xpose.msra.mxu0 0
        %6219 = vmatprep.subr.bf16.mxu0 0
        %6220 = vmatpush1.bf16.xpose.msra.mxu0 0
        %6221 = vmatprep.subr.bf16.mxu0 0
        %6222 = vmatpush1.bf16.xpose.msra.mxu0 0
        %6223 = vmatprep.subr.bf16.mxu0 0
        %6224 = vmatpush1.bf16.xpose.msra.mxu0 0
        %6225 = vmatprep.subr.bf16.mxu0 0
        %6226 = vmatpush1.bf16.xpose.msra.mxu0 0
        %6227 = vmatprep.subr.bf16.mxu0 0
        %6228 = vmatpush1.bf16.xpose.msra.mxu0 0
        %6229 = vmatprep.subr.bf16.mxu0 0
        %6230 = vmatpush1.bf16.xpose.msra.mxu0 0
        %6231 = vmatprep.subr.bf16.mxu0 0
        %6232 = vmatpush1.bf16.xpose.msra.mxu0 0
        %6233 = vmatprep.subr.bf16.mxu0 0
        %6234 = vmatpush1.bf16.xpose.msra.mxu0 0
        %6235 = vmatprep.subr.bf16.mxu0 0
        %6236 = vmatpush1.bf16.xpose.msra.mxu0 0
        %6237 = vmatprep.subr.bf16.mxu0 0
        %6238 = vmatpush1.bf16.xpose.msra.mxu0 0
        %6239 = vmatprep.subr.bf16.mxu0 0
        %6240 = vmatpush1.bf16.xpose.msra.mxu0 0
        %6241 = vmatprep.subr.bf16.mxu0 0
        %6242 = vmatpush1.bf16.xpose.msra.mxu0 0
        %6243 = vmatprep.subr.bf16.mxu0 0
        %6244 = vmatpush1.bf16.xpose.msra.mxu0 0
        %6245 = vmatprep.mubr.bf16.mxu0 0
        %6246 = vmatmul.mubr.bf16.gmra.mrb[0].mxu0 %v6208
        %v6247 = vpop.f32.mrb[0].mxu0
        %v6248 = vadd.f32 0.0, %v6247
        %v6249 = vpop.f32.mrb[0].mxu0
        %v6250 = vpop.f32.mrb[0].mxu0
        %v6251 = vpop.f32.mrb[0].mxu0
        %6252 = vdwg.mxu0
        %v6253 = vsel %vm5922, %v6248, -inf
        %6254 = vmax.xlane.f32.xlu0 %v6253
        %v6255 = vpop.xlane.xlu0 %6254
        %v6256 = vsub.f32 %v6248, %v6255
        %v6257 = vmul.f32 %v6256, 1.442695
        %v6258 = vpow.pop %v6257
        %v6259 = vsel %vm5922, %v6258, 0.0
        %6260 = vadd.xlane.f32.xlu0 %v6259
        %v6261 = vpop.xlane.xlu0 %6260
        %v6262 = vrcp.pop %v6261
        %v6263 = vmul.f32 %v6258, %v6262
        %v6264 = vpack.c.bf16 %v6263, %v6263
        %6265 = vrot.lane.b32.xlu0 %v5935, 80
        %v6266 = vpop.permute.xlu0 %6265
        %v6268 = vsel %vm2362, %v6264, 0
        %v6271 = vsel %vm2381, %v6266, 0
        %6273 = vmatprep.subr.bf16.mxu0 0
        %6274 = vmatpush1.bf16.msra.mxu0 %v6271
        %6275 = vmatprep.subr.bf16.mxu0 0
        %6276 = vmatpush1.bf16.msra.mxu0 0
        %6277 = vmatprep.subr.bf16.mxu0 0
        %6278 = vmatpush1.bf16.msra.mxu0 0
        %6279 = vmatprep.subr.bf16.mxu0 0
        %6280 = vmatpush1.bf16.msra.mxu0 0
        %6281 = vmatprep.subr.bf16.mxu0 0
        %6282 = vmatpush1.bf16.msra.mxu0 0
        %6283 = vmatprep.subr.bf16.mxu0 0
        %6284 = vmatpush1.bf16.msra.mxu0 0
        %6285 = vmatprep.subr.bf16.mxu0 0
        %6286 = vmatpush1.bf16.msra.mxu0 0
        %6287 = vmatprep.subr.bf16.mxu0 0
        %6288 = vmatpush1.bf16.msra.mxu0 0
        %6289 = vmatprep.subr.bf16.mxu0 0
        %6290 = vmatpush1.bf16.msra.mxu0 0
        %6291 = vmatprep.subr.bf16.mxu0 0
        %6292 = vmatpush1.bf16.msra.mxu0 0
        %6293 = vmatprep.subr.bf16.mxu0 0
        %6294 = vmatpush1.bf16.msra.mxu0 0
        %6295 = vmatprep.subr.bf16.mxu0 0
        %6296 = vmatpush1.bf16.msra.mxu0 0
        %6297 = vmatprep.subr.bf16.mxu0 0
        %6298 = vmatpush1.bf16.msra.mxu0 0
        %6299 = vmatprep.subr.bf16.mxu0 0
        %6300 = vmatpush1.bf16.msra.mxu0 0
        %6301 = vmatprep.subr.bf16.mxu0 0
        %6302 = vmatpush1.bf16.msra.mxu0 0
        %6303 = vmatprep.subr.bf16.mxu0 0
        %6304 = vmatpush1.bf16.msra.mxu0 0
        %6305 = vmatprep.mubr.bf16.mxu0 0
        %6306 = vmatmul.mubr.bf16.gmra.mrb[0].mxu0 %v6268
        %v6307 = vpop.f32.mrb[0].mxu0
        %v6308 = vadd.f32 0.0, %v6307
        %v6309 = vpop.f32.mrb[0].mxu0
        %v6310 = vpop.f32.mrb[0].mxu0
        %v6311 = vpop.f32.mrb[0].mxu0
        %6312 = vdwg.mxu0
        %6314 = vrot.lane.b32.xlu0 %v6088, 16
        %v6315 = vpop.permute.xlu0 %6314
        %6318 = vrot.lane.b32.xlu0 %v6198, 32
        %v6319 = vpop.permute.xlu0 %6318
        %6322 = vrot.lane.b32.xlu0 %v6308, 48
        %v6323 = vpop.permute.xlu0 %6322
        %v6325 = vsel %vm2769, %v5977, %v6315
        %v6326 = vsel %vm2098, %v6325, %v6319
        %v6327 = vsel %vm5201, %v6326, %v6323
        %v6328 = vpack.c.bf16 %v5868, %v5864
        %v6330 = vrot.slane %v6328, 3
        %6331 = vrot.lane.b32.xlu0 %v6330, 64
        %v6332 = vpop.permute.xlu0 %6331
        %v6334 = vsel %vm2769, %v6330, 0
        %v6337 = vsel %vm2769, %v6332, 0
        %6339 = vmatprep.subr.bf16.mxu0 0
        %6340 = vmatpush1.bf16.xpose.msra.mxu0 %v6337
        %6341 = vmatprep.subr.bf16.mxu0 0
        %6342 = vmatpush1.bf16.xpose.msra.mxu0 0
        %6343 = vmatprep.subr.bf16.mxu0 0
        %6344 = vmatpush1.bf16.xpose.msra.mxu0 0
        %6345 = vmatprep.subr.bf16.mxu0 0
        %6346 = vmatpush1.bf16.xpose.msra.mxu0 0
        %6347 = vmatprep.subr.bf16.mxu0 0
        %6348 = vmatpush1.bf16.xpose.msra.mxu0 0
        %6349 = vmatprep.subr.bf16.mxu0 0
        %6350 = vmatpush1.bf16.xpose.msra.mxu0 0
        %6351 = vmatprep.subr.bf16.mxu0 0
        %6352 = vmatpush1.bf16.xpose.msra.mxu0 0
        %6353 = vmatprep.subr.bf16.mxu0 0
        %6354 = vmatpush1.bf16.xpose.msra.mxu0 0
        %6355 = vmatprep.subr.bf16.mxu0 0
        %6356 = vmatpush1.bf16.xpose.msra.mxu0 0
        %6357 = vmatprep.subr.bf16.mxu0 0
        %6358 = vmatpush1.bf16.xpose.msra.mxu0 0
        %6359 = vmatprep.subr.bf16.mxu0 0
        %6360 = vmatpush1.bf16.xpose.msra.mxu0 0
        %6361 = vmatprep.subr.bf16.mxu0 0
        %6362 = vmatpush1.bf16.xpose.msra.mxu0 0
        %6363 = vmatprep.subr.bf16.mxu0 0
        %6364 = vmatpush1.bf16.xpose.msra.mxu0 0
        %6365 = vmatprep.subr.bf16.mxu0 0
        %6366 = vmatpush1.bf16.xpose.msra.mxu0 0
        %6367 = vmatprep.subr.bf16.mxu0 0
        %6368 = vmatpush1.bf16.xpose.msra.mxu0 0
        %6369 = vmatprep.subr.bf16.mxu0 0
        %6370 = vmatpush1.bf16.xpose.msra.mxu0 0
        %6371 = vmatprep.mubr.bf16.mxu0 0
        %6372 = vmatmul.mubr.bf16.gmra.mrb[0].mxu0 %v6334
        %v6373 = vpop.f32.mrb[0].mxu0
        %v6374 = vadd.f32 0.0, %v6373
        %v6375 = vpop.f32.mrb[0].mxu0
        %v6376 = vpop.f32.mrb[0].mxu0
        %v6377 = vpop.f32.mrb[0].mxu0
        %6378 = vdwg.mxu0
        %v6379 = vsel %vm5922, %v6374, -inf
        %6380 = vmax.xlane.f32.xlu0 %v6379
        %v6381 = vpop.xlane.xlu0 %6380
        %v6382 = vsub.f32 %v6374, %v6381
        %v6383 = vmul.f32 %v6382, 1.442695
        %v6384 = vpow.pop %v6383
        %v6385 = vsel %vm5922, %v6384, 0.0
        %6386 = vadd.xlane.f32.xlu0 %v6385
        %v6387 = vpop.xlane.xlu0 %6386
        %v6388 = vrcp.pop %v6387
        %v6389 = vmul.f32 %v6384, %v6388
        %v6390 = vpack.c.bf16 %v6389, %v6389
        %v6391 = vpack.c.bf16 %v5870, %v5866
        %v6393 = vrot.slane %v6391, 3
        %v6395 = vsel %vm2362, %v6390, 0
        %v6398 = vsel %vm2381, %v6393, 0
        %6400 = vmatprep.subr.bf16.mxu0 0
        %6401 = vmatpush1.bf16.msra.mxu0 %v6398
        %6402 = vmatprep.subr.bf16.mxu0 0
        %6403 = vmatpush1.bf16.msra.mxu0 0
        %6404 = vmatprep.subr.bf16.mxu0 0
        %6405 = vmatpush1.bf16.msra.mxu0 0
        %6406 = vmatprep.subr.bf16.mxu0 0
        %6407 = vmatpush1.bf16.msra.mxu0 0
        %6408 = vmatprep.subr.bf16.mxu0 0
        %6409 = vmatpush1.bf16.msra.mxu0 0
        %6410 = vmatprep.subr.bf16.mxu0 0
        %6411 = vmatpush1.bf16.msra.mxu0 0
        %6412 = vmatprep.subr.bf16.mxu0 0
        %6413 = vmatpush1.bf16.msra.mxu0 0
        %6414 = vmatprep.subr.bf16.mxu0 0
        %6415 = vmatpush1.bf16.msra.mxu0 0
        %6416 = vmatprep.subr.bf16.mxu0 0
        %6417 = vmatpush1.bf16.msra.mxu0 0
        %6418 = vmatprep.subr.bf16.mxu0 0
        %6419 = vmatpush1.bf16.msra.mxu0 0
        %6420 = vmatprep.subr.bf16.mxu0 0
        %6421 = vmatpush1.bf16.msra.mxu0 0
        %6422 = vmatprep.subr.bf16.mxu0 0
        %6423 = vmatpush1.bf16.msra.mxu0 0
        %6424 = vmatprep.subr.bf16.mxu0 0
        %6425 = vmatpush1.bf16.msra.mxu0 0
        %6426 = vmatprep.subr.bf16.mxu0 0
        %6427 = vmatpush1.bf16.msra.mxu0 0
        %6428 = vmatprep.subr.bf16.mxu0 0
        %6429 = vmatpush1.bf16.msra.mxu0 0
        %6430 = vmatprep.subr.bf16.mxu0 0
        %6431 = vmatpush1.bf16.msra.mxu0 0
        %6432 = vmatprep.mubr.bf16.mxu0 0
        %6433 = vmatmul.mubr.bf16.gmra.mrb[0].mxu0 %v6395
        %v6434 = vpop.f32.mrb[0].mxu0
        %v6435 = vadd.f32 0.0, %v6434
        %v6436 = vpop.f32.mrb[0].mxu0
        %v6437 = vpop.f32.mrb[0].mxu0
        %v6438 = vpop.f32.mrb[0].mxu0
        %6439 = vdwg.mxu0
        %6440 = vrot.lane.b32.xlu0 %v6330, 112
        %v6441 = vpop.permute.xlu0 %6440
        %6442 = vrot.lane.b32.xlu0 %v6330, 48
        %v6443 = vpop.permute.xlu0 %6442
        %v6445 = vsel %vm2769, %v6441, 0
        %v6448 = vsel %vm2769, %v6443, 0
        %6450 = vmatprep.subr.bf16.mxu0 0
        %6451 = vmatpush1.bf16.xpose.msra.mxu0 %v6448
        %6452 = vmatprep.subr.bf16.mxu0 0
        %6453 = vmatpush1.bf16.xpose.msra.mxu0 0
        %6454 = vmatprep.subr.bf16.mxu0 0
        %6455 = vmatpush1.bf16.xpose.msra.mxu0 0
        %6456 = vmatprep.subr.bf16.mxu0 0
        %6457 = vmatpush1.bf16.xpose.msra.mxu0 0
        %6458 = vmatprep.subr.bf16.mxu0 0
        %6459 = vmatpush1.bf16.xpose.msra.mxu0 0
        %6460 = vmatprep.subr.bf16.mxu0 0
        %6461 = vmatpush1.bf16.xpose.msra.mxu0 0
        %6462 = vmatprep.subr.bf16.mxu0 0
        %6463 = vmatpush1.bf16.xpose.msra.mxu0 0
        %6464 = vmatprep.subr.bf16.mxu0 0
        %6465 = vmatpush1.bf16.xpose.msra.mxu0 0
        %6466 = vmatprep.subr.bf16.mxu0 0
        %6467 = vmatpush1.bf16.xpose.msra.mxu0 0
        %6468 = vmatprep.subr.bf16.mxu0 0
        %6469 = vmatpush1.bf16.xpose.msra.mxu0 0
        %6470 = vmatprep.subr.bf16.mxu0 0
        %6471 = vmatpush1.bf16.xpose.msra.mxu0 0
        %6472 = vmatprep.subr.bf16.mxu0 0
        %6473 = vmatpush1.bf16.xpose.msra.mxu0 0
        %6474 = vmatprep.subr.bf16.mxu0 0
        %6475 = vmatpush1.bf16.xpose.msra.mxu0 0
        %6476 = vmatprep.subr.bf16.mxu0 0
        %6477 = vmatpush1.bf16.xpose.msra.mxu0 0
        %6478 = vmatprep.subr.bf16.mxu0 0
        %6479 = vmatpush1.bf16.xpose.msra.mxu0 0
        %6480 = vmatprep.subr.bf16.mxu0 0
        %6481 = vmatpush1.bf16.xpose.msra.mxu0 0
        %6482 = vmatprep.mubr.bf16.mxu0 0
        %6483 = vmatmul.mubr.bf16.gmra.mrb[0].mxu0 %v6445
        %v6484 = vpop.f32.mrb[0].mxu0
        %v6485 = vadd.f32 0.0, %v6484
        %v6486 = vpop.f32.mrb[0].mxu0
        %v6487 = vpop.f32.mrb[0].mxu0
        %v6488 = vpop.f32.mrb[0].mxu0
        %6489 = vdwg.mxu0
        %v6490 = vsel %vm5922, %v6485, -inf
        %6491 = vmax.xlane.f32.xlu0 %v6490
        %v6492 = vpop.xlane.xlu0 %6491
        %v6493 = vsub.f32 %v6485, %v6492
        %v6494 = vmul.f32 %v6493, 1.442695
        %v6495 = vpow.pop %v6494
        %v6496 = vsel %vm5922, %v6495, 0.0
        %6497 = vadd.xlane.f32.xlu0 %v6496
        %v6498 = vpop.xlane.xlu0 %6497
        %v6499 = vrcp.pop %v6498
        %v6500 = vmul.f32 %v6495, %v6499
        %v6501 = vpack.c.bf16 %v6500, %v6500
        %6502 = vrot.lane.b32.xlu0 %v6393, 112
        %v6503 = vpop.permute.xlu0 %6502
        %v6505 = vsel %vm2362, %v6501, 0
        %v6508 = vsel %vm2381, %v6503, 0
        %6510 = vmatprep.subr.bf16.mxu0 0
        %6511 = vmatpush1.bf16.msra.mxu0 %v6508
        %6512 = vmatprep.subr.bf16.mxu0 0
        %6513 = vmatpush1.bf16.msra.mxu0 0
        %6514 = vmatprep.subr.bf16.mxu0 0
        %6515 = vmatpush1.bf16.msra.mxu0 0
        %6516 = vmatprep.subr.bf16.mxu0 0
        %6517 = vmatpush1.bf16.msra.mxu0 0
        %6518 = vmatprep.subr.bf16.mxu0 0
        %6519 = vmatpush1.bf16.msra.mxu0 0
        %6520 = vmatprep.subr.bf16.mxu0 0
        %6521 = vmatpush1.bf16.msra.mxu0 0
        %6522 = vmatprep.subr.bf16.mxu0 0
        %6523 = vmatpush1.bf16.msra.mxu0 0
        %6524 = vmatprep.subr.bf16.mxu0 0
        %6525 = vmatpush1.bf16.msra.mxu0 0
        %6526 = vmatprep.subr.bf16.mxu0 0
        %6527 = vmatpush1.bf16.msra.mxu0 0
        %6528 = vmatprep.subr.bf16.mxu0 0
        %6529 = vmatpush1.bf16.msra.mxu0 0
        %6530 = vmatprep.subr.bf16.mxu0 0
        %6531 = vmatpush1.bf16.msra.mxu0 0
        %6532 = vmatprep.subr.bf16.mxu0 0
        %6533 = vmatpush1.bf16.msra.mxu0 0
        %6534 = vmatprep.subr.bf16.mxu0 0
        %6535 = vmatpush1.bf16.msra.mxu0 0
        %6536 = vmatprep.subr.bf16.mxu0 0
        %6537 = vmatpush1.bf16.msra.mxu0 0
        %6538 = vmatprep.subr.bf16.mxu0 0
        %6539 = vmatpush1.bf16.msra.mxu0 0
        %6540 = vmatprep.subr.bf16.mxu0 0
        %6541 = vmatpush1.bf16.msra.mxu0 0
        %6542 = vmatprep.mubr.bf16.mxu0 0
        %6543 = vmatmul.mubr.bf16.gmra.mrb[0].mxu0 %v6505
        %v6544 = vpop.f32.mrb[0].mxu0
        %v6545 = vadd.f32 0.0, %v6544
        %v6546 = vpop.f32.mrb[0].mxu0
        %v6547 = vpop.f32.mrb[0].mxu0
        %v6548 = vpop.f32.mrb[0].mxu0
        %6549 = vdwg.mxu0
        %6550 = vrot.lane.b32.xlu0 %v6330, 96
        %v6551 = vpop.permute.xlu0 %6550
        %6552 = vrot.lane.b32.xlu0 %v6330, 32
        %v6553 = vpop.permute.xlu0 %6552
        %v6555 = vsel %vm2769, %v6551, 0
        %v6558 = vsel %vm2769, %v6553, 0
        %6560 = vmatprep.subr.bf16.mxu0 0
        %6561 = vmatpush1.bf16.xpose.msra.mxu0 %v6558
        %6562 = vmatprep.subr.bf16.mxu0 0
        %6563 = vmatpush1.bf16.xpose.msra.mxu0 0
        %6564 = vmatprep.subr.bf16.mxu0 0
        %6565 = vmatpush1.bf16.xpose.msra.mxu0 0
        %6566 = vmatprep.subr.bf16.mxu0 0
        %6567 = vmatpush1.bf16.xpose.msra.mxu0 0
        %6568 = vmatprep.subr.bf16.mxu0 0
        %6569 = vmatpush1.bf16.xpose.msra.mxu0 0
        %6570 = vmatprep.subr.bf16.mxu0 0
        %6571 = vmatpush1.bf16.xpose.msra.mxu0 0
        %6572 = vmatprep.subr.bf16.mxu0 0
        %6573 = vmatpush1.bf16.xpose.msra.mxu0 0
        %6574 = vmatprep.subr.bf16.mxu0 0
        %6575 = vmatpush1.bf16.xpose.msra.mxu0 0
        %6576 = vmatprep.subr.bf16.mxu0 0
        %6577 = vmatpush1.bf16.xpose.msra.mxu0 0
        %6578 = vmatprep.subr.bf16.mxu0 0
        %6579 = vmatpush1.bf16.xpose.msra.mxu0 0
        %6580 = vmatprep.subr.bf16.mxu0 0
        %6581 = vmatpush1.bf16.xpose.msra.mxu0 0
        %6582 = vmatprep.subr.bf16.mxu0 0
        %6583 = vmatpush1.bf16.xpose.msra.mxu0 0
        %6584 = vmatprep.subr.bf16.mxu0 0
        %6585 = vmatpush1.bf16.xpose.msra.mxu0 0
        %6586 = vmatprep.subr.bf16.mxu0 0
        %6587 = vmatpush1.bf16.xpose.msra.mxu0 0
        %6588 = vmatprep.subr.bf16.mxu0 0
        %6589 = vmatpush1.bf16.xpose.msra.mxu0 0
        %6590 = vmatprep.subr.bf16.mxu0 0
        %6591 = vmatpush1.bf16.xpose.msra.mxu0 0
        %6592 = vmatprep.mubr.bf16.mxu0 0
        %6593 = vmatmul.mubr.bf16.gmra.mrb[0].mxu0 %v6555
        %v6594 = vpop.f32.mrb[0].mxu0
        %v6595 = vadd.f32 0.0, %v6594
        %v6596 = vpop.f32.mrb[0].mxu0
        %v6597 = vpop.f32.mrb[0].mxu0
        %v6598 = vpop.f32.mrb[0].mxu0
        %6599 = vdwg.mxu0
        %v6600 = vsel %vm5922, %v6595, -inf
        %6601 = vmax.xlane.f32.xlu0 %v6600
        %v6602 = vpop.xlane.xlu0 %6601
        %v6603 = vsub.f32 %v6595, %v6602
        %v6604 = vmul.f32 %v6603, 1.442695
        %v6605 = vpow.pop %v6604
        %v6606 = vsel %vm5922, %v6605, 0.0
        %6607 = vadd.xlane.f32.xlu0 %v6606
        %v6608 = vpop.xlane.xlu0 %6607
        %v6609 = vrcp.pop %v6608
        %v6610 = vmul.f32 %v6605, %v6609
        %v6611 = vpack.c.bf16 %v6610, %v6610
        %6612 = vrot.lane.b32.xlu0 %v6393, 96
        %v6613 = vpop.permute.xlu0 %6612
        %v6615 = vsel %vm2362, %v6611, 0
        %v6618 = vsel %vm2381, %v6613, 0
        %6620 = vmatprep.subr.bf16.mxu0 0
        %6621 = vmatpush1.bf16.msra.mxu0 %v6618
        %6622 = vmatprep.subr.bf16.mxu0 0
        %6623 = vmatpush1.bf16.msra.mxu0 0
        %6624 = vmatprep.subr.bf16.mxu0 0
        %6625 = vmatpush1.bf16.msra.mxu0 0
        %6626 = vmatprep.subr.bf16.mxu0 0
        %6627 = vmatpush1.bf16.msra.mxu0 0
        %6628 = vmatprep.subr.bf16.mxu0 0
        %6629 = vmatpush1.bf16.msra.mxu0 0
        %6630 = vmatprep.subr.bf16.mxu0 0
        %6631 = vmatpush1.bf16.msra.mxu0 0
        %6632 = vmatprep.subr.bf16.mxu0 0
        %6633 = vmatpush1.bf16.msra.mxu0 0
        %6634 = vmatprep.subr.bf16.mxu0 0
        %6635 = vmatpush1.bf16.msra.mxu0 0
        %6636 = vmatprep.subr.bf16.mxu0 0
        %6637 = vmatpush1.bf16.msra.mxu0 0
        %6638 = vmatprep.subr.bf16.mxu0 0
        %6639 = vmatpush1.bf16.msra.mxu0 0
        %6640 = vmatprep.subr.bf16.mxu0 0
        %6641 = vmatpush1.bf16.msra.mxu0 0
        %6642 = vmatprep.subr.bf16.mxu0 0
        %6643 = vmatpush1.bf16.msra.mxu0 0
        %6644 = vmatprep.subr.bf16.mxu0 0
        %6645 = vmatpush1.bf16.msra.mxu0 0
        %6646 = vmatprep.subr.bf16.mxu0 0
        %6647 = vmatpush1.bf16.msra.mxu0 0
        %6648 = vmatprep.subr.bf16.mxu0 0
        %6649 = vmatpush1.bf16.msra.mxu0 0
        %6650 = vmatprep.subr.bf16.mxu0 0
        %6651 = vmatpush1.bf16.msra.mxu0 0
        %6652 = vmatprep.mubr.bf16.mxu0 0
        %6653 = vmatmul.mubr.bf16.gmra.mrb[0].mxu0 %v6615
        %v6654 = vpop.f32.mrb[0].mxu0
        %v6655 = vadd.f32 0.0, %v6654
        %v6656 = vpop.f32.mrb[0].mxu0
        %v6657 = vpop.f32.mrb[0].mxu0
        %v6658 = vpop.f32.mrb[0].mxu0
        %6659 = vdwg.mxu0
        %6660 = vrot.lane.b32.xlu0 %v6330, 80
        %v6661 = vpop.permute.xlu0 %6660
        %6662 = vrot.lane.b32.xlu0 %v6330, 16
        %v6663 = vpop.permute.xlu0 %6662
        %v6665 = vsel %vm2769, %v6661, 0
        %v6668 = vsel %vm2769, %v6663, 0
        %6670 = vmatprep.subr.bf16.mxu0 0
        %6671 = vmatpush1.bf16.xpose.msra.mxu0 %v6668
        %6672 = vmatprep.subr.bf16.mxu0 0
        %6673 = vmatpush1.bf16.xpose.msra.mxu0 0
        %6674 = vmatprep.subr.bf16.mxu0 0
        %6675 = vmatpush1.bf16.xpose.msra.mxu0 0
        %6676 = vmatprep.subr.bf16.mxu0 0
        %6677 = vmatpush1.bf16.xpose.msra.mxu0 0
        %6678 = vmatprep.subr.bf16.mxu0 0
        %6679 = vmatpush1.bf16.xpose.msra.mxu0 0
        %6680 = vmatprep.subr.bf16.mxu0 0
        %6681 = vmatpush1.bf16.xpose.msra.mxu0 0
        %6682 = vmatprep.subr.bf16.mxu0 0
        %6683 = vmatpush1.bf16.xpose.msra.mxu0 0
        %6684 = vmatprep.subr.bf16.mxu0 0
        %6685 = vmatpush1.bf16.xpose.msra.mxu0 0
        %6686 = vmatprep.subr.bf16.mxu0 0
        %6687 = vmatpush1.bf16.xpose.msra.mxu0 0
        %6688 = vmatprep.subr.bf16.mxu0 0
        %6689 = vmatpush1.bf16.xpose.msra.mxu0 0
        %6690 = vmatprep.subr.bf16.mxu0 0
        %6691 = vmatpush1.bf16.xpose.msra.mxu0 0
        %6692 = vmatprep.subr.bf16.mxu0 0
        %6693 = vmatpush1.bf16.xpose.msra.mxu0 0
        %6694 = vmatprep.subr.bf16.mxu0 0
        %6695 = vmatpush1.bf16.xpose.msra.mxu0 0
        %6696 = vmatprep.subr.bf16.mxu0 0
        %6697 = vmatpush1.bf16.xpose.msra.mxu0 0
        %6698 = vmatprep.subr.bf16.mxu0 0
        %6699 = vmatpush1.bf16.xpose.msra.mxu0 0
        %6700 = vmatprep.subr.bf16.mxu0 0
        %6701 = vmatpush1.bf16.xpose.msra.mxu0 0
        %6702 = vmatprep.mubr.bf16.mxu0 0
        %6703 = vmatmul.mubr.bf16.gmra.mrb[0].mxu0 %v6665
        %v6704 = vpop.f32.mrb[0].mxu0
        %v6705 = vadd.f32 0.0, %v6704
        %v6706 = vpop.f32.mrb[0].mxu0
        %v6707 = vpop.f32.mrb[0].mxu0
        %v6708 = vpop.f32.mrb[0].mxu0
        %6709 = vdwg.mxu0
        %v6710 = vsel %vm5922, %v6705, -inf
        %6711 = vmax.xlane.f32.xlu0 %v6710
        %v6712 = vpop.xlane.xlu0 %6711
        %v6713 = vsub.f32 %v6705, %v6712
        %v6714 = vmul.f32 %v6713, 1.442695
        %v6715 = vpow.pop %v6714
        %v6716 = vsel %vm5922, %v6715, 0.0
        %6717 = vadd.xlane.f32.xlu0 %v6716
        %v6718 = vpop.xlane.xlu0 %6717
        %v6719 = vrcp.pop %v6718
        %v6720 = vmul.f32 %v6715, %v6719
        %v6721 = vpack.c.bf16 %v6720, %v6720
        %6722 = vrot.lane.b32.xlu0 %v6393, 80
        %v6723 = vpop.permute.xlu0 %6722
        %v6725 = vsel %vm2362, %v6721, 0
        %v6728 = vsel %vm2381, %v6723, 0
        %6730 = vmatprep.subr.bf16.mxu0 0
        %6731 = vmatpush1.bf16.msra.mxu0 %v6728
        %6732 = vmatprep.subr.bf16.mxu0 0
        %6733 = vmatpush1.bf16.msra.mxu0 0
        %6734 = vmatprep.subr.bf16.mxu0 0
        %6735 = vmatpush1.bf16.msra.mxu0 0
        %6736 = vmatprep.subr.bf16.mxu0 0
        %6737 = vmatpush1.bf16.msra.mxu0 0
        %6738 = vmatprep.subr.bf16.mxu0 0
        %6739 = vmatpush1.bf16.msra.mxu0 0
        %6740 = vmatprep.subr.bf16.mxu0 0
        %6741 = vmatpush1.bf16.msra.mxu0 0
        %6742 = vmatprep.subr.bf16.mxu0 0
        %6743 = vmatpush1.bf16.msra.mxu0 0
        %6744 = vmatprep.subr.bf16.mxu0 0
        %6745 = vmatpush1.bf16.msra.mxu0 0
        %6746 = vmatprep.subr.bf16.mxu0 0
        %6747 = vmatpush1.bf16.msra.mxu0 0
        %6748 = vmatprep.subr.bf16.mxu0 0
        %6749 = vmatpush1.bf16.msra.mxu0 0
        %6750 = vmatprep.subr.bf16.mxu0 0
        %6751 = vmatpush1.bf16.msra.mxu0 0
        %6752 = vmatprep.subr.bf16.mxu0 0
        %6753 = vmatpush1.bf16.msra.mxu0 0
        %6754 = vmatprep.subr.bf16.mxu0 0
        %6755 = vmatpush1.bf16.msra.mxu0 0
        %6756 = vmatprep.subr.bf16.mxu0 0
        %6757 = vmatpush1.bf16.msra.mxu0 0
        %6758 = vmatprep.subr.bf16.mxu0 0
        %6759 = vmatpush1.bf16.msra.mxu0 0
        %6760 = vmatprep.subr.bf16.mxu0 0
        %6761 = vmatpush1.bf16.msra.mxu0 0
        %6762 = vmatprep.mubr.bf16.mxu0 0
        %6763 = vmatmul.mubr.bf16.gmra.mrb[0].mxu0 %v6725
        %v6764 = vpop.f32.mrb[0].mxu0
        %v6765 = vadd.f32 0.0, %v6764
        %v6766 = vpop.f32.mrb[0].mxu0
        %v6767 = vpop.f32.mrb[0].mxu0
        %v6768 = vpop.f32.mrb[0].mxu0
        %6769 = vdwg.mxu0
        %6771 = vrot.lane.b32.xlu0 %v6545, 16
        %v6772 = vpop.permute.xlu0 %6771
        %6775 = vrot.lane.b32.xlu0 %v6655, 32
        %v6776 = vpop.permute.xlu0 %6775
        %6779 = vrot.lane.b32.xlu0 %v6765, 48
        %v6780 = vpop.permute.xlu0 %6779
        %v6782 = vsel %vm2769, %v6435, %v6772
        %v6783 = vsel %vm2098, %v6782, %v6776
        %v6784 = vsel %vm5201, %v6783, %v6780
        %v6786 = vrot.slane %v6784, 2
        %v6788 = vsel %vm5662, %v6327, %v6786
        %v6790 = vlaneseq
        %v6791 = vshrl.u32 %v6790, 7
        %v6792 = vsub.s32 0, %v6791
        %v6793 = vrot.slane %v2051, %v6792
        %v6795 = vadd.f32 %v5741, %v6793
        %v6796 = vadd.f32 %v5742, %v6793
        %v6797 = vpack.c.bf16 %v6786, %v6788
        %v6806 = vunpack.c.l.b16 %v2043
        %v6807 = vunpack.c.l.b16 %v2044
        %v6808 = vunpack.c.l.b16 %v2045
        %v6809 = vunpack.c.l.b16 %v2046
        %v6810 = vunpack.c.l.b16 %v2047
        %v6811 = vunpack.c.l.b16 %v2048
        %v6812 = vunpack.c.l.b16 %v2049
        %v6813 = vunpack.c.l.b16 %v2050
        %v6814 = vpack.c.b16 %v6807, %v6806
        %v6815 = vpack.c.b16 %v6809, %v6808
        %v6816 = vpack.c.b16 %v6811, %v6810
        %v6817 = vpack.c.b16 %v6813, %v6812
        %v6823 = vsel %vm2142, %v6797, 0
        %6825 = vmatprep.subr.bf16.mxu0 0
        %6826 = vmatpush1.bf16.msra.mxu0 %v6814
        %6827 = vmatprep.subr.bf16.mxu0 0
        %6828 = vmatpush1.bf16.msra.mxu0 %v6815
        %6829 = vmatprep.subr.bf16.mxu0 0
        %6830 = vmatpush1.bf16.msra.mxu0 %v6816
        %6831 = vmatprep.subr.bf16.mxu0 0
        %6832 = vmatpush1.bf16.msra.mxu0 %v6817
        %6833 = vmatprep.subr.bf16.mxu0 0
        %6834 = vmatpush1.bf16.msra.mxu0 0
        %6835 = vmatprep.subr.bf16.mxu0 0
        %6836 = vmatpush1.bf16.msra.mxu0 0
        %6837 = vmatprep.subr.bf16.mxu0 0
        %6838 = vmatpush1.bf16.msra.mxu0 0
        %6839 = vmatprep.subr.bf16.mxu0 0
        %6840 = vmatpush1.bf16.msra.mxu0 0
        %6841 = vmatprep.subr.bf16.mxu0 0
        %6842 = vmatpush1.bf16.msra.mxu0 0
        %6843 = vmatprep.subr.bf16.mxu0 0
        %6844 = vmatpush1.bf16.msra.mxu0 0
        %6845 = vmatprep.subr.bf16.mxu0 0
        %6846 = vmatpush1.bf16.msra.mxu0 0
        %6847 = vmatprep.subr.bf16.mxu0 0
        %6848 = vmatpush1.bf16.msra.mxu0 0
        %6849 = vmatprep.subr.bf16.mxu0 0
        %6850 = vmatpush1.bf16.msra.mxu0 0
        %6851 = vmatprep.subr.bf16.mxu0 0
        %6852 = vmatpush1.bf16.msra.mxu0 0
        %6853 = vmatprep.subr.bf16.mxu0 0
        %6854 = vmatpush1.bf16.msra.mxu0 0
        %6855 = vmatprep.subr.bf16.mxu0 0
        %6856 = vmatpush1.bf16.msra.mxu0 0
        %6857 = vmatprep.mubr.bf16.mxu0 0
        %6858 = vmatmul.mubr.bf16.gmra.mrb[0].mxu0 %v6823
        %v6859 = vpop.f32.mrb[0].mxu0
        %v6860 = vadd.f32 0.0, %v6859
        %v6861 = vpop.f32.mrb[0].mxu0
        %v6862 = vpop.f32.mrb[0].mxu0
        %v6863 = vadd.f32 0.0, %v6862
        %v6864 = vpop.f32.mrb[0].mxu0
        %6865 = vdwg.mxu0
        %v6866 = vadd.f32 %v6795, %v6860
        %v6867 = vadd.f32 %v6796, %v6863
        %v6868 = vsel %vm2142, %v6866, 0.0
        %6869 = vadd.xlane.f32.xlu0 %v6868
        %v6870 = vpop.xlane.xlu0 %6869
        %v6871 = vsel %vm2146, %v6867, 0.0
        %6872 = vadd.xlane.f32.xlu0 %v6871
        %v6873 = vpop.xlane.xlu0 %6872
        %v6874 = vmul.f32 %v6870, %v2150
        %v6875 = vmul.f32 %v6873, %v2150
        %v6876 = vsub.f32 %v6866, %v6874
        %v6877 = vsub.f32 %v6867, %v6875
        %v6878 = vmul.f32 %v6876, %v6876
        %v6879 = vmul.f32 %v6877, %v6877
        %v6880 = vsel %vm2142, %v6878, 0.0
        %6881 = vadd.xlane.f32.xlu0 %v6880
        %v6882 = vpop.xlane.xlu0 %6881
        %v6883 = vsel %vm2146, %v6879, 0.0
        %6884 = vadd.xlane.f32.xlu0 %v6883
        %v6885 = vpop.xlane.xlu0 %6884
        %v6886 = vmul.f32 %v6882, %v2150
        %v6887 = vmul.f32 %v6885, %v2150
        %v6888 = vadd.f32 %v6886, 1e-05
        %v6889 = vadd.f32 %v6887, 1e-05
        %v6890 = vrsqrt.pop %v6888
        %v6891 = vrsqrt.pop %v6889
        %v6892 = vmul.f32 %v6876, %v6890
        %v6893 = vmul.f32 %v6877, %v6891
        %v6895 = vlaneseq
        %v6896 = vshrl.u32 %v6895, 7
        %v6897 = vsub.s32 0, %v6896
        %v6898 = vrot.slane %v2012, %v6897
        %v6900 = vmul.f32 %v6892, %v6898
        %v6901 = vmul.f32 %v6893, %v6898
        %v6903 = vlaneseq
        %v6904 = vshrl.u32 %v6903, 7
        %v6905 = vsub.s32 0, %v6904
        %v6906 = vrot.slane %v2013, %v6905
        %v6908 = vadd.f32 %v6900, %v6906
        %v6909 = vadd.f32 %v6901, %v6906
        %v6910 = vpack.c.bf16 %v6909, %v6908
        %v6912 = vlaneseq
        %v6913 = vshrl.u32 %v6912, 7
        %v6914 = vsub.s32 0, %v6913
        %v6915 = vrot.slane %v2060, %v6914
        %v6916 = vlaneseq
        %v6917 = vshrl.u32 %v6916, 7
        %v6918 = vsub.s32 1, %v6917
        %v6919 = vrot.slane %v2060, %v6918
        %v6930 = vunpack.c.l.b16 %v2052
        %v6931 = vunpack.c.h.b16 %v2052
        %v6932 = vunpack.c.l.b16 %v2053
        %v6933 = vunpack.c.h.b16 %v2053
        %v6934 = vunpack.c.l.b16 %v2054
        %v6935 = vunpack.c.h.b16 %v2054
        %v6936 = vunpack.c.l.b16 %v2055
        %v6937 = vunpack.c.h.b16 %v2055
        %v6938 = vunpack.c.l.b16 %v2056
        %v6939 = vunpack.c.h.b16 %v2056
        %v6940 = vunpack.c.l.b16 %v2057
        %v6941 = vunpack.c.h.b16 %v2057
        %v6942 = vunpack.c.l.b16 %v2058
        %v6943 = vunpack.c.h.b16 %v2058
        %v6944 = vunpack.c.l.b16 %v2059
        %v6945 = vunpack.c.h.b16 %v2059
        %v6946 = vpack.c.b16 %v6932, %v6930
        %v6947 = vpack.c.b16 %v6933, %v6931
        %v6948 = vpack.c.b16 %v6936, %v6934
        %v6949 = vpack.c.b16 %v6937, %v6935
        %v6950 = vpack.c.b16 %v6940, %v6938
        %v6951 = vpack.c.b16 %v6941, %v6939
        %v6952 = vpack.c.b16 %v6944, %v6942
        %v6953 = vpack.c.b16 %v6945, %v6943
        %v6963 = vsel %vm2142, %v6910, 0
        %6965 = vmatprep.subr.bf16.mxu0 %v6947
        %6966 = vmatpush1.bf16.msra.mxu0 %v6946
        %6967 = vmatprep.subr.bf16.mxu0 %v6949
        %6968 = vmatpush1.bf16.msra.mxu0 %v6948
        %6969 = vmatprep.subr.bf16.mxu0 %v6951
        %6970 = vmatpush1.bf16.msra.mxu0 %v6950
        %6971 = vmatprep.subr.bf16.mxu0 %v6953
        %6972 = vmatpush1.bf16.msra.mxu0 %v6952
        %6973 = vmatprep.subr.bf16.mxu0 0
        %6974 = vmatpush1.bf16.msra.mxu0 0
        %6975 = vmatprep.subr.bf16.mxu0 0
        %6976 = vmatpush1.bf16.msra.mxu0 0
        %6977 = vmatprep.subr.bf16.mxu0 0
        %6978 = vmatpush1.bf16.msra.mxu0 0
        %6979 = vmatprep.subr.bf16.mxu0 0
        %6980 = vmatpush1.bf16.msra.mxu0 0
        %6981 = vmatprep.subr.bf16.mxu0 0
        %6982 = vmatpush1.bf16.msra.mxu0 0
        %6983 = vmatprep.subr.bf16.mxu0 0
        %6984 = vmatpush1.bf16.msra.mxu0 0
        %6985 = vmatprep.subr.bf16.mxu0 0
        %6986 = vmatpush1.bf16.msra.mxu0 0
        %6987 = vmatprep.subr.bf16.mxu0 0
        %6988 = vmatpush1.bf16.msra.mxu0 0
        %6989 = vmatprep.subr.bf16.mxu0 0
        %6990 = vmatpush1.bf16.msra.mxu0 0
        %6991 = vmatprep.subr.bf16.mxu0 0
        %6992 = vmatpush1.bf16.msra.mxu0 0
        %6993 = vmatprep.subr.bf16.mxu0 0
        %6994 = vmatpush1.bf16.msra.mxu0 0
        %6995 = vmatprep.subr.bf16.mxu0 0
        %6996 = vmatpush1.bf16.msra.mxu0 0
        %6997 = vmatprep.mubr.bf16.mxu0 0
        %6998 = vmatmul.mubr.bf16.gmra.mrb[0].mxu0 %v6963
        %v6999 = vpop.f32.mrb[0].mxu0
        %v7000 = vadd.f32 %v6915, %v6999
        %v7001 = vpop.f32.mrb[0].mxu0
        %v7002 = vadd.f32 %v6919, %v7001
        %v7003 = vpop.f32.mrb[0].mxu0
        %v7004 = vadd.f32 %v6915, %v7003
        %v7005 = vpop.f32.mrb[0].mxu0
        %v7006 = vadd.f32 %v6919, %v7005
        %7007 = vdwg.mxu0
        %v7008 = vmul.f32 %v7000, 0.5
        %v7009 = vmul.f32 %v7002, 0.5
        %v7010 = vmul.f32 %v7004, 0.5
        %v7011 = vmul.f32 %v7006, 0.5
        %v7012 = vmul.f32 %v7000, 0.70710677
        %v7013 = vmul.f32 %v7002, 0.70710677
        %v7014 = vmul.f32 %v7004, 0.70710677
        %v7015 = vmul.f32 %v7006, 0.70710677
        %v7016 = verf.f32.pop %v7012
        %v7017 = verf.f32.pop %v7013
        %v7018 = verf.f32.pop %v7014
        %v7019 = verf.f32.pop %v7015
        %v7020 = vadd.f32 %v7016, 1.0
        %v7021 = vadd.f32 %v7017, 1.0
        %v7022 = vadd.f32 %v7018, 1.0
        %v7023 = vadd.f32 %v7019, 1.0
        %v7024 = vmul.f32 %v7008, %v7020
        %v7025 = vmul.f32 %v7009, %v7021
        %v7026 = vmul.f32 %v7010, %v7022
        %v7027 = vmul.f32 %v7011, %v7023
        %v7029 = vlaneseq
        %v7030 = vshrl.u32 %v7029, 7
        %v7031 = vsub.s32 0, %v7030
        %v7032 = vrot.slane %v2093, %v7031
        %v7034 = vadd.f32 %v6866, %v7032
        %v7035 = vadd.f32 %v6867, %v7032
        %v7036 = vpack.c.bf16 %v7026, %v7024
        %v7037 = vpack.c.bf16 %v7027, %v7025
        %v7070 = vunpack.c.l.b16 %v2061
        %v7071 = vunpack.c.l.b16 %v2062
        %v7072 = vunpack.c.l.b16 %v2063
        %v7073 = vunpack.c.l.b16 %v2064
        %v7074 = vunpack.c.l.b16 %v2065
        %v7075 = vunpack.c.l.b16 %v2066
        %v7076 = vunpack.c.l.b16 %v2067
        %v7077 = vunpack.c.l.b16 %v2068
        %v7078 = vunpack.c.l.b16 %v2069
        %v7079 = vunpack.c.l.b16 %v2070
        %v7080 = vunpack.c.l.b16 %v2071
        %v7081 = vunpack.c.l.b16 %v2072
        %v7082 = vunpack.c.l.b16 %v2073
        %v7083 = vunpack.c.l.b16 %v2074
        %v7084 = vunpack.c.l.b16 %v2075
        %v7085 = vunpack.c.l.b16 %v2076
        %v7086 = vunpack.c.l.b16 %v2077
        %v7087 = vunpack.c.l.b16 %v2078
        %v7088 = vunpack.c.l.b16 %v2079
        %v7089 = vunpack.c.l.b16 %v2080
        %v7090 = vunpack.c.l.b16 %v2081
        %v7091 = vunpack.c.l.b16 %v2082
        %v7092 = vunpack.c.l.b16 %v2083
        %v7093 = vunpack.c.l.b16 %v2084
        %v7094 = vunpack.c.l.b16 %v2085
        %v7095 = vunpack.c.l.b16 %v2086
        %v7096 = vunpack.c.l.b16 %v2087
        %v7097 = vunpack.c.l.b16 %v2088
        %v7098 = vunpack.c.l.b16 %v2089
        %v7099 = vunpack.c.l.b16 %v2090
        %v7100 = vunpack.c.l.b16 %v2091
        %v7101 = vunpack.c.l.b16 %v2092
        %v7102 = vpack.c.b16 %v7071, %v7070
        %v7103 = vpack.c.b16 %v7073, %v7072
        %v7104 = vpack.c.b16 %v7075, %v7074
        %v7105 = vpack.c.b16 %v7077, %v7076
        %v7106 = vpack.c.b16 %v7079, %v7078
        %v7107 = vpack.c.b16 %v7081, %v7080
        %v7108 = vpack.c.b16 %v7083, %v7082
        %v7109 = vpack.c.b16 %v7085, %v7084
        %v7110 = vpack.c.b16 %v7087, %v7086
        %v7111 = vpack.c.b16 %v7089, %v7088
        %v7112 = vpack.c.b16 %v7091, %v7090
        %v7113 = vpack.c.b16 %v7093, %v7092
        %v7114 = vpack.c.b16 %v7095, %v7094
        %v7115 = vpack.c.b16 %v7097, %v7096
        %v7116 = vpack.c.b16 %v7099, %v7098
        %v7117 = vpack.c.b16 %v7101, %v7100
        %7134 = vmatprep.subr.bf16.mxu0 0
        %7135 = vmatpush1.bf16.msra.mxu0 %v7102
        %7136 = vmatprep.subr.bf16.mxu0 0
        %7137 = vmatpush1.bf16.msra.mxu0 %v7103
        %7138 = vmatprep.subr.bf16.mxu0 0
        %7139 = vmatpush1.bf16.msra.mxu0 %v7104
        %7140 = vmatprep.subr.bf16.mxu0 0
        %7141 = vmatpush1.bf16.msra.mxu0 %v7105
        %7142 = vmatprep.subr.bf16.mxu0 0
        %7143 = vmatpush1.bf16.msra.mxu0 %v7106
        %7144 = vmatprep.subr.bf16.mxu0 0
        %7145 = vmatpush1.bf16.msra.mxu0 %v7107
        %7146 = vmatprep.subr.bf16.mxu0 0
        %7147 = vmatpush1.bf16.msra.mxu0 %v7108
        %7148 = vmatprep.subr.bf16.mxu0 0
        %7149 = vmatpush1.bf16.msra.mxu0 %v7109
        %7150 = vmatprep.subr.bf16.mxu0 0
        %7151 = vmatpush1.bf16.msra.mxu0 %v7110
        %7152 = vmatprep.subr.bf16.mxu0 0
        %7153 = vmatpush1.bf16.msra.mxu0 %v7111
        %7154 = vmatprep.subr.bf16.mxu0 0
        %7155 = vmatpush1.bf16.msra.mxu0 %v7112
        %7156 = vmatprep.subr.bf16.mxu0 0
        %7157 = vmatpush1.bf16.msra.mxu0 %v7113
        %7158 = vmatprep.subr.bf16.mxu0 0
        %7159 = vmatpush1.bf16.msra.mxu0 %v7114
        %7160 = vmatprep.subr.bf16.mxu0 0
        %7161 = vmatpush1.bf16.msra.mxu0 %v7115
        %7162 = vmatprep.subr.bf16.mxu0 0
        %7163 = vmatpush1.bf16.msra.mxu0 %v7116
        %7164 = vmatprep.subr.bf16.mxu0 0
        %7165 = vmatpush1.bf16.msra.mxu0 %v7117
        %7166 = vmatprep.mubr.bf16.mxu0 %v7037
        %7167 = vmatmul.mubr.bf16.gmra.mrb[0].mxu0 %v7036
        %v7168 = vpop.f32.mrb[0].mxu0
        %v7169 = vadd.f32 0.0, %v7168
        %v7170 = vpop.f32.mrb[0].mxu0
        %v7171 = vpop.f32.mrb[0].mxu0
        %v7172 = vadd.f32 0.0, %v7171
        %v7173 = vpop.f32.mrb[0].mxu0
        %7174 = vdwg.mxu0
        %v7175 = vadd.f32 %v7034, %v7169
        %v7176 = vadd.f32 %v7035, %v7172
        %7177 = vst.msk [vmem:[#allocation2] sm:$0xff] %vm2098, %v4586
        %7178 = vst.msk [vmem:[#allocation2 + $0x8] sm:$0xff] %vm2098, %v4587
        %7179 = vst.msk [vmem:[#allocation3] sm:$0xff] %vm2142, %v7175
        %7180 = vst.msk [vmem:[#allocation3 + $0x8] sm:$0xf] %vm2146, %v7176
        %p7181 = scmp.eq.s32.totalorder %s104, 1
        // Predicated region
        $region201: #{encoder_forward.1} parent=195 // pred_check
          %p7182 = pneg %p7181
        $region202: #{encoder_forward.1} parent=195 // pred_check_branch
          %7184 = sbr.rel (%p7182) target = $region204
        $region203: #{encoder_forward.1} parent=195 // pred_region
          %v7185 = vld [vmem:[%s81] sm:$0x1]
          %v7186 = vld [vmem:[%s83] sm:$0x1]
          %v7187 = vsel %vm2098, %v4586, 0.0
          %7188 = vadd.xlane.f32.xlu0 %v7187
          %v7189 = vpop.xlane.xlu0 %7188
          %v7190 = vsel %vm2098, %v4587, 0.0
          %7191 = vadd.xlane.f32.xlu0 %v7190
          %v7192 = vpop.xlane.xlu0 %7191
          %v7193 = vmul.f32 %v7189, %v2105
          %v7194 = vmul.f32 %v7192, %v2105
          %v7195 = vsub.f32 %v4586, %v7193
          %v7196 = vsub.f32 %v4587, %v7194
          %v7197 = vmul.f32 %v7195, %v7195
          %v7198 = vmul.f32 %v7196, %v7196
          %v7199 = vsel %vm2098, %v7197, 0.0
          %7200 = vadd.xlane.f32.xlu0 %v7199
          %v7201 = vpop.xlane.xlu0 %7200
          %v7202 = vsel %vm2098, %v7198, 0.0
          %7203 = vadd.xlane.f32.xlu0 %v7202
          %v7204 = vpop.xlane.xlu0 %7203
          %v7205 = vmul.f32 %v7201, %v2105
          %v7206 = vmul.f32 %v7204, %v2105
          %v7207 = vadd.f32 %v7205, 1e-05
          %v7208 = vadd.f32 %v7206, 1e-05
          %v7209 = vrsqrt.pop %v7207
          %v7210 = vrsqrt.pop %v7208
          %v7211 = vmul.f32 %v7195, %v7209
          %v7212 = vmul.f32 %v7196, %v7210
          %v7214 = vlaneseq
          %v7215 = vshrl.u32 %v7214, 7
          %v7216 = vsub.s32 0, %v7215
          %v7217 = vrot.slane %v7185, %v7216
          %v7219 = vmul.f32 %v7211, %v7217
          %v7220 = vmul.f32 %v7212, %v7217
          %v7222 = vlaneseq
          %v7223 = vshrl.u32 %v7222, 7
          %v7224 = vsub.s32 0, %v7223
          %v7225 = vrot.slane %v7186, %v7224
          %v7227 = vadd.f32 %v7219, %v7225
          %v7228 = vadd.f32 %v7220, %v7225
          %7229 = vst.msk [vmem:[#allocation4] sm:$0xff] %vm2098, %v7227
          %7230 = vst.msk [vmem:[#allocation4 + $0x8] sm:$0xff] %vm2098, %v7228
          %v7231 = vld [vmem:[%s85] sm:$0x1]
          %v7232 = vld [vmem:[%s87] sm:$0x1]
          %v7233 = vsel %vm2142, %v7175, 0.0
          %7234 = vadd.xlane.f32.xlu0 %v7233
          %v7235 = vpop.xlane.xlu0 %7234
          %v7236 = vsel %vm2146, %v7176, 0.0
          %7237 = vadd.xlane.f32.xlu0 %v7236
          %v7238 = vpop.xlane.xlu0 %7237
          %v7239 = vmul.f32 %v7235, %v2150
          %v7240 = vmul.f32 %v7238, %v2150
          %v7241 = vsub.f32 %v7175, %v7239
          %v7242 = vsub.f32 %v7176, %v7240
          %v7243 = vmul.f32 %v7241, %v7241
          %v7244 = vmul.f32 %v7242, %v7242
          %v7245 = vsel %vm2142, %v7243, 0.0
          %7246 = vadd.xlane.f32.xlu0 %v7245
          %v7247 = vpop.xlane.xlu0 %7246
          %v7248 = vsel %vm2146, %v7244, 0.0
          %7249 = vadd.xlane.f32.xlu0 %v7248
          %v7250 = vpop.xlane.xlu0 %7249
          %v7251 = vmul.f32 %v7247, %v2150
          %v7252 = vmul.f32 %v7250, %v2150
          %v7253 = vadd.f32 %v7251, 1e-05
          %v7254 = vadd.f32 %v7252, 1e-05
          %v7255 = vrsqrt.pop %v7253
          %v7256 = vrsqrt.pop %v7254
          %v7257 = vmul.f32 %v7241, %v7255
          %v7258 = vmul.f32 %v7242, %v7256
          %v7260 = vlaneseq
          %v7261 = vshrl.u32 %v7260, 7
          %v7262 = vsub.s32 0, %v7261
          %v7263 = vrot.slane %v7231, %v7262
          %v7265 = vmul.f32 %v7257, %v7263
          %v7266 = vmul.f32 %v7258, %v7263
          %v7268 = vlaneseq
          %v7269 = vshrl.u32 %v7268, 7
          %v7270 = vsub.s32 0, %v7269
          %v7271 = vrot.slane %v7232, %v7270
          %v7273 = vadd.f32 %v7265, %v7271
          %v7274 = vadd.f32 %v7266, %v7271
          %7275 = vst.msk [vmem:[%s91] sm:$0xff] %vm2142, %v7273
          %7276 = vst.msk [vmem:[%s91 + $0x8] sm:$0xf] %vm2146, %v7274
        $region204: #{encoder_forward.1} parent=195 // pred_fallthru
          _
        // Predicated region
        $region205: #{encoder_forward.1} parent=195 // pred_check
          %p7277 = pneg %p1231
        $region206: #{encoder_forward.1} parent=195 // pred_check_branch
          %7279 = sbr.rel (%p7277) target = $region208
        $region207: #{encoder_forward.1} parent=195 // pred_region
          %s7281 = ssub.s32 256, 256
          %7282 = vsyncadd [#allocation5], %s7281
          %s7283 = sshll.u32 [#allocation4], 4
          %s7284 = int_to_ptr.vmem [resolvable:$true] %s7283
          %7289 = dma.vmem_to_hbm [thread:$0]  %s7284, 256, %s89, [#allocation5], 128, 128, 8
        $region208: #{encoder_forward.1} parent=195 // pred_fallthru
          _
        // Predicated region
        $region209: #{encoder_forward.1} parent=195 // pred_check
          %p7290 = pneg %p1252
        $region210: #{encoder_forward.1} parent=195 // pred_check_branch
          %7292 = sbr.rel (%p7290) target = $region212
        $region211: #{encoder_forward.1} parent=195 // pred_region
          _
        $region212: #{encoder_forward.1} parent=195 // pred_fallthru
          _
        // Predicated region
        $region213: #{encoder_forward.1} parent=195 // pred_check
          %p7293 = pneg %p1231
        $region214: #{encoder_forward.1} parent=195 // pred_check_branch
          %7295 = sbr.rel (%p7293) target = $region216
        $region215: #{encoder_forward.1} parent=195 // pred_region
          %7296 = dma.done [#allocation5], 256
        $region216: #{encoder_forward.1} parent=195 // pred_fallthru
          _
        // Predicated region
        $region217: #{encoder_forward.1} parent=195 // pred_check
          %p7297 = pneg %p1252
        $region218: #{encoder_forward.1} parent=195 // pred_check_branch
          %7299 = sbr.rel (%p7297) target = $region220
        $region219: #{encoder_forward.1} parent=195 // pred_region
          _
        $region220: #{encoder_forward.1} parent=195 // pred_fallthru
          _
      $region196: #{encoder_forward.1} parent=5 // pred_fallthru
        _
      %p7300 = scmp.le.s32.totalorder 2, %s99
      // Predicated region
      $region221: #{encoder_forward.1} parent=5 // pred_check
        %p7301 = pneg %p7300
      $region222: #{encoder_forward.1} parent=5 // pred_check_branch
        %7303 = sbr.rel (%p7301) target = $region224
      $region223: #{encoder_forward.1} parent=5 // pred_region
        %s7304 = ssub.s32 %s99, 2
      $region224: #{encoder_forward.1} parent=5 // pred_fallthru
        _
    $region6: #{encoder_forward.1} parent=1 // loop_footer
      %s103 = sadd.s32 1, %s99
    $region7: #{encoder_forward.1} parent=1 // loop_footer_branch
      %98 = sbr.rel target = $region3
    $region8: #{encoder_forward.1} parent=1 // loop_exit
      _
    %7305 = vsyncpa [#allocation5], 1
    %s7306 = scalar_lea.sflag [#allocation5], 1
    %7307 = vsyncpa %s7306, 1

</llo_original>
